<compile_context>
chip_gen: v7x
topology: tpu7x:2x2x1
jax: 0.10.0
libtpu: 0.0.40
codegen_flags: <defaults>
</compile_context>

<pallas_src>
import numpy as np

import jax
import jax.numpy as jnp
from jax import lax
from jax.experimental import pallas as pl
from jax.experimental.pallas import tpu as pltpu


# --------------------------------------------------------------------------
# Constant-matrix builders (computed once at __init__, passed as kernel inputs)
# --------------------------------------------------------------------------
def _shift_matrices(h, w):
    """(9, H*W, H*W) 0/1 matrices S_k: S_k[q, p] = 1 iff output position p
    reads conv tap k (dy=kh-1, dx=kw-1) from source position q (zero padding
    handled by simply leaving out-of-bounds taps as all-zero columns)."""
    hw = h * w
    s = np.zeros((9, hw, hw), np.float32)
    for kh in range(3):
        for kw in range(3):
            k = kh * 3 + kw
            dy, dx = kh - 1, kw - 1
            for hh in range(h):
                for ww in range(w):
                    sh, sw = hh + dy, ww + dx
                    if 0 <= sh < h and 0 <= sw < w:
                        s[k, sh * w + sw, hh * w + ww] = 1.0
    return s


def _upsample_matrix(h_in, w_in, h_out, w_out):
    """(H_in*W_in, H_out*W_out) 0/1 nearest-neighbour replication matrix
    (x_up = x @ U), matching nn.Upsample(mode='nearest') for integer scale."""
    u = np.zeros((h_in * w_in, h_out * w_out), np.float32)
    rh, rw = h_out // h_in, w_out // w_in
    for h2 in range(h_out):
        for w2 in range(w_out):
            u[(h2 // rh) * w_in + (w2 // rw), h2 * w_out + w2] = 1.0
    return u


# --------------------------------------------------------------------------
# In-kernel helpers (operate on (C, H*W) values)
# --------------------------------------------------------------------------
def _conv3x3_lrelu(x, w_ref, b_ref, s_ref, negative_slope=0.2):
    """3x3 conv (padding=1) + LeakyReLU(0.2) as 18 MXU matmuls.

    x:     (Cin, HW)  f32 value
    w_ref: (9, Cout, Cin)  per-tap transposed weights
    b_ref: (Cout, 1)
    s_ref: (9, HW, HW)  constant shift/mask matrices
    """
    cout = w_ref.shape[1]
    hw = x.shape[1]
    acc = jnp.zeros((cout, hw), jnp.float32)
    for k in range(9):
        tap = jnp.dot(w_ref[k], x, preferred_element_type=jnp.float32)
        acc = acc + jnp.dot(tap, s_ref[k], preferred_element_type=jnp.float32)
    acc = acc + b_ref[...]
    return jnp.where(acc >= 0.0, acc, negative_slope * acc)


# --------------------------------------------------------------------------
# Generator (progressive-growing generator, attention=False path)
# --------------------------------------------------------------------------
class GeneratorPallas:
    """JAX/Pallas port of models/PGmodel.py::Generator (attention=False).

    Scaled-down channel plan mirroring the original structure
    (outchs[i] == inchs[i+1], first block has no Upsample).
    """

    def __init__(self, key, weight, latent_size=16, char_num=4,
                 num_dimension=12):
        self.latent_size = latent_size
        self.char_num = char_num
        self.num_dimension = num_dimension
        # TODO(synk): ImpEmbedding / Conditioning_Augumentation classes were
        # not provided; the embedding is modeled as a multi-hot weighted sum
        # over the pretrained word-vector table `weight`, and CA_layer is
        # unused in the reference forward (mu, logvar stay None).
        self.imp_weight = jnp.asarray(weight, jnp.float32)

        inchs = [latent_size + char_num + num_dimension, 32, 16]
        outchs = [32, 16, 8]
        sizes = [4, 8, 16]
        firsts = [True, False, False]
        self.sizes = sizes
        self.firsts = firsts

        def init_conv(k, cin, cout, scale=0.1):
            k_w, k_b = jax.random.split(k)
            w = scale * jax.random.normal(k_w, (cout, cin, 3, 3), jnp.float32)
            b = scale * jax.random.normal(k_b, (cout,), jnp.float32)
            return w, b

        # Reference-form (OIHW) params and kernel-form params.
        self.blocks = []      # each: [(w1, b1), (w2, b2)]  (OIHW)
        self.torgb = []       # each: (w (Cout,), b ())
        self._kblocks = []    # kernel-form per block
        self._ktorgb = []     # kernel-form toRGB: ((1, Cout), (1, 1))
        prev_size = None
        for size, cin, cout, first in zip(sizes, inchs, outchs, firsts):
            key, k1, k2, k3 = jax.random.split(key, 4)
            w1, b1 = init_conv(k1, cin, cout)
            w2, b2 = init_conv(k2, cout, cout)
            self.blocks.append([(w1, b1), (w2, b2)])
            k_rw, k_rb = jax.random.split(k3)
            rw = 0.1 * jax.random.normal(k_rw, (cout,), jnp.float32)
            rb = 0.1 * jax.random.normal(k_rb, (), jnp.float32)
            self.torgb.append((rw, rb))

            kform = {
                "w1": w1.transpose(2, 3, 0, 1).reshape(9, cout, cin),
                "b1": b1.reshape(cout, 1),
                "w2": w2.transpose(2, 3, 0, 1).reshape(9, cout, cout),
                "b2": b2.reshape(cout, 1),
                "S": jnp.asarray(_shift_matrices(size, size)),
            }
            if not first:
                kform["U"] = jnp.asarray(
                    _upsample_matrix(prev_size, prev_size, size, size))
            self._kblocks.append(kform)
            self._ktorgb.append((rw.reshape(1, cout), rb.reshape(1, 1)))
            prev_size = size

        self._fused_cache = {}   # nlayer -> jitted fused forward

    # ----------------------------------------------------------------------
    def _collect_params(self, nlayer):
        params = []
        for i in range(nlayer + 1):
            kb = self._kblocks[i]
            if not self.firsts[i]:
                params.append(kb["U"])
            params += [kb["w1"], kb["b1"], kb["w2"], kb["b2"], kb["S"]]
        params += list(self._ktorgb[nlayer])
        if nlayer > 0:
            params += list(self._ktorgb[nlayer - 1])
        return params

    def _get_fused(self, nlayer):
        if nlayer in self._fused_cache:
            return self._fused_cache[nlayer]

        firsts = self.firsts
        hw_out = self.sizes[nlayer] ** 2

        def kernel(*refs):
            alpha_ref, x_ref = refs[0], refs[1]
            o_ref = refs[-1]
            it = iter(refs[2:-1])

            x = x_ref[0]                               # (C0, 16) activation
            x_sml = None
            for i in range(nlayer + 1):
                if not firsts[i]:
                    u_ref = next(it)
                    x = jnp.dot(x, u_ref[...],         # fused nearest upsample
                                preferred_element_type=jnp.float32)
                    if i == nlayer:
                        x_sml = x                      # == F.interpolate(x, big)
                w1_ref, b1_ref = next(it), next(it)
                w2_ref, b2_ref = next(it), next(it)
                s_ref = next(it)
                x = _conv3x3_lrelu(x, w1_ref, b1_ref, s_ref)
                x = _conv3x3_lrelu(x, w2_ref, b2_ref, s_ref)

            # toRGB (1x1 conv, Cout=1) + blend + tanh, all lane-dense (1, HW).
            rgbw_ref, rgbb_ref = next(it), next(it)
            dst_big = jnp.dot(rgbw_ref[...], x,
                              preferred_element_type=jnp.float32) + rgbb_ref[...]
            if nlayer == 0:
                out = jnp.tanh(dst_big)
            else:
                rgbws_ref, rgbbs_ref = next(it), next(it)
                dst_sml = jnp.dot(rgbws_ref[...], x_sml,
                                  preferred_element_type=jnp.float32) + rgbbs_ref[...]
                a = alpha_ref[0]
                out = jnp.tanh((1.0 - a) * dst_sml + a * dst_big)
            o_ref[0] = out.astype(o_ref.dtype)

        def _const_spec(arr):
            nd = arr.ndim
            return pl.BlockSpec(arr.shape, lambda n, _nd=nd: (0,) * _nd)

        def apply_fn(alpha, x_in, *params):
            n, c0, hw0 = x_in.shape
            in_specs = [
                pl.BlockSpec(memory_space=pltpu.MemorySpace.SMEM),   # alpha
                pl.BlockSpec((1, c0, hw0), lambda b: (b, 0, 0)),     # x_in
            ] + [_const_spec(p) for p in params]
            return pl.pallas_call(
                kernel,
                out_shape=jax.ShapeDtypeStruct((n, 1, hw_out), jnp.float32),
                grid=(n,),
                in_specs=in_specs,
                out_specs=pl.BlockSpec((1, 1, hw_out), lambda b: (b, 0, 0)),
                compiler_params=pltpu.CompilerParams(
                    dimension_semantics=("parallel",)),
            )(alpha, x_in, *params)

        fn = jax.jit(apply_fn)
        self._fused_cache[nlayer] = fn
        return fn

    # ----------------------------------------------------------------------
    def forward(self, x, y_char, y_imp, res, eps=1e-7, emb=True):
        n, c = x.shape
        x_lat = x.reshape(n, c // 16, 16)      # NCHW 4x4, spatial flattened
        # Impression embedding: tiny (B,10)x(10,12) matmul -> plain JAX
        # (a dedicated pallas_call would be pure dispatch overhead).
        y_sc = jnp.dot(y_imp, self.imp_weight) if emb else y_imp
        y_cond = jnp.concatenate([y_sc, y_char], axis=1)
        y_cond = jnp.broadcast_to(y_cond[:, :, None],
                                  (n, y_cond.shape[1], 16))
        x_in = jnp.concatenate([x_lat, y_cond], axis=1).astype(jnp.float32)

        res = min(res, len(self.blocks))
        nlayer = max(int(res - eps), 0)
        alpha = jnp.asarray([res - int(res - eps)], jnp.float32)

        fused = self._get_fused(nlayer)
        out = fused(alpha, x_in, *self._collect_params(nlayer))
        size = self.sizes[nlayer]
        out = out.reshape(n, 1, size, size)    # NCHW, pure reshape
        return out, None, None

    # Pure-JAX reference of the same forward pass (for correctness checking).
    def forward_reference(self, x, y_char, y_imp, res, eps=1e-7, emb=True):
        n, c = x.shape
        t = x.reshape(n, c // 16, 4, 4)
        y_sc = jnp.dot(y_imp, self.imp_weight) if emb else y_imp
        y_cond = jnp.concatenate([y_sc, y_char], axis=1)[:, :, None, None]
        y_cond = jnp.broadcast_to(y_cond, (n, y_cond.shape[1], 4, 4))
        t = jnp.concatenate([t, y_cond], axis=1)

        def conv_block(i, t):
            if not self.firsts[i]:
                r = self.sizes[i] // t.shape[2]
                t = jnp.repeat(jnp.repeat(t, r, axis=2), r, axis=3)
            for w, b in self.blocks[i]:
                t = lax.conv_general_dilated(
                    t, w, (1, 1), "SAME",
                    dimension_numbers=("NCHW", "OIHW", "NCHW"),
                    precision=lax.Precision.HIGHEST) + b[None, :, None, None]
                t = jnp.where(t >= 0.0, t, 0.2 * t)
            return t

        def to_rgb(i, t):
            w, b = self.torgb[i]
            return jnp.einsum("nchw,c->nhw", t, w,
                              precision=lax.Precision.HIGHEST)[:, None] + b

        res = min(res, len(self.blocks))
        nlayer = max(int(res - eps), 0)
        for i in range(nlayer):
            t = conv_block(i, t)
        x_big = conv_block(nlayer, t)
        dst_big = to_rgb(nlayer, x_big)
        if nlayer == 0:
            return jnp.tanh(dst_big), None, None
        r = x_big.shape[2] // t.shape[2]
        x_sml = jnp.repeat(jnp.repeat(t, r, axis=2), r, axis=3)
        dst_sml = to_rgb(nlayer - 1, x_sml)
        alpha = res - int(res - eps)
        return jnp.tanh((1 - alpha) * dst_sml + alpha * dst_big), None, None


# --------------------------------------------------------------------------
if __name__ == "__main__":
    key = jax.random.PRNGKey(0)
    k_w, k_x, k_imp, k_params = jax.random.split(key, 4)

    batch = 2
    latent_size = 16        # x channels after the NCHW reshape
    char_num = 4
    num_dimension = 12
    num_impressions = 10

    # Pretrained word-vector table stand-in for `weight` in __init__.
    weight = 0.5 * jax.random.normal(
        k_w, (num_impressions, num_dimension), jnp.float32)

    gen = GeneratorPallas(k_params, weight, latent_size=latent_size,
                          char_num=char_num, num_dimension=num_dimension)

    # Inputs (PyTorch conventions): x is the flat latent (n, latent_size*16).
    x = jax.random.normal(k_x, (batch, latent_size * 16), jnp.float32)
    y_char = jax.nn.one_hot(jnp.array([1, 3]), char_num, dtype=jnp.float32)
    y_imp = jax.random.bernoulli(
        k_imp, 0.4, (batch, num_impressions)).astype(jnp.float32)

    # res=1.7 exercises the alpha-blend branch (nlayer=1, alpha=0.7);
    # res=0.5 exercises the first-block-only / pure-tanh branch (nlayer=0).
    expected_size = {1.7: 8, 0.5: 4}
    for res in (1.7, 0.5):
        out, mu, logvar = gen.forward(x, y_char, y_imp, res)
        out = jax.block_until_ready(out)
        ref, _, _ = gen.forward_reference(x, y_char, y_imp, res)
        ref = jax.block_until_ready(ref)

        hw = expected_size[res]
        assert out.shape == (batch, 1, hw, hw), out.shape
        assert mu is None and logvar is None
        err = float(jnp.max(jnp.abs(out - ref)))
        assert jnp.allclose(out, ref, atol=5e-3, rtol=5e-3), err

    print("KERNEL_OK")
</pallas_src>

<mosaic_0001>
module attributes {stable_mosaic.version = 11 : i64} {
  func.func @kernel(%arg0: i32, %arg1: memref<1xf32, #tpu.memory_space<smem>>, %arg2: memref<1x32x16xf32, #tpu.memory_space<vmem>>, %arg3: memref<9x32x32xf32, #tpu.memory_space<vmem>>, %arg4: memref<32x1xf32, #tpu.memory_space<vmem>>, %arg5: memref<9x32x32xf32, #tpu.memory_space<vmem>>, %arg6: memref<32x1xf32, #tpu.memory_space<vmem>>, %arg7: memref<9x16x16xf32, #tpu.memory_space<vmem>>, %arg8: memref<16x64xf32, #tpu.memory_space<vmem>>, %arg9: memref<9x16x32xf32, #tpu.memory_space<vmem>>, %arg10: memref<16x1xf32, #tpu.memory_space<vmem>>, %arg11: memref<9x16x16xf32, #tpu.memory_space<vmem>>, %arg12: memref<16x1xf32, #tpu.memory_space<vmem>>, %arg13: memref<9x64x64xf32, #tpu.memory_space<vmem>>, %arg14: memref<1x16xf32, #tpu.memory_space<vmem>>, %arg15: memref<1x1xf32, #tpu.memory_space<vmem>>, %arg16: memref<1x32xf32, #tpu.memory_space<vmem>>, %arg17: memref<1x1xf32, #tpu.memory_space<vmem>>, %arg18: memref<1x1x64xf32, #tpu.memory_space<vmem>>) attributes {dimension_semantics = [#tpu.dimension_semantics<parallel>], iteration_bounds = array<i64: 2>, scalar_prefetch = 0 : i64, scratch_operands = 0 : i64, tpu.core_type = #tpu.core_type<tc>, window_params = [{transform_indices = @transform_0, window_bounds = array<i64: 1>}, {transform_indices = @transform_1, window_bounds = array<i64: 1, 32, 16>}, {pipeline_mode = #tpu.pipeline_mode<synchronous>, transform_indices = @transform_2, window_bounds = array<i64: 9, 32, 32>}, {pipeline_mode = #tpu.pipeline_mode<synchronous>, transform_indices = @transform_3, window_bounds = array<i64: 32, 1>}, {pipeline_mode = #tpu.pipeline_mode<synchronous>, transform_indices = @transform_4, window_bounds = array<i64: 9, 32, 32>}, {pipeline_mode = #tpu.pipeline_mode<synchronous>, transform_indices = @transform_5, window_bounds = array<i64: 32, 1>}, {pipeline_mode = #tpu.pipeline_mode<synchronous>, transform_indices = @transform_6, window_bounds = array<i64: 9, 16, 16>}, {pipeline_mode = #tpu.pipeline_mode<synchronous>, transform_indices = @transform_7, window_bounds = array<i64: 16, 64>}, {pipeline_mode = #tpu.pipeline_mode<synchronous>, transform_indices = @transform_8, window_bounds = array<i64: 9, 16, 32>}, {pipeline_mode = #tpu.pipeline_mode<synchronous>, transform_indices = @transform_9, window_bounds = array<i64: 16, 1>}, {pipeline_mode = #tpu.pipeline_mode<synchronous>, transform_indices = @transform_10, window_bounds = array<i64: 9, 16, 16>}, {pipeline_mode = #tpu.pipeline_mode<synchronous>, transform_indices = @transform_11, window_bounds = array<i64: 16, 1>}, {pipeline_mode = #tpu.pipeline_mode<synchronous>, transform_indices = @transform_12, window_bounds = array<i64: 9, 64, 64>}, {pipeline_mode = #tpu.pipeline_mode<synchronous>, transform_indices = @transform_13, window_bounds = array<i64: 1, 16>}, {pipeline_mode = #tpu.pipeline_mode<synchronous>, transform_indices = @transform_14, window_bounds = array<i64: 1, 1>}, {pipeline_mode = #tpu.pipeline_mode<synchronous>, transform_indices = @transform_15, window_bounds = array<i64: 1, 32>}, {pipeline_mode = #tpu.pipeline_mode<synchronous>, transform_indices = @transform_16, window_bounds = array<i64: 1, 1>}, {transform_indices = @transform_17, window_bounds = array<i64: 1, 1, 64>}]} {
    %c0 = arith.constant 0 : index
    %c0_0 = arith.constant 0 : index
    %c0_1 = arith.constant 0 : index
    %0 = vector.load %arg2[%c0, %c0_0, %c0_1] : memref<1x32x16xf32, #tpu.memory_space<vmem>>, vector<1x32x16xf32>
    %1 = vector.shape_cast %0 : vector<1x32x16xf32> to vector<32x16xf32>
    %cst = arith.constant 0.000000e+00 : f32
    %2 = vector.broadcast %cst : f32 to vector<32x16xf32>
    %c0_2 = arith.constant 0 : index
    %c0_3 = arith.constant 0 : index
    %c0_4 = arith.constant 0 : index
    %3 = vector.load %arg3[%c0_2, %c0_3, %c0_4] : memref<9x32x32xf32, #tpu.memory_space<vmem>>, vector<1x32x32xf32>
    %4 = vector.shape_cast %3 : vector<1x32x32xf32> to vector<32x32xf32>
    %cst_5 = arith.constant dense<0.000000e+00> : vector<32x16xf32>
    %5 = tpu.matmul %4, %1, %cst_5 {dimension_numbers = #tpu.dot_dimension_numbers<[1], [0], [0], [1], [0, 0, 1, 1], [], []>} : vector<32x32xf32>, vector<32x16xf32>, vector<32x16xf32> -> vector<32x16xf32>
    %c0_6 = arith.constant 0 : index
    %c0_7 = arith.constant 0 : index
    %c0_8 = arith.constant 0 : index
    %6 = vector.load %arg7[%c0_6, %c0_7, %c0_8] : memref<9x16x16xf32, #tpu.memory_space<vmem>>, vector<1x16x16xf32>
    %7 = vector.shape_cast %6 : vector<1x16x16xf32> to vector<16x16xf32>
    %cst_9 = arith.constant dense<0.000000e+00> : vector<32x16xf32>
    %8 = tpu.matmul %5, %7, %cst_9 {dimension_numbers = #tpu.dot_dimension_numbers<[1], [0], [0], [1], [0, 0, 1, 1], [], []>} : vector<32x16xf32>, vector<16x16xf32>, vector<32x16xf32> -> vector<32x16xf32>
    %9 = arith.addf %2, %8 : vector<32x16xf32>
    %c1 = arith.constant 1 : index
    %c0_10 = arith.constant 0 : index
    %c0_11 = arith.constant 0 : index
    %10 = vector.load %arg3[%c1, %c0_10, %c0_11] : memref<9x32x32xf32, #tpu.memory_space<vmem>>, vector<1x32x32xf32>
    %11 = vector.shape_cast %10 : vector<1x32x32xf32> to vector<32x32xf32>
    %cst_12 = arith.constant dense<0.000000e+00> : vector<32x16xf32>
    %12 = tpu.matmul %11, %1, %cst_12 {dimension_numbers = #tpu.dot_dimension_numbers<[1], [0], [0], [1], [0, 0, 1, 1], [], []>} : vector<32x32xf32>, vector<32x16xf32>, vector<32x16xf32> -> vector<32x16xf32>
    %c1_13 = arith.constant 1 : index
    %c0_14 = arith.constant 0 : index
    %c0_15 = arith.constant 0 : index
    %13 = vector.load %arg7[%c1_13, %c0_14, %c0_15] : memref<9x16x16xf32, #tpu.memory_space<vmem>>, vector<1x16x16xf32>
    %14 = vector.shape_cast %13 : vector<1x16x16xf32> to vector<16x16xf32>
    %cst_16 = arith.constant dense<0.000000e+00> : vector<32x16xf32>
    %15 = tpu.matmul %12, %14, %cst_16 {dimension_numbers = #tpu.dot_dimension_numbers<[1], [0], [0], [1], [0, 0, 1, 1], [], []>} : vector<32x16xf32>, vector<16x16xf32>, vector<32x16xf32> -> vector<32x16xf32>
    %16 = arith.addf %9, %15 : vector<32x16xf32>
    %c2 = arith.constant 2 : index
    %c0_17 = arith.constant 0 : index
    %c0_18 = arith.constant 0 : index
    %17 = vector.load %arg3[%c2, %c0_17, %c0_18] : memref<9x32x32xf32, #tpu.memory_space<vmem>>, vector<1x32x32xf32>
    %18 = vector.shape_cast %17 : vector<1x32x32xf32> to vector<32x32xf32>
    %cst_19 = arith.constant dense<0.000000e+00> : vector<32x16xf32>
    %19 = tpu.matmul %18, %1, %cst_19 {dimension_numbers = #tpu.dot_dimension_numbers<[1], [0], [0], [1], [0, 0, 1, 1], [], []>} : vector<32x32xf32>, vector<32x16xf32>, vector<32x16xf32> -> vector<32x16xf32>
    %c2_20 = arith.constant 2 : index
    %c0_21 = arith.constant 0 : index
    %c0_22 = arith.constant 0 : index
    %20 = vector.load %arg7[%c2_20, %c0_21, %c0_22] : memref<9x16x16xf32, #tpu.memory_space<vmem>>, vector<1x16x16xf32>
    %21 = vector.shape_cast %20 : vector<1x16x16xf32> to vector<16x16xf32>
    %cst_23 = arith.constant dense<0.000000e+00> : vector<32x16xf32>
    %22 = tpu.matmul %19, %21, %cst_23 {dimension_numbers = #tpu.dot_dimension_numbers<[1], [0], [0], [1], [0, 0, 1, 1], [], []>} : vector<32x16xf32>, vector<16x16xf32>, vector<32x16xf32> -> vector<32x16xf32>
    %23 = arith.addf %16, %22 : vector<32x16xf32>
    %c3 = arith.constant 3 : index
    %c0_24 = arith.constant 0 : index
    %c0_25 = arith.constant 0 : index
    %24 = vector.load %arg3[%c3, %c0_24, %c0_25] : memref<9x32x32xf32, #tpu.memory_space<vmem>>, vector<1x32x32xf32>
    %25 = vector.shape_cast %24 : vector<1x32x32xf32> to vector<32x32xf32>
    %cst_26 = arith.constant dense<0.000000e+00> : vector<32x16xf32>
    %26 = tpu.matmul %25, %1, %cst_26 {dimension_numbers = #tpu.dot_dimension_numbers<[1], [0], [0], [1], [0, 0, 1, 1], [], []>} : vector<32x32xf32>, vector<32x16xf32>, vector<32x16xf32> -> vector<32x16xf32>
    %c3_27 = arith.constant 3 : index
    %c0_28 = arith.constant 0 : index
    %c0_29 = arith.constant 0 : index
    %27 = vector.load %arg7[%c3_27, %c0_28, %c0_29] : memref<9x16x16xf32, #tpu.memory_space<vmem>>, vector<1x16x16xf32>
    %28 = vector.shape_cast %27 : vector<1x16x16xf32> to vector<16x16xf32>
    %cst_30 = arith.constant dense<0.000000e+00> : vector<32x16xf32>
    %29 = tpu.matmul %26, %28, %cst_30 {dimension_numbers = #tpu.dot_dimension_numbers<[1], [0], [0], [1], [0, 0, 1, 1], [], []>} : vector<32x16xf32>, vector<16x16xf32>, vector<32x16xf32> -> vector<32x16xf32>
    %30 = arith.addf %23, %29 : vector<32x16xf32>
    %c4 = arith.constant 4 : index
    %c0_31 = arith.constant 0 : index
    %c0_32 = arith.constant 0 : index
    %31 = vector.load %arg3[%c4, %c0_31, %c0_32] : memref<9x32x32xf32, #tpu.memory_space<vmem>>, vector<1x32x32xf32>
    %32 = vector.shape_cast %31 : vector<1x32x32xf32> to vector<32x32xf32>
    %cst_33 = arith.constant dense<0.000000e+00> : vector<32x16xf32>
    %33 = tpu.matmul %32, %1, %cst_33 {dimension_numbers = #tpu.dot_dimension_numbers<[1], [0], [0], [1], [0, 0, 1, 1], [], []>} : vector<32x32xf32>, vector<32x16xf32>, vector<32x16xf32> -> vector<32x16xf32>
    %c4_34 = arith.constant 4 : index
    %c0_35 = arith.constant 0 : index
    %c0_36 = arith.constant 0 : index
    %34 = vector.load %arg7[%c4_34, %c0_35, %c0_36] : memref<9x16x16xf32, #tpu.memory_space<vmem>>, vector<1x16x16xf32>
    %35 = vector.shape_cast %34 : vector<1x16x16xf32> to vector<16x16xf32>
    %cst_37 = arith.constant dense<0.000000e+00> : vector<32x16xf32>
    %36 = tpu.matmul %33, %35, %cst_37 {dimension_numbers = #tpu.dot_dimension_numbers<[1], [0], [0], [1], [0, 0, 1, 1], [], []>} : vector<32x16xf32>, vector<16x16xf32>, vector<32x16xf32> -> vector<32x16xf32>
    %37 = arith.addf %30, %36 : vector<32x16xf32>
    %c5 = arith.constant 5 : index
    %c0_38 = arith.constant 0 : index
    %c0_39 = arith.constant 0 : index
    %38 = vector.load %arg3[%c5, %c0_38, %c0_39] : memref<9x32x32xf32, #tpu.memory_space<vmem>>, vector<1x32x32xf32>
    %39 = vector.shape_cast %38 : vector<1x32x32xf32> to vector<32x32xf32>
    %cst_40 = arith.constant dense<0.000000e+00> : vector<32x16xf32>
    %40 = tpu.matmul %39, %1, %cst_40 {dimension_numbers = #tpu.dot_dimension_numbers<[1], [0], [0], [1], [0, 0, 1, 1], [], []>} : vector<32x32xf32>, vector<32x16xf32>, vector<32x16xf32> -> vector<32x16xf32>
    %c5_41 = arith.constant 5 : index
    %c0_42 = arith.constant 0 : index
    %c0_43 = arith.constant 0 : index
    %41 = vector.load %arg7[%c5_41, %c0_42, %c0_43] : memref<9x16x16xf32, #tpu.memory_space<vmem>>, vector<1x16x16xf32>
    %42 = vector.shape_cast %41 : vector<1x16x16xf32> to vector<16x16xf32>
    %cst_44 = arith.constant dense<0.000000e+00> : vector<32x16xf32>
    %43 = tpu.matmul %40, %42, %cst_44 {dimension_numbers = #tpu.dot_dimension_numbers<[1], [0], [0], [1], [0, 0, 1, 1], [], []>} : vector<32x16xf32>, vector<16x16xf32>, vector<32x16xf32> -> vector<32x16xf32>
    %44 = arith.addf %37, %43 : vector<32x16xf32>
    %c6 = arith.constant 6 : index
    %c0_45 = arith.constant 0 : index
    %c0_46 = arith.constant 0 : index
    %45 = vector.load %arg3[%c6, %c0_45, %c0_46] : memref<9x32x32xf32, #tpu.memory_space<vmem>>, vector<1x32x32xf32>
    %46 = vector.shape_cast %45 : vector<1x32x32xf32> to vector<32x32xf32>
    %cst_47 = arith.constant dense<0.000000e+00> : vector<32x16xf32>
    %47 = tpu.matmul %46, %1, %cst_47 {dimension_numbers = #tpu.dot_dimension_numbers<[1], [0], [0], [1], [0, 0, 1, 1], [], []>} : vector<32x32xf32>, vector<32x16xf32>, vector<32x16xf32> -> vector<32x16xf32>
    %c6_48 = arith.constant 6 : index
    %c0_49 = arith.constant 0 : index
    %c0_50 = arith.constant 0 : index
    %48 = vector.load %arg7[%c6_48, %c0_49, %c0_50] : memref<9x16x16xf32, #tpu.memory_space<vmem>>, vector<1x16x16xf32>
    %49 = vector.shape_cast %48 : vector<1x16x16xf32> to vector<16x16xf32>
    %cst_51 = arith.constant dense<0.000000e+00> : vector<32x16xf32>
    %50 = tpu.matmul %47, %49, %cst_51 {dimension_numbers = #tpu.dot_dimension_numbers<[1], [0], [0], [1], [0, 0, 1, 1], [], []>} : vector<32x16xf32>, vector<16x16xf32>, vector<32x16xf32> -> vector<32x16xf32>
    %51 = arith.addf %44, %50 : vector<32x16xf32>
    %c7 = arith.constant 7 : index
    %c0_52 = arith.constant 0 : index
    %c0_53 = arith.constant 0 : index
    %52 = vector.load %arg3[%c7, %c0_52, %c0_53] : memref<9x32x32xf32, #tpu.memory_space<vmem>>, vector<1x32x32xf32>
    %53 = vector.shape_cast %52 : vector<1x32x32xf32> to vector<32x32xf32>
    %cst_54 = arith.constant dense<0.000000e+00> : vector<32x16xf32>
    %54 = tpu.matmul %53, %1, %cst_54 {dimension_numbers = #tpu.dot_dimension_numbers<[1], [0], [0], [1], [0, 0, 1, 1], [], []>} : vector<32x32xf32>, vector<32x16xf32>, vector<32x16xf32> -> vector<32x16xf32>
    %c7_55 = arith.constant 7 : index
    %c0_56 = arith.constant 0 : index
    %c0_57 = arith.constant 0 : index
    %55 = vector.load %arg7[%c7_55, %c0_56, %c0_57] : memref<9x16x16xf32, #tpu.memory_space<vmem>>, vector<1x16x16xf32>
    %56 = vector.shape_cast %55 : vector<1x16x16xf32> to vector<16x16xf32>
    %cst_58 = arith.constant dense<0.000000e+00> : vector<32x16xf32>
    %57 = tpu.matmul %54, %56, %cst_58 {dimension_numbers = #tpu.dot_dimension_numbers<[1], [0], [0], [1], [0, 0, 1, 1], [], []>} : vector<32x16xf32>, vector<16x16xf32>, vector<32x16xf32> -> vector<32x16xf32>
    %58 = arith.addf %51, %57 : vector<32x16xf32>
    %c8 = arith.constant 8 : index
    %c0_59 = arith.constant 0 : index
    %c0_60 = arith.constant 0 : index
    %59 = vector.load %arg3[%c8, %c0_59, %c0_60] : memref<9x32x32xf32, #tpu.memory_space<vmem>>, vector<1x32x32xf32>
    %60 = vector.shape_cast %59 : vector<1x32x32xf32> to vector<32x32xf32>
    %cst_61 = arith.constant dense<0.000000e+00> : vector<32x16xf32>
    %61 = tpu.matmul %60, %1, %cst_61 {dimension_numbers = #tpu.dot_dimension_numbers<[1], [0], [0], [1], [0, 0, 1, 1], [], []>} : vector<32x32xf32>, vector<32x16xf32>, vector<32x16xf32> -> vector<32x16xf32>
    %c8_62 = arith.constant 8 : index
    %c0_63 = arith.constant 0 : index
    %c0_64 = arith.constant 0 : index
    %62 = vector.load %arg7[%c8_62, %c0_63, %c0_64] : memref<9x16x16xf32, #tpu.memory_space<vmem>>, vector<1x16x16xf32>
    %63 = vector.shape_cast %62 : vector<1x16x16xf32> to vector<16x16xf32>
    %cst_65 = arith.constant dense<0.000000e+00> : vector<32x16xf32>
    %64 = tpu.matmul %61, %63, %cst_65 {dimension_numbers = #tpu.dot_dimension_numbers<[1], [0], [0], [1], [0, 0, 1, 1], [], []>} : vector<32x16xf32>, vector<16x16xf32>, vector<32x16xf32> -> vector<32x16xf32>
    %65 = arith.addf %58, %64 : vector<32x16xf32>
    %c0_66 = arith.constant 0 : index
    %c0_67 = arith.constant 0 : index
    %66 = vector.load %arg4[%c0_66, %c0_67] : memref<32x1xf32, #tpu.memory_space<vmem>>, vector<32x1xf32>
    %67 = vector.broadcast %66 : vector<32x1xf32> to vector<32x16xf32>
    %68 = arith.addf %65, %67 : vector<32x16xf32>
    %cst_68 = arith.constant 0.000000e+00 : f32
    %69 = vector.broadcast %cst_68 : f32 to vector<32x16xf32>
    %70 = arith.cmpf oge, %68, %69 : vector<32x16xf32>
    %cst_69 = arith.constant 2.000000e-01 : f32
    %71 = vector.broadcast %cst_69 : f32 to vector<32x16xf32>
    %72 = arith.mulf %71, %68 : vector<32x16xf32>
    %73 = arith.select %70, %68, %72 : vector<32x16xi1>, vector<32x16xf32>
    %cst_70 = arith.constant 0.000000e+00 : f32
    %74 = vector.broadcast %cst_70 : f32 to vector<32x16xf32>
    %c0_71 = arith.constant 0 : index
    %c0_72 = arith.constant 0 : index
    %c0_73 = arith.constant 0 : index
    %75 = vector.load %arg5[%c0_71, %c0_72, %c0_73] : memref<9x32x32xf32, #tpu.memory_space<vmem>>, vector<1x32x32xf32>
    %76 = vector.shape_cast %75 : vector<1x32x32xf32> to vector<32x32xf32>
    %cst_74 = arith.constant dense<0.000000e+00> : vector<32x16xf32>
    %77 = tpu.matmul %76, %73, %cst_74 {dimension_numbers = #tpu.dot_dimension_numbers<[1], [0], [0], [1], [0, 0, 1, 1], [], []>} : vector<32x32xf32>, vector<32x16xf32>, vector<32x16xf32> -> vector<32x16xf32>
    %c0_75 = arith.constant 0 : index
    %c0_76 = arith.constant 0 : index
    %c0_77 = arith.constant 0 : index
    %78 = vector.load %arg7[%c0_75, %c0_76, %c0_77] : memref<9x16x16xf32, #tpu.memory_space<vmem>>, vector<1x16x16xf32>
    %79 = vector.shape_cast %78 : vector<1x16x16xf32> to vector<16x16xf32>
    %cst_78 = arith.constant dense<0.000000e+00> : vector<32x16xf32>
    %80 = tpu.matmul %77, %79, %cst_78 {dimension_numbers = #tpu.dot_dimension_numbers<[1], [0], [0], [1], [0, 0, 1, 1], [], []>} : vector<32x16xf32>, vector<16x16xf32>, vector<32x16xf32> -> vector<32x16xf32>
    %81 = arith.addf %74, %80 : vector<32x16xf32>
    %c1_79 = arith.constant 1 : index
    %c0_80 = arith.constant 0 : index
    %c0_81 = arith.constant 0 : index
    %82 = vector.load %arg5[%c1_79, %c0_80, %c0_81] : memref<9x32x32xf32, #tpu.memory_space<vmem>>, vector<1x32x32xf32>
    %83 = vector.shape_cast %82 : vector<1x32x32xf32> to vector<32x32xf32>
    %cst_82 = arith.constant dense<0.000000e+00> : vector<32x16xf32>
    %84 = tpu.matmul %83, %73, %cst_82 {dimension_numbers = #tpu.dot_dimension_numbers<[1], [0], [0], [1], [0, 0, 1, 1], [], []>} : vector<32x32xf32>, vector<32x16xf32>, vector<32x16xf32> -> vector<32x16xf32>
    %c1_83 = arith.constant 1 : index
    %c0_84 = arith.constant 0 : index
    %c0_85 = arith.constant 0 : index
    %85 = vector.load %arg7[%c1_83, %c0_84, %c0_85] : memref<9x16x16xf32, #tpu.memory_space<vmem>>, vector<1x16x16xf32>
    %86 = vector.shape_cast %85 : vector<1x16x16xf32> to vector<16x16xf32>
    %cst_86 = arith.constant dense<0.000000e+00> : vector<32x16xf32>
    %87 = tpu.matmul %84, %86, %cst_86 {dimension_numbers = #tpu.dot_dimension_numbers<[1], [0], [0], [1], [0, 0, 1, 1], [], []>} : vector<32x16xf32>, vector<16x16xf32>, vector<32x16xf32> -> vector<32x16xf32>
    %88 = arith.addf %81, %87 : vector<32x16xf32>
    %c2_87 = arith.constant 2 : index
    %c0_88 = arith.constant 0 : index
    %c0_89 = arith.constant 0 : index
    %89 = vector.load %arg5[%c2_87, %c0_88, %c0_89] : memref<9x32x32xf32, #tpu.memory_space<vmem>>, vector<1x32x32xf32>
    %90 = vector.shape_cast %89 : vector<1x32x32xf32> to vector<32x32xf32>
    %cst_90 = arith.constant dense<0.000000e+00> : vector<32x16xf32>
    %91 = tpu.matmul %90, %73, %cst_90 {dimension_numbers = #tpu.dot_dimension_numbers<[1], [0], [0], [1], [0, 0, 1, 1], [], []>} : vector<32x32xf32>, vector<32x16xf32>, vector<32x16xf32> -> vector<32x16xf32>
    %c2_91 = arith.constant 2 : index
    %c0_92 = arith.constant 0 : index
    %c0_93 = arith.constant 0 : index
    %92 = vector.load %arg7[%c2_91, %c0_92, %c0_93] : memref<9x16x16xf32, #tpu.memory_space<vmem>>, vector<1x16x16xf32>
    %93 = vector.shape_cast %92 : vector<1x16x16xf32> to vector<16x16xf32>
    %cst_94 = arith.constant dense<0.000000e+00> : vector<32x16xf32>
    %94 = tpu.matmul %91, %93, %cst_94 {dimension_numbers = #tpu.dot_dimension_numbers<[1], [0], [0], [1], [0, 0, 1, 1], [], []>} : vector<32x16xf32>, vector<16x16xf32>, vector<32x16xf32> -> vector<32x16xf32>
    %95 = arith.addf %88, %94 : vector<32x16xf32>
    %c3_95 = arith.constant 3 : index
    %c0_96 = arith.constant 0 : index
    %c0_97 = arith.constant 0 : index
    %96 = vector.load %arg5[%c3_95, %c0_96, %c0_97] : memref<9x32x32xf32, #tpu.memory_space<vmem>>, vector<1x32x32xf32>
    %97 = vector.shape_cast %96 : vector<1x32x32xf32> to vector<32x32xf32>
    %cst_98 = arith.constant dense<0.000000e+00> : vector<32x16xf32>
    %98 = tpu.matmul %97, %73, %cst_98 {dimension_numbers = #tpu.dot_dimension_numbers<[1], [0], [0], [1], [0, 0, 1, 1], [], []>} : vector<32x32xf32>, vector<32x16xf32>, vector<32x16xf32> -> vector<32x16xf32>
    %c3_99 = arith.constant 3 : index
    %c0_100 = arith.constant 0 : index
    %c0_101 = arith.constant 0 : index
    %99 = vector.load %arg7[%c3_99, %c0_100, %c0_101] : memref<9x16x16xf32, #tpu.memory_space<vmem>>, vector<1x16x16xf32>
    %100 = vector.shape_cast %99 : vector<1x16x16xf32> to vector<16x16xf32>
    %cst_102 = arith.constant dense<0.000000e+00> : vector<32x16xf32>
    %101 = tpu.matmul %98, %100, %cst_102 {dimension_numbers = #tpu.dot_dimension_numbers<[1], [0], [0], [1], [0, 0, 1, 1], [], []>} : vector<32x16xf32>, vector<16x16xf32>, vector<32x16xf32> -> vector<32x16xf32>
    %102 = arith.addf %95, %101 : vector<32x16xf32>
    %c4_103 = arith.constant 4 : index
    %c0_104 = arith.constant 0 : index
    %c0_105 = arith.constant 0 : index
    %103 = vector.load %arg5[%c4_103, %c0_104, %c0_105] : memref<9x32x32xf32, #tpu.memory_space<vmem>>, vector<1x32x32xf32>
    %104 = vector.shape_cast %103 : vector<1x32x32xf32> to vector<32x32xf32>
    %cst_106 = arith.constant dense<0.000000e+00> : vector<32x16xf32>
    %105 = tpu.matmul %104, %73, %cst_106 {dimension_numbers = #tpu.dot_dimension_numbers<[1], [0], [0], [1], [0, 0, 1, 1], [], []>} : vector<32x32xf32>, vector<32x16xf32>, vector<32x16xf32> -> vector<32x16xf32>
    %c4_107 = arith.constant 4 : index
    %c0_108 = arith.constant 0 : index
    %c0_109 = arith.constant 0 : index
    %106 = vector.load %arg7[%c4_107, %c0_108, %c0_109] : memref<9x16x16xf32, #tpu.memory_space<vmem>>, vector<1x16x16xf32>
    %107 = vector.shape_cast %106 : vector<1x16x16xf32> to vector<16x16xf32>
    %cst_110 = arith.constant dense<0.000000e+00> : vector<32x16xf32>
    %108 = tpu.matmul %105, %107, %cst_110 {dimension_numbers = #tpu.dot_dimension_numbers<[1], [0], [0], [1], [0, 0, 1, 1], [], []>} : vector<32x16xf32>, vector<16x16xf32>, vector<32x16xf32> -> vector<32x16xf32>
    %109 = arith.addf %102, %108 : vector<32x16xf32>
    %c5_111 = arith.constant 5 : index
    %c0_112 = arith.constant 0 : index
    %c0_113 = arith.constant 0 : index
    %110 = vector.load %arg5[%c5_111, %c0_112, %c0_113] : memref<9x32x32xf32, #tpu.memory_space<vmem>>, vector<1x32x32xf32>
    %111 = vector.shape_cast %110 : vector<1x32x32xf32> to vector<32x32xf32>
    %cst_114 = arith.constant dense<0.000000e+00> : vector<32x16xf32>
    %112 = tpu.matmul %111, %73, %cst_114 {dimension_numbers = #tpu.dot_dimension_numbers<[1], [0], [0], [1], [0, 0, 1, 1], [], []>} : vector<32x32xf32>, vector<32x16xf32>, vector<32x16xf32> -> vector<32x16xf32>
    %c5_115 = arith.constant 5 : index
    %c0_116 = arith.constant 0 : index
    %c0_117 = arith.constant 0 : index
    %113 = vector.load %arg7[%c5_115, %c0_116, %c0_117] : memref<9x16x16xf32, #tpu.memory_space<vmem>>, vector<1x16x16xf32>
    %114 = vector.shape_cast %113 : vector<1x16x16xf32> to vector<16x16xf32>
    %cst_118 = arith.constant dense<0.000000e+00> : vector<32x16xf32>
    %115 = tpu.matmul %112, %114, %cst_118 {dimension_numbers = #tpu.dot_dimension_numbers<[1], [0], [0], [1], [0, 0, 1, 1], [], []>} : vector<32x16xf32>, vector<16x16xf32>, vector<32x16xf32> -> vector<32x16xf32>
    %116 = arith.addf %109, %115 : vector<32x16xf32>
    %c6_119 = arith.constant 6 : index
    %c0_120 = arith.constant 0 : index
    %c0_121 = arith.constant 0 : index
    %117 = vector.load %arg5[%c6_119, %c0_120, %c0_121] : memref<9x32x32xf32, #tpu.memory_space<vmem>>, vector<1x32x32xf32>
    %118 = vector.shape_cast %117 : vector<1x32x32xf32> to vector<32x32xf32>
    %cst_122 = arith.constant dense<0.000000e+00> : vector<32x16xf32>
    %119 = tpu.matmul %118, %73, %cst_122 {dimension_numbers = #tpu.dot_dimension_numbers<[1], [0], [0], [1], [0, 0, 1, 1], [], []>} : vector<32x32xf32>, vector<32x16xf32>, vector<32x16xf32> -> vector<32x16xf32>
    %c6_123 = arith.constant 6 : index
    %c0_124 = arith.constant 0 : index
    %c0_125 = arith.constant 0 : index
    %120 = vector.load %arg7[%c6_123, %c0_124, %c0_125] : memref<9x16x16xf32, #tpu.memory_space<vmem>>, vector<1x16x16xf32>
    %121 = vector.shape_cast %120 : vector<1x16x16xf32> to vector<16x16xf32>
    %cst_126 = arith.constant dense<0.000000e+00> : vector<32x16xf32>
    %122 = tpu.matmul %119, %121, %cst_126 {dimension_numbers = #tpu.dot_dimension_numbers<[1], [0], [0], [1], [0, 0, 1, 1], [], []>} : vector<32x16xf32>, vector<16x16xf32>, vector<32x16xf32> -> vector<32x16xf32>
    %123 = arith.addf %116, %122 : vector<32x16xf32>
    %c7_127 = arith.constant 7 : index
    %c0_128 = arith.constant 0 : index
    %c0_129 = arith.constant 0 : index
    %124 = vector.load %arg5[%c7_127, %c0_128, %c0_129] : memref<9x32x32xf32, #tpu.memory_space<vmem>>, vector<1x32x32xf32>
    %125 = vector.shape_cast %124 : vector<1x32x32xf32> to vector<32x32xf32>
    %cst_130 = arith.constant dense<0.000000e+00> : vector<32x16xf32>
    %126 = tpu.matmul %125, %73, %cst_130 {dimension_numbers = #tpu.dot_dimension_numbers<[1], [0], [0], [1], [0, 0, 1, 1], [], []>} : vector<32x32xf32>, vector<32x16xf32>, vector<32x16xf32> -> vector<32x16xf32>
    %c7_131 = arith.constant 7 : index
    %c0_132 = arith.constant 0 : index
    %c0_133 = arith.constant 0 : index
    %127 = vector.load %arg7[%c7_131, %c0_132, %c0_133] : memref<9x16x16xf32, #tpu.memory_space<vmem>>, vector<1x16x16xf32>
    %128 = vector.shape_cast %127 : vector<1x16x16xf32> to vector<16x16xf32>
    %cst_134 = arith.constant dense<0.000000e+00> : vector<32x16xf32>
    %129 = tpu.matmul %126, %128, %cst_134 {dimension_numbers = #tpu.dot_dimension_numbers<[1], [0], [0], [1], [0, 0, 1, 1], [], []>} : vector<32x16xf32>, vector<16x16xf32>, vector<32x16xf32> -> vector<32x16xf32>
    %130 = arith.addf %123, %129 : vector<32x16xf32>
    %c8_135 = arith.constant 8 : index
    %c0_136 = arith.constant 0 : index
    %c0_137 = arith.constant 0 : index
    %131 = vector.load %arg5[%c8_135, %c0_136, %c0_137] : memref<9x32x32xf32, #tpu.memory_space<vmem>>, vector<1x32x32xf32>
    %132 = vector.shape_cast %131 : vector<1x32x32xf32> to vector<32x32xf32>
    %cst_138 = arith.constant dense<0.000000e+00> : vector<32x16xf32>
    %133 = tpu.matmul %132, %73, %cst_138 {dimension_numbers = #tpu.dot_dimension_numbers<[1], [0], [0], [1], [0, 0, 1, 1], [], []>} : vector<32x32xf32>, vector<32x16xf32>, vector<32x16xf32> -> vector<32x16xf32>
    %c8_139 = arith.constant 8 : index
    %c0_140 = arith.constant 0 : index
    %c0_141 = arith.constant 0 : index
    %134 = vector.load %arg7[%c8_139, %c0_140, %c0_141] : memref<9x16x16xf32, #tpu.memory_space<vmem>>, vector<1x16x16xf32>
    %135 = vector.shape_cast %134 : vector<1x16x16xf32> to vector<16x16xf32>
    %cst_142 = arith.constant dense<0.000000e+00> : vector<32x16xf32>
    %136 = tpu.matmul %133, %135, %cst_142 {dimension_numbers = #tpu.dot_dimension_numbers<[1], [0], [0], [1], [0, 0, 1, 1], [], []>} : vector<32x16xf32>, vector<16x16xf32>, vector<32x16xf32> -> vector<32x16xf32>
    %137 = arith.addf %130, %136 : vector<32x16xf32>
    %c0_143 = arith.constant 0 : index
    %c0_144 = arith.constant 0 : index
    %138 = vector.load %arg6[%c0_143, %c0_144] : memref<32x1xf32, #tpu.memory_space<vmem>>, vector<32x1xf32>
    %139 = vector.broadcast %138 : vector<32x1xf32> to vector<32x16xf32>
    %140 = arith.addf %137, %139 : vector<32x16xf32>
    %cst_145 = arith.constant 0.000000e+00 : f32
    %141 = vector.broadcast %cst_145 : f32 to vector<32x16xf32>
    %142 = arith.cmpf oge, %140, %141 : vector<32x16xf32>
    %cst_146 = arith.constant 2.000000e-01 : f32
    %143 = vector.broadcast %cst_146 : f32 to vector<32x16xf32>
    %144 = arith.mulf %143, %140 : vector<32x16xf32>
    %145 = arith.select %142, %140, %144 : vector<32x16xi1>, vector<32x16xf32>
    %c0_147 = arith.constant 0 : index
    %c0_148 = arith.constant 0 : index
    %146 = vector.load %arg8[%c0_147, %c0_148] : memref<16x64xf32, #tpu.memory_space<vmem>>, vector<16x64xf32>
    %cst_149 = arith.constant dense<0.000000e+00> : vector<32x64xf32>
    %147 = tpu.matmul %145, %146, %cst_149 {dimension_numbers = #tpu.dot_dimension_numbers<[1], [0], [0], [1], [0, 0, 1, 1], [], []>} : vector<32x16xf32>, vector<16x64xf32>, vector<32x64xf32> -> vector<32x64xf32>
    %cst_150 = arith.constant 0.000000e+00 : f32
    %148 = vector.broadcast %cst_150 : f32 to vector<16x64xf32>
    %c0_151 = arith.constant 0 : index
    %c0_152 = arith.constant 0 : index
    %c0_153 = arith.constant 0 : index
    %149 = vector.load %arg9[%c0_151, %c0_152, %c0_153] : memref<9x16x32xf32, #tpu.memory_space<vmem>>, vector<1x16x32xf32>
    %150 = vector.shape_cast %149 : vector<1x16x32xf32> to vector<16x32xf32>
    %cst_154 = arith.constant dense<0.000000e+00> : vector<16x64xf32>
    %151 = tpu.matmul %150, %147, %cst_154 {dimension_numbers = #tpu.dot_dimension_numbers<[1], [0], [0], [1], [0, 0, 1, 1], [], []>} : vector<16x32xf32>, vector<32x64xf32>, vector<16x64xf32> -> vector<16x64xf32>
    %c0_155 = arith.constant 0 : index
    %c0_156 = arith.constant 0 : index
    %c0_157 = arith.constant 0 : index
    %152 = vector.load %arg13[%c0_155, %c0_156, %c0_157] : memref<9x64x64xf32, #tpu.memory_space<vmem>>, vector<1x64x64xf32>
    %153 = vector.shape_cast %152 : vector<1x64x64xf32> to vector<64x64xf32>
    %cst_158 = arith.constant dense<0.000000e+00> : vector<16x64xf32>
    %154 = tpu.matmul %151, %153, %cst_158 {dimension_numbers = #tpu.dot_dimension_numbers<[1], [0], [0], [1], [0, 0, 1, 1], [], []>} : vector<16x64xf32>, vector<64x64xf32>, vector<16x64xf32> -> vector<16x64xf32>
    %155 = arith.addf %148, %154 : vector<16x64xf32>
    %c1_159 = arith.constant 1 : index
    %c0_160 = arith.constant 0 : index
    %c0_161 = arith.constant 0 : index
    %156 = vector.load %arg9[%c1_159, %c0_160, %c0_161] : memref<9x16x32xf32, #tpu.memory_space<vmem>>, vector<1x16x32xf32>
    %157 = vector.shape_cast %156 : vector<1x16x32xf32> to vector<16x32xf32>
    %cst_162 = arith.constant dense<0.000000e+00> : vector<16x64xf32>
    %158 = tpu.matmul %157, %147, %cst_162 {dimension_numbers = #tpu.dot_dimension_numbers<[1], [0], [0], [1], [0, 0, 1, 1], [], []>} : vector<16x32xf32>, vector<32x64xf32>, vector<16x64xf32> -> vector<16x64xf32>
    %c1_163 = arith.constant 1 : index
    %c0_164 = arith.constant 0 : index
    %c0_165 = arith.constant 0 : index
    %159 = vector.load %arg13[%c1_163, %c0_164, %c0_165] : memref<9x64x64xf32, #tpu.memory_space<vmem>>, vector<1x64x64xf32>
    %160 = vector.shape_cast %159 : vector<1x64x64xf32> to vector<64x64xf32>
    %cst_166 = arith.constant dense<0.000000e+00> : vector<16x64xf32>
    %161 = tpu.matmul %158, %160, %cst_166 {dimension_numbers = #tpu.dot_dimension_numbers<[1], [0], [0], [1], [0, 0, 1, 1], [], []>} : vector<16x64xf32>, vector<64x64xf32>, vector<16x64xf32> -> vector<16x64xf32>
    %162 = arith.addf %155, %161 : vector<16x64xf32>
    %c2_167 = arith.constant 2 : index
    %c0_168 = arith.constant 0 : index
    %c0_169 = arith.constant 0 : index
    %163 = vector.load %arg9[%c2_167, %c0_168, %c0_169] : memref<9x16x32xf32, #tpu.memory_space<vmem>>, vector<1x16x32xf32>
    %164 = vector.shape_cast %163 : vector<1x16x32xf32> to vector<16x32xf32>
    %cst_170 = arith.constant dense<0.000000e+00> : vector<16x64xf32>
    %165 = tpu.matmul %164, %147, %cst_170 {dimension_numbers = #tpu.dot_dimension_numbers<[1], [0], [0], [1], [0, 0, 1, 1], [], []>} : vector<16x32xf32>, vector<32x64xf32>, vector<16x64xf32> -> vector<16x64xf32>
    %c2_171 = arith.constant 2 : index
    %c0_172 = arith.constant 0 : index
    %c0_173 = arith.constant 0 : index
    %166 = vector.load %arg13[%c2_171, %c0_172, %c0_173] : memref<9x64x64xf32, #tpu.memory_space<vmem>>, vector<1x64x64xf32>
    %167 = vector.shape_cast %166 : vector<1x64x64xf32> to vector<64x64xf32>
    %cst_174 = arith.constant dense<0.000000e+00> : vector<16x64xf32>
    %168 = tpu.matmul %165, %167, %cst_174 {dimension_numbers = #tpu.dot_dimension_numbers<[1], [0], [0], [1], [0, 0, 1, 1], [], []>} : vector<16x64xf32>, vector<64x64xf32>, vector<16x64xf32> -> vector<16x64xf32>
    %169 = arith.addf %162, %168 : vector<16x64xf32>
    %c3_175 = arith.constant 3 : index
    %c0_176 = arith.constant 0 : index
    %c0_177 = arith.constant 0 : index
    %170 = vector.load %arg9[%c3_175, %c0_176, %c0_177] : memref<9x16x32xf32, #tpu.memory_space<vmem>>, vector<1x16x32xf32>
    %171 = vector.shape_cast %170 : vector<1x16x32xf32> to vector<16x32xf32>
    %cst_178 = arith.constant dense<0.000000e+00> : vector<16x64xf32>
    %172 = tpu.matmul %171, %147, %cst_178 {dimension_numbers = #tpu.dot_dimension_numbers<[1], [0], [0], [1], [0, 0, 1, 1], [], []>} : vector<16x32xf32>, vector<32x64xf32>, vector<16x64xf32> -> vector<16x64xf32>
    %c3_179 = arith.constant 3 : index
    %c0_180 = arith.constant 0 : index
    %c0_181 = arith.constant 0 : index
    %173 = vector.load %arg13[%c3_179, %c0_180, %c0_181] : memref<9x64x64xf32, #tpu.memory_space<vmem>>, vector<1x64x64xf32>
    %174 = vector.shape_cast %173 : vector<1x64x64xf32> to vector<64x64xf32>
    %cst_182 = arith.constant dense<0.000000e+00> : vector<16x64xf32>
    %175 = tpu.matmul %172, %174, %cst_182 {dimension_numbers = #tpu.dot_dimension_numbers<[1], [0], [0], [1], [0, 0, 1, 1], [], []>} : vector<16x64xf32>, vector<64x64xf32>, vector<16x64xf32> -> vector<16x64xf32>
    %176 = arith.addf %169, %175 : vector<16x64xf32>
    %c4_183 = arith.constant 4 : index
    %c0_184 = arith.constant 0 : index
    %c0_185 = arith.constant 0 : index
    %177 = vector.load %arg9[%c4_183, %c0_184, %c0_185] : memref<9x16x32xf32, #tpu.memory_space<vmem>>, vector<1x16x32xf32>
    %178 = vector.shape_cast %177 : vector<1x16x32xf32> to vector<16x32xf32>
    %cst_186 = arith.constant dense<0.000000e+00> : vector<16x64xf32>
    %179 = tpu.matmul %178, %147, %cst_186 {dimension_numbers = #tpu.dot_dimension_numbers<[1], [0], [0], [1], [0, 0, 1, 1], [], []>} : vector<16x32xf32>, vector<32x64xf32>, vector<16x64xf32> -> vector<16x64xf32>
    %c4_187 = arith.constant 4 : index
    %c0_188 = arith.constant 0 : index
    %c0_189 = arith.constant 0 : index
    %180 = vector.load %arg13[%c4_187, %c0_188, %c0_189] : memref<9x64x64xf32, #tpu.memory_space<vmem>>, vector<1x64x64xf32>
    %181 = vector.shape_cast %180 : vector<1x64x64xf32> to vector<64x64xf32>
    %cst_190 = arith.constant dense<0.000000e+00> : vector<16x64xf32>
    %182 = tpu.matmul %179, %181, %cst_190 {dimension_numbers = #tpu.dot_dimension_numbers<[1], [0], [0], [1], [0, 0, 1, 1], [], []>} : vector<16x64xf32>, vector<64x64xf32>, vector<16x64xf32> -> vector<16x64xf32>
    %183 = arith.addf %176, %182 : vector<16x64xf32>
    %c5_191 = arith.constant 5 : index
    %c0_192 = arith.constant 0 : index
    %c0_193 = arith.constant 0 : index
    %184 = vector.load %arg9[%c5_191, %c0_192, %c0_193] : memref<9x16x32xf32, #tpu.memory_space<vmem>>, vector<1x16x32xf32>
    %185 = vector.shape_cast %184 : vector<1x16x32xf32> to vector<16x32xf32>
    %cst_194 = arith.constant dense<0.000000e+00> : vector<16x64xf32>
    %186 = tpu.matmul %185, %147, %cst_194 {dimension_numbers = #tpu.dot_dimension_numbers<[1], [0], [0], [1], [0, 0, 1, 1], [], []>} : vector<16x32xf32>, vector<32x64xf32>, vector<16x64xf32> -> vector<16x64xf32>
    %c5_195 = arith.constant 5 : index
    %c0_196 = arith.constant 0 : index
    %c0_197 = arith.constant 0 : index
    %187 = vector.load %arg13[%c5_195, %c0_196, %c0_197] : memref<9x64x64xf32, #tpu.memory_space<vmem>>, vector<1x64x64xf32>
    %188 = vector.shape_cast %187 : vector<1x64x64xf32> to vector<64x64xf32>
    %cst_198 = arith.constant dense<0.000000e+00> : vector<16x64xf32>
    %189 = tpu.matmul %186, %188, %cst_198 {dimension_numbers = #tpu.dot_dimension_numbers<[1], [0], [0], [1], [0, 0, 1, 1], [], []>} : vector<16x64xf32>, vector<64x64xf32>, vector<16x64xf32> -> vector<16x64xf32>
    %190 = arith.addf %183, %189 : vector<16x64xf32>
    %c6_199 = arith.constant 6 : index
    %c0_200 = arith.constant 0 : index
    %c0_201 = arith.constant 0 : index
    %191 = vector.load %arg9[%c6_199, %c0_200, %c0_201] : memref<9x16x32xf32, #tpu.memory_space<vmem>>, vector<1x16x32xf32>
    %192 = vector.shape_cast %191 : vector<1x16x32xf32> to vector<16x32xf32>
    %cst_202 = arith.constant dense<0.000000e+00> : vector<16x64xf32>
    %193 = tpu.matmul %192, %147, %cst_202 {dimension_numbers = #tpu.dot_dimension_numbers<[1], [0], [0], [1], [0, 0, 1, 1], [], []>} : vector<16x32xf32>, vector<32x64xf32>, vector<16x64xf32> -> vector<16x64xf32>
    %c6_203 = arith.constant 6 : index
    %c0_204 = arith.constant 0 : index
    %c0_205 = arith.constant 0 : index
    %194 = vector.load %arg13[%c6_203, %c0_204, %c0_205] : memref<9x64x64xf32, #tpu.memory_space<vmem>>, vector<1x64x64xf32>
    %195 = vector.shape_cast %194 : vector<1x64x64xf32> to vector<64x64xf32>
    %cst_206 = arith.constant dense<0.000000e+00> : vector<16x64xf32>
    %196 = tpu.matmul %193, %195, %cst_206 {dimension_numbers = #tpu.dot_dimension_numbers<[1], [0], [0], [1], [0, 0, 1, 1], [], []>} : vector<16x64xf32>, vector<64x64xf32>, vector<16x64xf32> -> vector<16x64xf32>
    %197 = arith.addf %190, %196 : vector<16x64xf32>
    %c7_207 = arith.constant 7 : index
    %c0_208 = arith.constant 0 : index
    %c0_209 = arith.constant 0 : index
    %198 = vector.load %arg9[%c7_207, %c0_208, %c0_209] : memref<9x16x32xf32, #tpu.memory_space<vmem>>, vector<1x16x32xf32>
    %199 = vector.shape_cast %198 : vector<1x16x32xf32> to vector<16x32xf32>
    %cst_210 = arith.constant dense<0.000000e+00> : vector<16x64xf32>
    %200 = tpu.matmul %199, %147, %cst_210 {dimension_numbers = #tpu.dot_dimension_numbers<[1], [0], [0], [1], [0, 0, 1, 1], [], []>} : vector<16x32xf32>, vector<32x64xf32>, vector<16x64xf32> -> vector<16x64xf32>
    %c7_211 = arith.constant 7 : index
    %c0_212 = arith.constant 0 : index
    %c0_213 = arith.constant 0 : index
    %201 = vector.load %arg13[%c7_211, %c0_212, %c0_213] : memref<9x64x64xf32, #tpu.memory_space<vmem>>, vector<1x64x64xf32>
    %202 = vector.shape_cast %201 : vector<1x64x64xf32> to vector<64x64xf32>
    %cst_214 = arith.constant dense<0.000000e+00> : vector<16x64xf32>
    %203 = tpu.matmul %200, %202, %cst_214 {dimension_numbers = #tpu.dot_dimension_numbers<[1], [0], [0], [1], [0, 0, 1, 1], [], []>} : vector<16x64xf32>, vector<64x64xf32>, vector<16x64xf32> -> vector<16x64xf32>
    %204 = arith.addf %197, %203 : vector<16x64xf32>
    %c8_215 = arith.constant 8 : index
    %c0_216 = arith.constant 0 : index
    %c0_217 = arith.constant 0 : index
    %205 = vector.load %arg9[%c8_215, %c0_216, %c0_217] : memref<9x16x32xf32, #tpu.memory_space<vmem>>, vector<1x16x32xf32>
    %206 = vector.shape_cast %205 : vector<1x16x32xf32> to vector<16x32xf32>
    %cst_218 = arith.constant dense<0.000000e+00> : vector<16x64xf32>
    %207 = tpu.matmul %206, %147, %cst_218 {dimension_numbers = #tpu.dot_dimension_numbers<[1], [0], [0], [1], [0, 0, 1, 1], [], []>} : vector<16x32xf32>, vector<32x64xf32>, vector<16x64xf32> -> vector<16x64xf32>
    %c8_219 = arith.constant 8 : index
    %c0_220 = arith.constant 0 : index
    %c0_221 = arith.constant 0 : index
    %208 = vector.load %arg13[%c8_219, %c0_220, %c0_221] : memref<9x64x64xf32, #tpu.memory_space<vmem>>, vector<1x64x64xf32>
    %209 = vector.shape_cast %208 : vector<1x64x64xf32> to vector<64x64xf32>
    %cst_222 = arith.constant dense<0.000000e+00> : vector<16x64xf32>
    %210 = tpu.matmul %207, %209, %cst_222 {dimension_numbers = #tpu.dot_dimension_numbers<[1], [0], [0], [1], [0, 0, 1, 1], [], []>} : vector<16x64xf32>, vector<64x64xf32>, vector<16x64xf32> -> vector<16x64xf32>
    %211 = arith.addf %204, %210 : vector<16x64xf32>
    %c0_223 = arith.constant 0 : index
    %c0_224 = arith.constant 0 : index
    %212 = vector.load %arg10[%c0_223, %c0_224] : memref<16x1xf32, #tpu.memory_space<vmem>>, vector<16x1xf32>
    %213 = vector.broadcast %212 : vector<16x1xf32> to vector<16x64xf32>
    %214 = arith.addf %211, %213 : vector<16x64xf32>
    %cst_225 = arith.constant 0.000000e+00 : f32
    %215 = vector.broadcast %cst_225 : f32 to vector<16x64xf32>
    %216 = arith.cmpf oge, %214, %215 : vector<16x64xf32>
    %cst_226 = arith.constant 2.000000e-01 : f32
    %217 = vector.broadcast %cst_226 : f32 to vector<16x64xf32>
    %218 = arith.mulf %217, %214 : vector<16x64xf32>
    %219 = arith.select %216, %214, %218 : vector<16x64xi1>, vector<16x64xf32>
    %cst_227 = arith.constant 0.000000e+00 : f32
    %220 = vector.broadcast %cst_227 : f32 to vector<16x64xf32>
    %c0_228 = arith.constant 0 : index
    %c0_229 = arith.constant 0 : index
    %c0_230 = arith.constant 0 : index
    %221 = vector.load %arg11[%c0_228, %c0_229, %c0_230] : memref<9x16x16xf32, #tpu.memory_space<vmem>>, vector<1x16x16xf32>
    %222 = vector.shape_cast %221 : vector<1x16x16xf32> to vector<16x16xf32>
    %cst_231 = arith.constant dense<0.000000e+00> : vector<16x64xf32>
    %223 = tpu.matmul %222, %219, %cst_231 {dimension_numbers = #tpu.dot_dimension_numbers<[1], [0], [0], [1], [0, 0, 1, 1], [], []>} : vector<16x16xf32>, vector<16x64xf32>, vector<16x64xf32> -> vector<16x64xf32>
    %c0_232 = arith.constant 0 : index
    %c0_233 = arith.constant 0 : index
    %c0_234 = arith.constant 0 : index
    %224 = vector.load %arg13[%c0_232, %c0_233, %c0_234] : memref<9x64x64xf32, #tpu.memory_space<vmem>>, vector<1x64x64xf32>
    %225 = vector.shape_cast %224 : vector<1x64x64xf32> to vector<64x64xf32>
    %cst_235 = arith.constant dense<0.000000e+00> : vector<16x64xf32>
    %226 = tpu.matmul %223, %225, %cst_235 {dimension_numbers = #tpu.dot_dimension_numbers<[1], [0], [0], [1], [0, 0, 1, 1], [], []>} : vector<16x64xf32>, vector<64x64xf32>, vector<16x64xf32> -> vector<16x64xf32>
    %227 = arith.addf %220, %226 : vector<16x64xf32>
    %c1_236 = arith.constant 1 : index
    %c0_237 = arith.constant 0 : index
    %c0_238 = arith.constant 0 : index
    %228 = vector.load %arg11[%c1_236, %c0_237, %c0_238] : memref<9x16x16xf32, #tpu.memory_space<vmem>>, vector<1x16x16xf32>
    %229 = vector.shape_cast %228 : vector<1x16x16xf32> to vector<16x16xf32>
    %cst_239 = arith.constant dense<0.000000e+00> : vector<16x64xf32>
    %230 = tpu.matmul %229, %219, %cst_239 {dimension_numbers = #tpu.dot_dimension_numbers<[1], [0], [0], [1], [0, 0, 1, 1], [], []>} : vector<16x16xf32>, vector<16x64xf32>, vector<16x64xf32> -> vector<16x64xf32>
    %c1_240 = arith.constant 1 : index
    %c0_241 = arith.constant 0 : index
    %c0_242 = arith.constant 0 : index
    %231 = vector.load %arg13[%c1_240, %c0_241, %c0_242] : memref<9x64x64xf32, #tpu.memory_space<vmem>>, vector<1x64x64xf32>
    %232 = vector.shape_cast %231 : vector<1x64x64xf32> to vector<64x64xf32>
    %cst_243 = arith.constant dense<0.000000e+00> : vector<16x64xf32>
    %233 = tpu.matmul %230, %232, %cst_243 {dimension_numbers = #tpu.dot_dimension_numbers<[1], [0], [0], [1], [0, 0, 1, 1], [], []>} : vector<16x64xf32>, vector<64x64xf32>, vector<16x64xf32> -> vector<16x64xf32>
    %234 = arith.addf %227, %233 : vector<16x64xf32>
    %c2_244 = arith.constant 2 : index
    %c0_245 = arith.constant 0 : index
    %c0_246 = arith.constant 0 : index
    %235 = vector.load %arg11[%c2_244, %c0_245, %c0_246] : memref<9x16x16xf32, #tpu.memory_space<vmem>>, vector<1x16x16xf32>
    %236 = vector.shape_cast %235 : vector<1x16x16xf32> to vector<16x16xf32>
    %cst_247 = arith.constant dense<0.000000e+00> : vector<16x64xf32>
    %237 = tpu.matmul %236, %219, %cst_247 {dimension_numbers = #tpu.dot_dimension_numbers<[1], [0], [0], [1], [0, 0, 1, 1], [], []>} : vector<16x16xf32>, vector<16x64xf32>, vector<16x64xf32> -> vector<16x64xf32>
    %c2_248 = arith.constant 2 : index
    %c0_249 = arith.constant 0 : index
    %c0_250 = arith.constant 0 : index
    %238 = vector.load %arg13[%c2_248, %c0_249, %c0_250] : memref<9x64x64xf32, #tpu.memory_space<vmem>>, vector<1x64x64xf32>
    %239 = vector.shape_cast %238 : vector<1x64x64xf32> to vector<64x64xf32>
    %cst_251 = arith.constant dense<0.000000e+00> : vector<16x64xf32>
    %240 = tpu.matmul %237, %239, %cst_251 {dimension_numbers = #tpu.dot_dimension_numbers<[1], [0], [0], [1], [0, 0, 1, 1], [], []>} : vector<16x64xf32>, vector<64x64xf32>, vector<16x64xf32> -> vector<16x64xf32>
    %241 = arith.addf %234, %240 : vector<16x64xf32>
    %c3_252 = arith.constant 3 : index
    %c0_253 = arith.constant 0 : index
    %c0_254 = arith.constant 0 : index
    %242 = vector.load %arg11[%c3_252, %c0_253, %c0_254] : memref<9x16x16xf32, #tpu.memory_space<vmem>>, vector<1x16x16xf32>
    %243 = vector.shape_cast %242 : vector<1x16x16xf32> to vector<16x16xf32>
    %cst_255 = arith.constant dense<0.000000e+00> : vector<16x64xf32>
    %244 = tpu.matmul %243, %219, %cst_255 {dimension_numbers = #tpu.dot_dimension_numbers<[1], [0], [0], [1], [0, 0, 1, 1], [], []>} : vector<16x16xf32>, vector<16x64xf32>, vector<16x64xf32> -> vector<16x64xf32>
    %c3_256 = arith.constant 3 : index
    %c0_257 = arith.constant 0 : index
    %c0_258 = arith.constant 0 : index
    %245 = vector.load %arg13[%c3_256, %c0_257, %c0_258] : memref<9x64x64xf32, #tpu.memory_space<vmem>>, vector<1x64x64xf32>
    %246 = vector.shape_cast %245 : vector<1x64x64xf32> to vector<64x64xf32>
    %cst_259 = arith.constant dense<0.000000e+00> : vector<16x64xf32>
    %247 = tpu.matmul %244, %246, %cst_259 {dimension_numbers = #tpu.dot_dimension_numbers<[1], [0], [0], [1], [0, 0, 1, 1], [], []>} : vector<16x64xf32>, vector<64x64xf32>, vector<16x64xf32> -> vector<16x64xf32>
    %248 = arith.addf %241, %247 : vector<16x64xf32>
    %c4_260 = arith.constant 4 : index
    %c0_261 = arith.constant 0 : index
    %c0_262 = arith.constant 0 : index
    %249 = vector.load %arg11[%c4_260, %c0_261, %c0_262] : memref<9x16x16xf32, #tpu.memory_space<vmem>>, vector<1x16x16xf32>
    %250 = vector.shape_cast %249 : vector<1x16x16xf32> to vector<16x16xf32>
    %cst_263 = arith.constant dense<0.000000e+00> : vector<16x64xf32>
    %251 = tpu.matmul %250, %219, %cst_263 {dimension_numbers = #tpu.dot_dimension_numbers<[1], [0], [0], [1], [0, 0, 1, 1], [], []>} : vector<16x16xf32>, vector<16x64xf32>, vector<16x64xf32> -> vector<16x64xf32>
    %c4_264 = arith.constant 4 : index
    %c0_265 = arith.constant 0 : index
    %c0_266 = arith.constant 0 : index
    %252 = vector.load %arg13[%c4_264, %c0_265, %c0_266] : memref<9x64x64xf32, #tpu.memory_space<vmem>>, vector<1x64x64xf32>
    %253 = vector.shape_cast %252 : vector<1x64x64xf32> to vector<64x64xf32>
    %cst_267 = arith.constant dense<0.000000e+00> : vector<16x64xf32>
    %254 = tpu.matmul %251, %253, %cst_267 {dimension_numbers = #tpu.dot_dimension_numbers<[1], [0], [0], [1], [0, 0, 1, 1], [], []>} : vector<16x64xf32>, vector<64x64xf32>, vector<16x64xf32> -> vector<16x64xf32>
    %255 = arith.addf %248, %254 : vector<16x64xf32>
    %c5_268 = arith.constant 5 : index
    %c0_269 = arith.constant 0 : index
    %c0_270 = arith.constant 0 : index
    %256 = vector.load %arg11[%c5_268, %c0_269, %c0_270] : memref<9x16x16xf32, #tpu.memory_space<vmem>>, vector<1x16x16xf32>
    %257 = vector.shape_cast %256 : vector<1x16x16xf32> to vector<16x16xf32>
    %cst_271 = arith.constant dense<0.000000e+00> : vector<16x64xf32>
    %258 = tpu.matmul %257, %219, %cst_271 {dimension_numbers = #tpu.dot_dimension_numbers<[1], [0], [0], [1], [0, 0, 1, 1], [], []>} : vector<16x16xf32>, vector<16x64xf32>, vector<16x64xf32> -> vector<16x64xf32>
    %c5_272 = arith.constant 5 : index
    %c0_273 = arith.constant 0 : index
    %c0_274 = arith.constant 0 : index
    %259 = vector.load %arg13[%c5_272, %c0_273, %c0_274] : memref<9x64x64xf32, #tpu.memory_space<vmem>>, vector<1x64x64xf32>
    %260 = vector.shape_cast %259 : vector<1x64x64xf32> to vector<64x64xf32>
    %cst_275 = arith.constant dense<0.000000e+00> : vector<16x64xf32>
    %261 = tpu.matmul %258, %260, %cst_275 {dimension_numbers = #tpu.dot_dimension_numbers<[1], [0], [0], [1], [0, 0, 1, 1], [], []>} : vector<16x64xf32>, vector<64x64xf32>, vector<16x64xf32> -> vector<16x64xf32>
    %262 = arith.addf %255, %261 : vector<16x64xf32>
    %c6_276 = arith.constant 6 : index
    %c0_277 = arith.constant 0 : index
    %c0_278 = arith.constant 0 : index
    %263 = vector.load %arg11[%c6_276, %c0_277, %c0_278] : memref<9x16x16xf32, #tpu.memory_space<vmem>>, vector<1x16x16xf32>
    %264 = vector.shape_cast %263 : vector<1x16x16xf32> to vector<16x16xf32>
    %cst_279 = arith.constant dense<0.000000e+00> : vector<16x64xf32>
    %265 = tpu.matmul %264, %219, %cst_279 {dimension_numbers = #tpu.dot_dimension_numbers<[1], [0], [0], [1], [0, 0, 1, 1], [], []>} : vector<16x16xf32>, vector<16x64xf32>, vector<16x64xf32> -> vector<16x64xf32>
    %c6_280 = arith.constant 6 : index
    %c0_281 = arith.constant 0 : index
    %c0_282 = arith.constant 0 : index
    %266 = vector.load %arg13[%c6_280, %c0_281, %c0_282] : memref<9x64x64xf32, #tpu.memory_space<vmem>>, vector<1x64x64xf32>
    %267 = vector.shape_cast %266 : vector<1x64x64xf32> to vector<64x64xf32>
    %cst_283 = arith.constant dense<0.000000e+00> : vector<16x64xf32>
    %268 = tpu.matmul %265, %267, %cst_283 {dimension_numbers = #tpu.dot_dimension_numbers<[1], [0], [0], [1], [0, 0, 1, 1], [], []>} : vector<16x64xf32>, vector<64x64xf32>, vector<16x64xf32> -> vector<16x64xf32>
    %269 = arith.addf %262, %268 : vector<16x64xf32>
    %c7_284 = arith.constant 7 : index
    %c0_285 = arith.constant 0 : index
    %c0_286 = arith.constant 0 : index
    %270 = vector.load %arg11[%c7_284, %c0_285, %c0_286] : memref<9x16x16xf32, #tpu.memory_space<vmem>>, vector<1x16x16xf32>
    %271 = vector.shape_cast %270 : vector<1x16x16xf32> to vector<16x16xf32>
    %cst_287 = arith.constant dense<0.000000e+00> : vector<16x64xf32>
    %272 = tpu.matmul %271, %219, %cst_287 {dimension_numbers = #tpu.dot_dimension_numbers<[1], [0], [0], [1], [0, 0, 1, 1], [], []>} : vector<16x16xf32>, vector<16x64xf32>, vector<16x64xf32> -> vector<16x64xf32>
    %c7_288 = arith.constant 7 : index
    %c0_289 = arith.constant 0 : index
    %c0_290 = arith.constant 0 : index
    %273 = vector.load %arg13[%c7_288, %c0_289, %c0_290] : memref<9x64x64xf32, #tpu.memory_space<vmem>>, vector<1x64x64xf32>
    %274 = vector.shape_cast %273 : vector<1x64x64xf32> to vector<64x64xf32>
    %cst_291 = arith.constant dense<0.000000e+00> : vector<16x64xf32>
    %275 = tpu.matmul %272, %274, %cst_291 {dimension_numbers = #tpu.dot_dimension_numbers<[1], [0], [0], [1], [0, 0, 1, 1], [], []>} : vector<16x64xf32>, vector<64x64xf32>, vector<16x64xf32> -> vector<16x64xf32>
    %276 = arith.addf %269, %275 : vector<16x64xf32>
    %c8_292 = arith.constant 8 : index
    %c0_293 = arith.constant 0 : index
    %c0_294 = arith.constant 0 : index
    %277 = vector.load %arg11[%c8_292, %c0_293, %c0_294] : memref<9x16x16xf32, #tpu.memory_space<vmem>>, vector<1x16x16xf32>
    %278 = vector.shape_cast %277 : vector<1x16x16xf32> to vector<16x16xf32>
    %cst_295 = arith.constant dense<0.000000e+00> : vector<16x64xf32>
    %279 = tpu.matmul %278, %219, %cst_295 {dimension_numbers = #tpu.dot_dimension_numbers<[1], [0], [0], [1], [0, 0, 1, 1], [], []>} : vector<16x16xf32>, vector<16x64xf32>, vector<16x64xf32> -> vector<16x64xf32>
    %c8_296 = arith.constant 8 : index
    %c0_297 = arith.constant 0 : index
    %c0_298 = arith.constant 0 : index
    %280 = vector.load %arg13[%c8_296, %c0_297, %c0_298] : memref<9x64x64xf32, #tpu.memory_space<vmem>>, vector<1x64x64xf32>
    %281 = vector.shape_cast %280 : vector<1x64x64xf32> to vector<64x64xf32>
    %cst_299 = arith.constant dense<0.000000e+00> : vector<16x64xf32>
    %282 = tpu.matmul %279, %281, %cst_299 {dimension_numbers = #tpu.dot_dimension_numbers<[1], [0], [0], [1], [0, 0, 1, 1], [], []>} : vector<16x64xf32>, vector<64x64xf32>, vector<16x64xf32> -> vector<16x64xf32>
    %283 = arith.addf %276, %282 : vector<16x64xf32>
    %c0_300 = arith.constant 0 : index
    %c0_301 = arith.constant 0 : index
    %284 = vector.load %arg12[%c0_300, %c0_301] : memref<16x1xf32, #tpu.memory_space<vmem>>, vector<16x1xf32>
    %285 = vector.broadcast %284 : vector<16x1xf32> to vector<16x64xf32>
    %286 = arith.addf %283, %285 : vector<16x64xf32>
    %cst_302 = arith.constant 0.000000e+00 : f32
    %287 = vector.broadcast %cst_302 : f32 to vector<16x64xf32>
    %288 = arith.cmpf oge, %286, %287 : vector<16x64xf32>
    %cst_303 = arith.constant 2.000000e-01 : f32
    %289 = vector.broadcast %cst_303 : f32 to vector<16x64xf32>
    %290 = arith.mulf %289, %286 : vector<16x64xf32>
    %291 = arith.select %288, %286, %290 : vector<16x64xi1>, vector<16x64xf32>
    %c0_304 = arith.constant 0 : index
    %c0_305 = arith.constant 0 : index
    %292 = vector.load %arg14[%c0_304, %c0_305] : memref<1x16xf32, #tpu.memory_space<vmem>>, vector<1x16xf32>
    %cst_306 = arith.constant dense<0.000000e+00> : vector<1x64xf32>
    %293 = tpu.matmul %292, %291, %cst_306 {dimension_numbers = #tpu.dot_dimension_numbers<[1], [0], [0], [1], [0, 0, 1, 1], [], []>} : vector<1x16xf32>, vector<16x64xf32>, vector<1x64xf32> -> vector<1x64xf32>
    %c0_307 = arith.constant 0 : index
    %c0_308 = arith.constant 0 : index
    %294 = vector.load %arg15[%c0_307, %c0_308] : memref<1x1xf32, #tpu.memory_space<vmem>>, vector<1x1xf32>
    %295 = vector.broadcast %294 : vector<1x1xf32> to vector<1x64xf32>
    %296 = arith.addf %293, %295 : vector<1x64xf32>
    %c0_309 = arith.constant 0 : index
    %c0_310 = arith.constant 0 : index
    %297 = vector.load %arg16[%c0_309, %c0_310] : memref<1x32xf32, #tpu.memory_space<vmem>>, vector<1x32xf32>
    %cst_311 = arith.constant dense<0.000000e+00> : vector<1x64xf32>
    %298 = tpu.matmul %297, %147, %cst_311 {dimension_numbers = #tpu.dot_dimension_numbers<[1], [0], [0], [1], [0, 0, 1, 1], [], []>} : vector<1x32xf32>, vector<32x64xf32>, vector<1x64xf32> -> vector<1x64xf32>
    %c0_312 = arith.constant 0 : index
    %c0_313 = arith.constant 0 : index
    %299 = vector.load %arg17[%c0_312, %c0_313] : memref<1x1xf32, #tpu.memory_space<vmem>>, vector<1x1xf32>
    %300 = vector.broadcast %299 : vector<1x1xf32> to vector<1x64xf32>
    %301 = arith.addf %298, %300 : vector<1x64xf32>
    %c0_314 = arith.constant 0 : index
    %302 = memref.load %arg1[%c0_314] : memref<1xf32, #tpu.memory_space<smem>>
    %cst_315 = arith.constant 1.000000e+00 : f32
    %303 = arith.subf %cst_315, %302 : f32
    %304 = vector.broadcast %303 : f32 to vector<1x64xf32>
    %305 = arith.mulf %304, %301 : vector<1x64xf32>
    %306 = vector.broadcast %302 : f32 to vector<1x64xf32>
    %307 = arith.mulf %306, %296 : vector<1x64xf32>
    %308 = arith.addf %305, %307 : vector<1x64xf32>
    %309 = math.tanh %308 : vector<1x64xf32>
    %c0_316 = arith.constant 0 : index
    %c0_317 = arith.constant 0 : index
    %c0_318 = arith.constant 0 : index
    %310 = vector.load %arg18[%c0_316, %c0_317, %c0_318] : memref<1x1x64xf32, #tpu.memory_space<vmem>>, vector<1x1x64xf32>
    %311 = vector.shape_cast %310 : vector<1x1x64xf32> to vector<1x64xf32>
    %312 = vector.shape_cast %309 : vector<1x64xf32> to vector<1x1x64xf32>
    tpu.vector_store %arg18[%c0_316, %c0_317, %c0_318], %312 {strides = array<i32>} : memref<1x1x64xf32, #tpu.memory_space<vmem>>, vector<1x1x64xf32>,
    return
  }
  func.func @transform_0(%arg0: i32) -> i32 {
    %c0_i32 = arith.constant 0 : i32
    %c0_i32_0 = arith.constant 0 : i32
    return %c0_i32 : i32
  }
  func.func @transform_1(%arg0: i32) -> (i32, i32, i32) {
    %c0_i32 = arith.constant 0 : i32
    %c0_i32_0 = arith.constant 0 : i32
    %c0_i32_1 = arith.constant 0 : i32
    return %arg0, %c0_i32, %c0_i32_0 : i32, i32, i32
  }
  func.func @transform_2(%arg0: i32) -> (i32, i32, i32) {
    %c0_i32 = arith.constant 0 : i32
    %c0_i32_0 = arith.constant 0 : i32
    %c0_i32_1 = arith.constant 0 : i32
    %c0_i32_2 = arith.constant 0 : i32
    return %c0_i32, %c0_i32_0, %c0_i32_1 : i32, i32, i32
  }
  func.func @transform_3(%arg0: i32) -> (i32, i32) {
    %c0_i32 = arith.constant 0 : i32
    %c0_i32_0 = arith.constant 0 : i32
    %c0_i32_1 = arith.constant 0 : i32
    return %c0_i32, %c0_i32_0 : i32, i32
  }
  func.func @transform_4(%arg0: i32) -> (i32, i32, i32) {
    %c0_i32 = arith.constant 0 : i32
    %c0_i32_0 = arith.constant 0 : i32
    %c0_i32_1 = arith.constant 0 : i32
    %c0_i32_2 = arith.constant 0 : i32
    return %c0_i32, %c0_i32_0, %c0_i32_1 : i32, i32, i32
  }
  func.func @transform_5(%arg0: i32) -> (i32, i32) {
    %c0_i32 = arith.constant 0 : i32
    %c0_i32_0 = arith.constant 0 : i32
    %c0_i32_1 = arith.constant 0 : i32
    return %c0_i32, %c0_i32_0 : i32, i32
  }
  func.func @transform_6(%arg0: i32) -> (i32, i32, i32) {
    %c0_i32 = arith.constant 0 : i32
    %c0_i32_0 = arith.constant 0 : i32
    %c0_i32_1 = arith.constant 0 : i32
    %c0_i32_2 = arith.constant 0 : i32
    return %c0_i32, %c0_i32_0, %c0_i32_1 : i32, i32, i32
  }
  func.func @transform_7(%arg0: i32) -> (i32, i32) {
    %c0_i32 = arith.constant 0 : i32
    %c0_i32_0 = arith.constant 0 : i32
    %c0_i32_1 = arith.constant 0 : i32
    return %c0_i32, %c0_i32_0 : i32, i32
  }
  func.func @transform_8(%arg0: i32) -> (i32, i32, i32) {
    %c0_i32 = arith.constant 0 : i32
    %c0_i32_0 = arith.constant 0 : i32
    %c0_i32_1 = arith.constant 0 : i32
    %c0_i32_2 = arith.constant 0 : i32
    return %c0_i32, %c0_i32_0, %c0_i32_1 : i32, i32, i32
  }
  func.func @transform_9(%arg0: i32) -> (i32, i32) {
    %c0_i32 = arith.constant 0 : i32
    %c0_i32_0 = arith.constant 0 : i32
    %c0_i32_1 = arith.constant 0 : i32
    return %c0_i32, %c0_i32_0 : i32, i32
  }
  func.func @transform_10(%arg0: i32) -> (i32, i32, i32) {
    %c0_i32 = arith.constant 0 : i32
    %c0_i32_0 = arith.constant 0 : i32
    %c0_i32_1 = arith.constant 0 : i32
    %c0_i32_2 = arith.constant 0 : i32
    return %c0_i32, %c0_i32_0, %c0_i32_1 : i32, i32, i32
  }
  func.func @transform_11(%arg0: i32) -> (i32, i32) {
    %c0_i32 = arith.constant 0 : i32
    %c0_i32_0 = arith.constant 0 : i32
    %c0_i32_1 = arith.constant 0 : i32
    return %c0_i32, %c0_i32_0 : i32, i32
  }
  func.func @transform_12(%arg0: i32) -> (i32, i32, i32) {
    %c0_i32 = arith.constant 0 : i32
    %c0_i32_0 = arith.constant 0 : i32
    %c0_i32_1 = arith.constant 0 : i32
    %c0_i32_2 = arith.constant 0 : i32
    return %c0_i32, %c0_i32_0, %c0_i32_1 : i32, i32, i32
  }
  func.func @transform_13(%arg0: i32) -> (i32, i32) {
    %c0_i32 = arith.constant 0 : i32
    %c0_i32_0 = arith.constant 0 : i32
    %c0_i32_1 = arith.constant 0 : i32
    return %c0_i32, %c0_i32_0 : i32, i32
  }
  func.func @transform_14(%arg0: i32) -> (i32, i32) {
    %c0_i32 = arith.constant 0 : i32
    %c0_i32_0 = arith.constant 0 : i32
    %c0_i32_1 = arith.constant 0 : i32
    return %c0_i32, %c0_i32_0 : i32, i32
  }
  func.func @transform_15(%arg0: i32) -> (i32, i32) {
    %c0_i32 = arith.constant 0 : i32
    %c0_i32_0 = arith.constant 0 : i32
    %c0_i32_1 = arith.constant 0 : i32
    return %c0_i32, %c0_i32_0 : i32, i32
  }
  func.func @transform_16(%arg0: i32) -> (i32, i32) {
    %c0_i32 = arith.constant 0 : i32
    %c0_i32_0 = arith.constant 0 : i32
    %c0_i32_1 = arith.constant 0 : i32
    return %c0_i32, %c0_i32_0 : i32, i32
  }
  func.func @transform_17(%arg0: i32) -> (i32, i32, i32) {
    %c0_i32 = arith.constant 0 : i32
    %c0_i32_0 = arith.constant 0 : i32
    %c0_i32_1 = arith.constant 0 : i32
    return %arg0, %c0_i32, %c0_i32_0 : i32, i32, i32
  }
}

</mosaic_0001>

<llo_original>
// kernel: apply_fn.1
$region0: #{apply_fn.1}
  #allocation0 [shape = 'u32[]', space=smem, size = 0x4, offset = 0x4, fixed_abs, tag = 'smem constant byte address 0x4 - core index']
  #allocation1 [shape = 'u32[144,128]{1,0:T(1,128)}', space=vmem, size = 0x12000, scoped, tag = 'internal scratch']
  #allocation2 [shape = 'f32[1]{0:T(128)S(6)}', space=smem, size = 0x200, scoped, tag = 'scoped memory for apply_fn.1']
  #allocation3 [shape = 'f32[1,1]{1,0:T(1,128)S(1)}', space=vmem, size = 0x200, scoped, tag = 'scoped memory for apply_fn.1']
  #allocation4 [shape = 'f32[1,1]{1,0:T(1,128)S(1)}', space=vmem, size = 0x200, scoped, tag = 'scoped memory for apply_fn.1']
  %s0 = inlined_call_operand.<no memory space> [shape: f32[1], index: 0, kind: input, shape index: {}]
  %s1 = inlined_call_operand.vmem [shape: f32[2,32,16], index: 1, kind: input, shape index: {}]
  %s2 = inlined_call_operand.hbm [shape: f32[9,32,32], index: 2, kind: input, shape index: {}]
  %s3 = inlined_call_operand.vmem [shape: f32[32,1], index: 3, kind: input, shape index: {}]
  %s4 = inlined_call_operand.hbm [shape: f32[9,32,32], index: 4, kind: input, shape index: {}]
  %s5 = inlined_call_operand.vmem [shape: f32[32,1], index: 5, kind: input, shape index: {}]
  %s6 = inlined_call_operand.vmem [shape: f32[9,16,16], index: 6, kind: input, shape index: {}]
  %s7 = inlined_call_operand.vmem [shape: f32[16,64], index: 7, kind: input, shape index: {}]
  %s8 = inlined_call_operand.hbm [shape: f32[9,16,32], index: 8, kind: input, shape index: {}]
  %s9 = inlined_call_operand.vmem [shape: f32[16,1], index: 9, kind: input, shape index: {}]
  %s10 = inlined_call_operand.hbm [shape: f32[9,16,16], index: 10, kind: input, shape index: {}]
  %s11 = inlined_call_operand.vmem [shape: f32[16,1], index: 11, kind: input, shape index: {}]
  %s12 = inlined_call_operand.hbm [shape: f32[9,64,64], index: 12, kind: input, shape index: {}]
  %s13 = inlined_call_operand.vmem [shape: f32[1,16], index: 13, kind: input, shape index: {}]
  %s14 = inlined_call_operand.<no memory space> [shape: f32[1,1], index: 14, kind: input, shape index: {}]
  %s15 = inlined_call_operand.vmem [shape: f32[1,32], index: 15, kind: input, shape index: {}]
  %s16 = inlined_call_operand.<no memory space> [shape: f32[1,1], index: 16, kind: input, shape index: {}]
  %s17 = inlined_call_operand.hbm [shape: f32[2,1,64], index: 17, kind: output, shape index: {}]
  %s18 = sld [smem:[#allocation0]]
  $region121: #{apply_fn.1} parent=0
    _
  %s20 = ssub.s32 1, %s18
  %s21 = scalar_select 0, %s20, %s18
  %22 = sst [smem:[#allocation2]] %s0
  %v23 = vstv %s14
  %24 = vst [vmem:[#allocation3] sm:$0x1] %v23
  %v25 = vstv %s16
  %26 = vst [vmem:[#allocation4] sm:$0x1] %v25
  $region1: #{apply_fn.1} parent=0
    #allocation5 [shape = 'u8[147456]{0}', space=vmem, size = 0x24000, scoped, tag = 'input window, operand 2, single buffered']
    #allocation6 [shape = 's32[2]{0}', space=sflag, size = 0x8, scoped, tag = 'scoped memory for apply_fn.1']
    #allocation7 [shape = 's32[2]{0}', space=sflag, size = 0x8, scoped, tag = 'scoped memory for apply_fn.1']
    #allocation8 [shape = 'u8[147456]{0}', space=vmem, size = 0x24000, scoped, tag = 'input window, operand 4, single buffered']
    #allocation9 [shape = 's32[1]{0}', space=sflag, size = 0x4, scoped, tag = 'scoped memory for apply_fn.1']
    #allocation10 [shape = 'u8[73728]{0}', space=vmem, size = 0x12000, scoped, tag = 'input window, operand 8, single buffered']
    #allocation11 [shape = 'u8[73728]{0}', space=vmem, size = 0x12000, scoped, tag = 'input window, operand 10, single buffered']
    #allocation12 [shape = 's32[1]{0}', space=sflag, size = 0x4, scoped, tag = 'scoped memory for apply_fn.1']
    #allocation13 [shape = 'u8[294912]{0}', space=vmem, size = 0x48000, scoped, tag = 'input window, operand 12, single buffered']
    #allocation14 [shape = 'u8[1024]{0}', space=vmem, size = 0x400, scoped, tag = 'output window, operand 0']
    %27 = vsyncpa [#allocation6], 0
    %28 = vsyncpa [#allocation9], 0
    %29 = vsyncpa [#allocation12], 0
    %30 = vsyncpa [#allocation7], 0
    %s31 = scalar_lea.sflag [#allocation7], 1
    %32 = vsyncpa %s31, 0
    loop: start=0, step=1, limit=4
    $region2: #{apply_fn.1} parent=1 // loop_pre_header
      _
    $region3: #{apply_fn.1} parent=1 // loop_header
      %s34 = sphi 0, %s38
      %p35 = scmp.ge.s32.totalorder %s34, 4
      %s42 = sphi 0, %s42
      %s44 = sphi 0, %s42
      %s45 = sphi 0, %s44
      %s59 = sphi 0, %s45
      %s65 = sphi 0, %s67
      %s68 = sphi 0, %s65
      %s69 = sphi 0, %s68
      %s85 = sphi 0, %s69
      %s89 = sphi 0, %s89
      %s91 = sphi 0, %s89
      %s92 = sphi 0, %s91
      %s106 = sphi 0, %s92
      %s110 = sphi 0, %s110
      %s112 = sphi 0, %s110
      %s113 = sphi 0, %s112
      %s127 = sphi 0, %s113
      %s131 = sphi 0, %s131
      %s133 = sphi 0, %s131
      %s134 = sphi 0, %s133
      %s148 = sphi 0, %s134
      %s152 = sphi 0, %s152
      %s154 = sphi 0, %s152
      %s155 = sphi 0, %s154
      %s169 = sphi 0, %s155
      %s173 = sphi 0, %s173
      %s175 = sphi 0, %s173
      %s176 = sphi 0, %s175
      %s190 = sphi 0, %s176
      %s194 = sphi 0, %s194
      %s196 = sphi 0, %s194
      %s197 = sphi 0, %s196
      %s211 = sphi 0, %s197
      %s215 = sphi 0, %s215
      %s217 = sphi 0, %s215
      %s218 = sphi 0, %s217
      %s232 = sphi 0, %s218
      %s236 = sphi 0, %s236
      %s238 = sphi 0, %s236
      %s239 = sphi 0, %s238
      %s253 = sphi 0, %s239
      %s257 = sphi 0, %s257
      %s259 = sphi 0, %s257
      %s260 = sphi 0, %s259
      %s274 = sphi 0, %s260
      %s278 = sphi 0, %s278
      %s280 = sphi 0, %s278
      %s281 = sphi 0, %s280
      %s295 = sphi 0, %s281
      %s299 = sphi 0, %s299
      %s301 = sphi 0, %s299
      %s302 = sphi 0, %s301
      %s316 = sphi 0, %s302
      %s320 = sphi 0, %s320
      %s322 = sphi 0, %s320
      %s323 = sphi 0, %s322
      %s337 = sphi 0, %s323
      %s341 = sphi 0, %s341
      %s343 = sphi 0, %s341
      %s344 = sphi 0, %s343
      %s358 = sphi 0, %s344
      %s362 = sphi 0, %s362
      %s364 = sphi 0, %s362
      %s365 = sphi 0, %s364
      %s379 = sphi 0, %s365
      %s383 = sphi 0, %s383
      %s385 = sphi 0, %s383
      %s386 = sphi 0, %s385
      %s400 = sphi 0, %s386
      %s406 = sphi 0, %s408
      %s409 = sphi 0, %s406
      %s410 = sphi 0, %s409
      %s426 = sphi 0, %s410
    $region4: #{apply_fn.1} parent=1 // loop_header_branch
      %37 = sbr.rel (%p35) target = $region8
    $region5: #{apply_fn.1} parent=1 // loop_body
      %s39 = ssub.s32 %s34, 1
      %s40 = ssub.s32 %s34, 2
      %s41 = sadd.s32 %s34, 1
      %s43 = sadd.s32 %s42, 1
      %p46 = scmp.eq.s32.totalorder %s34, 1
      %p47 = scmp.ne.s32.totalorder %s42, %s44
      %p48 = scmp.eq.s32.totalorder %s34, 0
      %p49 = por %p47, %p48
      %p50 = scmp.ne.s32.totalorder %s42, %s44
      %p51 = scmp.eq.s32.totalorder %s39, 1
      %p52 = por %p50, %p51
      %p53 = scmp.ne.s32.totalorder %s44, %s45
      %p54 = scmp.eq.s32.totalorder %s39, 0
      %p55 = por %p53, %p54
      %p56 = scmp.ne.s32.totalorder %s44, %s45
      %p57 = scmp.eq.s32.totalorder %s40, 1
      %p58 = por %p56, %p57
      %p60 = scmp.ne.s32.totalorder %s45, %s59
      %p61 = scmp.eq.s32.totalorder %s40, 0
      %p62 = por %p60, %p61
      %s63 = ssub.s32 %s34, %s41
      %p64 = scmp.eq.s32.totalorder %s63, 0
      %s66 = sadd.s32 %s65, 1
      %s67 = scalar_select %p64, %s65, %s66
      %p70 = pneg %p64
      %p71 = scmp.eq.s32.totalorder %s34, 1
      %p72 = por %p70, %p71
      %p73 = scmp.ne.s32.totalorder %s65, %s68
      %p74 = scmp.eq.s32.totalorder %s34, 0
      %p75 = por %p73, %p74
      %p76 = scmp.ne.s32.totalorder %s65, %s68
      %p77 = scmp.eq.s32.totalorder %s39, 1
      %p78 = por %p76, %p77
      %p79 = scmp.ne.s32.totalorder %s68, %s69
      %p80 = scmp.eq.s32.totalorder %s39, 0
      %p81 = por %p79, %p80
      %p82 = scmp.ne.s32.totalorder %s68, %s69
      %p83 = scmp.eq.s32.totalorder %s40, 1
      %p84 = por %p82, %p83
      %p86 = scmp.ne.s32.totalorder %s69, %s85
      %p87 = scmp.eq.s32.totalorder %s40, 0
      %p88 = por %p86, %p87
      %s90 = sadd.s32 %s89, 1
      %p93 = scmp.eq.s32.totalorder %s34, 1
      %p94 = scmp.ne.s32.totalorder %s89, %s91
      %p95 = scmp.eq.s32.totalorder %s34, 0
      %p96 = por %p94, %p95
      %p97 = scmp.ne.s32.totalorder %s89, %s91
      %p98 = scmp.eq.s32.totalorder %s39, 1
      %p99 = por %p97, %p98
      %p100 = scmp.ne.s32.totalorder %s91, %s92
      %p101 = scmp.eq.s32.totalorder %s39, 0
      %p102 = por %p100, %p101
      %p103 = scmp.ne.s32.totalorder %s91, %s92
      %p104 = scmp.eq.s32.totalorder %s40, 1
      %p105 = por %p103, %p104
      %p107 = scmp.ne.s32.totalorder %s92, %s106
      %p108 = scmp.eq.s32.totalorder %s40, 0
      %p109 = por %p107, %p108
      %s111 = sadd.s32 %s110, 1
      %p114 = scmp.eq.s32.totalorder %s34, 1
      %p115 = scmp.ne.s32.totalorder %s110, %s112
      %p116 = scmp.eq.s32.totalorder %s34, 0
      %p117 = por %p115, %p116
      %p118 = scmp.ne.s32.totalorder %s110, %s112
      %p119 = scmp.eq.s32.totalorder %s39, 1
      %p120 = por %p118, %p119
      %p121 = scmp.ne.s32.totalorder %s112, %s113
      %p122 = scmp.eq.s32.totalorder %s39, 0
      %p123 = por %p121, %p122
      %p124 = scmp.ne.s32.totalorder %s112, %s113
      %p125 = scmp.eq.s32.totalorder %s40, 1
      %p126 = por %p124, %p125
      %p128 = scmp.ne.s32.totalorder %s113, %s127
      %p129 = scmp.eq.s32.totalorder %s40, 0
      %p130 = por %p128, %p129
      %s132 = sadd.s32 %s131, 1
      %p135 = scmp.eq.s32.totalorder %s34, 1
      %p136 = scmp.ne.s32.totalorder %s131, %s133
      %p137 = scmp.eq.s32.totalorder %s34, 0
      %p138 = por %p136, %p137
      %p139 = scmp.ne.s32.totalorder %s131, %s133
      %p140 = scmp.eq.s32.totalorder %s39, 1
      %p141 = por %p139, %p140
      %p142 = scmp.ne.s32.totalorder %s133, %s134
      %p143 = scmp.eq.s32.totalorder %s39, 0
      %p144 = por %p142, %p143
      %p145 = scmp.ne.s32.totalorder %s133, %s134
      %p146 = scmp.eq.s32.totalorder %s40, 1
      %p147 = por %p145, %p146
      %p149 = scmp.ne.s32.totalorder %s134, %s148
      %p150 = scmp.eq.s32.totalorder %s40, 0
      %p151 = por %p149, %p150
      %s153 = sadd.s32 %s152, 1
      %p156 = scmp.eq.s32.totalorder %s34, 1
      %p157 = scmp.ne.s32.totalorder %s152, %s154
      %p158 = scmp.eq.s32.totalorder %s34, 0
      %p159 = por %p157, %p158
      %p160 = scmp.ne.s32.totalorder %s152, %s154
      %p161 = scmp.eq.s32.totalorder %s39, 1
      %p162 = por %p160, %p161
      %p163 = scmp.ne.s32.totalorder %s154, %s155
      %p164 = scmp.eq.s32.totalorder %s39, 0
      %p165 = por %p163, %p164
      %p166 = scmp.ne.s32.totalorder %s154, %s155
      %p167 = scmp.eq.s32.totalorder %s40, 1
      %p168 = por %p166, %p167
      %p170 = scmp.ne.s32.totalorder %s155, %s169
      %p171 = scmp.eq.s32.totalorder %s40, 0
      %p172 = por %p170, %p171
      %s174 = sadd.s32 %s173, 1
      %p177 = scmp.eq.s32.totalorder %s34, 1
      %p178 = scmp.ne.s32.totalorder %s173, %s175
      %p179 = scmp.eq.s32.totalorder %s34, 0
      %p180 = por %p178, %p179
      %p181 = scmp.ne.s32.totalorder %s173, %s175
      %p182 = scmp.eq.s32.totalorder %s39, 1
      %p183 = por %p181, %p182
      %p184 = scmp.ne.s32.totalorder %s175, %s176
      %p185 = scmp.eq.s32.totalorder %s39, 0
      %p186 = por %p184, %p185
      %p187 = scmp.ne.s32.totalorder %s175, %s176
      %p188 = scmp.eq.s32.totalorder %s40, 1
      %p189 = por %p187, %p188
      %p191 = scmp.ne.s32.totalorder %s176, %s190
      %p192 = scmp.eq.s32.totalorder %s40, 0
      %p193 = por %p191, %p192
      %s195 = sadd.s32 %s194, 1
      %p198 = scmp.eq.s32.totalorder %s34, 1
      %p199 = scmp.ne.s32.totalorder %s194, %s196
      %p200 = scmp.eq.s32.totalorder %s34, 0
      %p201 = por %p199, %p200
      %p202 = scmp.ne.s32.totalorder %s194, %s196
      %p203 = scmp.eq.s32.totalorder %s39, 1
      %p204 = por %p202, %p203
      %p205 = scmp.ne.s32.totalorder %s196, %s197
      %p206 = scmp.eq.s32.totalorder %s39, 0
      %p207 = por %p205, %p206
      %p208 = scmp.ne.s32.totalorder %s196, %s197
      %p209 = scmp.eq.s32.totalorder %s40, 1
      %p210 = por %p208, %p209
      %p212 = scmp.ne.s32.totalorder %s197, %s211
      %p213 = scmp.eq.s32.totalorder %s40, 0
      %p214 = por %p212, %p213
      %s216 = sadd.s32 %s215, 1
      %p219 = scmp.eq.s32.totalorder %s34, 1
      %p220 = scmp.ne.s32.totalorder %s215, %s217
      %p221 = scmp.eq.s32.totalorder %s34, 0
      %p222 = por %p220, %p221
      %p223 = scmp.ne.s32.totalorder %s215, %s217
      %p224 = scmp.eq.s32.totalorder %s39, 1
      %p225 = por %p223, %p224
      %p226 = scmp.ne.s32.totalorder %s217, %s218
      %p227 = scmp.eq.s32.totalorder %s39, 0
      %p228 = por %p226, %p227
      %p229 = scmp.ne.s32.totalorder %s217, %s218
      %p230 = scmp.eq.s32.totalorder %s40, 1
      %p231 = por %p229, %p230
      %p233 = scmp.ne.s32.totalorder %s218, %s232
      %p234 = scmp.eq.s32.totalorder %s40, 0
      %p235 = por %p233, %p234
      %s237 = sadd.s32 %s236, 1
      %p240 = scmp.eq.s32.totalorder %s34, 1
      %p241 = scmp.ne.s32.totalorder %s236, %s238
      %p242 = scmp.eq.s32.totalorder %s34, 0
      %p243 = por %p241, %p242
      %p244 = scmp.ne.s32.totalorder %s236, %s238
      %p245 = scmp.eq.s32.totalorder %s39, 1
      %p246 = por %p244, %p245
      %p247 = scmp.ne.s32.totalorder %s238, %s239
      %p248 = scmp.eq.s32.totalorder %s39, 0
      %p249 = por %p247, %p248
      %p250 = scmp.ne.s32.totalorder %s238, %s239
      %p251 = scmp.eq.s32.totalorder %s40, 1
      %p252 = por %p250, %p251
      %p254 = scmp.ne.s32.totalorder %s239, %s253
      %p255 = scmp.eq.s32.totalorder %s40, 0
      %p256 = por %p254, %p255
      %s258 = sadd.s32 %s257, 1
      %p261 = scmp.eq.s32.totalorder %s34, 1
      %p262 = scmp.ne.s32.totalorder %s257, %s259
      %p263 = scmp.eq.s32.totalorder %s34, 0
      %p264 = por %p262, %p263
      %p265 = scmp.ne.s32.totalorder %s257, %s259
      %p266 = scmp.eq.s32.totalorder %s39, 1
      %p267 = por %p265, %p266
      %p268 = scmp.ne.s32.totalorder %s259, %s260
      %p269 = scmp.eq.s32.totalorder %s39, 0
      %p270 = por %p268, %p269
      %p271 = scmp.ne.s32.totalorder %s259, %s260
      %p272 = scmp.eq.s32.totalorder %s40, 1
      %p273 = por %p271, %p272
      %p275 = scmp.ne.s32.totalorder %s260, %s274
      %p276 = scmp.eq.s32.totalorder %s40, 0
      %p277 = por %p275, %p276
      %s279 = sadd.s32 %s278, 1
      %p282 = scmp.eq.s32.totalorder %s34, 1
      %p283 = scmp.ne.s32.totalorder %s278, %s280
      %p284 = scmp.eq.s32.totalorder %s34, 0
      %p285 = por %p283, %p284
      %p286 = scmp.ne.s32.totalorder %s278, %s280
      %p287 = scmp.eq.s32.totalorder %s39, 1
      %p288 = por %p286, %p287
      %p289 = scmp.ne.s32.totalorder %s280, %s281
      %p290 = scmp.eq.s32.totalorder %s39, 0
      %p291 = por %p289, %p290
      %p292 = scmp.ne.s32.totalorder %s280, %s281
      %p293 = scmp.eq.s32.totalorder %s40, 1
      %p294 = por %p292, %p293
      %p296 = scmp.ne.s32.totalorder %s281, %s295
      %p297 = scmp.eq.s32.totalorder %s40, 0
      %p298 = por %p296, %p297
      %s300 = sadd.s32 %s299, 1
      %p303 = scmp.eq.s32.totalorder %s34, 1
      %p304 = scmp.ne.s32.totalorder %s299, %s301
      %p305 = scmp.eq.s32.totalorder %s34, 0
      %p306 = por %p304, %p305
      %p307 = scmp.ne.s32.totalorder %s299, %s301
      %p308 = scmp.eq.s32.totalorder %s39, 1
      %p309 = por %p307, %p308
      %p310 = scmp.ne.s32.totalorder %s301, %s302
      %p311 = scmp.eq.s32.totalorder %s39, 0
      %p312 = por %p310, %p311
      %p313 = scmp.ne.s32.totalorder %s301, %s302
      %p314 = scmp.eq.s32.totalorder %s40, 1
      %p315 = por %p313, %p314
      %p317 = scmp.ne.s32.totalorder %s302, %s316
      %p318 = scmp.eq.s32.totalorder %s40, 0
      %p319 = por %p317, %p318
      %s321 = sadd.s32 %s320, 1
      %p324 = scmp.eq.s32.totalorder %s34, 1
      %p325 = scmp.ne.s32.totalorder %s320, %s322
      %p326 = scmp.eq.s32.totalorder %s34, 0
      %p327 = por %p325, %p326
      %p328 = scmp.ne.s32.totalorder %s320, %s322
      %p329 = scmp.eq.s32.totalorder %s39, 1
      %p330 = por %p328, %p329
      %p331 = scmp.ne.s32.totalorder %s322, %s323
      %p332 = scmp.eq.s32.totalorder %s39, 0
      %p333 = por %p331, %p332
      %p334 = scmp.ne.s32.totalorder %s322, %s323
      %p335 = scmp.eq.s32.totalorder %s40, 1
      %p336 = por %p334, %p335
      %p338 = scmp.ne.s32.totalorder %s323, %s337
      %p339 = scmp.eq.s32.totalorder %s40, 0
      %p340 = por %p338, %p339
      %s342 = sadd.s32 %s341, 1
      %p345 = scmp.eq.s32.totalorder %s34, 1
      %p346 = scmp.ne.s32.totalorder %s341, %s343
      %p347 = scmp.eq.s32.totalorder %s34, 0
      %p348 = por %p346, %p347
      %p349 = scmp.ne.s32.totalorder %s341, %s343
      %p350 = scmp.eq.s32.totalorder %s39, 1
      %p351 = por %p349, %p350
      %p352 = scmp.ne.s32.totalorder %s343, %s344
      %p353 = scmp.eq.s32.totalorder %s39, 0
      %p354 = por %p352, %p353
      %p355 = scmp.ne.s32.totalorder %s343, %s344
      %p356 = scmp.eq.s32.totalorder %s40, 1
      %p357 = por %p355, %p356
      %p359 = scmp.ne.s32.totalorder %s344, %s358
      %p360 = scmp.eq.s32.totalorder %s40, 0
      %p361 = por %p359, %p360
      %s363 = sadd.s32 %s362, 1
      %p366 = scmp.eq.s32.totalorder %s34, 1
      %p367 = scmp.ne.s32.totalorder %s362, %s364
      %p368 = scmp.eq.s32.totalorder %s34, 0
      %p369 = por %p367, %p368
      %p370 = scmp.ne.s32.totalorder %s362, %s364
      %p371 = scmp.eq.s32.totalorder %s39, 1
      %p372 = por %p370, %p371
      %p373 = scmp.ne.s32.totalorder %s364, %s365
      %p374 = scmp.eq.s32.totalorder %s39, 0
      %p375 = por %p373, %p374
      %p376 = scmp.ne.s32.totalorder %s364, %s365
      %p377 = scmp.eq.s32.totalorder %s40, 1
      %p378 = por %p376, %p377
      %p380 = scmp.ne.s32.totalorder %s365, %s379
      %p381 = scmp.eq.s32.totalorder %s40, 0
      %p382 = por %p380, %p381
      %s384 = sadd.s32 %s383, 1
      %p387 = scmp.eq.s32.totalorder %s34, 1
      %p388 = scmp.ne.s32.totalorder %s383, %s385
      %p389 = scmp.eq.s32.totalorder %s34, 0
      %p390 = por %p388, %p389
      %p391 = scmp.ne.s32.totalorder %s383, %s385
      %p392 = scmp.eq.s32.totalorder %s39, 1
      %p393 = por %p391, %p392
      %p394 = scmp.ne.s32.totalorder %s385, %s386
      %p395 = scmp.eq.s32.totalorder %s39, 0
      %p396 = por %p394, %p395
      %p397 = scmp.ne.s32.totalorder %s385, %s386
      %p398 = scmp.eq.s32.totalorder %s40, 1
      %p399 = por %p397, %p398
      %p401 = scmp.ne.s32.totalorder %s386, %s400
      %p402 = scmp.eq.s32.totalorder %s40, 0
      %p403 = por %p401, %p402
      %s404 = ssub.s32 %s34, %s41
      %p405 = scmp.eq.s32.totalorder %s404, 0
      %s407 = sadd.s32 %s406, 1
      %s408 = scalar_select %p405, %s406, %s407
      %p411 = pneg %p405
      %p412 = scmp.eq.s32.totalorder %s34, 1
      %p413 = por %p411, %p412
      %p414 = scmp.ne.s32.totalorder %s406, %s409
      %p415 = scmp.eq.s32.totalorder %s34, 0
      %p416 = por %p414, %p415
      %p417 = scmp.ne.s32.totalorder %s406, %s409
      %p418 = scmp.eq.s32.totalorder %s39, 1
      %p419 = por %p417, %p418
      %p420 = scmp.ne.s32.totalorder %s409, %s410
      %p421 = scmp.eq.s32.totalorder %s39, 0
      %p422 = por %p420, %p421
      %p423 = scmp.ne.s32.totalorder %s409, %s410
      %p424 = scmp.eq.s32.totalorder %s40, 1
      %p425 = por %p423, %p424
      %p427 = scmp.ne.s32.totalorder %s410, %s426
      %p428 = scmp.eq.s32.totalorder %s40, 0
      %p429 = por %p427, %p428
      %p430 = scmp.le.s32.totalorder 1, %s34
      %p431 = scmp.lt.s32.totalorder %s34, 3
      %p432 = pnand %p430, %p431
      %p433 = pneg %p432
      // Predicated region
      $region9: #{apply_fn.1} parent=5 // pred_check
        _
      $region10: #{apply_fn.1} parent=5 // pred_check_branch
        %435 = sbr.rel (%p432) target = $region12
      $region11: #{apply_fn.1} parent=5 // pred_region
        %s436 = ssub.s32 %s34, 1
        // Predicated region
        $region13: #{apply_fn.1} parent=11 // pred_check
          %p437 = pneg %p55
        $region14: #{apply_fn.1} parent=11 // pred_check_branch
          %439 = sbr.rel (%p437) target = $region16
        $region15: #{apply_fn.1} parent=11 // pred_region
          _
        $region16: #{apply_fn.1} parent=11 // pred_fallthru
          _
        // Predicated region
        $region17: #{apply_fn.1} parent=11 // pred_check
          %p440 = pneg %p102
        $region18: #{apply_fn.1} parent=11 // pred_check_branch
          %442 = sbr.rel (%p440) target = $region20
        $region19: #{apply_fn.1} parent=11 // pred_region
          %s444 = ssub.s32 4608, 4608
          %445 = vsyncadd [#allocation6], %s444
          %s446 = sshll.u32 [#allocation5], 4
          %s447 = int_to_ptr.vmem [resolvable:$true] %s446
          %452 = dma.hbm_to_vmem [thread:$0]  %s2, 4608, %s447, [#allocation6], 128, 128, 8
        $region20: #{apply_fn.1} parent=11 // pred_fallthru
          _
        // Predicated region
        $region21: #{apply_fn.1} parent=11 // pred_check
          %p453 = pneg %p123
        $region22: #{apply_fn.1} parent=11 // pred_check_branch
          %455 = sbr.rel (%p453) target = $region24
        $region23: #{apply_fn.1} parent=11 // pred_region
          _
        $region24: #{apply_fn.1} parent=11 // pred_fallthru
          _
        // Predicated region
        $region25: #{apply_fn.1} parent=11 // pred_check
          %p456 = pneg %p144
        $region26: #{apply_fn.1} parent=11 // pred_check_branch
          %458 = sbr.rel (%p456) target = $region28
        $region27: #{apply_fn.1} parent=11 // pred_region
          %s460 = ssub.s32 4608, 4608
          %461 = vsyncadd [#allocation9], %s460
          %s462 = sshll.u32 [#allocation8], 4
          %s463 = int_to_ptr.vmem [resolvable:$true] %s462
          %468 = dma.hbm_to_vmem [thread:$0]  %s4, 4608, %s463, [#allocation9], 128, 128, 8
        $region28: #{apply_fn.1} parent=11 // pred_fallthru
          _
        // Predicated region
        $region29: #{apply_fn.1} parent=11 // pred_check
          %p469 = pneg %p165
        $region30: #{apply_fn.1} parent=11 // pred_check_branch
          %471 = sbr.rel (%p469) target = $region32
        $region31: #{apply_fn.1} parent=11 // pred_region
          _
        $region32: #{apply_fn.1} parent=11 // pred_fallthru
          _
        // Predicated region
        $region33: #{apply_fn.1} parent=11 // pred_check
          %p472 = pneg %p186
        $region34: #{apply_fn.1} parent=11 // pred_check_branch
          %474 = sbr.rel (%p472) target = $region36
        $region35: #{apply_fn.1} parent=11 // pred_region
          _
        $region36: #{apply_fn.1} parent=11 // pred_fallthru
          _
        // Predicated region
        $region37: #{apply_fn.1} parent=11 // pred_check
          %p475 = pneg %p207
        $region38: #{apply_fn.1} parent=11 // pred_check_branch
          %477 = sbr.rel (%p475) target = $region40
        $region39: #{apply_fn.1} parent=11 // pred_region
          _
        $region40: #{apply_fn.1} parent=11 // pred_fallthru
          _
        // Predicated region
        $region41: #{apply_fn.1} parent=11 // pred_check
          %p478 = pneg %p228
        $region42: #{apply_fn.1} parent=11 // pred_check_branch
          %480 = sbr.rel (%p478) target = $region44
        $region43: #{apply_fn.1} parent=11 // pred_region
          %s482 = ssub.s32 2304, 2304
          %483 = vsyncadd [#allocation9], %s482
          %s484 = sshll.u32 [#allocation10], 4
          %s485 = int_to_ptr.vmem [resolvable:$true] %s484
          %490 = dma.hbm_to_vmem [thread:$0]  %s8, 2304, %s485, [#allocation9], 128, 128, 8
        $region44: #{apply_fn.1} parent=11 // pred_fallthru
          _
        // Predicated region
        $region45: #{apply_fn.1} parent=11 // pred_check
          %p491 = pneg %p249
        $region46: #{apply_fn.1} parent=11 // pred_check_branch
          %493 = sbr.rel (%p491) target = $region48
        $region47: #{apply_fn.1} parent=11 // pred_region
          _
        $region48: #{apply_fn.1} parent=11 // pred_fallthru
          _
        // Predicated region
        $region49: #{apply_fn.1} parent=11 // pred_check
          %p494 = pneg %p270
        $region50: #{apply_fn.1} parent=11 // pred_check_branch
          %496 = sbr.rel (%p494) target = $region52
        $region51: #{apply_fn.1} parent=11 // pred_region
          %s498 = ssub.s32 2304, 2304
          %499 = vsyncadd [#allocation12], %s498
          %s500 = sshll.u32 [#allocation11], 4
          %s501 = int_to_ptr.vmem [resolvable:$true] %s500
          %506 = dma.hbm_to_vmem [thread:$0]  %s10, 2304, %s501, [#allocation12], 128, 128, 8
        $region52: #{apply_fn.1} parent=11 // pred_fallthru
          _
        // Predicated region
        $region53: #{apply_fn.1} parent=11 // pred_check
          %p507 = pneg %p291
        $region54: #{apply_fn.1} parent=11 // pred_check_branch
          %509 = sbr.rel (%p507) target = $region56
        $region55: #{apply_fn.1} parent=11 // pred_region
          _
        $region56: #{apply_fn.1} parent=11 // pred_fallthru
          _
        // Predicated region
        $region57: #{apply_fn.1} parent=11 // pred_check
          %p510 = pneg %p312
        $region58: #{apply_fn.1} parent=11 // pred_check_branch
          %512 = sbr.rel (%p510) target = $region60
        $region59: #{apply_fn.1} parent=11 // pred_region
          %s514 = ssub.s32 9216, 9216
          %515 = vsyncadd [#allocation12], %s514
          %s516 = sshll.u32 [#allocation13], 4
          %s517 = int_to_ptr.vmem [resolvable:$true] %s516
          %522 = dma.hbm_to_vmem [thread:$0]  %s12, 9216, %s517, [#allocation12], 128, 128, 8
        $region60: #{apply_fn.1} parent=11 // pred_fallthru
          _
        // Predicated region
        $region61: #{apply_fn.1} parent=11 // pred_check
          %p523 = pneg %p333
        $region62: #{apply_fn.1} parent=11 // pred_check_branch
          %525 = sbr.rel (%p523) target = $region64
        $region63: #{apply_fn.1} parent=11 // pred_region
          _
        $region64: #{apply_fn.1} parent=11 // pred_fallthru
          _
        // Predicated region
        $region65: #{apply_fn.1} parent=11 // pred_check
          %p526 = pneg %p354
        $region66: #{apply_fn.1} parent=11 // pred_check_branch
          %528 = sbr.rel (%p526) target = $region68
        $region67: #{apply_fn.1} parent=11 // pred_region
          _
        $region68: #{apply_fn.1} parent=11 // pred_fallthru
          _
        // Predicated region
        $region69: #{apply_fn.1} parent=11 // pred_check
          %p529 = pneg %p375
        $region70: #{apply_fn.1} parent=11 // pred_check_branch
          %531 = sbr.rel (%p529) target = $region72
        $region71: #{apply_fn.1} parent=11 // pred_region
          _
        $region72: #{apply_fn.1} parent=11 // pred_fallthru
          _
        // Predicated region
        $region73: #{apply_fn.1} parent=11 // pred_check
          %p532 = pneg %p396
        $region74: #{apply_fn.1} parent=11 // pred_check_branch
          %534 = sbr.rel (%p532) target = $region76
        $region75: #{apply_fn.1} parent=11 // pred_region
          _
        $region76: #{apply_fn.1} parent=11 // pred_fallthru
          _
      $region12: #{apply_fn.1} parent=5 // pred_fallthru
        _
      %p535 = scmp.lt.s32.totalorder %s34, 2
      // Predicated region
      $region77: #{apply_fn.1} parent=5 // pred_check
        %p536 = pneg %p535
      $region78: #{apply_fn.1} parent=5 // pred_check_branch
        %538 = sbr.rel (%p536) target = $region80
      $region79: #{apply_fn.1} parent=5 // pred_region
        // Predicated region
        $region81: #{apply_fn.1} parent=79 // pred_check
          %p539 = pneg %p75
        $region82: #{apply_fn.1} parent=79 // pred_check_branch
          %541 = sbr.rel (%p539) target = $region84
        $region83: #{apply_fn.1} parent=79 // pred_region
          %p542 = scmp.lt.s32.totalorder %s34, 1
          %s543 = scalar_select %p542, %s34, 1
          %s544 = smul.addr %s543, 4
          %s545 = smul.addr %s544, 8
          %s546 = scalar_lea.vmem %s1, %s545
        $region84: #{apply_fn.1} parent=79 // pred_fallthru
          _
      $region80: #{apply_fn.1} parent=5 // pred_fallthru
        _
      %p547 = scmp.le.s32.totalorder 1, %s34
      %p548 = scmp.lt.s32.totalorder %s34, 3
      %p549 = pnand %p547, %p548
      %p550 = pneg %p549
      // Predicated region
      $region85: #{apply_fn.1} parent=5 // pred_check
        _
      $region86: #{apply_fn.1} parent=5 // pred_check_branch
        %552 = sbr.rel (%p549) target = $region88
      $region87: #{apply_fn.1} parent=5 // pred_region
        %s553 = ssub.s32 %s34, 1
        // Predicated region
        $region89: #{apply_fn.1} parent=87 // pred_check
          %p554 = pneg %p102
        $region90: #{apply_fn.1} parent=87 // pred_check_branch
          %556 = sbr.rel (%p554) target = $region92
        $region91: #{apply_fn.1} parent=87 // pred_region
          %557 = dma.done [#allocation6], 4608
        $region92: #{apply_fn.1} parent=87 // pred_fallthru
          _
        // Predicated region
        $region93: #{apply_fn.1} parent=87 // pred_check
          %p558 = pneg %p144
        $region94: #{apply_fn.1} parent=87 // pred_check_branch
          %560 = sbr.rel (%p558) target = $region96
        $region95: #{apply_fn.1} parent=87 // pred_region
          %561 = dma.done [#allocation9], 4608
        $region96: #{apply_fn.1} parent=87 // pred_fallthru
          _
        // Predicated region
        $region97: #{apply_fn.1} parent=87 // pred_check
          %p562 = pneg %p228
        $region98: #{apply_fn.1} parent=87 // pred_check_branch
          %564 = sbr.rel (%p562) target = $region100
        $region99: #{apply_fn.1} parent=87 // pred_region
          %565 = dma.done [#allocation9], 2304
        $region100: #{apply_fn.1} parent=87 // pred_fallthru
          _
        // Predicated region
        $region101: #{apply_fn.1} parent=87 // pred_check
          %p566 = pneg %p270
        $region102: #{apply_fn.1} parent=87 // pred_check_branch
          %568 = sbr.rel (%p566) target = $region104
        $region103: #{apply_fn.1} parent=87 // pred_region
          %569 = dma.done [#allocation12], 2304
        $region104: #{apply_fn.1} parent=87 // pred_fallthru
          _
        // Predicated region
        $region105: #{apply_fn.1} parent=87 // pred_check
          %p570 = pneg %p312
        $region106: #{apply_fn.1} parent=87 // pred_check_branch
          %572 = sbr.rel (%p570) target = $region108
        $region107: #{apply_fn.1} parent=87 // pred_region
          %573 = dma.done [#allocation12], 9216
        $region108: #{apply_fn.1} parent=87 // pred_fallthru
          _
        %p574 = pneg %p55
        %p575 = pneg %p52
        %p576 = scmp.lt.s32.totalorder %s39, 1
        %s577 = scalar_select %p576, %s39, 1
        %s578 = smul.addr %s577, 4
        %s579 = smul.addr %s578, 8
        %s580 = scalar_lea.vmem %s1, %s579
        %p581 = pneg %p81
        %p582 = pneg %p78
        %p583 = pneg %p102
        %p584 = pneg %p99
        %p585 = pneg %p123
        %p586 = pneg %p120
        %p587 = pneg %p144
        %p588 = pneg %p141
        %p589 = pneg %p165
        %p590 = pneg %p162
        %p591 = pneg %p186
        %p592 = pneg %p183
        %p593 = pneg %p207
        %p594 = pneg %p204
        %p595 = pneg %p228
        %p596 = pneg %p225
        %p597 = pneg %p249
        %p598 = pneg %p246
        %p599 = pneg %p270
        %p600 = pneg %p267
        %p601 = pneg %p291
        %p602 = pneg %p288
        %p603 = pneg %p312
        %p604 = pneg %p309
        %p605 = pneg %p333
        %p606 = pneg %p330
        %p607 = pneg %p354
        %p608 = pneg %p351
        %p609 = pneg %p375
        %p610 = pneg %p372
        %p611 = pneg %p396
        %p612 = pneg %p393
        %p613 = pneg %p422
        %p614 = pneg %p419
        %s615 = sand.u32 %s409, 1
        %s616 = scalar_lea.sflag [#allocation7], %s615
        %s617 = sand.u32 %s409, 1
        %s618 = scalar_lea.vmem [#allocation14], %s617
        %p619 = scmp.lt.s32.totalorder %s39, 1
        %s620 = scalar_select %p619, %s39, 1
        %s621 = smul.addr %s620, 4
        %s622 = smul.addr %s621, 8
        %s623 = scalar_lea.vmem %s1, %s622
        %v624 = vld [vmem:[%s623] sm:$0xff]
        %v625 = vld [vmem:[%s623 + $0x8] sm:$0xff]
        %v626 = vld [vmem:[%s623 + $0x10] sm:$0xff]
        %v627 = vld [vmem:[%s623 + $0x18] sm:$0xff]
        %v628 = vld [vmem:[#allocation5] sm:$0xff]
        %v629 = vld [vmem:[#allocation5 + $0x8] sm:$0xff]
        %v630 = vld [vmem:[#allocation5 + $0x10] sm:$0xff]
        %v631 = vld [vmem:[#allocation5 + $0x18] sm:$0xff]
        %vm632 = vcmask 261120
        %v634 = vsel %vm632, %v628, 0
        %v637 = vsel %vm632, %v629, 0
        %v640 = vsel %vm632, %v630, 0
        %v643 = vsel %vm632, %v631, 0
        %645 = vmatprep.subr.mxu0 0.0
        %646 = vmatpush1.msra.mxu0 %v624
        %647 = vmatprep.subr.mxu0 0.0
        %648 = vmatpush1.msra.mxu0 %v625
        %649 = vmatprep.subr.mxu0 0.0
        %650 = vmatpush1.msra.mxu0 %v626
        %651 = vmatprep.subr.mxu0 0.0
        %652 = vmatpush1.msra.mxu0 %v627
        %653 = vmatprep.subr.mxu0 0.0
        %654 = vmatpush1.msra.mxu0 0.0
        %655 = vmatprep.subr.mxu0 0.0
        %656 = vmatpush1.msra.mxu0 0.0
        %657 = vmatprep.subr.mxu0 0.0
        %658 = vmatpush1.msra.mxu0 0.0
        %659 = vmatprep.subr.mxu0 0.0
        %660 = vmatpush1.msra.mxu0 0.0
        %661 = vmatprep.subr.mxu0 0.0
        %662 = vmatpush1.msra.mxu0 0.0
        %663 = vmatprep.subr.mxu0 0.0
        %664 = vmatpush1.msra.mxu0 0.0
        %665 = vmatprep.subr.mxu0 0.0
        %666 = vmatpush1.msra.mxu0 0.0
        %667 = vmatprep.subr.mxu0 0.0
        %668 = vmatpush1.msra.mxu0 0.0
        %669 = vmatprep.subr.mxu0 0.0
        %670 = vmatpush1.msra.mxu0 0.0
        %671 = vmatprep.subr.mxu0 0.0
        %672 = vmatpush1.msra.mxu0 0.0
        %673 = vmatprep.subr.mxu0 0.0
        %674 = vmatpush1.msra.mxu0 0.0
        %675 = vmatprep.subr.mxu0 0.0
        %676 = vmatpush1.msra.mxu0 0.0
        %677 = vmatprep.subr.mxu0 0.0
        %678 = vmatpush1.msra.mxu0 0.0
        %679 = vmatprep.subr.mxu0 0.0
        %680 = vmatpush1.msra.mxu0 0.0
        %681 = vmatprep.subr.mxu0 0.0
        %682 = vmatpush1.msra.mxu0 0.0
        %683 = vmatprep.subr.mxu0 0.0
        %684 = vmatpush1.msra.mxu0 0.0
        %685 = vmatprep.subr.mxu0 0.0
        %686 = vmatpush1.msra.mxu0 0.0
        %687 = vmatprep.subr.mxu0 0.0
        %688 = vmatpush1.msra.mxu0 0.0
        %689 = vmatprep.subr.mxu0 0.0
        %690 = vmatpush1.msra.mxu0 0.0
        %691 = vmatprep.subr.mxu0 0.0
        %692 = vmatpush1.msra.mxu0 0.0
        %693 = vmatprep.subr.mxu0 0.0
        %694 = vmatpush1.msra.mxu0 0.0
        %695 = vmatprep.subr.mxu0 0.0
        %696 = vmatpush1.msra.mxu0 0.0
        %697 = vmatprep.subr.mxu0 0.0
        %698 = vmatpush1.msra.mxu0 0.0
        %699 = vmatprep.subr.mxu0 0.0
        %700 = vmatpush1.msra.mxu0 0.0
        %701 = vmatprep.subr.mxu0 0.0
        %702 = vmatpush1.msra.mxu0 0.0
        %703 = vmatprep.subr.mxu0 0.0
        %704 = vmatpush1.msra.mxu0 0.0
        %705 = vmatprep.subr.mxu0 0.0
        %706 = vmatpush1.msra.mxu0 0.0
        %707 = vmatprep.subr.mxu0 0.0
        %708 = vmatpush1.msra.mxu0 0.0
        %709 = vmatprep.mubr.f32.mxu0 0.0
        %710 = vmatmul.mubr.f32.gmra.mrb[0].mxu0 %v634
        %v711 = vpop.f32.mrb[0].mxu0
        %v712 = vadd.f32 0.0, %v711
        %v713 = vpop.f32.mrb[0].mxu0
        %714 = vmatprep.mubr.f32.mxu0 0.0
        %715 = vmatmul.mubr.f32.gmra.mrb[0].mxu0 %v637
        %v716 = vpop.f32.mrb[0].mxu0
        %v717 = vadd.f32 0.0, %v716
        %v718 = vpop.f32.mrb[0].mxu0
        %719 = vmatprep.mubr.f32.mxu0 0.0
        %720 = vmatmul.mubr.f32.gmra.mrb[0].mxu0 %v640
        %v721 = vpop.f32.mrb[0].mxu0
        %v722 = vadd.f32 0.0, %v721
        %v723 = vpop.f32.mrb[0].mxu0
        %724 = vmatprep.mubr.f32.mxu0 0.0
        %725 = vmatmul.mubr.f32.gmra.mrb[0].mxu0 %v643
        %v726 = vpop.f32.mrb[0].mxu0
        %v727 = vadd.f32 0.0, %v726
        %v728 = vpop.f32.mrb[0].mxu0
        %729 = vdwg.mxu0
        %v730 = vld [vmem:[%s6] sm:$0xff]
        %v731 = vld [vmem:[%s6 + $0x8] sm:$0xff]
        %s732 = scalar_lea.vmem [#allocation5], 32
        %v733 = vld [vmem:[%s732] sm:$0xff]
        %v734 = vld [vmem:[%s732 + $0x8] sm:$0xff]
        %v735 = vld [vmem:[%s732 + $0x10] sm:$0xff]
        %v736 = vld [vmem:[%s732 + $0x18] sm:$0xff]
        %v738 = vsel %vm632, %v733, 0
        %v741 = vsel %vm632, %v734, 0
        %v744 = vsel %vm632, %v735, 0
        %v747 = vsel %vm632, %v736, 0
        %749 = vmatprep.subr.mxu0 0.0
        %750 = vmatpush1.msra.mxu0 %v624
        %751 = vmatprep.subr.mxu0 0.0
        %752 = vmatpush1.msra.mxu0 %v625
        %753 = vmatprep.subr.mxu0 0.0
        %754 = vmatpush1.msra.mxu0 %v626
        %755 = vmatprep.subr.mxu0 0.0
        %756 = vmatpush1.msra.mxu0 %v627
        %757 = vmatprep.subr.mxu0 0.0
        %758 = vmatpush1.msra.mxu0 0.0
        %759 = vmatprep.subr.mxu0 0.0
        %760 = vmatpush1.msra.mxu0 0.0
        %761 = vmatprep.subr.mxu0 0.0
        %762 = vmatpush1.msra.mxu0 0.0
        %763 = vmatprep.subr.mxu0 0.0
        %764 = vmatpush1.msra.mxu0 0.0
        %765 = vmatprep.subr.mxu0 0.0
        %766 = vmatpush1.msra.mxu0 0.0
        %767 = vmatprep.subr.mxu0 0.0
        %768 = vmatpush1.msra.mxu0 0.0
        %769 = vmatprep.subr.mxu0 0.0
        %770 = vmatpush1.msra.mxu0 0.0
        %771 = vmatprep.subr.mxu0 0.0
        %772 = vmatpush1.msra.mxu0 0.0
        %773 = vmatprep.subr.mxu0 0.0
        %774 = vmatpush1.msra.mxu0 0.0
        %775 = vmatprep.subr.mxu0 0.0
        %776 = vmatpush1.msra.mxu0 0.0
        %777 = vmatprep.subr.mxu0 0.0
        %778 = vmatpush1.msra.mxu0 0.0
        %779 = vmatprep.subr.mxu0 0.0
        %780 = vmatpush1.msra.mxu0 0.0
        %781 = vmatprep.subr.mxu0 0.0
        %782 = vmatpush1.msra.mxu0 0.0
        %783 = vmatprep.subr.mxu0 0.0
        %784 = vmatpush1.msra.mxu0 0.0
        %785 = vmatprep.subr.mxu0 0.0
        %786 = vmatpush1.msra.mxu0 0.0
        %787 = vmatprep.subr.mxu0 0.0
        %788 = vmatpush1.msra.mxu0 0.0
        %789 = vmatprep.subr.mxu0 0.0
        %790 = vmatpush1.msra.mxu0 0.0
        %791 = vmatprep.subr.mxu0 0.0
        %792 = vmatpush1.msra.mxu0 0.0
        %793 = vmatprep.subr.mxu0 0.0
        %794 = vmatpush1.msra.mxu0 0.0
        %795 = vmatprep.subr.mxu0 0.0
        %796 = vmatpush1.msra.mxu0 0.0
        %797 = vmatprep.subr.mxu0 0.0
        %798 = vmatpush1.msra.mxu0 0.0
        %799 = vmatprep.subr.mxu0 0.0
        %800 = vmatpush1.msra.mxu0 0.0
        %801 = vmatprep.subr.mxu0 0.0
        %802 = vmatpush1.msra.mxu0 0.0
        %803 = vmatprep.subr.mxu0 0.0
        %804 = vmatpush1.msra.mxu0 0.0
        %805 = vmatprep.subr.mxu0 0.0
        %806 = vmatpush1.msra.mxu0 0.0
        %807 = vmatprep.subr.mxu0 0.0
        %808 = vmatpush1.msra.mxu0 0.0
        %809 = vmatprep.subr.mxu0 0.0
        %810 = vmatpush1.msra.mxu0 0.0
        %811 = vmatprep.subr.mxu0 0.0
        %812 = vmatpush1.msra.mxu0 0.0
        %813 = vmatprep.mubr.f32.mxu0 0.0
        %814 = vmatmul.mubr.f32.gmra.mrb[0].mxu0 %v738
        %v815 = vpop.f32.mrb[0].mxu0
        %v816 = vadd.f32 0.0, %v815
        %v817 = vpop.f32.mrb[0].mxu0
        %818 = vmatprep.mubr.f32.mxu0 0.0
        %819 = vmatmul.mubr.f32.gmra.mrb[0].mxu0 %v741
        %v820 = vpop.f32.mrb[0].mxu0
        %v821 = vadd.f32 0.0, %v820
        %v822 = vpop.f32.mrb[0].mxu0
        %823 = vmatprep.mubr.f32.mxu0 0.0
        %824 = vmatmul.mubr.f32.gmra.mrb[0].mxu0 %v744
        %v825 = vpop.f32.mrb[0].mxu0
        %v826 = vadd.f32 0.0, %v825
        %v827 = vpop.f32.mrb[0].mxu0
        %828 = vmatprep.mubr.f32.mxu0 0.0
        %829 = vmatmul.mubr.f32.gmra.mrb[0].mxu0 %v747
        %v830 = vpop.f32.mrb[0].mxu0
        %v831 = vadd.f32 0.0, %v830
        %v832 = vpop.f32.mrb[0].mxu0
        %833 = vdwg.mxu0
        %s834 = scalar_lea.vmem %s6, 16
        %v835 = vld [vmem:[%s834] sm:$0xff]
        %v836 = vld [vmem:[%s834 + $0x8] sm:$0xff]
        %vm837 = vcmask 130048
        %v839 = vsel %vm837, %v816, 0
        %v842 = vsel %vm837, %v821, 0
        %v845 = vsel %vm837, %v826, 0
        %v848 = vsel %vm837, %v831, 0
        %850 = vmatprep.subr.mxu0 0.0
        %851 = vmatpush1.msra.mxu0 %v835
        %852 = vmatprep.subr.mxu0 0.0
        %853 = vmatpush1.msra.mxu0 %v836
        %854 = vmatprep.subr.mxu0 0.0
        %855 = vmatpush1.msra.mxu0 0.0
        %856 = vmatprep.subr.mxu0 0.0
        %857 = vmatpush1.msra.mxu0 0.0
        %858 = vmatprep.subr.mxu0 0.0
        %859 = vmatpush1.msra.mxu0 0.0
        %860 = vmatprep.subr.mxu0 0.0
        %861 = vmatpush1.msra.mxu0 0.0
        %862 = vmatprep.subr.mxu0 0.0
        %863 = vmatpush1.msra.mxu0 0.0
        %864 = vmatprep.subr.mxu0 0.0
        %865 = vmatpush1.msra.mxu0 0.0
        %866 = vmatprep.subr.mxu0 0.0
        %867 = vmatpush1.msra.mxu0 0.0
        %868 = vmatprep.subr.mxu0 0.0
        %869 = vmatpush1.msra.mxu0 0.0
        %870 = vmatprep.subr.mxu0 0.0
        %871 = vmatpush1.msra.mxu0 0.0
        %872 = vmatprep.subr.mxu0 0.0
        %873 = vmatpush1.msra.mxu0 0.0
        %874 = vmatprep.subr.mxu0 0.0
        %875 = vmatpush1.msra.mxu0 0.0
        %876 = vmatprep.subr.mxu0 0.0
        %877 = vmatpush1.msra.mxu0 0.0
        %878 = vmatprep.subr.mxu0 0.0
        %879 = vmatpush1.msra.mxu0 0.0
        %880 = vmatprep.subr.mxu0 0.0
        %881 = vmatpush1.msra.mxu0 0.0
        %882 = vmatprep.subr.mxu0 0.0
        %883 = vmatpush1.msra.mxu0 0.0
        %884 = vmatprep.subr.mxu0 0.0
        %885 = vmatpush1.msra.mxu0 0.0
        %886 = vmatprep.subr.mxu0 0.0
        %887 = vmatpush1.msra.mxu0 0.0
        %888 = vmatprep.subr.mxu0 0.0
        %889 = vmatpush1.msra.mxu0 0.0
        %890 = vmatprep.subr.mxu0 0.0
        %891 = vmatpush1.msra.mxu0 0.0
        %892 = vmatprep.subr.mxu0 0.0
        %893 = vmatpush1.msra.mxu0 0.0
        %894 = vmatprep.subr.mxu0 0.0
        %895 = vmatpush1.msra.mxu0 0.0
        %896 = vmatprep.subr.mxu0 0.0
        %897 = vmatpush1.msra.mxu0 0.0
        %898 = vmatprep.subr.mxu0 0.0
        %899 = vmatpush1.msra.mxu0 0.0
        %900 = vmatprep.subr.mxu0 0.0
        %901 = vmatpush1.msra.mxu0 0.0
        %902 = vmatprep.subr.mxu0 0.0
        %903 = vmatpush1.msra.mxu0 0.0
        %904 = vmatprep.subr.mxu0 0.0
        %905 = vmatpush1.msra.mxu0 0.0
        %906 = vmatprep.subr.mxu0 0.0
        %907 = vmatpush1.msra.mxu0 0.0
        %908 = vmatprep.subr.mxu0 0.0
        %909 = vmatpush1.msra.mxu0 0.0
        %910 = vmatprep.subr.mxu0 0.0
        %911 = vmatpush1.msra.mxu0 0.0
        %912 = vmatprep.subr.mxu0 0.0
        %913 = vmatpush1.msra.mxu0 0.0
        %914 = vmatprep.mubr.f32.mxu0 0.0
        %915 = vmatmul.mubr.f32.gmra.mrb[0].mxu0 %v839
        %v916 = vpop.f32.mrb[0].mxu0
        %v917 = vadd.f32 0.0, %v916
        %v918 = vpop.f32.mrb[0].mxu0
        %919 = vmatprep.mubr.f32.mxu0 0.0
        %920 = vmatmul.mubr.f32.gmra.mrb[0].mxu0 %v842
        %v921 = vpop.f32.mrb[0].mxu0
        %v922 = vadd.f32 0.0, %v921
        %v923 = vpop.f32.mrb[0].mxu0
        %924 = vmatprep.mubr.f32.mxu0 0.0
        %925 = vmatmul.mubr.f32.gmra.mrb[0].mxu0 %v845
        %v926 = vpop.f32.mrb[0].mxu0
        %v927 = vadd.f32 0.0, %v926
        %v928 = vpop.f32.mrb[0].mxu0
        %929 = vmatprep.mubr.f32.mxu0 0.0
        %930 = vmatmul.mubr.f32.gmra.mrb[0].mxu0 %v848
        %v931 = vpop.f32.mrb[0].mxu0
        %v932 = vadd.f32 0.0, %v931
        %v933 = vpop.f32.mrb[0].mxu0
        %934 = vdwg.mxu0
        %v936 = vsel %vm837, %v712, 0
        %v939 = vsel %vm837, %v717, 0
        %v942 = vsel %vm837, %v722, 0
        %v945 = vsel %vm837, %v727, 0
        %947 = vmatprep.subr.mxu0 0.0
        %948 = vmatpush1.msra.mxu0 %v730
        %949 = vmatprep.subr.mxu0 0.0
        %950 = vmatpush1.msra.mxu0 %v731
        %951 = vmatprep.subr.mxu0 0.0
        %952 = vmatpush1.msra.mxu0 0.0
        %953 = vmatprep.subr.mxu0 0.0
        %954 = vmatpush1.msra.mxu0 0.0
        %955 = vmatprep.subr.mxu0 0.0
        %956 = vmatpush1.msra.mxu0 0.0
        %957 = vmatprep.subr.mxu0 0.0
        %958 = vmatpush1.msra.mxu0 0.0
        %959 = vmatprep.subr.mxu0 0.0
        %960 = vmatpush1.msra.mxu0 0.0
        %961 = vmatprep.subr.mxu0 0.0
        %962 = vmatpush1.msra.mxu0 0.0
        %963 = vmatprep.subr.mxu0 0.0
        %964 = vmatpush1.msra.mxu0 0.0
        %965 = vmatprep.subr.mxu0 0.0
        %966 = vmatpush1.msra.mxu0 0.0
        %967 = vmatprep.subr.mxu0 0.0
        %968 = vmatpush1.msra.mxu0 0.0
        %969 = vmatprep.subr.mxu0 0.0
        %970 = vmatpush1.msra.mxu0 0.0
        %971 = vmatprep.subr.mxu0 0.0
        %972 = vmatpush1.msra.mxu0 0.0
        %973 = vmatprep.subr.mxu0 0.0
        %974 = vmatpush1.msra.mxu0 0.0
        %975 = vmatprep.subr.mxu0 0.0
        %976 = vmatpush1.msra.mxu0 0.0
        %977 = vmatprep.subr.mxu0 0.0
        %978 = vmatpush1.msra.mxu0 0.0
        %979 = vmatprep.subr.mxu0 0.0
        %980 = vmatpush1.msra.mxu0 0.0
        %981 = vmatprep.subr.mxu0 0.0
        %982 = vmatpush1.msra.mxu0 0.0
        %983 = vmatprep.subr.mxu0 0.0
        %984 = vmatpush1.msra.mxu0 0.0
        %985 = vmatprep.subr.mxu0 0.0
        %986 = vmatpush1.msra.mxu0 0.0
        %987 = vmatprep.subr.mxu0 0.0
        %988 = vmatpush1.msra.mxu0 0.0
        %989 = vmatprep.subr.mxu0 0.0
        %990 = vmatpush1.msra.mxu0 0.0
        %991 = vmatprep.subr.mxu0 0.0
        %992 = vmatpush1.msra.mxu0 0.0
        %993 = vmatprep.subr.mxu0 0.0
        %994 = vmatpush1.msra.mxu0 0.0
        %995 = vmatprep.subr.mxu0 0.0
        %996 = vmatpush1.msra.mxu0 0.0
        %997 = vmatprep.subr.mxu0 0.0
        %998 = vmatpush1.msra.mxu0 0.0
        %999 = vmatprep.subr.mxu0 0.0
        %1000 = vmatpush1.msra.mxu0 0.0
        %1001 = vmatprep.subr.mxu0 0.0
        %1002 = vmatpush1.msra.mxu0 0.0
        %1003 = vmatprep.subr.mxu0 0.0
        %1004 = vmatpush1.msra.mxu0 0.0
        %1005 = vmatprep.subr.mxu0 0.0
        %1006 = vmatpush1.msra.mxu0 0.0
        %1007 = vmatprep.subr.mxu0 0.0
        %1008 = vmatpush1.msra.mxu0 0.0
        %1009 = vmatprep.subr.mxu0 0.0
        %1010 = vmatpush1.msra.mxu0 0.0
        %1011 = vmatprep.mubr.f32.mxu0 0.0
        %1012 = vmatmul.mubr.f32.gmra.mrb[0].mxu0 %v936
        %v1013 = vpop.f32.mrb[0].mxu0
        %v1014 = vadd.f32 %v917, %v1013
        %v1015 = vpop.f32.mrb[0].mxu0
        %1016 = vmatprep.mubr.f32.mxu0 0.0
        %1017 = vmatmul.mubr.f32.gmra.mrb[0].mxu0 %v939
        %v1018 = vpop.f32.mrb[0].mxu0
        %v1019 = vadd.f32 %v922, %v1018
        %v1020 = vpop.f32.mrb[0].mxu0
        %1021 = vmatprep.mubr.f32.mxu0 0.0
        %1022 = vmatmul.mubr.f32.gmra.mrb[0].mxu0 %v942
        %v1023 = vpop.f32.mrb[0].mxu0
        %v1024 = vadd.f32 %v927, %v1023
        %v1025 = vpop.f32.mrb[0].mxu0
        %1026 = vmatprep.mubr.f32.mxu0 0.0
        %1027 = vmatmul.mubr.f32.gmra.mrb[0].mxu0 %v945
        %v1028 = vpop.f32.mrb[0].mxu0
        %v1029 = vadd.f32 %v932, %v1028
        %v1030 = vpop.f32.mrb[0].mxu0
        %1031 = vdwg.mxu0
        %s1032 = scalar_lea.vmem [#allocation5], 64
        %v1033 = vld [vmem:[%s1032] sm:$0xff]
        %v1034 = vld [vmem:[%s1032 + $0x8] sm:$0xff]
        %v1035 = vld [vmem:[%s1032 + $0x10] sm:$0xff]
        %v1036 = vld [vmem:[%s1032 + $0x18] sm:$0xff]
        %v1038 = vsel %vm632, %v1033, 0
        %v1041 = vsel %vm632, %v1034, 0
        %v1044 = vsel %vm632, %v1035, 0
        %v1047 = vsel %vm632, %v1036, 0
        %1049 = vmatprep.subr.mxu0 0.0
        %1050 = vmatpush1.msra.mxu0 %v624
        %1051 = vmatprep.subr.mxu0 0.0
        %1052 = vmatpush1.msra.mxu0 %v625
        %1053 = vmatprep.subr.mxu0 0.0
        %1054 = vmatpush1.msra.mxu0 %v626
        %1055 = vmatprep.subr.mxu0 0.0
        %1056 = vmatpush1.msra.mxu0 %v627
        %1057 = vmatprep.subr.mxu0 0.0
        %1058 = vmatpush1.msra.mxu0 0.0
        %1059 = vmatprep.subr.mxu0 0.0
        %1060 = vmatpush1.msra.mxu0 0.0
        %1061 = vmatprep.subr.mxu0 0.0
        %1062 = vmatpush1.msra.mxu0 0.0
        %1063 = vmatprep.subr.mxu0 0.0
        %1064 = vmatpush1.msra.mxu0 0.0
        %1065 = vmatprep.subr.mxu0 0.0
        %1066 = vmatpush1.msra.mxu0 0.0
        %1067 = vmatprep.subr.mxu0 0.0
        %1068 = vmatpush1.msra.mxu0 0.0
        %1069 = vmatprep.subr.mxu0 0.0
        %1070 = vmatpush1.msra.mxu0 0.0
        %1071 = vmatprep.subr.mxu0 0.0
        %1072 = vmatpush1.msra.mxu0 0.0
        %1073 = vmatprep.subr.mxu0 0.0
        %1074 = vmatpush1.msra.mxu0 0.0
        %1075 = vmatprep.subr.mxu0 0.0
        %1076 = vmatpush1.msra.mxu0 0.0
        %1077 = vmatprep.subr.mxu0 0.0
        %1078 = vmatpush1.msra.mxu0 0.0
        %1079 = vmatprep.subr.mxu0 0.0
        %1080 = vmatpush1.msra.mxu0 0.0
        %1081 = vmatprep.subr.mxu0 0.0
        %1082 = vmatpush1.msra.mxu0 0.0
        %1083 = vmatprep.subr.mxu0 0.0
        %1084 = vmatpush1.msra.mxu0 0.0
        %1085 = vmatprep.subr.mxu0 0.0
        %1086 = vmatpush1.msra.mxu0 0.0
        %1087 = vmatprep.subr.mxu0 0.0
        %1088 = vmatpush1.msra.mxu0 0.0
        %1089 = vmatprep.subr.mxu0 0.0
        %1090 = vmatpush1.msra.mxu0 0.0
        %1091 = vmatprep.subr.mxu0 0.0
        %1092 = vmatpush1.msra.mxu0 0.0
        %1093 = vmatprep.subr.mxu0 0.0
        %1094 = vmatpush1.msra.mxu0 0.0
        %1095 = vmatprep.subr.mxu0 0.0
        %1096 = vmatpush1.msra.mxu0 0.0
        %1097 = vmatprep.subr.mxu0 0.0
        %1098 = vmatpush1.msra.mxu0 0.0
        %1099 = vmatprep.subr.mxu0 0.0
        %1100 = vmatpush1.msra.mxu0 0.0
        %1101 = vmatprep.subr.mxu0 0.0
        %1102 = vmatpush1.msra.mxu0 0.0
        %1103 = vmatprep.subr.mxu0 0.0
        %1104 = vmatpush1.msra.mxu0 0.0
        %1105 = vmatprep.subr.mxu0 0.0
        %1106 = vmatpush1.msra.mxu0 0.0
        %1107 = vmatprep.subr.mxu0 0.0
        %1108 = vmatpush1.msra.mxu0 0.0
        %1109 = vmatprep.subr.mxu0 0.0
        %1110 = vmatpush1.msra.mxu0 0.0
        %1111 = vmatprep.subr.mxu0 0.0
        %1112 = vmatpush1.msra.mxu0 0.0
        %1113 = vmatprep.mubr.f32.mxu0 0.0
        %1114 = vmatmul.mubr.f32.gmra.mrb[0].mxu0 %v1038
        %v1115 = vpop.f32.mrb[0].mxu0
        %v1116 = vadd.f32 0.0, %v1115
        %v1117 = vpop.f32.mrb[0].mxu0
        %1118 = vmatprep.mubr.f32.mxu0 0.0
        %1119 = vmatmul.mubr.f32.gmra.mrb[0].mxu0 %v1041
        %v1120 = vpop.f32.mrb[0].mxu0
        %v1121 = vadd.f32 0.0, %v1120
        %v1122 = vpop.f32.mrb[0].mxu0
        %1123 = vmatprep.mubr.f32.mxu0 0.0
        %1124 = vmatmul.mubr.f32.gmra.mrb[0].mxu0 %v1044
        %v1125 = vpop.f32.mrb[0].mxu0
        %v1126 = vadd.f32 0.0, %v1125
        %v1127 = vpop.f32.mrb[0].mxu0
        %1128 = vmatprep.mubr.f32.mxu0 0.0
        %1129 = vmatmul.mubr.f32.gmra.mrb[0].mxu0 %v1047
        %v1130 = vpop.f32.mrb[0].mxu0
        %v1131 = vadd.f32 0.0, %v1130
        %v1132 = vpop.f32.mrb[0].mxu0
        %1133 = vdwg.mxu0
        %s1134 = scalar_lea.vmem %s6, 32
        %v1135 = vld [vmem:[%s1134] sm:$0xff]
        %v1136 = vld [vmem:[%s1134 + $0x8] sm:$0xff]
        %v1138 = vsel %vm837, %v1116, 0
        %v1141 = vsel %vm837, %v1121, 0
        %v1144 = vsel %vm837, %v1126, 0
        %v1147 = vsel %vm837, %v1131, 0
        %1149 = vmatprep.subr.mxu0 0.0
        %1150 = vmatpush1.msra.mxu0 %v1135
        %1151 = vmatprep.subr.mxu0 0.0
        %1152 = vmatpush1.msra.mxu0 %v1136
        %1153 = vmatprep.subr.mxu0 0.0
        %1154 = vmatpush1.msra.mxu0 0.0
        %1155 = vmatprep.subr.mxu0 0.0
        %1156 = vmatpush1.msra.mxu0 0.0
        %1157 = vmatprep.subr.mxu0 0.0
        %1158 = vmatpush1.msra.mxu0 0.0
        %1159 = vmatprep.subr.mxu0 0.0
        %1160 = vmatpush1.msra.mxu0 0.0
        %1161 = vmatprep.subr.mxu0 0.0
        %1162 = vmatpush1.msra.mxu0 0.0
        %1163 = vmatprep.subr.mxu0 0.0
        %1164 = vmatpush1.msra.mxu0 0.0
        %1165 = vmatprep.subr.mxu0 0.0
        %1166 = vmatpush1.msra.mxu0 0.0
        %1167 = vmatprep.subr.mxu0 0.0
        %1168 = vmatpush1.msra.mxu0 0.0
        %1169 = vmatprep.subr.mxu0 0.0
        %1170 = vmatpush1.msra.mxu0 0.0
        %1171 = vmatprep.subr.mxu0 0.0
        %1172 = vmatpush1.msra.mxu0 0.0
        %1173 = vmatprep.subr.mxu0 0.0
        %1174 = vmatpush1.msra.mxu0 0.0
        %1175 = vmatprep.subr.mxu0 0.0
        %1176 = vmatpush1.msra.mxu0 0.0
        %1177 = vmatprep.subr.mxu0 0.0
        %1178 = vmatpush1.msra.mxu0 0.0
        %1179 = vmatprep.subr.mxu0 0.0
        %1180 = vmatpush1.msra.mxu0 0.0
        %1181 = vmatprep.subr.mxu0 0.0
        %1182 = vmatpush1.msra.mxu0 0.0
        %1183 = vmatprep.subr.mxu0 0.0
        %1184 = vmatpush1.msra.mxu0 0.0
        %1185 = vmatprep.subr.mxu0 0.0
        %1186 = vmatpush1.msra.mxu0 0.0
        %1187 = vmatprep.subr.mxu0 0.0
        %1188 = vmatpush1.msra.mxu0 0.0
        %1189 = vmatprep.subr.mxu0 0.0
        %1190 = vmatpush1.msra.mxu0 0.0
        %1191 = vmatprep.subr.mxu0 0.0
        %1192 = vmatpush1.msra.mxu0 0.0
        %1193 = vmatprep.subr.mxu0 0.0
        %1194 = vmatpush1.msra.mxu0 0.0
        %1195 = vmatprep.subr.mxu0 0.0
        %1196 = vmatpush1.msra.mxu0 0.0
        %1197 = vmatprep.subr.mxu0 0.0
        %1198 = vmatpush1.msra.mxu0 0.0
        %1199 = vmatprep.subr.mxu0 0.0
        %1200 = vmatpush1.msra.mxu0 0.0
        %1201 = vmatprep.subr.mxu0 0.0
        %1202 = vmatpush1.msra.mxu0 0.0
        %1203 = vmatprep.subr.mxu0 0.0
        %1204 = vmatpush1.msra.mxu0 0.0
        %1205 = vmatprep.subr.mxu0 0.0
        %1206 = vmatpush1.msra.mxu0 0.0
        %1207 = vmatprep.subr.mxu0 0.0
        %1208 = vmatpush1.msra.mxu0 0.0
        %1209 = vmatprep.subr.mxu0 0.0
        %1210 = vmatpush1.msra.mxu0 0.0
        %1211 = vmatprep.subr.mxu0 0.0
        %1212 = vmatpush1.msra.mxu0 0.0
        %1213 = vmatprep.mubr.f32.mxu0 0.0
        %1214 = vmatmul.mubr.f32.gmra.mrb[0].mxu0 %v1138
        %v1215 = vpop.f32.mrb[0].mxu0
        %v1216 = vadd.f32 0.0, %v1215
        %v1217 = vpop.f32.mrb[0].mxu0
        %1218 = vmatprep.mubr.f32.mxu0 0.0
        %1219 = vmatmul.mubr.f32.gmra.mrb[0].mxu0 %v1141
        %v1220 = vpop.f32.mrb[0].mxu0
        %v1221 = vadd.f32 0.0, %v1220
        %v1222 = vpop.f32.mrb[0].mxu0
        %1223 = vmatprep.mubr.f32.mxu0 0.0
        %1224 = vmatmul.mubr.f32.gmra.mrb[0].mxu0 %v1144
        %v1225 = vpop.f32.mrb[0].mxu0
        %v1226 = vadd.f32 0.0, %v1225
        %v1227 = vpop.f32.mrb[0].mxu0
        %1228 = vmatprep.mubr.f32.mxu0 0.0
        %1229 = vmatmul.mubr.f32.gmra.mrb[0].mxu0 %v1147
        %v1230 = vpop.f32.mrb[0].mxu0
        %v1231 = vadd.f32 0.0, %v1230
        %v1232 = vpop.f32.mrb[0].mxu0
        %1233 = vdwg.mxu0
        %v1234 = vadd.f32 %v1014, %v1216
        %v1235 = vadd.f32 %v1019, %v1221
        %v1236 = vadd.f32 %v1024, %v1226
        %v1237 = vadd.f32 %v1029, %v1231
        %s1238 = scalar_lea.vmem [#allocation5], 96
        %v1239 = vld [vmem:[%s1238] sm:$0xff]
        %v1240 = vld [vmem:[%s1238 + $0x8] sm:$0xff]
        %v1241 = vld [vmem:[%s1238 + $0x10] sm:$0xff]
        %v1242 = vld [vmem:[%s1238 + $0x18] sm:$0xff]
        %v1244 = vsel %vm632, %v1239, 0
        %v1247 = vsel %vm632, %v1240, 0
        %v1250 = vsel %vm632, %v1241, 0
        %v1253 = vsel %vm632, %v1242, 0
        %1255 = vmatprep.subr.mxu0 0.0
        %1256 = vmatpush1.msra.mxu0 %v624
        %1257 = vmatprep.subr.mxu0 0.0
        %1258 = vmatpush1.msra.mxu0 %v625
        %1259 = vmatprep.subr.mxu0 0.0
        %1260 = vmatpush1.msra.mxu0 %v626
        %1261 = vmatprep.subr.mxu0 0.0
        %1262 = vmatpush1.msra.mxu0 %v627
        %1263 = vmatprep.subr.mxu0 0.0
        %1264 = vmatpush1.msra.mxu0 0.0
        %1265 = vmatprep.subr.mxu0 0.0
        %1266 = vmatpush1.msra.mxu0 0.0
        %1267 = vmatprep.subr.mxu0 0.0
        %1268 = vmatpush1.msra.mxu0 0.0
        %1269 = vmatprep.subr.mxu0 0.0
        %1270 = vmatpush1.msra.mxu0 0.0
        %1271 = vmatprep.subr.mxu0 0.0
        %1272 = vmatpush1.msra.mxu0 0.0
        %1273 = vmatprep.subr.mxu0 0.0
        %1274 = vmatpush1.msra.mxu0 0.0
        %1275 = vmatprep.subr.mxu0 0.0
        %1276 = vmatpush1.msra.mxu0 0.0
        %1277 = vmatprep.subr.mxu0 0.0
        %1278 = vmatpush1.msra.mxu0 0.0
        %1279 = vmatprep.subr.mxu0 0.0
        %1280 = vmatpush1.msra.mxu0 0.0
        %1281 = vmatprep.subr.mxu0 0.0
        %1282 = vmatpush1.msra.mxu0 0.0
        %1283 = vmatprep.subr.mxu0 0.0
        %1284 = vmatpush1.msra.mxu0 0.0
        %1285 = vmatprep.subr.mxu0 0.0
        %1286 = vmatpush1.msra.mxu0 0.0
        %1287 = vmatprep.subr.mxu0 0.0
        %1288 = vmatpush1.msra.mxu0 0.0
        %1289 = vmatprep.subr.mxu0 0.0
        %1290 = vmatpush1.msra.mxu0 0.0
        %1291 = vmatprep.subr.mxu0 0.0
        %1292 = vmatpush1.msra.mxu0 0.0
        %1293 = vmatprep.subr.mxu0 0.0
        %1294 = vmatpush1.msra.mxu0 0.0
        %1295 = vmatprep.subr.mxu0 0.0
        %1296 = vmatpush1.msra.mxu0 0.0
        %1297 = vmatprep.subr.mxu0 0.0
        %1298 = vmatpush1.msra.mxu0 0.0
        %1299 = vmatprep.subr.mxu0 0.0
        %1300 = vmatpush1.msra.mxu0 0.0
        %1301 = vmatprep.subr.mxu0 0.0
        %1302 = vmatpush1.msra.mxu0 0.0
        %1303 = vmatprep.subr.mxu0 0.0
        %1304 = vmatpush1.msra.mxu0 0.0
        %1305 = vmatprep.subr.mxu0 0.0
        %1306 = vmatpush1.msra.mxu0 0.0
        %1307 = vmatprep.subr.mxu0 0.0
        %1308 = vmatpush1.msra.mxu0 0.0
        %1309 = vmatprep.subr.mxu0 0.0
        %1310 = vmatpush1.msra.mxu0 0.0
        %1311 = vmatprep.subr.mxu0 0.0
        %1312 = vmatpush1.msra.mxu0 0.0
        %1313 = vmatprep.subr.mxu0 0.0
        %1314 = vmatpush1.msra.mxu0 0.0
        %1315 = vmatprep.subr.mxu0 0.0
        %1316 = vmatpush1.msra.mxu0 0.0
        %1317 = vmatprep.subr.mxu0 0.0
        %1318 = vmatpush1.msra.mxu0 0.0
        %1319 = vmatprep.mubr.f32.mxu0 0.0
        %1320 = vmatmul.mubr.f32.gmra.mrb[0].mxu0 %v1244
        %v1321 = vpop.f32.mrb[0].mxu0
        %v1322 = vadd.f32 0.0, %v1321
        %v1323 = vpop.f32.mrb[0].mxu0
        %1324 = vmatprep.mubr.f32.mxu0 0.0
        %1325 = vmatmul.mubr.f32.gmra.mrb[0].mxu0 %v1247
        %v1326 = vpop.f32.mrb[0].mxu0
        %v1327 = vadd.f32 0.0, %v1326
        %v1328 = vpop.f32.mrb[0].mxu0
        %1329 = vmatprep.mubr.f32.mxu0 0.0
        %1330 = vmatmul.mubr.f32.gmra.mrb[0].mxu0 %v1250
        %v1331 = vpop.f32.mrb[0].mxu0
        %v1332 = vadd.f32 0.0, %v1331
        %v1333 = vpop.f32.mrb[0].mxu0
        %1334 = vmatprep.mubr.f32.mxu0 0.0
        %1335 = vmatmul.mubr.f32.gmra.mrb[0].mxu0 %v1253
        %v1336 = vpop.f32.mrb[0].mxu0
        %v1337 = vadd.f32 0.0, %v1336
        %v1338 = vpop.f32.mrb[0].mxu0
        %1339 = vdwg.mxu0
        %s1340 = scalar_lea.vmem %s6, 48
        %v1341 = vld [vmem:[%s1340] sm:$0xff]
        %v1342 = vld [vmem:[%s1340 + $0x8] sm:$0xff]
        %v1344 = vsel %vm837, %v1322, 0
        %v1347 = vsel %vm837, %v1327, 0
        %v1350 = vsel %vm837, %v1332, 0
        %v1353 = vsel %vm837, %v1337, 0
        %1355 = vmatprep.subr.mxu0 0.0
        %1356 = vmatpush1.msra.mxu0 %v1341
        %1357 = vmatprep.subr.mxu0 0.0
        %1358 = vmatpush1.msra.mxu0 %v1342
        %1359 = vmatprep.subr.mxu0 0.0
        %1360 = vmatpush1.msra.mxu0 0.0
        %1361 = vmatprep.subr.mxu0 0.0
        %1362 = vmatpush1.msra.mxu0 0.0
        %1363 = vmatprep.subr.mxu0 0.0
        %1364 = vmatpush1.msra.mxu0 0.0
        %1365 = vmatprep.subr.mxu0 0.0
        %1366 = vmatpush1.msra.mxu0 0.0
        %1367 = vmatprep.subr.mxu0 0.0
        %1368 = vmatpush1.msra.mxu0 0.0
        %1369 = vmatprep.subr.mxu0 0.0
        %1370 = vmatpush1.msra.mxu0 0.0
        %1371 = vmatprep.subr.mxu0 0.0
        %1372 = vmatpush1.msra.mxu0 0.0
        %1373 = vmatprep.subr.mxu0 0.0
        %1374 = vmatpush1.msra.mxu0 0.0
        %1375 = vmatprep.subr.mxu0 0.0
        %1376 = vmatpush1.msra.mxu0 0.0
        %1377 = vmatprep.subr.mxu0 0.0
        %1378 = vmatpush1.msra.mxu0 0.0
        %1379 = vmatprep.subr.mxu0 0.0
        %1380 = vmatpush1.msra.mxu0 0.0
        %1381 = vmatprep.subr.mxu0 0.0
        %1382 = vmatpush1.msra.mxu0 0.0
        %1383 = vmatprep.subr.mxu0 0.0
        %1384 = vmatpush1.msra.mxu0 0.0
        %1385 = vmatprep.subr.mxu0 0.0
        %1386 = vmatpush1.msra.mxu0 0.0
        %1387 = vmatprep.subr.mxu0 0.0
        %1388 = vmatpush1.msra.mxu0 0.0
        %1389 = vmatprep.subr.mxu0 0.0
        %1390 = vmatpush1.msra.mxu0 0.0
        %1391 = vmatprep.subr.mxu0 0.0
        %1392 = vmatpush1.msra.mxu0 0.0
        %1393 = vmatprep.subr.mxu0 0.0
        %1394 = vmatpush1.msra.mxu0 0.0
        %1395 = vmatprep.subr.mxu0 0.0
        %1396 = vmatpush1.msra.mxu0 0.0
        %1397 = vmatprep.subr.mxu0 0.0
        %1398 = vmatpush1.msra.mxu0 0.0
        %1399 = vmatprep.subr.mxu0 0.0
        %1400 = vmatpush1.msra.mxu0 0.0
        %1401 = vmatprep.subr.mxu0 0.0
        %1402 = vmatpush1.msra.mxu0 0.0
        %1403 = vmatprep.subr.mxu0 0.0
        %1404 = vmatpush1.msra.mxu0 0.0
        %1405 = vmatprep.subr.mxu0 0.0
        %1406 = vmatpush1.msra.mxu0 0.0
        %1407 = vmatprep.subr.mxu0 0.0
        %1408 = vmatpush1.msra.mxu0 0.0
        %1409 = vmatprep.subr.mxu0 0.0
        %1410 = vmatpush1.msra.mxu0 0.0
        %1411 = vmatprep.subr.mxu0 0.0
        %1412 = vmatpush1.msra.mxu0 0.0
        %1413 = vmatprep.subr.mxu0 0.0
        %1414 = vmatpush1.msra.mxu0 0.0
        %1415 = vmatprep.subr.mxu0 0.0
        %1416 = vmatpush1.msra.mxu0 0.0
        %1417 = vmatprep.subr.mxu0 0.0
        %1418 = vmatpush1.msra.mxu0 0.0
        %1419 = vmatprep.mubr.f32.mxu0 0.0
        %1420 = vmatmul.mubr.f32.gmra.mrb[0].mxu0 %v1344
        %v1421 = vpop.f32.mrb[0].mxu0
        %v1422 = vadd.f32 0.0, %v1421
        %v1423 = vpop.f32.mrb[0].mxu0
        %1424 = vmatprep.mubr.f32.mxu0 0.0
        %1425 = vmatmul.mubr.f32.gmra.mrb[0].mxu0 %v1347
        %v1426 = vpop.f32.mrb[0].mxu0
        %v1427 = vadd.f32 0.0, %v1426
        %v1428 = vpop.f32.mrb[0].mxu0
        %1429 = vmatprep.mubr.f32.mxu0 0.0
        %1430 = vmatmul.mubr.f32.gmra.mrb[0].mxu0 %v1350
        %v1431 = vpop.f32.mrb[0].mxu0
        %v1432 = vadd.f32 0.0, %v1431
        %v1433 = vpop.f32.mrb[0].mxu0
        %1434 = vmatprep.mubr.f32.mxu0 0.0
        %1435 = vmatmul.mubr.f32.gmra.mrb[0].mxu0 %v1353
        %v1436 = vpop.f32.mrb[0].mxu0
        %v1437 = vadd.f32 0.0, %v1436
        %v1438 = vpop.f32.mrb[0].mxu0
        %1439 = vdwg.mxu0
        %v1440 = vadd.f32 %v1234, %v1422
        %v1441 = vadd.f32 %v1235, %v1427
        %v1442 = vadd.f32 %v1236, %v1432
        %v1443 = vadd.f32 %v1237, %v1437
        %s1444 = scalar_lea.vmem [#allocation5], 128
        %v1445 = vld [vmem:[%s1444] sm:$0xff]
        %v1446 = vld [vmem:[%s1444 + $0x8] sm:$0xff]
        %v1447 = vld [vmem:[%s1444 + $0x10] sm:$0xff]
        %v1448 = vld [vmem:[%s1444 + $0x18] sm:$0xff]
        %v1450 = vsel %vm632, %v1445, 0
        %v1453 = vsel %vm632, %v1446, 0
        %v1456 = vsel %vm632, %v1447, 0
        %v1459 = vsel %vm632, %v1448, 0
        %1461 = vmatprep.subr.mxu0 0.0
        %1462 = vmatpush1.msra.mxu0 %v624
        %1463 = vmatprep.subr.mxu0 0.0
        %1464 = vmatpush1.msra.mxu0 %v625
        %1465 = vmatprep.subr.mxu0 0.0
        %1466 = vmatpush1.msra.mxu0 %v626
        %1467 = vmatprep.subr.mxu0 0.0
        %1468 = vmatpush1.msra.mxu0 %v627
        %1469 = vmatprep.subr.mxu0 0.0
        %1470 = vmatpush1.msra.mxu0 0.0
        %1471 = vmatprep.subr.mxu0 0.0
        %1472 = vmatpush1.msra.mxu0 0.0
        %1473 = vmatprep.subr.mxu0 0.0
        %1474 = vmatpush1.msra.mxu0 0.0
        %1475 = vmatprep.subr.mxu0 0.0
        %1476 = vmatpush1.msra.mxu0 0.0
        %1477 = vmatprep.subr.mxu0 0.0
        %1478 = vmatpush1.msra.mxu0 0.0
        %1479 = vmatprep.subr.mxu0 0.0
        %1480 = vmatpush1.msra.mxu0 0.0
        %1481 = vmatprep.subr.mxu0 0.0
        %1482 = vmatpush1.msra.mxu0 0.0
        %1483 = vmatprep.subr.mxu0 0.0
        %1484 = vmatpush1.msra.mxu0 0.0
        %1485 = vmatprep.subr.mxu0 0.0
        %1486 = vmatpush1.msra.mxu0 0.0
        %1487 = vmatprep.subr.mxu0 0.0
        %1488 = vmatpush1.msra.mxu0 0.0
        %1489 = vmatprep.subr.mxu0 0.0
        %1490 = vmatpush1.msra.mxu0 0.0
        %1491 = vmatprep.subr.mxu0 0.0
        %1492 = vmatpush1.msra.mxu0 0.0
        %1493 = vmatprep.subr.mxu0 0.0
        %1494 = vmatpush1.msra.mxu0 0.0
        %1495 = vmatprep.subr.mxu0 0.0
        %1496 = vmatpush1.msra.mxu0 0.0
        %1497 = vmatprep.subr.mxu0 0.0
        %1498 = vmatpush1.msra.mxu0 0.0
        %1499 = vmatprep.subr.mxu0 0.0
        %1500 = vmatpush1.msra.mxu0 0.0
        %1501 = vmatprep.subr.mxu0 0.0
        %1502 = vmatpush1.msra.mxu0 0.0
        %1503 = vmatprep.subr.mxu0 0.0
        %1504 = vmatpush1.msra.mxu0 0.0
        %1505 = vmatprep.subr.mxu0 0.0
        %1506 = vmatpush1.msra.mxu0 0.0
        %1507 = vmatprep.subr.mxu0 0.0
        %1508 = vmatpush1.msra.mxu0 0.0
        %1509 = vmatprep.subr.mxu0 0.0
        %1510 = vmatpush1.msra.mxu0 0.0
        %1511 = vmatprep.subr.mxu0 0.0
        %1512 = vmatpush1.msra.mxu0 0.0
        %1513 = vmatprep.subr.mxu0 0.0
        %1514 = vmatpush1.msra.mxu0 0.0
        %1515 = vmatprep.subr.mxu0 0.0
        %1516 = vmatpush1.msra.mxu0 0.0
        %1517 = vmatprep.subr.mxu0 0.0
        %1518 = vmatpush1.msra.mxu0 0.0
        %1519 = vmatprep.subr.mxu0 0.0
        %1520 = vmatpush1.msra.mxu0 0.0
        %1521 = vmatprep.subr.mxu0 0.0
        %1522 = vmatpush1.msra.mxu0 0.0
        %1523 = vmatprep.subr.mxu0 0.0
        %1524 = vmatpush1.msra.mxu0 0.0
        %1525 = vmatprep.mubr.f32.mxu0 0.0
        %1526 = vmatmul.mubr.f32.gmra.mrb[0].mxu0 %v1450
        %v1527 = vpop.f32.mrb[0].mxu0
        %v1528 = vadd.f32 0.0, %v1527
        %v1529 = vpop.f32.mrb[0].mxu0
        %1530 = vmatprep.mubr.f32.mxu0 0.0
        %1531 = vmatmul.mubr.f32.gmra.mrb[0].mxu0 %v1453
        %v1532 = vpop.f32.mrb[0].mxu0
        %v1533 = vadd.f32 0.0, %v1532
        %v1534 = vpop.f32.mrb[0].mxu0
        %1535 = vmatprep.mubr.f32.mxu0 0.0
        %1536 = vmatmul.mubr.f32.gmra.mrb[0].mxu0 %v1456
        %v1537 = vpop.f32.mrb[0].mxu0
        %v1538 = vadd.f32 0.0, %v1537
        %v1539 = vpop.f32.mrb[0].mxu0
        %1540 = vmatprep.mubr.f32.mxu0 0.0
        %1541 = vmatmul.mubr.f32.gmra.mrb[0].mxu0 %v1459
        %v1542 = vpop.f32.mrb[0].mxu0
        %v1543 = vadd.f32 0.0, %v1542
        %v1544 = vpop.f32.mrb[0].mxu0
        %1545 = vdwg.mxu0
        %s1546 = scalar_lea.vmem %s6, 64
        %v1547 = vld [vmem:[%s1546] sm:$0xff]
        %v1548 = vld [vmem:[%s1546 + $0x8] sm:$0xff]
        %v1550 = vsel %vm837, %v1528, 0
        %v1553 = vsel %vm837, %v1533, 0
        %v1556 = vsel %vm837, %v1538, 0
        %v1559 = vsel %vm837, %v1543, 0
        %1561 = vmatprep.subr.mxu0 0.0
        %1562 = vmatpush1.msra.mxu0 %v1547
        %1563 = vmatprep.subr.mxu0 0.0
        %1564 = vmatpush1.msra.mxu0 %v1548
        %1565 = vmatprep.subr.mxu0 0.0
        %1566 = vmatpush1.msra.mxu0 0.0
        %1567 = vmatprep.subr.mxu0 0.0
        %1568 = vmatpush1.msra.mxu0 0.0
        %1569 = vmatprep.subr.mxu0 0.0
        %1570 = vmatpush1.msra.mxu0 0.0
        %1571 = vmatprep.subr.mxu0 0.0
        %1572 = vmatpush1.msra.mxu0 0.0
        %1573 = vmatprep.subr.mxu0 0.0
        %1574 = vmatpush1.msra.mxu0 0.0
        %1575 = vmatprep.subr.mxu0 0.0
        %1576 = vmatpush1.msra.mxu0 0.0
        %1577 = vmatprep.subr.mxu0 0.0
        %1578 = vmatpush1.msra.mxu0 0.0
        %1579 = vmatprep.subr.mxu0 0.0
        %1580 = vmatpush1.msra.mxu0 0.0
        %1581 = vmatprep.subr.mxu0 0.0
        %1582 = vmatpush1.msra.mxu0 0.0
        %1583 = vmatprep.subr.mxu0 0.0
        %1584 = vmatpush1.msra.mxu0 0.0
        %1585 = vmatprep.subr.mxu0 0.0
        %1586 = vmatpush1.msra.mxu0 0.0
        %1587 = vmatprep.subr.mxu0 0.0
        %1588 = vmatpush1.msra.mxu0 0.0
        %1589 = vmatprep.subr.mxu0 0.0
        %1590 = vmatpush1.msra.mxu0 0.0
        %1591 = vmatprep.subr.mxu0 0.0
        %1592 = vmatpush1.msra.mxu0 0.0
        %1593 = vmatprep.subr.mxu0 0.0
        %1594 = vmatpush1.msra.mxu0 0.0
        %1595 = vmatprep.subr.mxu0 0.0
        %1596 = vmatpush1.msra.mxu0 0.0
        %1597 = vmatprep.subr.mxu0 0.0
        %1598 = vmatpush1.msra.mxu0 0.0
        %1599 = vmatprep.subr.mxu0 0.0
        %1600 = vmatpush1.msra.mxu0 0.0
        %1601 = vmatprep.subr.mxu0 0.0
        %1602 = vmatpush1.msra.mxu0 0.0
        %1603 = vmatprep.subr.mxu0 0.0
        %1604 = vmatpush1.msra.mxu0 0.0
        %1605 = vmatprep.subr.mxu0 0.0
        %1606 = vmatpush1.msra.mxu0 0.0
        %1607 = vmatprep.subr.mxu0 0.0
        %1608 = vmatpush1.msra.mxu0 0.0
        %1609 = vmatprep.subr.mxu0 0.0
        %1610 = vmatpush1.msra.mxu0 0.0
        %1611 = vmatprep.subr.mxu0 0.0
        %1612 = vmatpush1.msra.mxu0 0.0
        %1613 = vmatprep.subr.mxu0 0.0
        %1614 = vmatpush1.msra.mxu0 0.0
        %1615 = vmatprep.subr.mxu0 0.0
        %1616 = vmatpush1.msra.mxu0 0.0
        %1617 = vmatprep.subr.mxu0 0.0
        %1618 = vmatpush1.msra.mxu0 0.0
        %1619 = vmatprep.subr.mxu0 0.0
        %1620 = vmatpush1.msra.mxu0 0.0
        %1621 = vmatprep.subr.mxu0 0.0
        %1622 = vmatpush1.msra.mxu0 0.0
        %1623 = vmatprep.subr.mxu0 0.0
        %1624 = vmatpush1.msra.mxu0 0.0
        %1625 = vmatprep.mubr.f32.mxu0 0.0
        %1626 = vmatmul.mubr.f32.gmra.mrb[0].mxu0 %v1550
        %v1627 = vpop.f32.mrb[0].mxu0
        %v1628 = vadd.f32 0.0, %v1627
        %v1629 = vpop.f32.mrb[0].mxu0
        %1630 = vmatprep.mubr.f32.mxu0 0.0
        %1631 = vmatmul.mubr.f32.gmra.mrb[0].mxu0 %v1553
        %v1632 = vpop.f32.mrb[0].mxu0
        %v1633 = vadd.f32 0.0, %v1632
        %v1634 = vpop.f32.mrb[0].mxu0
        %1635 = vmatprep.mubr.f32.mxu0 0.0
        %1636 = vmatmul.mubr.f32.gmra.mrb[0].mxu0 %v1556
        %v1637 = vpop.f32.mrb[0].mxu0
        %v1638 = vadd.f32 0.0, %v1637
        %v1639 = vpop.f32.mrb[0].mxu0
        %1640 = vmatprep.mubr.f32.mxu0 0.0
        %1641 = vmatmul.mubr.f32.gmra.mrb[0].mxu0 %v1559
        %v1642 = vpop.f32.mrb[0].mxu0
        %v1643 = vadd.f32 0.0, %v1642
        %v1644 = vpop.f32.mrb[0].mxu0
        %1645 = vdwg.mxu0
        %v1646 = vadd.f32 %v1440, %v1628
        %v1647 = vadd.f32 %v1441, %v1633
        %v1648 = vadd.f32 %v1442, %v1638
        %v1649 = vadd.f32 %v1443, %v1643
        %s1650 = scalar_lea.vmem [#allocation5], 160
        %v1651 = vld [vmem:[%s1650] sm:$0xff]
        %v1652 = vld [vmem:[%s1650 + $0x8] sm:$0xff]
        %v1653 = vld [vmem:[%s1650 + $0x10] sm:$0xff]
        %v1654 = vld [vmem:[%s1650 + $0x18] sm:$0xff]
        %v1656 = vsel %vm632, %v1651, 0
        %v1659 = vsel %vm632, %v1652, 0
        %v1662 = vsel %vm632, %v1653, 0
        %v1665 = vsel %vm632, %v1654, 0
        %1667 = vmatprep.subr.mxu0 0.0
        %1668 = vmatpush1.msra.mxu0 %v624
        %1669 = vmatprep.subr.mxu0 0.0
        %1670 = vmatpush1.msra.mxu0 %v625
        %1671 = vmatprep.subr.mxu0 0.0
        %1672 = vmatpush1.msra.mxu0 %v626
        %1673 = vmatprep.subr.mxu0 0.0
        %1674 = vmatpush1.msra.mxu0 %v627
        %1675 = vmatprep.subr.mxu0 0.0
        %1676 = vmatpush1.msra.mxu0 0.0
        %1677 = vmatprep.subr.mxu0 0.0
        %1678 = vmatpush1.msra.mxu0 0.0
        %1679 = vmatprep.subr.mxu0 0.0
        %1680 = vmatpush1.msra.mxu0 0.0
        %1681 = vmatprep.subr.mxu0 0.0
        %1682 = vmatpush1.msra.mxu0 0.0
        %1683 = vmatprep.subr.mxu0 0.0
        %1684 = vmatpush1.msra.mxu0 0.0
        %1685 = vmatprep.subr.mxu0 0.0
        %1686 = vmatpush1.msra.mxu0 0.0
        %1687 = vmatprep.subr.mxu0 0.0
        %1688 = vmatpush1.msra.mxu0 0.0
        %1689 = vmatprep.subr.mxu0 0.0
        %1690 = vmatpush1.msra.mxu0 0.0
        %1691 = vmatprep.subr.mxu0 0.0
        %1692 = vmatpush1.msra.mxu0 0.0
        %1693 = vmatprep.subr.mxu0 0.0
        %1694 = vmatpush1.msra.mxu0 0.0
        %1695 = vmatprep.subr.mxu0 0.0
        %1696 = vmatpush1.msra.mxu0 0.0
        %1697 = vmatprep.subr.mxu0 0.0
        %1698 = vmatpush1.msra.mxu0 0.0
        %1699 = vmatprep.subr.mxu0 0.0
        %1700 = vmatpush1.msra.mxu0 0.0
        %1701 = vmatprep.subr.mxu0 0.0
        %1702 = vmatpush1.msra.mxu0 0.0
        %1703 = vmatprep.subr.mxu0 0.0
        %1704 = vmatpush1.msra.mxu0 0.0
        %1705 = vmatprep.subr.mxu0 0.0
        %1706 = vmatpush1.msra.mxu0 0.0
        %1707 = vmatprep.subr.mxu0 0.0
        %1708 = vmatpush1.msra.mxu0 0.0
        %1709 = vmatprep.subr.mxu0 0.0
        %1710 = vmatpush1.msra.mxu0 0.0
        %1711 = vmatprep.subr.mxu0 0.0
        %1712 = vmatpush1.msra.mxu0 0.0
        %1713 = vmatprep.subr.mxu0 0.0
        %1714 = vmatpush1.msra.mxu0 0.0
        %1715 = vmatprep.subr.mxu0 0.0
        %1716 = vmatpush1.msra.mxu0 0.0
        %1717 = vmatprep.subr.mxu0 0.0
        %1718 = vmatpush1.msra.mxu0 0.0
        %1719 = vmatprep.subr.mxu0 0.0
        %1720 = vmatpush1.msra.mxu0 0.0
        %1721 = vmatprep.subr.mxu0 0.0
        %1722 = vmatpush1.msra.mxu0 0.0
        %1723 = vmatprep.subr.mxu0 0.0
        %1724 = vmatpush1.msra.mxu0 0.0
        %1725 = vmatprep.subr.mxu0 0.0
        %1726 = vmatpush1.msra.mxu0 0.0
        %1727 = vmatprep.subr.mxu0 0.0
        %1728 = vmatpush1.msra.mxu0 0.0
        %1729 = vmatprep.subr.mxu0 0.0
        %1730 = vmatpush1.msra.mxu0 0.0
        %1731 = vmatprep.mubr.f32.mxu0 0.0
        %1732 = vmatmul.mubr.f32.gmra.mrb[0].mxu0 %v1656
        %v1733 = vpop.f32.mrb[0].mxu0
        %v1734 = vadd.f32 0.0, %v1733
        %v1735 = vpop.f32.mrb[0].mxu0
        %1736 = vmatprep.mubr.f32.mxu0 0.0
        %1737 = vmatmul.mubr.f32.gmra.mrb[0].mxu0 %v1659
        %v1738 = vpop.f32.mrb[0].mxu0
        %v1739 = vadd.f32 0.0, %v1738
        %v1740 = vpop.f32.mrb[0].mxu0
        %1741 = vmatprep.mubr.f32.mxu0 0.0
        %1742 = vmatmul.mubr.f32.gmra.mrb[0].mxu0 %v1662
        %v1743 = vpop.f32.mrb[0].mxu0
        %v1744 = vadd.f32 0.0, %v1743
        %v1745 = vpop.f32.mrb[0].mxu0
        %1746 = vmatprep.mubr.f32.mxu0 0.0
        %1747 = vmatmul.mubr.f32.gmra.mrb[0].mxu0 %v1665
        %v1748 = vpop.f32.mrb[0].mxu0
        %v1749 = vadd.f32 0.0, %v1748
        %v1750 = vpop.f32.mrb[0].mxu0
        %1751 = vdwg.mxu0
        %s1752 = scalar_lea.vmem %s6, 80
        %v1753 = vld [vmem:[%s1752] sm:$0xff]
        %v1754 = vld [vmem:[%s1752 + $0x8] sm:$0xff]
        %v1756 = vsel %vm837, %v1734, 0
        %v1759 = vsel %vm837, %v1739, 0
        %v1762 = vsel %vm837, %v1744, 0
        %v1765 = vsel %vm837, %v1749, 0
        %1767 = vmatprep.subr.mxu0 0.0
        %1768 = vmatpush1.msra.mxu0 %v1753
        %1769 = vmatprep.subr.mxu0 0.0
        %1770 = vmatpush1.msra.mxu0 %v1754
        %1771 = vmatprep.subr.mxu0 0.0
        %1772 = vmatpush1.msra.mxu0 0.0
        %1773 = vmatprep.subr.mxu0 0.0
        %1774 = vmatpush1.msra.mxu0 0.0
        %1775 = vmatprep.subr.mxu0 0.0
        %1776 = vmatpush1.msra.mxu0 0.0
        %1777 = vmatprep.subr.mxu0 0.0
        %1778 = vmatpush1.msra.mxu0 0.0
        %1779 = vmatprep.subr.mxu0 0.0
        %1780 = vmatpush1.msra.mxu0 0.0
        %1781 = vmatprep.subr.mxu0 0.0
        %1782 = vmatpush1.msra.mxu0 0.0
        %1783 = vmatprep.subr.mxu0 0.0
        %1784 = vmatpush1.msra.mxu0 0.0
        %1785 = vmatprep.subr.mxu0 0.0
        %1786 = vmatpush1.msra.mxu0 0.0
        %1787 = vmatprep.subr.mxu0 0.0
        %1788 = vmatpush1.msra.mxu0 0.0
        %1789 = vmatprep.subr.mxu0 0.0
        %1790 = vmatpush1.msra.mxu0 0.0
        %1791 = vmatprep.subr.mxu0 0.0
        %1792 = vmatpush1.msra.mxu0 0.0
        %1793 = vmatprep.subr.mxu0 0.0
        %1794 = vmatpush1.msra.mxu0 0.0
        %1795 = vmatprep.subr.mxu0 0.0
        %1796 = vmatpush1.msra.mxu0 0.0
        %1797 = vmatprep.subr.mxu0 0.0
        %1798 = vmatpush1.msra.mxu0 0.0
        %1799 = vmatprep.subr.mxu0 0.0
        %1800 = vmatpush1.msra.mxu0 0.0
        %1801 = vmatprep.subr.mxu0 0.0
        %1802 = vmatpush1.msra.mxu0 0.0
        %1803 = vmatprep.subr.mxu0 0.0
        %1804 = vmatpush1.msra.mxu0 0.0
        %1805 = vmatprep.subr.mxu0 0.0
        %1806 = vmatpush1.msra.mxu0 0.0
        %1807 = vmatprep.subr.mxu0 0.0
        %1808 = vmatpush1.msra.mxu0 0.0
        %1809 = vmatprep.subr.mxu0 0.0
        %1810 = vmatpush1.msra.mxu0 0.0
        %1811 = vmatprep.subr.mxu0 0.0
        %1812 = vmatpush1.msra.mxu0 0.0
        %1813 = vmatprep.subr.mxu0 0.0
        %1814 = vmatpush1.msra.mxu0 0.0
        %1815 = vmatprep.subr.mxu0 0.0
        %1816 = vmatpush1.msra.mxu0 0.0
        %1817 = vmatprep.subr.mxu0 0.0
        %1818 = vmatpush1.msra.mxu0 0.0
        %1819 = vmatprep.subr.mxu0 0.0
        %1820 = vmatpush1.msra.mxu0 0.0
        %1821 = vmatprep.subr.mxu0 0.0
        %1822 = vmatpush1.msra.mxu0 0.0
        %1823 = vmatprep.subr.mxu0 0.0
        %1824 = vmatpush1.msra.mxu0 0.0
        %1825 = vmatprep.subr.mxu0 0.0
        %1826 = vmatpush1.msra.mxu0 0.0
        %1827 = vmatprep.subr.mxu0 0.0
        %1828 = vmatpush1.msra.mxu0 0.0
        %1829 = vmatprep.subr.mxu0 0.0
        %1830 = vmatpush1.msra.mxu0 0.0
        %1831 = vmatprep.mubr.f32.mxu0 0.0
        %1832 = vmatmul.mubr.f32.gmra.mrb[0].mxu0 %v1756
        %v1833 = vpop.f32.mrb[0].mxu0
        %v1834 = vadd.f32 0.0, %v1833
        %v1835 = vpop.f32.mrb[0].mxu0
        %1836 = vmatprep.mubr.f32.mxu0 0.0
        %1837 = vmatmul.mubr.f32.gmra.mrb[0].mxu0 %v1759
        %v1838 = vpop.f32.mrb[0].mxu0
        %v1839 = vadd.f32 0.0, %v1838
        %v1840 = vpop.f32.mrb[0].mxu0
        %1841 = vmatprep.mubr.f32.mxu0 0.0
        %1842 = vmatmul.mubr.f32.gmra.mrb[0].mxu0 %v1762
        %v1843 = vpop.f32.mrb[0].mxu0
        %v1844 = vadd.f32 0.0, %v1843
        %v1845 = vpop.f32.mrb[0].mxu0
        %1846 = vmatprep.mubr.f32.mxu0 0.0
        %1847 = vmatmul.mubr.f32.gmra.mrb[0].mxu0 %v1765
        %v1848 = vpop.f32.mrb[0].mxu0
        %v1849 = vadd.f32 0.0, %v1848
        %v1850 = vpop.f32.mrb[0].mxu0
        %1851 = vdwg.mxu0
        %v1852 = vadd.f32 %v1646, %v1834
        %v1853 = vadd.f32 %v1647, %v1839
        %v1854 = vadd.f32 %v1648, %v1844
        %v1855 = vadd.f32 %v1649, %v1849
        %s1856 = scalar_lea.vmem [#allocation5], 192
        %v1857 = vld [vmem:[%s1856] sm:$0xff]
        %v1858 = vld [vmem:[%s1856 + $0x8] sm:$0xff]
        %v1859 = vld [vmem:[%s1856 + $0x10] sm:$0xff]
        %v1860 = vld [vmem:[%s1856 + $0x18] sm:$0xff]
        %v1862 = vsel %vm632, %v1857, 0
        %v1865 = vsel %vm632, %v1858, 0
        %v1868 = vsel %vm632, %v1859, 0
        %v1871 = vsel %vm632, %v1860, 0
        %1873 = vmatprep.subr.mxu0 0.0
        %1874 = vmatpush1.msra.mxu0 %v624
        %1875 = vmatprep.subr.mxu0 0.0
        %1876 = vmatpush1.msra.mxu0 %v625
        %1877 = vmatprep.subr.mxu0 0.0
        %1878 = vmatpush1.msra.mxu0 %v626
        %1879 = vmatprep.subr.mxu0 0.0
        %1880 = vmatpush1.msra.mxu0 %v627
        %1881 = vmatprep.subr.mxu0 0.0
        %1882 = vmatpush1.msra.mxu0 0.0
        %1883 = vmatprep.subr.mxu0 0.0
        %1884 = vmatpush1.msra.mxu0 0.0
        %1885 = vmatprep.subr.mxu0 0.0
        %1886 = vmatpush1.msra.mxu0 0.0
        %1887 = vmatprep.subr.mxu0 0.0
        %1888 = vmatpush1.msra.mxu0 0.0
        %1889 = vmatprep.subr.mxu0 0.0
        %1890 = vmatpush1.msra.mxu0 0.0
        %1891 = vmatprep.subr.mxu0 0.0
        %1892 = vmatpush1.msra.mxu0 0.0
        %1893 = vmatprep.subr.mxu0 0.0
        %1894 = vmatpush1.msra.mxu0 0.0
        %1895 = vmatprep.subr.mxu0 0.0
        %1896 = vmatpush1.msra.mxu0 0.0
        %1897 = vmatprep.subr.mxu0 0.0
        %1898 = vmatpush1.msra.mxu0 0.0
        %1899 = vmatprep.subr.mxu0 0.0
        %1900 = vmatpush1.msra.mxu0 0.0
        %1901 = vmatprep.subr.mxu0 0.0
        %1902 = vmatpush1.msra.mxu0 0.0
        %1903 = vmatprep.subr.mxu0 0.0
        %1904 = vmatpush1.msra.mxu0 0.0
        %1905 = vmatprep.subr.mxu0 0.0
        %1906 = vmatpush1.msra.mxu0 0.0
        %1907 = vmatprep.subr.mxu0 0.0
        %1908 = vmatpush1.msra.mxu0 0.0
        %1909 = vmatprep.subr.mxu0 0.0
        %1910 = vmatpush1.msra.mxu0 0.0
        %1911 = vmatprep.subr.mxu0 0.0
        %1912 = vmatpush1.msra.mxu0 0.0
        %1913 = vmatprep.subr.mxu0 0.0
        %1914 = vmatpush1.msra.mxu0 0.0
        %1915 = vmatprep.subr.mxu0 0.0
        %1916 = vmatpush1.msra.mxu0 0.0
        %1917 = vmatprep.subr.mxu0 0.0
        %1918 = vmatpush1.msra.mxu0 0.0
        %1919 = vmatprep.subr.mxu0 0.0
        %1920 = vmatpush1.msra.mxu0 0.0
        %1921 = vmatprep.subr.mxu0 0.0
        %1922 = vmatpush1.msra.mxu0 0.0
        %1923 = vmatprep.subr.mxu0 0.0
        %1924 = vmatpush1.msra.mxu0 0.0
        %1925 = vmatprep.subr.mxu0 0.0
        %1926 = vmatpush1.msra.mxu0 0.0
        %1927 = vmatprep.subr.mxu0 0.0
        %1928 = vmatpush1.msra.mxu0 0.0
        %1929 = vmatprep.subr.mxu0 0.0
        %1930 = vmatpush1.msra.mxu0 0.0
        %1931 = vmatprep.subr.mxu0 0.0
        %1932 = vmatpush1.msra.mxu0 0.0
        %1933 = vmatprep.subr.mxu0 0.0
        %1934 = vmatpush1.msra.mxu0 0.0
        %1935 = vmatprep.subr.mxu0 0.0
        %1936 = vmatpush1.msra.mxu0 0.0
        %1937 = vmatprep.mubr.f32.mxu0 0.0
        %1938 = vmatmul.mubr.f32.gmra.mrb[0].mxu0 %v1862
        %v1939 = vpop.f32.mrb[0].mxu0
        %v1940 = vadd.f32 0.0, %v1939
        %v1941 = vpop.f32.mrb[0].mxu0
        %1942 = vmatprep.mubr.f32.mxu0 0.0
        %1943 = vmatmul.mubr.f32.gmra.mrb[0].mxu0 %v1865
        %v1944 = vpop.f32.mrb[0].mxu0
        %v1945 = vadd.f32 0.0, %v1944
        %v1946 = vpop.f32.mrb[0].mxu0
        %1947 = vmatprep.mubr.f32.mxu0 0.0
        %1948 = vmatmul.mubr.f32.gmra.mrb[0].mxu0 %v1868
        %v1949 = vpop.f32.mrb[0].mxu0
        %v1950 = vadd.f32 0.0, %v1949
        %v1951 = vpop.f32.mrb[0].mxu0
        %1952 = vmatprep.mubr.f32.mxu0 0.0
        %1953 = vmatmul.mubr.f32.gmra.mrb[0].mxu0 %v1871
        %v1954 = vpop.f32.mrb[0].mxu0
        %v1955 = vadd.f32 0.0, %v1954
        %v1956 = vpop.f32.mrb[0].mxu0
        %1957 = vdwg.mxu0
        %s1958 = scalar_lea.vmem %s6, 96
        %v1959 = vld [vmem:[%s1958] sm:$0xff]
        %v1960 = vld [vmem:[%s1958 + $0x8] sm:$0xff]
        %v1962 = vsel %vm837, %v1940, 0
        %v1965 = vsel %vm837, %v1945, 0
        %v1968 = vsel %vm837, %v1950, 0
        %v1971 = vsel %vm837, %v1955, 0
        %1973 = vmatprep.subr.mxu0 0.0
        %1974 = vmatpush1.msra.mxu0 %v1959
        %1975 = vmatprep.subr.mxu0 0.0
        %1976 = vmatpush1.msra.mxu0 %v1960
        %1977 = vmatprep.subr.mxu0 0.0
        %1978 = vmatpush1.msra.mxu0 0.0
        %1979 = vmatprep.subr.mxu0 0.0
        %1980 = vmatpush1.msra.mxu0 0.0
        %1981 = vmatprep.subr.mxu0 0.0
        %1982 = vmatpush1.msra.mxu0 0.0
        %1983 = vmatprep.subr.mxu0 0.0
        %1984 = vmatpush1.msra.mxu0 0.0
        %1985 = vmatprep.subr.mxu0 0.0
        %1986 = vmatpush1.msra.mxu0 0.0
        %1987 = vmatprep.subr.mxu0 0.0
        %1988 = vmatpush1.msra.mxu0 0.0
        %1989 = vmatprep.subr.mxu0 0.0
        %1990 = vmatpush1.msra.mxu0 0.0
        %1991 = vmatprep.subr.mxu0 0.0
        %1992 = vmatpush1.msra.mxu0 0.0
        %1993 = vmatprep.subr.mxu0 0.0
        %1994 = vmatpush1.msra.mxu0 0.0
        %1995 = vmatprep.subr.mxu0 0.0
        %1996 = vmatpush1.msra.mxu0 0.0
        %1997 = vmatprep.subr.mxu0 0.0
        %1998 = vmatpush1.msra.mxu0 0.0
        %1999 = vmatprep.subr.mxu0 0.0
        %2000 = vmatpush1.msra.mxu0 0.0
        %2001 = vmatprep.subr.mxu0 0.0
        %2002 = vmatpush1.msra.mxu0 0.0
        %2003 = vmatprep.subr.mxu0 0.0
        %2004 = vmatpush1.msra.mxu0 0.0
        %2005 = vmatprep.subr.mxu0 0.0
        %2006 = vmatpush1.msra.mxu0 0.0
        %2007 = vmatprep.subr.mxu0 0.0
        %2008 = vmatpush1.msra.mxu0 0.0
        %2009 = vmatprep.subr.mxu0 0.0
        %2010 = vmatpush1.msra.mxu0 0.0
        %2011 = vmatprep.subr.mxu0 0.0
        %2012 = vmatpush1.msra.mxu0 0.0
        %2013 = vmatprep.subr.mxu0 0.0
        %2014 = vmatpush1.msra.mxu0 0.0
        %2015 = vmatprep.subr.mxu0 0.0
        %2016 = vmatpush1.msra.mxu0 0.0
        %2017 = vmatprep.subr.mxu0 0.0
        %2018 = vmatpush1.msra.mxu0 0.0
        %2019 = vmatprep.subr.mxu0 0.0
        %2020 = vmatpush1.msra.mxu0 0.0
        %2021 = vmatprep.subr.mxu0 0.0
        %2022 = vmatpush1.msra.mxu0 0.0
        %2023 = vmatprep.subr.mxu0 0.0
        %2024 = vmatpush1.msra.mxu0 0.0
        %2025 = vmatprep.subr.mxu0 0.0
        %2026 = vmatpush1.msra.mxu0 0.0
        %2027 = vmatprep.subr.mxu0 0.0
        %2028 = vmatpush1.msra.mxu0 0.0
        %2029 = vmatprep.subr.mxu0 0.0
        %2030 = vmatpush1.msra.mxu0 0.0
        %2031 = vmatprep.subr.mxu0 0.0
        %2032 = vmatpush1.msra.mxu0 0.0
        %2033 = vmatprep.subr.mxu0 0.0
        %2034 = vmatpush1.msra.mxu0 0.0
        %2035 = vmatprep.subr.mxu0 0.0
        %2036 = vmatpush1.msra.mxu0 0.0
        %2037 = vmatprep.mubr.f32.mxu0 0.0
        %2038 = vmatmul.mubr.f32.gmra.mrb[0].mxu0 %v1962
        %v2039 = vpop.f32.mrb[0].mxu0
        %v2040 = vadd.f32 0.0, %v2039
        %v2041 = vpop.f32.mrb[0].mxu0
        %2042 = vmatprep.mubr.f32.mxu0 0.0
        %2043 = vmatmul.mubr.f32.gmra.mrb[0].mxu0 %v1965
        %v2044 = vpop.f32.mrb[0].mxu0
        %v2045 = vadd.f32 0.0, %v2044
        %v2046 = vpop.f32.mrb[0].mxu0
        %2047 = vmatprep.mubr.f32.mxu0 0.0
        %2048 = vmatmul.mubr.f32.gmra.mrb[0].mxu0 %v1968
        %v2049 = vpop.f32.mrb[0].mxu0
        %v2050 = vadd.f32 0.0, %v2049
        %v2051 = vpop.f32.mrb[0].mxu0
        %2052 = vmatprep.mubr.f32.mxu0 0.0
        %2053 = vmatmul.mubr.f32.gmra.mrb[0].mxu0 %v1971
        %v2054 = vpop.f32.mrb[0].mxu0
        %v2055 = vadd.f32 0.0, %v2054
        %v2056 = vpop.f32.mrb[0].mxu0
        %2057 = vdwg.mxu0
        %v2058 = vadd.f32 %v1852, %v2040
        %v2059 = vadd.f32 %v1853, %v2045
        %v2060 = vadd.f32 %v1854, %v2050
        %v2061 = vadd.f32 %v1855, %v2055
        %s2062 = scalar_lea.vmem [#allocation5], 224
        %v2063 = vld [vmem:[%s2062] sm:$0xff]
        %v2064 = vld [vmem:[%s2062 + $0x8] sm:$0xff]
        %v2065 = vld [vmem:[%s2062 + $0x10] sm:$0xff]
        %v2066 = vld [vmem:[%s2062 + $0x18] sm:$0xff]
        %v2068 = vsel %vm632, %v2063, 0
        %v2071 = vsel %vm632, %v2064, 0
        %v2074 = vsel %vm632, %v2065, 0
        %v2077 = vsel %vm632, %v2066, 0
        %2079 = vmatprep.subr.mxu0 0.0
        %2080 = vmatpush1.msra.mxu0 %v624
        %2081 = vmatprep.subr.mxu0 0.0
        %2082 = vmatpush1.msra.mxu0 %v625
        %2083 = vmatprep.subr.mxu0 0.0
        %2084 = vmatpush1.msra.mxu0 %v626
        %2085 = vmatprep.subr.mxu0 0.0
        %2086 = vmatpush1.msra.mxu0 %v627
        %2087 = vmatprep.subr.mxu0 0.0
        %2088 = vmatpush1.msra.mxu0 0.0
        %2089 = vmatprep.subr.mxu0 0.0
        %2090 = vmatpush1.msra.mxu0 0.0
        %2091 = vmatprep.subr.mxu0 0.0
        %2092 = vmatpush1.msra.mxu0 0.0
        %2093 = vmatprep.subr.mxu0 0.0
        %2094 = vmatpush1.msra.mxu0 0.0
        %2095 = vmatprep.subr.mxu0 0.0
        %2096 = vmatpush1.msra.mxu0 0.0
        %2097 = vmatprep.subr.mxu0 0.0
        %2098 = vmatpush1.msra.mxu0 0.0
        %2099 = vmatprep.subr.mxu0 0.0
        %2100 = vmatpush1.msra.mxu0 0.0
        %2101 = vmatprep.subr.mxu0 0.0
        %2102 = vmatpush1.msra.mxu0 0.0
        %2103 = vmatprep.subr.mxu0 0.0
        %2104 = vmatpush1.msra.mxu0 0.0
        %2105 = vmatprep.subr.mxu0 0.0
        %2106 = vmatpush1.msra.mxu0 0.0
        %2107 = vmatprep.subr.mxu0 0.0
        %2108 = vmatpush1.msra.mxu0 0.0
        %2109 = vmatprep.subr.mxu0 0.0
        %2110 = vmatpush1.msra.mxu0 0.0
        %2111 = vmatprep.subr.mxu0 0.0
        %2112 = vmatpush1.msra.mxu0 0.0
        %2113 = vmatprep.subr.mxu0 0.0
        %2114 = vmatpush1.msra.mxu0 0.0
        %2115 = vmatprep.subr.mxu0 0.0
        %2116 = vmatpush1.msra.mxu0 0.0
        %2117 = vmatprep.subr.mxu0 0.0
        %2118 = vmatpush1.msra.mxu0 0.0
        %2119 = vmatprep.subr.mxu0 0.0
        %2120 = vmatpush1.msra.mxu0 0.0
        %2121 = vmatprep.subr.mxu0 0.0
        %2122 = vmatpush1.msra.mxu0 0.0
        %2123 = vmatprep.subr.mxu0 0.0
        %2124 = vmatpush1.msra.mxu0 0.0
        %2125 = vmatprep.subr.mxu0 0.0
        %2126 = vmatpush1.msra.mxu0 0.0
        %2127 = vmatprep.subr.mxu0 0.0
        %2128 = vmatpush1.msra.mxu0 0.0
        %2129 = vmatprep.subr.mxu0 0.0
        %2130 = vmatpush1.msra.mxu0 0.0
        %2131 = vmatprep.subr.mxu0 0.0
        %2132 = vmatpush1.msra.mxu0 0.0
        %2133 = vmatprep.subr.mxu0 0.0
        %2134 = vmatpush1.msra.mxu0 0.0
        %2135 = vmatprep.subr.mxu0 0.0
        %2136 = vmatpush1.msra.mxu0 0.0
        %2137 = vmatprep.subr.mxu0 0.0
        %2138 = vmatpush1.msra.mxu0 0.0
        %2139 = vmatprep.subr.mxu0 0.0
        %2140 = vmatpush1.msra.mxu0 0.0
        %2141 = vmatprep.subr.mxu0 0.0
        %2142 = vmatpush1.msra.mxu0 0.0
        %2143 = vmatprep.mubr.f32.mxu0 0.0
        %2144 = vmatmul.mubr.f32.gmra.mrb[0].mxu0 %v2068
        %v2145 = vpop.f32.mrb[0].mxu0
        %v2146 = vadd.f32 0.0, %v2145
        %v2147 = vpop.f32.mrb[0].mxu0
        %2148 = vmatprep.mubr.f32.mxu0 0.0
        %2149 = vmatmul.mubr.f32.gmra.mrb[0].mxu0 %v2071
        %v2150 = vpop.f32.mrb[0].mxu0
        %v2151 = vadd.f32 0.0, %v2150
        %v2152 = vpop.f32.mrb[0].mxu0
        %2153 = vmatprep.mubr.f32.mxu0 0.0
        %2154 = vmatmul.mubr.f32.gmra.mrb[0].mxu0 %v2074
        %v2155 = vpop.f32.mrb[0].mxu0
        %v2156 = vadd.f32 0.0, %v2155
        %v2157 = vpop.f32.mrb[0].mxu0
        %2158 = vmatprep.mubr.f32.mxu0 0.0
        %2159 = vmatmul.mubr.f32.gmra.mrb[0].mxu0 %v2077
        %v2160 = vpop.f32.mrb[0].mxu0
        %v2161 = vadd.f32 0.0, %v2160
        %v2162 = vpop.f32.mrb[0].mxu0
        %2163 = vdwg.mxu0
        %s2164 = scalar_lea.vmem %s6, 112
        %v2165 = vld [vmem:[%s2164] sm:$0xff]
        %v2166 = vld [vmem:[%s2164 + $0x8] sm:$0xff]
        %v2168 = vsel %vm837, %v2146, 0
        %v2171 = vsel %vm837, %v2151, 0
        %v2174 = vsel %vm837, %v2156, 0
        %v2177 = vsel %vm837, %v2161, 0
        %2179 = vmatprep.subr.mxu0 0.0
        %2180 = vmatpush1.msra.mxu0 %v2165
        %2181 = vmatprep.subr.mxu0 0.0
        %2182 = vmatpush1.msra.mxu0 %v2166
        %2183 = vmatprep.subr.mxu0 0.0
        %2184 = vmatpush1.msra.mxu0 0.0
        %2185 = vmatprep.subr.mxu0 0.0
        %2186 = vmatpush1.msra.mxu0 0.0
        %2187 = vmatprep.subr.mxu0 0.0
        %2188 = vmatpush1.msra.mxu0 0.0
        %2189 = vmatprep.subr.mxu0 0.0
        %2190 = vmatpush1.msra.mxu0 0.0
        %2191 = vmatprep.subr.mxu0 0.0
        %2192 = vmatpush1.msra.mxu0 0.0
        %2193 = vmatprep.subr.mxu0 0.0
        %2194 = vmatpush1.msra.mxu0 0.0
        %2195 = vmatprep.subr.mxu0 0.0
        %2196 = vmatpush1.msra.mxu0 0.0
        %2197 = vmatprep.subr.mxu0 0.0
        %2198 = vmatpush1.msra.mxu0 0.0
        %2199 = vmatprep.subr.mxu0 0.0
        %2200 = vmatpush1.msra.mxu0 0.0
        %2201 = vmatprep.subr.mxu0 0.0
        %2202 = vmatpush1.msra.mxu0 0.0
        %2203 = vmatprep.subr.mxu0 0.0
        %2204 = vmatpush1.msra.mxu0 0.0
        %2205 = vmatprep.subr.mxu0 0.0
        %2206 = vmatpush1.msra.mxu0 0.0
        %2207 = vmatprep.subr.mxu0 0.0
        %2208 = vmatpush1.msra.mxu0 0.0
        %2209 = vmatprep.subr.mxu0 0.0
        %2210 = vmatpush1.msra.mxu0 0.0
        %2211 = vmatprep.subr.mxu0 0.0
        %2212 = vmatpush1.msra.mxu0 0.0
        %2213 = vmatprep.subr.mxu0 0.0
        %2214 = vmatpush1.msra.mxu0 0.0
        %2215 = vmatprep.subr.mxu0 0.0
        %2216 = vmatpush1.msra.mxu0 0.0
        %2217 = vmatprep.subr.mxu0 0.0
        %2218 = vmatpush1.msra.mxu0 0.0
        %2219 = vmatprep.subr.mxu0 0.0
        %2220 = vmatpush1.msra.mxu0 0.0
        %2221 = vmatprep.subr.mxu0 0.0
        %2222 = vmatpush1.msra.mxu0 0.0
        %2223 = vmatprep.subr.mxu0 0.0
        %2224 = vmatpush1.msra.mxu0 0.0
        %2225 = vmatprep.subr.mxu0 0.0
        %2226 = vmatpush1.msra.mxu0 0.0
        %2227 = vmatprep.subr.mxu0 0.0
        %2228 = vmatpush1.msra.mxu0 0.0
        %2229 = vmatprep.subr.mxu0 0.0
        %2230 = vmatpush1.msra.mxu0 0.0
        %2231 = vmatprep.subr.mxu0 0.0
        %2232 = vmatpush1.msra.mxu0 0.0
        %2233 = vmatprep.subr.mxu0 0.0
        %2234 = vmatpush1.msra.mxu0 0.0
        %2235 = vmatprep.subr.mxu0 0.0
        %2236 = vmatpush1.msra.mxu0 0.0
        %2237 = vmatprep.subr.mxu0 0.0
        %2238 = vmatpush1.msra.mxu0 0.0
        %2239 = vmatprep.subr.mxu0 0.0
        %2240 = vmatpush1.msra.mxu0 0.0
        %2241 = vmatprep.subr.mxu0 0.0
        %2242 = vmatpush1.msra.mxu0 0.0
        %2243 = vmatprep.mubr.f32.mxu0 0.0
        %2244 = vmatmul.mubr.f32.gmra.mrb[0].mxu0 %v2168
        %v2245 = vpop.f32.mrb[0].mxu0
        %v2246 = vadd.f32 0.0, %v2245
        %v2247 = vpop.f32.mrb[0].mxu0
        %2248 = vmatprep.mubr.f32.mxu0 0.0
        %2249 = vmatmul.mubr.f32.gmra.mrb[0].mxu0 %v2171
        %v2250 = vpop.f32.mrb[0].mxu0
        %v2251 = vadd.f32 0.0, %v2250
        %v2252 = vpop.f32.mrb[0].mxu0
        %2253 = vmatprep.mubr.f32.mxu0 0.0
        %2254 = vmatmul.mubr.f32.gmra.mrb[0].mxu0 %v2174
        %v2255 = vpop.f32.mrb[0].mxu0
        %v2256 = vadd.f32 0.0, %v2255
        %v2257 = vpop.f32.mrb[0].mxu0
        %2258 = vmatprep.mubr.f32.mxu0 0.0
        %2259 = vmatmul.mubr.f32.gmra.mrb[0].mxu0 %v2177
        %v2260 = vpop.f32.mrb[0].mxu0
        %v2261 = vadd.f32 0.0, %v2260
        %v2262 = vpop.f32.mrb[0].mxu0
        %2263 = vdwg.mxu0
        %v2264 = vadd.f32 %v2058, %v2246
        %v2265 = vadd.f32 %v2059, %v2251
        %v2266 = vadd.f32 %v2060, %v2256
        %v2267 = vadd.f32 %v2061, %v2261
        %s2268 = scalar_lea.vmem [#allocation5], 256
        %v2269 = vld [vmem:[%s2268] sm:$0xff]
        %v2270 = vld [vmem:[%s2268 + $0x8] sm:$0xff]
        %v2271 = vld [vmem:[%s2268 + $0x10] sm:$0xff]
        %v2272 = vld [vmem:[%s2268 + $0x18] sm:$0xff]
        %v2274 = vsel %vm632, %v2269, 0
        %v2277 = vsel %vm632, %v2270, 0
        %v2280 = vsel %vm632, %v2271, 0
        %v2283 = vsel %vm632, %v2272, 0
        %2285 = vmatprep.subr.mxu0 0.0
        %2286 = vmatpush1.msra.mxu0 %v624
        %2287 = vmatprep.subr.mxu0 0.0
        %2288 = vmatpush1.msra.mxu0 %v625
        %2289 = vmatprep.subr.mxu0 0.0
        %2290 = vmatpush1.msra.mxu0 %v626
        %2291 = vmatprep.subr.mxu0 0.0
        %2292 = vmatpush1.msra.mxu0 %v627
        %2293 = vmatprep.subr.mxu0 0.0
        %2294 = vmatpush1.msra.mxu0 0.0
        %2295 = vmatprep.subr.mxu0 0.0
        %2296 = vmatpush1.msra.mxu0 0.0
        %2297 = vmatprep.subr.mxu0 0.0
        %2298 = vmatpush1.msra.mxu0 0.0
        %2299 = vmatprep.subr.mxu0 0.0
        %2300 = vmatpush1.msra.mxu0 0.0
        %2301 = vmatprep.subr.mxu0 0.0
        %2302 = vmatpush1.msra.mxu0 0.0
        %2303 = vmatprep.subr.mxu0 0.0
        %2304 = vmatpush1.msra.mxu0 0.0
        %2305 = vmatprep.subr.mxu0 0.0
        %2306 = vmatpush1.msra.mxu0 0.0
        %2307 = vmatprep.subr.mxu0 0.0
        %2308 = vmatpush1.msra.mxu0 0.0
        %2309 = vmatprep.subr.mxu0 0.0
        %2310 = vmatpush1.msra.mxu0 0.0
        %2311 = vmatprep.subr.mxu0 0.0
        %2312 = vmatpush1.msra.mxu0 0.0
        %2313 = vmatprep.subr.mxu0 0.0
        %2314 = vmatpush1.msra.mxu0 0.0
        %2315 = vmatprep.subr.mxu0 0.0
        %2316 = vmatpush1.msra.mxu0 0.0
        %2317 = vmatprep.subr.mxu0 0.0
        %2318 = vmatpush1.msra.mxu0 0.0
        %2319 = vmatprep.subr.mxu0 0.0
        %2320 = vmatpush1.msra.mxu0 0.0
        %2321 = vmatprep.subr.mxu0 0.0
        %2322 = vmatpush1.msra.mxu0 0.0
        %2323 = vmatprep.subr.mxu0 0.0
        %2324 = vmatpush1.msra.mxu0 0.0
        %2325 = vmatprep.subr.mxu0 0.0
        %2326 = vmatpush1.msra.mxu0 0.0
        %2327 = vmatprep.subr.mxu0 0.0
        %2328 = vmatpush1.msra.mxu0 0.0
        %2329 = vmatprep.subr.mxu0 0.0
        %2330 = vmatpush1.msra.mxu0 0.0
        %2331 = vmatprep.subr.mxu0 0.0
        %2332 = vmatpush1.msra.mxu0 0.0
        %2333 = vmatprep.subr.mxu0 0.0
        %2334 = vmatpush1.msra.mxu0 0.0
        %2335 = vmatprep.subr.mxu0 0.0
        %2336 = vmatpush1.msra.mxu0 0.0
        %2337 = vmatprep.subr.mxu0 0.0
        %2338 = vmatpush1.msra.mxu0 0.0
        %2339 = vmatprep.subr.mxu0 0.0
        %2340 = vmatpush1.msra.mxu0 0.0
        %2341 = vmatprep.subr.mxu0 0.0
        %2342 = vmatpush1.msra.mxu0 0.0
        %2343 = vmatprep.subr.mxu0 0.0
        %2344 = vmatpush1.msra.mxu0 0.0
        %2345 = vmatprep.subr.mxu0 0.0
        %2346 = vmatpush1.msra.mxu0 0.0
        %2347 = vmatprep.subr.mxu0 0.0
        %2348 = vmatpush1.msra.mxu0 0.0
        %2349 = vmatprep.mubr.f32.mxu0 0.0
        %2350 = vmatmul.mubr.f32.gmra.mrb[0].mxu0 %v2274
        %v2351 = vpop.f32.mrb[0].mxu0
        %v2352 = vadd.f32 0.0, %v2351
        %v2353 = vpop.f32.mrb[0].mxu0
        %2354 = vmatprep.mubr.f32.mxu0 0.0
        %2355 = vmatmul.mubr.f32.gmra.mrb[0].mxu0 %v2277
        %v2356 = vpop.f32.mrb[0].mxu0
        %v2357 = vadd.f32 0.0, %v2356
        %v2358 = vpop.f32.mrb[0].mxu0
        %2359 = vmatprep.mubr.f32.mxu0 0.0
        %2360 = vmatmul.mubr.f32.gmra.mrb[0].mxu0 %v2280
        %v2361 = vpop.f32.mrb[0].mxu0
        %v2362 = vadd.f32 0.0, %v2361
        %v2363 = vpop.f32.mrb[0].mxu0
        %2364 = vmatprep.mubr.f32.mxu0 0.0
        %2365 = vmatmul.mubr.f32.gmra.mrb[0].mxu0 %v2283
        %v2366 = vpop.f32.mrb[0].mxu0
        %v2367 = vadd.f32 0.0, %v2366
        %v2368 = vpop.f32.mrb[0].mxu0
        %2369 = vdwg.mxu0
        %s2370 = scalar_lea.vmem %s6, 128
        %v2371 = vld [vmem:[%s2370] sm:$0xff]
        %v2372 = vld [vmem:[%s2370 + $0x8] sm:$0xff]
        %v2374 = vsel %vm837, %v2352, 0
        %v2377 = vsel %vm837, %v2357, 0
        %v2380 = vsel %vm837, %v2362, 0
        %v2383 = vsel %vm837, %v2367, 0
        %2385 = vmatprep.subr.mxu0 0.0
        %2386 = vmatpush1.msra.mxu0 %v2371
        %2387 = vmatprep.subr.mxu0 0.0
        %2388 = vmatpush1.msra.mxu0 %v2372
        %2389 = vmatprep.subr.mxu0 0.0
        %2390 = vmatpush1.msra.mxu0 0.0
        %2391 = vmatprep.subr.mxu0 0.0
        %2392 = vmatpush1.msra.mxu0 0.0
        %2393 = vmatprep.subr.mxu0 0.0
        %2394 = vmatpush1.msra.mxu0 0.0
        %2395 = vmatprep.subr.mxu0 0.0
        %2396 = vmatpush1.msra.mxu0 0.0
        %2397 = vmatprep.subr.mxu0 0.0
        %2398 = vmatpush1.msra.mxu0 0.0
        %2399 = vmatprep.subr.mxu0 0.0
        %2400 = vmatpush1.msra.mxu0 0.0
        %2401 = vmatprep.subr.mxu0 0.0
        %2402 = vmatpush1.msra.mxu0 0.0
        %2403 = vmatprep.subr.mxu0 0.0
        %2404 = vmatpush1.msra.mxu0 0.0
        %2405 = vmatprep.subr.mxu0 0.0
        %2406 = vmatpush1.msra.mxu0 0.0
        %2407 = vmatprep.subr.mxu0 0.0
        %2408 = vmatpush1.msra.mxu0 0.0
        %2409 = vmatprep.subr.mxu0 0.0
        %2410 = vmatpush1.msra.mxu0 0.0
        %2411 = vmatprep.subr.mxu0 0.0
        %2412 = vmatpush1.msra.mxu0 0.0
        %2413 = vmatprep.subr.mxu0 0.0
        %2414 = vmatpush1.msra.mxu0 0.0
        %2415 = vmatprep.subr.mxu0 0.0
        %2416 = vmatpush1.msra.mxu0 0.0
        %2417 = vmatprep.subr.mxu0 0.0
        %2418 = vmatpush1.msra.mxu0 0.0
        %2419 = vmatprep.subr.mxu0 0.0
        %2420 = vmatpush1.msra.mxu0 0.0
        %2421 = vmatprep.subr.mxu0 0.0
        %2422 = vmatpush1.msra.mxu0 0.0
        %2423 = vmatprep.subr.mxu0 0.0
        %2424 = vmatpush1.msra.mxu0 0.0
        %2425 = vmatprep.subr.mxu0 0.0
        %2426 = vmatpush1.msra.mxu0 0.0
        %2427 = vmatprep.subr.mxu0 0.0
        %2428 = vmatpush1.msra.mxu0 0.0
        %2429 = vmatprep.subr.mxu0 0.0
        %2430 = vmatpush1.msra.mxu0 0.0
        %2431 = vmatprep.subr.mxu0 0.0
        %2432 = vmatpush1.msra.mxu0 0.0
        %2433 = vmatprep.subr.mxu0 0.0
        %2434 = vmatpush1.msra.mxu0 0.0
        %2435 = vmatprep.subr.mxu0 0.0
        %2436 = vmatpush1.msra.mxu0 0.0
        %2437 = vmatprep.subr.mxu0 0.0
        %2438 = vmatpush1.msra.mxu0 0.0
        %2439 = vmatprep.subr.mxu0 0.0
        %2440 = vmatpush1.msra.mxu0 0.0
        %2441 = vmatprep.subr.mxu0 0.0
        %2442 = vmatpush1.msra.mxu0 0.0
        %2443 = vmatprep.subr.mxu0 0.0
        %2444 = vmatpush1.msra.mxu0 0.0
        %2445 = vmatprep.subr.mxu0 0.0
        %2446 = vmatpush1.msra.mxu0 0.0
        %2447 = vmatprep.subr.mxu0 0.0
        %2448 = vmatpush1.msra.mxu0 0.0
        %2449 = vmatprep.mubr.f32.mxu0 0.0
        %2450 = vmatmul.mubr.f32.gmra.mrb[0].mxu0 %v2374
        %v2451 = vpop.f32.mrb[0].mxu0
        %v2452 = vadd.f32 0.0, %v2451
        %v2453 = vpop.f32.mrb[0].mxu0
        %2454 = vmatprep.mubr.f32.mxu0 0.0
        %2455 = vmatmul.mubr.f32.gmra.mrb[0].mxu0 %v2377
        %v2456 = vpop.f32.mrb[0].mxu0
        %v2457 = vadd.f32 0.0, %v2456
        %v2458 = vpop.f32.mrb[0].mxu0
        %2459 = vmatprep.mubr.f32.mxu0 0.0
        %2460 = vmatmul.mubr.f32.gmra.mrb[0].mxu0 %v2380
        %v2461 = vpop.f32.mrb[0].mxu0
        %v2462 = vadd.f32 0.0, %v2461
        %v2463 = vpop.f32.mrb[0].mxu0
        %2464 = vmatprep.mubr.f32.mxu0 0.0
        %2465 = vmatmul.mubr.f32.gmra.mrb[0].mxu0 %v2383
        %v2466 = vpop.f32.mrb[0].mxu0
        %v2467 = vadd.f32 0.0, %v2466
        %v2468 = vpop.f32.mrb[0].mxu0
        %2469 = vdwg.mxu0
        %v2470 = vadd.f32 %v2264, %v2452
        %v2471 = vadd.f32 %v2265, %v2457
        %v2472 = vadd.f32 %v2266, %v2462
        %v2473 = vadd.f32 %v2267, %v2467
        %v2474 = vld [vmem:[%s3] sm:$0xff]
        %v2475 = vld [vmem:[%s3 + $0x8] sm:$0xff]
        %v2476 = vld [vmem:[%s3 + $0x10] sm:$0xff]
        %v2477 = vld [vmem:[%s3 + $0x18] sm:$0xff]
        %2479 = vset.pattern.permute.xlu0 0
        %2480 = vperm.xlu0 %2479, %v2474
        %v2481 = vpop.permute.xlu0 %2480
        %2484 = vset.pattern.permute.xlu0 0
        %2485 = vperm.xlu0 %2484, %v2475
        %v2486 = vpop.permute.xlu0 %2485
        %2489 = vset.pattern.permute.xlu0 0
        %2490 = vperm.xlu0 %2489, %v2476
        %v2491 = vpop.permute.xlu0 %2490
        %2494 = vset.pattern.permute.xlu0 0
        %2495 = vperm.xlu0 %2494, %v2477
        %v2496 = vpop.permute.xlu0 %2495
        %v2498 = vadd.f32 %v2470, %v2481
        %v2499 = vadd.f32 %v2471, %v2486
        %v2500 = vadd.f32 %v2472, %v2491
        %v2501 = vadd.f32 %v2473, %v2496
        %vm2502 = vcmp.ge.f32.partialorder %v2498, 0.0
        %vm2503 = vcmp.ge.f32.partialorder %v2499, 0.0
        %vm2504 = vcmp.ge.f32.partialorder %v2500, 0.0
        %vm2505 = vcmp.ge.f32.partialorder %v2501, 0.0
        %v2506 = vmul.f32 %v2498, 0.2
        %v2507 = vmul.f32 %v2499, 0.2
        %v2508 = vmul.f32 %v2500, 0.2
        %v2509 = vmul.f32 %v2501, 0.2
        %v2510 = vsel %vm2502, %v2498, %v2506
        %v2511 = vsel %vm2503, %v2499, %v2507
        %v2512 = vsel %vm2504, %v2500, %v2508
        %v2513 = vsel %vm2505, %v2501, %v2509
        %v2514 = vld [vmem:[#allocation8] sm:$0xff]
        %v2515 = vld [vmem:[#allocation8 + $0x8] sm:$0xff]
        %v2516 = vld [vmem:[#allocation8 + $0x10] sm:$0xff]
        %v2517 = vld [vmem:[#allocation8 + $0x18] sm:$0xff]
        %v2519 = vsel %vm632, %v2514, 0
        %v2522 = vsel %vm632, %v2515, 0
        %v2525 = vsel %vm632, %v2516, 0
        %v2528 = vsel %vm632, %v2517, 0
        %2530 = vmatprep.subr.mxu0 0.0
        %2531 = vmatpush1.msra.mxu0 %v2510
        %2532 = vmatprep.subr.mxu0 0.0
        %2533 = vmatpush1.msra.mxu0 %v2511
        %2534 = vmatprep.subr.mxu0 0.0
        %2535 = vmatpush1.msra.mxu0 %v2512
        %2536 = vmatprep.subr.mxu0 0.0
        %2537 = vmatpush1.msra.mxu0 %v2513
        %2538 = vmatprep.subr.mxu0 0.0
        %2539 = vmatpush1.msra.mxu0 0.0
        %2540 = vmatprep.subr.mxu0 0.0
        %2541 = vmatpush1.msra.mxu0 0.0
        %2542 = vmatprep.subr.mxu0 0.0
        %2543 = vmatpush1.msra.mxu0 0.0
        %2544 = vmatprep.subr.mxu0 0.0
        %2545 = vmatpush1.msra.mxu0 0.0
        %2546 = vmatprep.subr.mxu0 0.0
        %2547 = vmatpush1.msra.mxu0 0.0
        %2548 = vmatprep.subr.mxu0 0.0
        %2549 = vmatpush1.msra.mxu0 0.0
        %2550 = vmatprep.subr.mxu0 0.0
        %2551 = vmatpush1.msra.mxu0 0.0
        %2552 = vmatprep.subr.mxu0 0.0
        %2553 = vmatpush1.msra.mxu0 0.0
        %2554 = vmatprep.subr.mxu0 0.0
        %2555 = vmatpush1.msra.mxu0 0.0
        %2556 = vmatprep.subr.mxu0 0.0
        %2557 = vmatpush1.msra.mxu0 0.0
        %2558 = vmatprep.subr.mxu0 0.0
        %2559 = vmatpush1.msra.mxu0 0.0
        %2560 = vmatprep.subr.mxu0 0.0
        %2561 = vmatpush1.msra.mxu0 0.0
        %2562 = vmatprep.subr.mxu0 0.0
        %2563 = vmatpush1.msra.mxu0 0.0
        %2564 = vmatprep.subr.mxu0 0.0
        %2565 = vmatpush1.msra.mxu0 0.0
        %2566 = vmatprep.subr.mxu0 0.0
        %2567 = vmatpush1.msra.mxu0 0.0
        %2568 = vmatprep.subr.mxu0 0.0
        %2569 = vmatpush1.msra.mxu0 0.0
        %2570 = vmatprep.subr.mxu0 0.0
        %2571 = vmatpush1.msra.mxu0 0.0
        %2572 = vmatprep.subr.mxu0 0.0
        %2573 = vmatpush1.msra.mxu0 0.0
        %2574 = vmatprep.subr.mxu0 0.0
        %2575 = vmatpush1.msra.mxu0 0.0
        %2576 = vmatprep.subr.mxu0 0.0
        %2577 = vmatpush1.msra.mxu0 0.0
        %2578 = vmatprep.subr.mxu0 0.0
        %2579 = vmatpush1.msra.mxu0 0.0
        %2580 = vmatprep.subr.mxu0 0.0
        %2581 = vmatpush1.msra.mxu0 0.0
        %2582 = vmatprep.subr.mxu0 0.0
        %2583 = vmatpush1.msra.mxu0 0.0
        %2584 = vmatprep.subr.mxu0 0.0
        %2585 = vmatpush1.msra.mxu0 0.0
        %2586 = vmatprep.subr.mxu0 0.0
        %2587 = vmatpush1.msra.mxu0 0.0
        %2588 = vmatprep.subr.mxu0 0.0
        %2589 = vmatpush1.msra.mxu0 0.0
        %2590 = vmatprep.subr.mxu0 0.0
        %2591 = vmatpush1.msra.mxu0 0.0
        %2592 = vmatprep.subr.mxu0 0.0
        %2593 = vmatpush1.msra.mxu0 0.0
        %2594 = vmatprep.mubr.f32.mxu0 0.0
        %2595 = vmatmul.mubr.f32.gmra.mrb[0].mxu0 %v2519
        %v2596 = vpop.f32.mrb[0].mxu0
        %v2597 = vadd.f32 0.0, %v2596
        %v2598 = vpop.f32.mrb[0].mxu0
        %2599 = vmatprep.mubr.f32.mxu0 0.0
        %2600 = vmatmul.mubr.f32.gmra.mrb[0].mxu0 %v2522
        %v2601 = vpop.f32.mrb[0].mxu0
        %v2602 = vadd.f32 0.0, %v2601
        %v2603 = vpop.f32.mrb[0].mxu0
        %2604 = vmatprep.mubr.f32.mxu0 0.0
        %2605 = vmatmul.mubr.f32.gmra.mrb[0].mxu0 %v2525
        %v2606 = vpop.f32.mrb[0].mxu0
        %v2607 = vadd.f32 0.0, %v2606
        %v2608 = vpop.f32.mrb[0].mxu0
        %2609 = vmatprep.mubr.f32.mxu0 0.0
        %2610 = vmatmul.mubr.f32.gmra.mrb[0].mxu0 %v2528
        %v2611 = vpop.f32.mrb[0].mxu0
        %v2612 = vadd.f32 0.0, %v2611
        %v2613 = vpop.f32.mrb[0].mxu0
        %2614 = vdwg.mxu0
        %s2615 = scalar_lea.vmem [#allocation8], 32
        %v2616 = vld [vmem:[%s2615] sm:$0xff]
        %v2617 = vld [vmem:[%s2615 + $0x8] sm:$0xff]
        %v2618 = vld [vmem:[%s2615 + $0x10] sm:$0xff]
        %v2619 = vld [vmem:[%s2615 + $0x18] sm:$0xff]
        %v2621 = vsel %vm632, %v2616, 0
        %v2624 = vsel %vm632, %v2617, 0
        %v2627 = vsel %vm632, %v2618, 0
        %v2630 = vsel %vm632, %v2619, 0
        %2632 = vmatprep.subr.mxu0 0.0
        %2633 = vmatpush1.msra.mxu0 %v2510
        %2634 = vmatprep.subr.mxu0 0.0
        %2635 = vmatpush1.msra.mxu0 %v2511
        %2636 = vmatprep.subr.mxu0 0.0
        %2637 = vmatpush1.msra.mxu0 %v2512
        %2638 = vmatprep.subr.mxu0 0.0
        %2639 = vmatpush1.msra.mxu0 %v2513
        %2640 = vmatprep.subr.mxu0 0.0
        %2641 = vmatpush1.msra.mxu0 0.0
        %2642 = vmatprep.subr.mxu0 0.0
        %2643 = vmatpush1.msra.mxu0 0.0
        %2644 = vmatprep.subr.mxu0 0.0
        %2645 = vmatpush1.msra.mxu0 0.0
        %2646 = vmatprep.subr.mxu0 0.0
        %2647 = vmatpush1.msra.mxu0 0.0
        %2648 = vmatprep.subr.mxu0 0.0
        %2649 = vmatpush1.msra.mxu0 0.0
        %2650 = vmatprep.subr.mxu0 0.0
        %2651 = vmatpush1.msra.mxu0 0.0
        %2652 = vmatprep.subr.mxu0 0.0
        %2653 = vmatpush1.msra.mxu0 0.0
        %2654 = vmatprep.subr.mxu0 0.0
        %2655 = vmatpush1.msra.mxu0 0.0
        %2656 = vmatprep.subr.mxu0 0.0
        %2657 = vmatpush1.msra.mxu0 0.0
        %2658 = vmatprep.subr.mxu0 0.0
        %2659 = vmatpush1.msra.mxu0 0.0
        %2660 = vmatprep.subr.mxu0 0.0
        %2661 = vmatpush1.msra.mxu0 0.0
        %2662 = vmatprep.subr.mxu0 0.0
        %2663 = vmatpush1.msra.mxu0 0.0
        %2664 = vmatprep.subr.mxu0 0.0
        %2665 = vmatpush1.msra.mxu0 0.0
        %2666 = vmatprep.subr.mxu0 0.0
        %2667 = vmatpush1.msra.mxu0 0.0
        %2668 = vmatprep.subr.mxu0 0.0
        %2669 = vmatpush1.msra.mxu0 0.0
        %2670 = vmatprep.subr.mxu0 0.0
        %2671 = vmatpush1.msra.mxu0 0.0
        %2672 = vmatprep.subr.mxu0 0.0
        %2673 = vmatpush1.msra.mxu0 0.0
        %2674 = vmatprep.subr.mxu0 0.0
        %2675 = vmatpush1.msra.mxu0 0.0
        %2676 = vmatprep.subr.mxu0 0.0
        %2677 = vmatpush1.msra.mxu0 0.0
        %2678 = vmatprep.subr.mxu0 0.0
        %2679 = vmatpush1.msra.mxu0 0.0
        %2680 = vmatprep.subr.mxu0 0.0
        %2681 = vmatpush1.msra.mxu0 0.0
        %2682 = vmatprep.subr.mxu0 0.0
        %2683 = vmatpush1.msra.mxu0 0.0
        %2684 = vmatprep.subr.mxu0 0.0
        %2685 = vmatpush1.msra.mxu0 0.0
        %2686 = vmatprep.subr.mxu0 0.0
        %2687 = vmatpush1.msra.mxu0 0.0
        %2688 = vmatprep.subr.mxu0 0.0
        %2689 = vmatpush1.msra.mxu0 0.0
        %2690 = vmatprep.subr.mxu0 0.0
        %2691 = vmatpush1.msra.mxu0 0.0
        %2692 = vmatprep.subr.mxu0 0.0
        %2693 = vmatpush1.msra.mxu0 0.0
        %2694 = vmatprep.subr.mxu0 0.0
        %2695 = vmatpush1.msra.mxu0 0.0
        %2696 = vmatprep.mubr.f32.mxu0 0.0
        %2697 = vmatmul.mubr.f32.gmra.mrb[0].mxu0 %v2621
        %v2698 = vpop.f32.mrb[0].mxu0
        %v2699 = vadd.f32 0.0, %v2698
        %v2700 = vpop.f32.mrb[0].mxu0
        %2701 = vmatprep.mubr.f32.mxu0 0.0
        %2702 = vmatmul.mubr.f32.gmra.mrb[0].mxu0 %v2624
        %v2703 = vpop.f32.mrb[0].mxu0
        %v2704 = vadd.f32 0.0, %v2703
        %v2705 = vpop.f32.mrb[0].mxu0
        %2706 = vmatprep.mubr.f32.mxu0 0.0
        %2707 = vmatmul.mubr.f32.gmra.mrb[0].mxu0 %v2627
        %v2708 = vpop.f32.mrb[0].mxu0
        %v2709 = vadd.f32 0.0, %v2708
        %v2710 = vpop.f32.mrb[0].mxu0
        %2711 = vmatprep.mubr.f32.mxu0 0.0
        %2712 = vmatmul.mubr.f32.gmra.mrb[0].mxu0 %v2630
        %v2713 = vpop.f32.mrb[0].mxu0
        %v2714 = vadd.f32 0.0, %v2713
        %v2715 = vpop.f32.mrb[0].mxu0
        %2716 = vdwg.mxu0
        %v2718 = vsel %vm837, %v2699, 0
        %v2721 = vsel %vm837, %v2704, 0
        %v2724 = vsel %vm837, %v2709, 0
        %v2727 = vsel %vm837, %v2714, 0
        %2729 = vmatprep.subr.mxu0 0.0
        %2730 = vmatpush1.msra.mxu0 %v835
        %2731 = vmatprep.subr.mxu0 0.0
        %2732 = vmatpush1.msra.mxu0 %v836
        %2733 = vmatprep.subr.mxu0 0.0
        %2734 = vmatpush1.msra.mxu0 0.0
        %2735 = vmatprep.subr.mxu0 0.0
        %2736 = vmatpush1.msra.mxu0 0.0
        %2737 = vmatprep.subr.mxu0 0.0
        %2738 = vmatpush1.msra.mxu0 0.0
        %2739 = vmatprep.subr.mxu0 0.0
        %2740 = vmatpush1.msra.mxu0 0.0
        %2741 = vmatprep.subr.mxu0 0.0
        %2742 = vmatpush1.msra.mxu0 0.0
        %2743 = vmatprep.subr.mxu0 0.0
        %2744 = vmatpush1.msra.mxu0 0.0
        %2745 = vmatprep.subr.mxu0 0.0
        %2746 = vmatpush1.msra.mxu0 0.0
        %2747 = vmatprep.subr.mxu0 0.0
        %2748 = vmatpush1.msra.mxu0 0.0
        %2749 = vmatprep.subr.mxu0 0.0
        %2750 = vmatpush1.msra.mxu0 0.0
        %2751 = vmatprep.subr.mxu0 0.0
        %2752 = vmatpush1.msra.mxu0 0.0
        %2753 = vmatprep.subr.mxu0 0.0
        %2754 = vmatpush1.msra.mxu0 0.0
        %2755 = vmatprep.subr.mxu0 0.0
        %2756 = vmatpush1.msra.mxu0 0.0
        %2757 = vmatprep.subr.mxu0 0.0
        %2758 = vmatpush1.msra.mxu0 0.0
        %2759 = vmatprep.subr.mxu0 0.0
        %2760 = vmatpush1.msra.mxu0 0.0
        %2761 = vmatprep.subr.mxu0 0.0
        %2762 = vmatpush1.msra.mxu0 0.0
        %2763 = vmatprep.subr.mxu0 0.0
        %2764 = vmatpush1.msra.mxu0 0.0
        %2765 = vmatprep.subr.mxu0 0.0
        %2766 = vmatpush1.msra.mxu0 0.0
        %2767 = vmatprep.subr.mxu0 0.0
        %2768 = vmatpush1.msra.mxu0 0.0
        %2769 = vmatprep.subr.mxu0 0.0
        %2770 = vmatpush1.msra.mxu0 0.0
        %2771 = vmatprep.subr.mxu0 0.0
        %2772 = vmatpush1.msra.mxu0 0.0
        %2773 = vmatprep.subr.mxu0 0.0
        %2774 = vmatpush1.msra.mxu0 0.0
        %2775 = vmatprep.subr.mxu0 0.0
        %2776 = vmatpush1.msra.mxu0 0.0
        %2777 = vmatprep.subr.mxu0 0.0
        %2778 = vmatpush1.msra.mxu0 0.0
        %2779 = vmatprep.subr.mxu0 0.0
        %2780 = vmatpush1.msra.mxu0 0.0
        %2781 = vmatprep.subr.mxu0 0.0
        %2782 = vmatpush1.msra.mxu0 0.0
        %2783 = vmatprep.subr.mxu0 0.0
        %2784 = vmatpush1.msra.mxu0 0.0
        %2785 = vmatprep.subr.mxu0 0.0
        %2786 = vmatpush1.msra.mxu0 0.0
        %2787 = vmatprep.subr.mxu0 0.0
        %2788 = vmatpush1.msra.mxu0 0.0
        %2789 = vmatprep.subr.mxu0 0.0
        %2790 = vmatpush1.msra.mxu0 0.0
        %2791 = vmatprep.subr.mxu0 0.0
        %2792 = vmatpush1.msra.mxu0 0.0
        %2793 = vmatprep.mubr.f32.mxu0 0.0
        %2794 = vmatmul.mubr.f32.gmra.mrb[0].mxu0 %v2718
        %v2795 = vpop.f32.mrb[0].mxu0
        %v2796 = vadd.f32 0.0, %v2795
        %v2797 = vpop.f32.mrb[0].mxu0
        %2798 = vmatprep.mubr.f32.mxu0 0.0
        %2799 = vmatmul.mubr.f32.gmra.mrb[0].mxu0 %v2721
        %v2800 = vpop.f32.mrb[0].mxu0
        %v2801 = vadd.f32 0.0, %v2800
        %v2802 = vpop.f32.mrb[0].mxu0
        %2803 = vmatprep.mubr.f32.mxu0 0.0
        %2804 = vmatmul.mubr.f32.gmra.mrb[0].mxu0 %v2724
        %v2805 = vpop.f32.mrb[0].mxu0
        %v2806 = vadd.f32 0.0, %v2805
        %v2807 = vpop.f32.mrb[0].mxu0
        %2808 = vmatprep.mubr.f32.mxu0 0.0
        %2809 = vmatmul.mubr.f32.gmra.mrb[0].mxu0 %v2727
        %v2810 = vpop.f32.mrb[0].mxu0
        %v2811 = vadd.f32 0.0, %v2810
        %v2812 = vpop.f32.mrb[0].mxu0
        %2813 = vdwg.mxu0
        %v2815 = vsel %vm837, %v2597, 0
        %v2818 = vsel %vm837, %v2602, 0
        %v2821 = vsel %vm837, %v2607, 0
        %v2824 = vsel %vm837, %v2612, 0
        %2826 = vmatprep.subr.mxu0 0.0
        %2827 = vmatpush1.msra.mxu0 %v730
        %2828 = vmatprep.subr.mxu0 0.0
        %2829 = vmatpush1.msra.mxu0 %v731
        %2830 = vmatprep.subr.mxu0 0.0
        %2831 = vmatpush1.msra.mxu0 0.0
        %2832 = vmatprep.subr.mxu0 0.0
        %2833 = vmatpush1.msra.mxu0 0.0
        %2834 = vmatprep.subr.mxu0 0.0
        %2835 = vmatpush1.msra.mxu0 0.0
        %2836 = vmatprep.subr.mxu0 0.0
        %2837 = vmatpush1.msra.mxu0 0.0
        %2838 = vmatprep.subr.mxu0 0.0
        %2839 = vmatpush1.msra.mxu0 0.0
        %2840 = vmatprep.subr.mxu0 0.0
        %2841 = vmatpush1.msra.mxu0 0.0
        %2842 = vmatprep.subr.mxu0 0.0
        %2843 = vmatpush1.msra.mxu0 0.0
        %2844 = vmatprep.subr.mxu0 0.0
        %2845 = vmatpush1.msra.mxu0 0.0
        %2846 = vmatprep.subr.mxu0 0.0
        %2847 = vmatpush1.msra.mxu0 0.0
        %2848 = vmatprep.subr.mxu0 0.0
        %2849 = vmatpush1.msra.mxu0 0.0
        %2850 = vmatprep.subr.mxu0 0.0
        %2851 = vmatpush1.msra.mxu0 0.0
        %2852 = vmatprep.subr.mxu0 0.0
        %2853 = vmatpush1.msra.mxu0 0.0
        %2854 = vmatprep.subr.mxu0 0.0
        %2855 = vmatpush1.msra.mxu0 0.0
        %2856 = vmatprep.subr.mxu0 0.0
        %2857 = vmatpush1.msra.mxu0 0.0
        %2858 = vmatprep.subr.mxu0 0.0
        %2859 = vmatpush1.msra.mxu0 0.0
        %2860 = vmatprep.subr.mxu0 0.0
        %2861 = vmatpush1.msra.mxu0 0.0
        %2862 = vmatprep.subr.mxu0 0.0
        %2863 = vmatpush1.msra.mxu0 0.0
        %2864 = vmatprep.subr.mxu0 0.0
        %2865 = vmatpush1.msra.mxu0 0.0
        %2866 = vmatprep.subr.mxu0 0.0
        %2867 = vmatpush1.msra.mxu0 0.0
        %2868 = vmatprep.subr.mxu0 0.0
        %2869 = vmatpush1.msra.mxu0 0.0
        %2870 = vmatprep.subr.mxu0 0.0
        %2871 = vmatpush1.msra.mxu0 0.0
        %2872 = vmatprep.subr.mxu0 0.0
        %2873 = vmatpush1.msra.mxu0 0.0
        %2874 = vmatprep.subr.mxu0 0.0
        %2875 = vmatpush1.msra.mxu0 0.0
        %2876 = vmatprep.subr.mxu0 0.0
        %2877 = vmatpush1.msra.mxu0 0.0
        %2878 = vmatprep.subr.mxu0 0.0
        %2879 = vmatpush1.msra.mxu0 0.0
        %2880 = vmatprep.subr.mxu0 0.0
        %2881 = vmatpush1.msra.mxu0 0.0
        %2882 = vmatprep.subr.mxu0 0.0
        %2883 = vmatpush1.msra.mxu0 0.0
        %2884 = vmatprep.subr.mxu0 0.0
        %2885 = vmatpush1.msra.mxu0 0.0
        %2886 = vmatprep.subr.mxu0 0.0
        %2887 = vmatpush1.msra.mxu0 0.0
        %2888 = vmatprep.subr.mxu0 0.0
        %2889 = vmatpush1.msra.mxu0 0.0
        %2890 = vmatprep.mubr.f32.mxu0 0.0
        %2891 = vmatmul.mubr.f32.gmra.mrb[0].mxu0 %v2815
        %v2892 = vpop.f32.mrb[0].mxu0
        %v2893 = vadd.f32 %v2796, %v2892
        %v2894 = vpop.f32.mrb[0].mxu0
        %2895 = vmatprep.mubr.f32.mxu0 0.0
        %2896 = vmatmul.mubr.f32.gmra.mrb[0].mxu0 %v2818
        %v2897 = vpop.f32.mrb[0].mxu0
        %v2898 = vadd.f32 %v2801, %v2897
        %v2899 = vpop.f32.mrb[0].mxu0
        %2900 = vmatprep.mubr.f32.mxu0 0.0
        %2901 = vmatmul.mubr.f32.gmra.mrb[0].mxu0 %v2821
        %v2902 = vpop.f32.mrb[0].mxu0
        %v2903 = vadd.f32 %v2806, %v2902
        %v2904 = vpop.f32.mrb[0].mxu0
        %2905 = vmatprep.mubr.f32.mxu0 0.0
        %2906 = vmatmul.mubr.f32.gmra.mrb[0].mxu0 %v2824
        %v2907 = vpop.f32.mrb[0].mxu0
        %v2908 = vadd.f32 %v2811, %v2907
        %v2909 = vpop.f32.mrb[0].mxu0
        %2910 = vdwg.mxu0
        %s2911 = scalar_lea.vmem [#allocation8], 64
        %v2912 = vld [vmem:[%s2911] sm:$0xff]
        %v2913 = vld [vmem:[%s2911 + $0x8] sm:$0xff]
        %v2914 = vld [vmem:[%s2911 + $0x10] sm:$0xff]
        %v2915 = vld [vmem:[%s2911 + $0x18] sm:$0xff]
        %v2917 = vsel %vm632, %v2912, 0
        %v2920 = vsel %vm632, %v2913, 0
        %v2923 = vsel %vm632, %v2914, 0
        %v2926 = vsel %vm632, %v2915, 0
        %2928 = vmatprep.subr.mxu0 0.0
        %2929 = vmatpush1.msra.mxu0 %v2510
        %2930 = vmatprep.subr.mxu0 0.0
        %2931 = vmatpush1.msra.mxu0 %v2511
        %2932 = vmatprep.subr.mxu0 0.0
        %2933 = vmatpush1.msra.mxu0 %v2512
        %2934 = vmatprep.subr.mxu0 0.0
        %2935 = vmatpush1.msra.mxu0 %v2513
        %2936 = vmatprep.subr.mxu0 0.0
        %2937 = vmatpush1.msra.mxu0 0.0
        %2938 = vmatprep.subr.mxu0 0.0
        %2939 = vmatpush1.msra.mxu0 0.0
        %2940 = vmatprep.subr.mxu0 0.0
        %2941 = vmatpush1.msra.mxu0 0.0
        %2942 = vmatprep.subr.mxu0 0.0
        %2943 = vmatpush1.msra.mxu0 0.0
        %2944 = vmatprep.subr.mxu0 0.0
        %2945 = vmatpush1.msra.mxu0 0.0
        %2946 = vmatprep.subr.mxu0 0.0
        %2947 = vmatpush1.msra.mxu0 0.0
        %2948 = vmatprep.subr.mxu0 0.0
        %2949 = vmatpush1.msra.mxu0 0.0
        %2950 = vmatprep.subr.mxu0 0.0
        %2951 = vmatpush1.msra.mxu0 0.0
        %2952 = vmatprep.subr.mxu0 0.0
        %2953 = vmatpush1.msra.mxu0 0.0
        %2954 = vmatprep.subr.mxu0 0.0
        %2955 = vmatpush1.msra.mxu0 0.0
        %2956 = vmatprep.subr.mxu0 0.0
        %2957 = vmatpush1.msra.mxu0 0.0
        %2958 = vmatprep.subr.mxu0 0.0
        %2959 = vmatpush1.msra.mxu0 0.0
        %2960 = vmatprep.subr.mxu0 0.0
        %2961 = vmatpush1.msra.mxu0 0.0
        %2962 = vmatprep.subr.mxu0 0.0
        %2963 = vmatpush1.msra.mxu0 0.0
        %2964 = vmatprep.subr.mxu0 0.0
        %2965 = vmatpush1.msra.mxu0 0.0
        %2966 = vmatprep.subr.mxu0 0.0
        %2967 = vmatpush1.msra.mxu0 0.0
        %2968 = vmatprep.subr.mxu0 0.0
        %2969 = vmatpush1.msra.mxu0 0.0
        %2970 = vmatprep.subr.mxu0 0.0
        %2971 = vmatpush1.msra.mxu0 0.0
        %2972 = vmatprep.subr.mxu0 0.0
        %2973 = vmatpush1.msra.mxu0 0.0
        %2974 = vmatprep.subr.mxu0 0.0
        %2975 = vmatpush1.msra.mxu0 0.0
        %2976 = vmatprep.subr.mxu0 0.0
        %2977 = vmatpush1.msra.mxu0 0.0
        %2978 = vmatprep.subr.mxu0 0.0
        %2979 = vmatpush1.msra.mxu0 0.0
        %2980 = vmatprep.subr.mxu0 0.0
        %2981 = vmatpush1.msra.mxu0 0.0
        %2982 = vmatprep.subr.mxu0 0.0
        %2983 = vmatpush1.msra.mxu0 0.0
        %2984 = vmatprep.subr.mxu0 0.0
        %2985 = vmatpush1.msra.mxu0 0.0
        %2986 = vmatprep.subr.mxu0 0.0
        %2987 = vmatpush1.msra.mxu0 0.0
        %2988 = vmatprep.subr.mxu0 0.0
        %2989 = vmatpush1.msra.mxu0 0.0
        %2990 = vmatprep.subr.mxu0 0.0
        %2991 = vmatpush1.msra.mxu0 0.0
        %2992 = vmatprep.mubr.f32.mxu0 0.0
        %2993 = vmatmul.mubr.f32.gmra.mrb[0].mxu0 %v2917
        %v2994 = vpop.f32.mrb[0].mxu0
        %v2995 = vadd.f32 0.0, %v2994
        %v2996 = vpop.f32.mrb[0].mxu0
        %2997 = vmatprep.mubr.f32.mxu0 0.0
        %2998 = vmatmul.mubr.f32.gmra.mrb[0].mxu0 %v2920
        %v2999 = vpop.f32.mrb[0].mxu0
        %v3000 = vadd.f32 0.0, %v2999
        %v3001 = vpop.f32.mrb[0].mxu0
        %3002 = vmatprep.mubr.f32.mxu0 0.0
        %3003 = vmatmul.mubr.f32.gmra.mrb[0].mxu0 %v2923
        %v3004 = vpop.f32.mrb[0].mxu0
        %v3005 = vadd.f32 0.0, %v3004
        %v3006 = vpop.f32.mrb[0].mxu0
        %3007 = vmatprep.mubr.f32.mxu0 0.0
        %3008 = vmatmul.mubr.f32.gmra.mrb[0].mxu0 %v2926
        %v3009 = vpop.f32.mrb[0].mxu0
        %v3010 = vadd.f32 0.0, %v3009
        %v3011 = vpop.f32.mrb[0].mxu0
        %3012 = vdwg.mxu0
        %v3014 = vsel %vm837, %v2995, 0
        %v3017 = vsel %vm837, %v3000, 0
        %v3020 = vsel %vm837, %v3005, 0
        %v3023 = vsel %vm837, %v3010, 0
        %3025 = vmatprep.subr.mxu0 0.0
        %3026 = vmatpush1.msra.mxu0 %v1135
        %3027 = vmatprep.subr.mxu0 0.0
        %3028 = vmatpush1.msra.mxu0 %v1136
        %3029 = vmatprep.subr.mxu0 0.0
        %3030 = vmatpush1.msra.mxu0 0.0
        %3031 = vmatprep.subr.mxu0 0.0
        %3032 = vmatpush1.msra.mxu0 0.0
        %3033 = vmatprep.subr.mxu0 0.0
        %3034 = vmatpush1.msra.mxu0 0.0
        %3035 = vmatprep.subr.mxu0 0.0
        %3036 = vmatpush1.msra.mxu0 0.0
        %3037 = vmatprep.subr.mxu0 0.0
        %3038 = vmatpush1.msra.mxu0 0.0
        %3039 = vmatprep.subr.mxu0 0.0
        %3040 = vmatpush1.msra.mxu0 0.0
        %3041 = vmatprep.subr.mxu0 0.0
        %3042 = vmatpush1.msra.mxu0 0.0
        %3043 = vmatprep.subr.mxu0 0.0
        %3044 = vmatpush1.msra.mxu0 0.0
        %3045 = vmatprep.subr.mxu0 0.0
        %3046 = vmatpush1.msra.mxu0 0.0
        %3047 = vmatprep.subr.mxu0 0.0
        %3048 = vmatpush1.msra.mxu0 0.0
        %3049 = vmatprep.subr.mxu0 0.0
        %3050 = vmatpush1.msra.mxu0 0.0
        %3051 = vmatprep.subr.mxu0 0.0
        %3052 = vmatpush1.msra.mxu0 0.0
        %3053 = vmatprep.subr.mxu0 0.0
        %3054 = vmatpush1.msra.mxu0 0.0
        %3055 = vmatprep.subr.mxu0 0.0
        %3056 = vmatpush1.msra.mxu0 0.0
        %3057 = vmatprep.subr.mxu0 0.0
        %3058 = vmatpush1.msra.mxu0 0.0
        %3059 = vmatprep.subr.mxu0 0.0
        %3060 = vmatpush1.msra.mxu0 0.0
        %3061 = vmatprep.subr.mxu0 0.0
        %3062 = vmatpush1.msra.mxu0 0.0
        %3063 = vmatprep.subr.mxu0 0.0
        %3064 = vmatpush1.msra.mxu0 0.0
        %3065 = vmatprep.subr.mxu0 0.0
        %3066 = vmatpush1.msra.mxu0 0.0
        %3067 = vmatprep.subr.mxu0 0.0
        %3068 = vmatpush1.msra.mxu0 0.0
        %3069 = vmatprep.subr.mxu0 0.0
        %3070 = vmatpush1.msra.mxu0 0.0
        %3071 = vmatprep.subr.mxu0 0.0
        %3072 = vmatpush1.msra.mxu0 0.0
        %3073 = vmatprep.subr.mxu0 0.0
        %3074 = vmatpush1.msra.mxu0 0.0
        %3075 = vmatprep.subr.mxu0 0.0
        %3076 = vmatpush1.msra.mxu0 0.0
        %3077 = vmatprep.subr.mxu0 0.0
        %3078 = vmatpush1.msra.mxu0 0.0
        %3079 = vmatprep.subr.mxu0 0.0
        %3080 = vmatpush1.msra.mxu0 0.0
        %3081 = vmatprep.subr.mxu0 0.0
        %3082 = vmatpush1.msra.mxu0 0.0
        %3083 = vmatprep.subr.mxu0 0.0
        %3084 = vmatpush1.msra.mxu0 0.0
        %3085 = vmatprep.subr.mxu0 0.0
        %3086 = vmatpush1.msra.mxu0 0.0
        %3087 = vmatprep.subr.mxu0 0.0
        %3088 = vmatpush1.msra.mxu0 0.0
        %3089 = vmatprep.mubr.f32.mxu0 0.0
        %3090 = vmatmul.mubr.f32.gmra.mrb[0].mxu0 %v3014
        %v3091 = vpop.f32.mrb[0].mxu0
        %v3092 = vadd.f32 0.0, %v3091
        %v3093 = vpop.f32.mrb[0].mxu0
        %3094 = vmatprep.mubr.f32.mxu0 0.0
        %3095 = vmatmul.mubr.f32.gmra.mrb[0].mxu0 %v3017
        %v3096 = vpop.f32.mrb[0].mxu0
        %v3097 = vadd.f32 0.0, %v3096
        %v3098 = vpop.f32.mrb[0].mxu0
        %3099 = vmatprep.mubr.f32.mxu0 0.0
        %3100 = vmatmul.mubr.f32.gmra.mrb[0].mxu0 %v3020
        %v3101 = vpop.f32.mrb[0].mxu0
        %v3102 = vadd.f32 0.0, %v3101
        %v3103 = vpop.f32.mrb[0].mxu0
        %3104 = vmatprep.mubr.f32.mxu0 0.0
        %3105 = vmatmul.mubr.f32.gmra.mrb[0].mxu0 %v3023
        %v3106 = vpop.f32.mrb[0].mxu0
        %v3107 = vadd.f32 0.0, %v3106
        %v3108 = vpop.f32.mrb[0].mxu0
        %3109 = vdwg.mxu0
        %v3110 = vadd.f32 %v2893, %v3092
        %v3111 = vadd.f32 %v2898, %v3097
        %v3112 = vadd.f32 %v2903, %v3102
        %v3113 = vadd.f32 %v2908, %v3107
        %s3114 = scalar_lea.vmem [#allocation8], 96
        %v3115 = vld [vmem:[%s3114] sm:$0xff]
        %v3116 = vld [vmem:[%s3114 + $0x8] sm:$0xff]
        %v3117 = vld [vmem:[%s3114 + $0x10] sm:$0xff]
        %v3118 = vld [vmem:[%s3114 + $0x18] sm:$0xff]
        %v3120 = vsel %vm632, %v3115, 0
        %v3123 = vsel %vm632, %v3116, 0
        %v3126 = vsel %vm632, %v3117, 0
        %v3129 = vsel %vm632, %v3118, 0
        %3131 = vmatprep.subr.mxu0 0.0
        %3132 = vmatpush1.msra.mxu0 %v2510
        %3133 = vmatprep.subr.mxu0 0.0
        %3134 = vmatpush1.msra.mxu0 %v2511
        %3135 = vmatprep.subr.mxu0 0.0
        %3136 = vmatpush1.msra.mxu0 %v2512
        %3137 = vmatprep.subr.mxu0 0.0
        %3138 = vmatpush1.msra.mxu0 %v2513
        %3139 = vmatprep.subr.mxu0 0.0
        %3140 = vmatpush1.msra.mxu0 0.0
        %3141 = vmatprep.subr.mxu0 0.0
        %3142 = vmatpush1.msra.mxu0 0.0
        %3143 = vmatprep.subr.mxu0 0.0
        %3144 = vmatpush1.msra.mxu0 0.0
        %3145 = vmatprep.subr.mxu0 0.0
        %3146 = vmatpush1.msra.mxu0 0.0
        %3147 = vmatprep.subr.mxu0 0.0
        %3148 = vmatpush1.msra.mxu0 0.0
        %3149 = vmatprep.subr.mxu0 0.0
        %3150 = vmatpush1.msra.mxu0 0.0
        %3151 = vmatprep.subr.mxu0 0.0
        %3152 = vmatpush1.msra.mxu0 0.0
        %3153 = vmatprep.subr.mxu0 0.0
        %3154 = vmatpush1.msra.mxu0 0.0
        %3155 = vmatprep.subr.mxu0 0.0
        %3156 = vmatpush1.msra.mxu0 0.0
        %3157 = vmatprep.subr.mxu0 0.0
        %3158 = vmatpush1.msra.mxu0 0.0
        %3159 = vmatprep.subr.mxu0 0.0
        %3160 = vmatpush1.msra.mxu0 0.0
        %3161 = vmatprep.subr.mxu0 0.0
        %3162 = vmatpush1.msra.mxu0 0.0
        %3163 = vmatprep.subr.mxu0 0.0
        %3164 = vmatpush1.msra.mxu0 0.0
        %3165 = vmatprep.subr.mxu0 0.0
        %3166 = vmatpush1.msra.mxu0 0.0
        %3167 = vmatprep.subr.mxu0 0.0
        %3168 = vmatpush1.msra.mxu0 0.0
        %3169 = vmatprep.subr.mxu0 0.0
        %3170 = vmatpush1.msra.mxu0 0.0
        %3171 = vmatprep.subr.mxu0 0.0
        %3172 = vmatpush1.msra.mxu0 0.0
        %3173 = vmatprep.subr.mxu0 0.0
        %3174 = vmatpush1.msra.mxu0 0.0
        %3175 = vmatprep.subr.mxu0 0.0
        %3176 = vmatpush1.msra.mxu0 0.0
        %3177 = vmatprep.subr.mxu0 0.0
        %3178 = vmatpush1.msra.mxu0 0.0
        %3179 = vmatprep.subr.mxu0 0.0
        %3180 = vmatpush1.msra.mxu0 0.0
        %3181 = vmatprep.subr.mxu0 0.0
        %3182 = vmatpush1.msra.mxu0 0.0
        %3183 = vmatprep.subr.mxu0 0.0
        %3184 = vmatpush1.msra.mxu0 0.0
        %3185 = vmatprep.subr.mxu0 0.0
        %3186 = vmatpush1.msra.mxu0 0.0
        %3187 = vmatprep.subr.mxu0 0.0
        %3188 = vmatpush1.msra.mxu0 0.0
        %3189 = vmatprep.subr.mxu0 0.0
        %3190 = vmatpush1.msra.mxu0 0.0
        %3191 = vmatprep.subr.mxu0 0.0
        %3192 = vmatpush1.msra.mxu0 0.0
        %3193 = vmatprep.subr.mxu0 0.0
        %3194 = vmatpush1.msra.mxu0 0.0
        %3195 = vmatprep.mubr.f32.mxu0 0.0
        %3196 = vmatmul.mubr.f32.gmra.mrb[0].mxu0 %v3120
        %v3197 = vpop.f32.mrb[0].mxu0
        %v3198 = vadd.f32 0.0, %v3197
        %v3199 = vpop.f32.mrb[0].mxu0
        %3200 = vmatprep.mubr.f32.mxu0 0.0
        %3201 = vmatmul.mubr.f32.gmra.mrb[0].mxu0 %v3123
        %v3202 = vpop.f32.mrb[0].mxu0
        %v3203 = vadd.f32 0.0, %v3202
        %v3204 = vpop.f32.mrb[0].mxu0
        %3205 = vmatprep.mubr.f32.mxu0 0.0
        %3206 = vmatmul.mubr.f32.gmra.mrb[0].mxu0 %v3126
        %v3207 = vpop.f32.mrb[0].mxu0
        %v3208 = vadd.f32 0.0, %v3207
        %v3209 = vpop.f32.mrb[0].mxu0
        %3210 = vmatprep.mubr.f32.mxu0 0.0
        %3211 = vmatmul.mubr.f32.gmra.mrb[0].mxu0 %v3129
        %v3212 = vpop.f32.mrb[0].mxu0
        %v3213 = vadd.f32 0.0, %v3212
        %v3214 = vpop.f32.mrb[0].mxu0
        %3215 = vdwg.mxu0
        %v3217 = vsel %vm837, %v3198, 0
        %v3220 = vsel %vm837, %v3203, 0
        %v3223 = vsel %vm837, %v3208, 0
        %v3226 = vsel %vm837, %v3213, 0
        %3228 = vmatprep.subr.mxu0 0.0
        %3229 = vmatpush1.msra.mxu0 %v1341
        %3230 = vmatprep.subr.mxu0 0.0
        %3231 = vmatpush1.msra.mxu0 %v1342
        %3232 = vmatprep.subr.mxu0 0.0
        %3233 = vmatpush1.msra.mxu0 0.0
        %3234 = vmatprep.subr.mxu0 0.0
        %3235 = vmatpush1.msra.mxu0 0.0
        %3236 = vmatprep.subr.mxu0 0.0
        %3237 = vmatpush1.msra.mxu0 0.0
        %3238 = vmatprep.subr.mxu0 0.0
        %3239 = vmatpush1.msra.mxu0 0.0
        %3240 = vmatprep.subr.mxu0 0.0
        %3241 = vmatpush1.msra.mxu0 0.0
        %3242 = vmatprep.subr.mxu0 0.0
        %3243 = vmatpush1.msra.mxu0 0.0
        %3244 = vmatprep.subr.mxu0 0.0
        %3245 = vmatpush1.msra.mxu0 0.0
        %3246 = vmatprep.subr.mxu0 0.0
        %3247 = vmatpush1.msra.mxu0 0.0
        %3248 = vmatprep.subr.mxu0 0.0
        %3249 = vmatpush1.msra.mxu0 0.0
        %3250 = vmatprep.subr.mxu0 0.0
        %3251 = vmatpush1.msra.mxu0 0.0
        %3252 = vmatprep.subr.mxu0 0.0
        %3253 = vmatpush1.msra.mxu0 0.0
        %3254 = vmatprep.subr.mxu0 0.0
        %3255 = vmatpush1.msra.mxu0 0.0
        %3256 = vmatprep.subr.mxu0 0.0
        %3257 = vmatpush1.msra.mxu0 0.0
        %3258 = vmatprep.subr.mxu0 0.0
        %3259 = vmatpush1.msra.mxu0 0.0
        %3260 = vmatprep.subr.mxu0 0.0
        %3261 = vmatpush1.msra.mxu0 0.0
        %3262 = vmatprep.subr.mxu0 0.0
        %3263 = vmatpush1.msra.mxu0 0.0
        %3264 = vmatprep.subr.mxu0 0.0
        %3265 = vmatpush1.msra.mxu0 0.0
        %3266 = vmatprep.subr.mxu0 0.0
        %3267 = vmatpush1.msra.mxu0 0.0
        %3268 = vmatprep.subr.mxu0 0.0
        %3269 = vmatpush1.msra.mxu0 0.0
        %3270 = vmatprep.subr.mxu0 0.0
        %3271 = vmatpush1.msra.mxu0 0.0
        %3272 = vmatprep.subr.mxu0 0.0
        %3273 = vmatpush1.msra.mxu0 0.0
        %3274 = vmatprep.subr.mxu0 0.0
        %3275 = vmatpush1.msra.mxu0 0.0
        %3276 = vmatprep.subr.mxu0 0.0
        %3277 = vmatpush1.msra.mxu0 0.0
        %3278 = vmatprep.subr.mxu0 0.0
        %3279 = vmatpush1.msra.mxu0 0.0
        %3280 = vmatprep.subr.mxu0 0.0
        %3281 = vmatpush1.msra.mxu0 0.0
        %3282 = vmatprep.subr.mxu0 0.0
        %3283 = vmatpush1.msra.mxu0 0.0
        %3284 = vmatprep.subr.mxu0 0.0
        %3285 = vmatpush1.msra.mxu0 0.0
        %3286 = vmatprep.subr.mxu0 0.0
        %3287 = vmatpush1.msra.mxu0 0.0
        %3288 = vmatprep.subr.mxu0 0.0
        %3289 = vmatpush1.msra.mxu0 0.0
        %3290 = vmatprep.subr.mxu0 0.0
        %3291 = vmatpush1.msra.mxu0 0.0
        %3292 = vmatprep.mubr.f32.mxu0 0.0
        %3293 = vmatmul.mubr.f32.gmra.mrb[0].mxu0 %v3217
        %v3294 = vpop.f32.mrb[0].mxu0
        %v3295 = vadd.f32 0.0, %v3294
        %v3296 = vpop.f32.mrb[0].mxu0
        %3297 = vmatprep.mubr.f32.mxu0 0.0
        %3298 = vmatmul.mubr.f32.gmra.mrb[0].mxu0 %v3220
        %v3299 = vpop.f32.mrb[0].mxu0
        %v3300 = vadd.f32 0.0, %v3299
        %v3301 = vpop.f32.mrb[0].mxu0
        %3302 = vmatprep.mubr.f32.mxu0 0.0
        %3303 = vmatmul.mubr.f32.gmra.mrb[0].mxu0 %v3223
        %v3304 = vpop.f32.mrb[0].mxu0
        %v3305 = vadd.f32 0.0, %v3304
        %v3306 = vpop.f32.mrb[0].mxu0
        %3307 = vmatprep.mubr.f32.mxu0 0.0
        %3308 = vmatmul.mubr.f32.gmra.mrb[0].mxu0 %v3226
        %v3309 = vpop.f32.mrb[0].mxu0
        %v3310 = vadd.f32 0.0, %v3309
        %v3311 = vpop.f32.mrb[0].mxu0
        %3312 = vdwg.mxu0
        %v3313 = vadd.f32 %v3110, %v3295
        %v3314 = vadd.f32 %v3111, %v3300
        %v3315 = vadd.f32 %v3112, %v3305
        %v3316 = vadd.f32 %v3113, %v3310
        %s3317 = scalar_lea.vmem [#allocation8], 128
        %v3318 = vld [vmem:[%s3317] sm:$0xff]
        %v3319 = vld [vmem:[%s3317 + $0x8] sm:$0xff]
        %v3320 = vld [vmem:[%s3317 + $0x10] sm:$0xff]
        %v3321 = vld [vmem:[%s3317 + $0x18] sm:$0xff]
        %v3323 = vsel %vm632, %v3318, 0
        %v3326 = vsel %vm632, %v3319, 0
        %v3329 = vsel %vm632, %v3320, 0
        %v3332 = vsel %vm632, %v3321, 0
        %3334 = vmatprep.subr.mxu0 0.0
        %3335 = vmatpush1.msra.mxu0 %v2510
        %3336 = vmatprep.subr.mxu0 0.0
        %3337 = vmatpush1.msra.mxu0 %v2511
        %3338 = vmatprep.subr.mxu0 0.0
        %3339 = vmatpush1.msra.mxu0 %v2512
        %3340 = vmatprep.subr.mxu0 0.0
        %3341 = vmatpush1.msra.mxu0 %v2513
        %3342 = vmatprep.subr.mxu0 0.0
        %3343 = vmatpush1.msra.mxu0 0.0
        %3344 = vmatprep.subr.mxu0 0.0
        %3345 = vmatpush1.msra.mxu0 0.0
        %3346 = vmatprep.subr.mxu0 0.0
        %3347 = vmatpush1.msra.mxu0 0.0
        %3348 = vmatprep.subr.mxu0 0.0
        %3349 = vmatpush1.msra.mxu0 0.0
        %3350 = vmatprep.subr.mxu0 0.0
        %3351 = vmatpush1.msra.mxu0 0.0
        %3352 = vmatprep.subr.mxu0 0.0
        %3353 = vmatpush1.msra.mxu0 0.0
        %3354 = vmatprep.subr.mxu0 0.0
        %3355 = vmatpush1.msra.mxu0 0.0
        %3356 = vmatprep.subr.mxu0 0.0
        %3357 = vmatpush1.msra.mxu0 0.0
        %3358 = vmatprep.subr.mxu0 0.0
        %3359 = vmatpush1.msra.mxu0 0.0
        %3360 = vmatprep.subr.mxu0 0.0
        %3361 = vmatpush1.msra.mxu0 0.0
        %3362 = vmatprep.subr.mxu0 0.0
        %3363 = vmatpush1.msra.mxu0 0.0
        %3364 = vmatprep.subr.mxu0 0.0
        %3365 = vmatpush1.msra.mxu0 0.0
        %3366 = vmatprep.subr.mxu0 0.0
        %3367 = vmatpush1.msra.mxu0 0.0
        %3368 = vmatprep.subr.mxu0 0.0
        %3369 = vmatpush1.msra.mxu0 0.0
        %3370 = vmatprep.subr.mxu0 0.0
        %3371 = vmatpush1.msra.mxu0 0.0
        %3372 = vmatprep.subr.mxu0 0.0
        %3373 = vmatpush1.msra.mxu0 0.0
        %3374 = vmatprep.subr.mxu0 0.0
        %3375 = vmatpush1.msra.mxu0 0.0
        %3376 = vmatprep.subr.mxu0 0.0
        %3377 = vmatpush1.msra.mxu0 0.0
        %3378 = vmatprep.subr.mxu0 0.0
        %3379 = vmatpush1.msra.mxu0 0.0
        %3380 = vmatprep.subr.mxu0 0.0
        %3381 = vmatpush1.msra.mxu0 0.0
        %3382 = vmatprep.subr.mxu0 0.0
        %3383 = vmatpush1.msra.mxu0 0.0
        %3384 = vmatprep.subr.mxu0 0.0
        %3385 = vmatpush1.msra.mxu0 0.0
        %3386 = vmatprep.subr.mxu0 0.0
        %3387 = vmatpush1.msra.mxu0 0.0
        %3388 = vmatprep.subr.mxu0 0.0
        %3389 = vmatpush1.msra.mxu0 0.0
        %3390 = vmatprep.subr.mxu0 0.0
        %3391 = vmatpush1.msra.mxu0 0.0
        %3392 = vmatprep.subr.mxu0 0.0
        %3393 = vmatpush1.msra.mxu0 0.0
        %3394 = vmatprep.subr.mxu0 0.0
        %3395 = vmatpush1.msra.mxu0 0.0
        %3396 = vmatprep.subr.mxu0 0.0
        %3397 = vmatpush1.msra.mxu0 0.0
        %3398 = vmatprep.mubr.f32.mxu0 0.0
        %3399 = vmatmul.mubr.f32.gmra.mrb[0].mxu0 %v3323
        %v3400 = vpop.f32.mrb[0].mxu0
        %v3401 = vadd.f32 0.0, %v3400
        %v3402 = vpop.f32.mrb[0].mxu0
        %3403 = vmatprep.mubr.f32.mxu0 0.0
        %3404 = vmatmul.mubr.f32.gmra.mrb[0].mxu0 %v3326
        %v3405 = vpop.f32.mrb[0].mxu0
        %v3406 = vadd.f32 0.0, %v3405
        %v3407 = vpop.f32.mrb[0].mxu0
        %3408 = vmatprep.mubr.f32.mxu0 0.0
        %3409 = vmatmul.mubr.f32.gmra.mrb[0].mxu0 %v3329
        %v3410 = vpop.f32.mrb[0].mxu0
        %v3411 = vadd.f32 0.0, %v3410
        %v3412 = vpop.f32.mrb[0].mxu0
        %3413 = vmatprep.mubr.f32.mxu0 0.0
        %3414 = vmatmul.mubr.f32.gmra.mrb[0].mxu0 %v3332
        %v3415 = vpop.f32.mrb[0].mxu0
        %v3416 = vadd.f32 0.0, %v3415
        %v3417 = vpop.f32.mrb[0].mxu0
        %3418 = vdwg.mxu0
        %v3420 = vsel %vm837, %v3401, 0
        %v3423 = vsel %vm837, %v3406, 0
        %v3426 = vsel %vm837, %v3411, 0
        %v3429 = vsel %vm837, %v3416, 0
        %3431 = vmatprep.subr.mxu0 0.0
        %3432 = vmatpush1.msra.mxu0 %v1547
        %3433 = vmatprep.subr.mxu0 0.0
        %3434 = vmatpush1.msra.mxu0 %v1548
        %3435 = vmatprep.subr.mxu0 0.0
        %3436 = vmatpush1.msra.mxu0 0.0
        %3437 = vmatprep.subr.mxu0 0.0
        %3438 = vmatpush1.msra.mxu0 0.0
        %3439 = vmatprep.subr.mxu0 0.0
        %3440 = vmatpush1.msra.mxu0 0.0
        %3441 = vmatprep.subr.mxu0 0.0
        %3442 = vmatpush1.msra.mxu0 0.0
        %3443 = vmatprep.subr.mxu0 0.0
        %3444 = vmatpush1.msra.mxu0 0.0
        %3445 = vmatprep.subr.mxu0 0.0
        %3446 = vmatpush1.msra.mxu0 0.0
        %3447 = vmatprep.subr.mxu0 0.0
        %3448 = vmatpush1.msra.mxu0 0.0
        %3449 = vmatprep.subr.mxu0 0.0
        %3450 = vmatpush1.msra.mxu0 0.0
        %3451 = vmatprep.subr.mxu0 0.0
        %3452 = vmatpush1.msra.mxu0 0.0
        %3453 = vmatprep.subr.mxu0 0.0
        %3454 = vmatpush1.msra.mxu0 0.0
        %3455 = vmatprep.subr.mxu0 0.0
        %3456 = vmatpush1.msra.mxu0 0.0
        %3457 = vmatprep.subr.mxu0 0.0
        %3458 = vmatpush1.msra.mxu0 0.0
        %3459 = vmatprep.subr.mxu0 0.0
        %3460 = vmatpush1.msra.mxu0 0.0
        %3461 = vmatprep.subr.mxu0 0.0
        %3462 = vmatpush1.msra.mxu0 0.0
        %3463 = vmatprep.subr.mxu0 0.0
        %3464 = vmatpush1.msra.mxu0 0.0
        %3465 = vmatprep.subr.mxu0 0.0
        %3466 = vmatpush1.msra.mxu0 0.0
        %3467 = vmatprep.subr.mxu0 0.0
        %3468 = vmatpush1.msra.mxu0 0.0
        %3469 = vmatprep.subr.mxu0 0.0
        %3470 = vmatpush1.msra.mxu0 0.0
        %3471 = vmatprep.subr.mxu0 0.0
        %3472 = vmatpush1.msra.mxu0 0.0
        %3473 = vmatprep.subr.mxu0 0.0
        %3474 = vmatpush1.msra.mxu0 0.0
        %3475 = vmatprep.subr.mxu0 0.0
        %3476 = vmatpush1.msra.mxu0 0.0
        %3477 = vmatprep.subr.mxu0 0.0
        %3478 = vmatpush1.msra.mxu0 0.0
        %3479 = vmatprep.subr.mxu0 0.0
        %3480 = vmatpush1.msra.mxu0 0.0
        %3481 = vmatprep.subr.mxu0 0.0
        %3482 = vmatpush1.msra.mxu0 0.0
        %3483 = vmatprep.subr.mxu0 0.0
        %3484 = vmatpush1.msra.mxu0 0.0
        %3485 = vmatprep.subr.mxu0 0.0
        %3486 = vmatpush1.msra.mxu0 0.0
        %3487 = vmatprep.subr.mxu0 0.0
        %3488 = vmatpush1.msra.mxu0 0.0
        %3489 = vmatprep.subr.mxu0 0.0
        %3490 = vmatpush1.msra.mxu0 0.0
        %3491 = vmatprep.subr.mxu0 0.0
        %3492 = vmatpush1.msra.mxu0 0.0
        %3493 = vmatprep.subr.mxu0 0.0
        %3494 = vmatpush1.msra.mxu0 0.0
        %3495 = vmatprep.mubr.f32.mxu0 0.0
        %3496 = vmatmul.mubr.f32.gmra.mrb[0].mxu0 %v3420
        %v3497 = vpop.f32.mrb[0].mxu0
        %v3498 = vadd.f32 0.0, %v3497
        %v3499 = vpop.f32.mrb[0].mxu0
        %3500 = vmatprep.mubr.f32.mxu0 0.0
        %3501 = vmatmul.mubr.f32.gmra.mrb[0].mxu0 %v3423
        %v3502 = vpop.f32.mrb[0].mxu0
        %v3503 = vadd.f32 0.0, %v3502
        %v3504 = vpop.f32.mrb[0].mxu0
        %3505 = vmatprep.mubr.f32.mxu0 0.0
        %3506 = vmatmul.mubr.f32.gmra.mrb[0].mxu0 %v3426
        %v3507 = vpop.f32.mrb[0].mxu0
        %v3508 = vadd.f32 0.0, %v3507
        %v3509 = vpop.f32.mrb[0].mxu0
        %3510 = vmatprep.mubr.f32.mxu0 0.0
        %3511 = vmatmul.mubr.f32.gmra.mrb[0].mxu0 %v3429
        %v3512 = vpop.f32.mrb[0].mxu0
        %v3513 = vadd.f32 0.0, %v3512
        %v3514 = vpop.f32.mrb[0].mxu0
        %3515 = vdwg.mxu0
        %v3516 = vadd.f32 %v3313, %v3498
        %v3517 = vadd.f32 %v3314, %v3503
        %v3518 = vadd.f32 %v3315, %v3508
        %v3519 = vadd.f32 %v3316, %v3513
        %s3520 = scalar_lea.vmem [#allocation8], 160
        %v3521 = vld [vmem:[%s3520] sm:$0xff]
        %v3522 = vld [vmem:[%s3520 + $0x8] sm:$0xff]
        %v3523 = vld [vmem:[%s3520 + $0x10] sm:$0xff]
        %v3524 = vld [vmem:[%s3520 + $0x18] sm:$0xff]
        %v3526 = vsel %vm632, %v3521, 0
        %v3529 = vsel %vm632, %v3522, 0
        %v3532 = vsel %vm632, %v3523, 0
        %v3535 = vsel %vm632, %v3524, 0
        %3537 = vmatprep.subr.mxu0 0.0
        %3538 = vmatpush1.msra.mxu0 %v2510
        %3539 = vmatprep.subr.mxu0 0.0
        %3540 = vmatpush1.msra.mxu0 %v2511
        %3541 = vmatprep.subr.mxu0 0.0
        %3542 = vmatpush1.msra.mxu0 %v2512
        %3543 = vmatprep.subr.mxu0 0.0
        %3544 = vmatpush1.msra.mxu0 %v2513
        %3545 = vmatprep.subr.mxu0 0.0
        %3546 = vmatpush1.msra.mxu0 0.0
        %3547 = vmatprep.subr.mxu0 0.0
        %3548 = vmatpush1.msra.mxu0 0.0
        %3549 = vmatprep.subr.mxu0 0.0
        %3550 = vmatpush1.msra.mxu0 0.0
        %3551 = vmatprep.subr.mxu0 0.0
        %3552 = vmatpush1.msra.mxu0 0.0
        %3553 = vmatprep.subr.mxu0 0.0
        %3554 = vmatpush1.msra.mxu0 0.0
        %3555 = vmatprep.subr.mxu0 0.0
        %3556 = vmatpush1.msra.mxu0 0.0
        %3557 = vmatprep.subr.mxu0 0.0
        %3558 = vmatpush1.msra.mxu0 0.0
        %3559 = vmatprep.subr.mxu0 0.0
        %3560 = vmatpush1.msra.mxu0 0.0
        %3561 = vmatprep.subr.mxu0 0.0
        %3562 = vmatpush1.msra.mxu0 0.0
        %3563 = vmatprep.subr.mxu0 0.0
        %3564 = vmatpush1.msra.mxu0 0.0
        %3565 = vmatprep.subr.mxu0 0.0
        %3566 = vmatpush1.msra.mxu0 0.0
        %3567 = vmatprep.subr.mxu0 0.0
        %3568 = vmatpush1.msra.mxu0 0.0
        %3569 = vmatprep.subr.mxu0 0.0
        %3570 = vmatpush1.msra.mxu0 0.0
        %3571 = vmatprep.subr.mxu0 0.0
        %3572 = vmatpush1.msra.mxu0 0.0
        %3573 = vmatprep.subr.mxu0 0.0
        %3574 = vmatpush1.msra.mxu0 0.0
        %3575 = vmatprep.subr.mxu0 0.0
        %3576 = vmatpush1.msra.mxu0 0.0
        %3577 = vmatprep.subr.mxu0 0.0
        %3578 = vmatpush1.msra.mxu0 0.0
        %3579 = vmatprep.subr.mxu0 0.0
        %3580 = vmatpush1.msra.mxu0 0.0
        %3581 = vmatprep.subr.mxu0 0.0
        %3582 = vmatpush1.msra.mxu0 0.0
        %3583 = vmatprep.subr.mxu0 0.0
        %3584 = vmatpush1.msra.mxu0 0.0
        %3585 = vmatprep.subr.mxu0 0.0
        %3586 = vmatpush1.msra.mxu0 0.0
        %3587 = vmatprep.subr.mxu0 0.0
        %3588 = vmatpush1.msra.mxu0 0.0
        %3589 = vmatprep.subr.mxu0 0.0
        %3590 = vmatpush1.msra.mxu0 0.0
        %3591 = vmatprep.subr.mxu0 0.0
        %3592 = vmatpush1.msra.mxu0 0.0
        %3593 = vmatprep.subr.mxu0 0.0
        %3594 = vmatpush1.msra.mxu0 0.0
        %3595 = vmatprep.subr.mxu0 0.0
        %3596 = vmatpush1.msra.mxu0 0.0
        %3597 = vmatprep.subr.mxu0 0.0
        %3598 = vmatpush1.msra.mxu0 0.0
        %3599 = vmatprep.subr.mxu0 0.0
        %3600 = vmatpush1.msra.mxu0 0.0
        %3601 = vmatprep.mubr.f32.mxu0 0.0
        %3602 = vmatmul.mubr.f32.gmra.mrb[0].mxu0 %v3526
        %v3603 = vpop.f32.mrb[0].mxu0
        %v3604 = vadd.f32 0.0, %v3603
        %v3605 = vpop.f32.mrb[0].mxu0
        %3606 = vmatprep.mubr.f32.mxu0 0.0
        %3607 = vmatmul.mubr.f32.gmra.mrb[0].mxu0 %v3529
        %v3608 = vpop.f32.mrb[0].mxu0
        %v3609 = vadd.f32 0.0, %v3608
        %v3610 = vpop.f32.mrb[0].mxu0
        %3611 = vmatprep.mubr.f32.mxu0 0.0
        %3612 = vmatmul.mubr.f32.gmra.mrb[0].mxu0 %v3532
        %v3613 = vpop.f32.mrb[0].mxu0
        %v3614 = vadd.f32 0.0, %v3613
        %v3615 = vpop.f32.mrb[0].mxu0
        %3616 = vmatprep.mubr.f32.mxu0 0.0
        %3617 = vmatmul.mubr.f32.gmra.mrb[0].mxu0 %v3535
        %v3618 = vpop.f32.mrb[0].mxu0
        %v3619 = vadd.f32 0.0, %v3618
        %v3620 = vpop.f32.mrb[0].mxu0
        %3621 = vdwg.mxu0
        %v3623 = vsel %vm837, %v3604, 0
        %v3626 = vsel %vm837, %v3609, 0
        %v3629 = vsel %vm837, %v3614, 0
        %v3632 = vsel %vm837, %v3619, 0
        %3634 = vmatprep.subr.mxu0 0.0
        %3635 = vmatpush1.msra.mxu0 %v1753
        %3636 = vmatprep.subr.mxu0 0.0
        %3637 = vmatpush1.msra.mxu0 %v1754
        %3638 = vmatprep.subr.mxu0 0.0
        %3639 = vmatpush1.msra.mxu0 0.0
        %3640 = vmatprep.subr.mxu0 0.0
        %3641 = vmatpush1.msra.mxu0 0.0
        %3642 = vmatprep.subr.mxu0 0.0
        %3643 = vmatpush1.msra.mxu0 0.0
        %3644 = vmatprep.subr.mxu0 0.0
        %3645 = vmatpush1.msra.mxu0 0.0
        %3646 = vmatprep.subr.mxu0 0.0
        %3647 = vmatpush1.msra.mxu0 0.0
        %3648 = vmatprep.subr.mxu0 0.0
        %3649 = vmatpush1.msra.mxu0 0.0
        %3650 = vmatprep.subr.mxu0 0.0
        %3651 = vmatpush1.msra.mxu0 0.0
        %3652 = vmatprep.subr.mxu0 0.0
        %3653 = vmatpush1.msra.mxu0 0.0
        %3654 = vmatprep.subr.mxu0 0.0
        %3655 = vmatpush1.msra.mxu0 0.0
        %3656 = vmatprep.subr.mxu0 0.0
        %3657 = vmatpush1.msra.mxu0 0.0
        %3658 = vmatprep.subr.mxu0 0.0
        %3659 = vmatpush1.msra.mxu0 0.0
        %3660 = vmatprep.subr.mxu0 0.0
        %3661 = vmatpush1.msra.mxu0 0.0
        %3662 = vmatprep.subr.mxu0 0.0
        %3663 = vmatpush1.msra.mxu0 0.0
        %3664 = vmatprep.subr.mxu0 0.0
        %3665 = vmatpush1.msra.mxu0 0.0
        %3666 = vmatprep.subr.mxu0 0.0
        %3667 = vmatpush1.msra.mxu0 0.0
        %3668 = vmatprep.subr.mxu0 0.0
        %3669 = vmatpush1.msra.mxu0 0.0
        %3670 = vmatprep.subr.mxu0 0.0
        %3671 = vmatpush1.msra.mxu0 0.0
        %3672 = vmatprep.subr.mxu0 0.0
        %3673 = vmatpush1.msra.mxu0 0.0
        %3674 = vmatprep.subr.mxu0 0.0
        %3675 = vmatpush1.msra.mxu0 0.0
        %3676 = vmatprep.subr.mxu0 0.0
        %3677 = vmatpush1.msra.mxu0 0.0
        %3678 = vmatprep.subr.mxu0 0.0
        %3679 = vmatpush1.msra.mxu0 0.0
        %3680 = vmatprep.subr.mxu0 0.0
        %3681 = vmatpush1.msra.mxu0 0.0
        %3682 = vmatprep.subr.mxu0 0.0
        %3683 = vmatpush1.msra.mxu0 0.0
        %3684 = vmatprep.subr.mxu0 0.0
        %3685 = vmatpush1.msra.mxu0 0.0
        %3686 = vmatprep.subr.mxu0 0.0
        %3687 = vmatpush1.msra.mxu0 0.0
        %3688 = vmatprep.subr.mxu0 0.0
        %3689 = vmatpush1.msra.mxu0 0.0
        %3690 = vmatprep.subr.mxu0 0.0
        %3691 = vmatpush1.msra.mxu0 0.0
        %3692 = vmatprep.subr.mxu0 0.0
        %3693 = vmatpush1.msra.mxu0 0.0
        %3694 = vmatprep.subr.mxu0 0.0
        %3695 = vmatpush1.msra.mxu0 0.0
        %3696 = vmatprep.subr.mxu0 0.0
        %3697 = vmatpush1.msra.mxu0 0.0
        %3698 = vmatprep.mubr.f32.mxu0 0.0
        %3699 = vmatmul.mubr.f32.gmra.mrb[0].mxu0 %v3623
        %v3700 = vpop.f32.mrb[0].mxu0
        %v3701 = vadd.f32 0.0, %v3700
        %v3702 = vpop.f32.mrb[0].mxu0
        %3703 = vmatprep.mubr.f32.mxu0 0.0
        %3704 = vmatmul.mubr.f32.gmra.mrb[0].mxu0 %v3626
        %v3705 = vpop.f32.mrb[0].mxu0
        %v3706 = vadd.f32 0.0, %v3705
        %v3707 = vpop.f32.mrb[0].mxu0
        %3708 = vmatprep.mubr.f32.mxu0 0.0
        %3709 = vmatmul.mubr.f32.gmra.mrb[0].mxu0 %v3629
        %v3710 = vpop.f32.mrb[0].mxu0
        %v3711 = vadd.f32 0.0, %v3710
        %v3712 = vpop.f32.mrb[0].mxu0
        %3713 = vmatprep.mubr.f32.mxu0 0.0
        %3714 = vmatmul.mubr.f32.gmra.mrb[0].mxu0 %v3632
        %v3715 = vpop.f32.mrb[0].mxu0
        %v3716 = vadd.f32 0.0, %v3715
        %v3717 = vpop.f32.mrb[0].mxu0
        %3718 = vdwg.mxu0
        %v3719 = vadd.f32 %v3516, %v3701
        %v3720 = vadd.f32 %v3517, %v3706
        %v3721 = vadd.f32 %v3518, %v3711
        %v3722 = vadd.f32 %v3519, %v3716
        %s3723 = scalar_lea.vmem [#allocation8], 192
        %v3724 = vld [vmem:[%s3723] sm:$0xff]
        %v3725 = vld [vmem:[%s3723 + $0x8] sm:$0xff]
        %v3726 = vld [vmem:[%s3723 + $0x10] sm:$0xff]
        %v3727 = vld [vmem:[%s3723 + $0x18] sm:$0xff]
        %v3729 = vsel %vm632, %v3724, 0
        %v3732 = vsel %vm632, %v3725, 0
        %v3735 = vsel %vm632, %v3726, 0
        %v3738 = vsel %vm632, %v3727, 0
        %3740 = vmatprep.subr.mxu0 0.0
        %3741 = vmatpush1.msra.mxu0 %v2510
        %3742 = vmatprep.subr.mxu0 0.0
        %3743 = vmatpush1.msra.mxu0 %v2511
        %3744 = vmatprep.subr.mxu0 0.0
        %3745 = vmatpush1.msra.mxu0 %v2512
        %3746 = vmatprep.subr.mxu0 0.0
        %3747 = vmatpush1.msra.mxu0 %v2513
        %3748 = vmatprep.subr.mxu0 0.0
        %3749 = vmatpush1.msra.mxu0 0.0
        %3750 = vmatprep.subr.mxu0 0.0
        %3751 = vmatpush1.msra.mxu0 0.0
        %3752 = vmatprep.subr.mxu0 0.0
        %3753 = vmatpush1.msra.mxu0 0.0
        %3754 = vmatprep.subr.mxu0 0.0
        %3755 = vmatpush1.msra.mxu0 0.0
        %3756 = vmatprep.subr.mxu0 0.0
        %3757 = vmatpush1.msra.mxu0 0.0
        %3758 = vmatprep.subr.mxu0 0.0
        %3759 = vmatpush1.msra.mxu0 0.0
        %3760 = vmatprep.subr.mxu0 0.0
        %3761 = vmatpush1.msra.mxu0 0.0
        %3762 = vmatprep.subr.mxu0 0.0
        %3763 = vmatpush1.msra.mxu0 0.0
        %3764 = vmatprep.subr.mxu0 0.0
        %3765 = vmatpush1.msra.mxu0 0.0
        %3766 = vmatprep.subr.mxu0 0.0
        %3767 = vmatpush1.msra.mxu0 0.0
        %3768 = vmatprep.subr.mxu0 0.0
        %3769 = vmatpush1.msra.mxu0 0.0
        %3770 = vmatprep.subr.mxu0 0.0
        %3771 = vmatpush1.msra.mxu0 0.0
        %3772 = vmatprep.subr.mxu0 0.0
        %3773 = vmatpush1.msra.mxu0 0.0
        %3774 = vmatprep.subr.mxu0 0.0
        %3775 = vmatpush1.msra.mxu0 0.0
        %3776 = vmatprep.subr.mxu0 0.0
        %3777 = vmatpush1.msra.mxu0 0.0
        %3778 = vmatprep.subr.mxu0 0.0
        %3779 = vmatpush1.msra.mxu0 0.0
        %3780 = vmatprep.subr.mxu0 0.0
        %3781 = vmatpush1.msra.mxu0 0.0
        %3782 = vmatprep.subr.mxu0 0.0
        %3783 = vmatpush1.msra.mxu0 0.0
        %3784 = vmatprep.subr.mxu0 0.0
        %3785 = vmatpush1.msra.mxu0 0.0
        %3786 = vmatprep.subr.mxu0 0.0
        %3787 = vmatpush1.msra.mxu0 0.0
        %3788 = vmatprep.subr.mxu0 0.0
        %3789 = vmatpush1.msra.mxu0 0.0
        %3790 = vmatprep.subr.mxu0 0.0
        %3791 = vmatpush1.msra.mxu0 0.0
        %3792 = vmatprep.subr.mxu0 0.0
        %3793 = vmatpush1.msra.mxu0 0.0
        %3794 = vmatprep.subr.mxu0 0.0
        %3795 = vmatpush1.msra.mxu0 0.0
        %3796 = vmatprep.subr.mxu0 0.0
        %3797 = vmatpush1.msra.mxu0 0.0
        %3798 = vmatprep.subr.mxu0 0.0
        %3799 = vmatpush1.msra.mxu0 0.0
        %3800 = vmatprep.subr.mxu0 0.0
        %3801 = vmatpush1.msra.mxu0 0.0
        %3802 = vmatprep.subr.mxu0 0.0
        %3803 = vmatpush1.msra.mxu0 0.0
        %3804 = vmatprep.mubr.f32.mxu0 0.0
        %3805 = vmatmul.mubr.f32.gmra.mrb[0].mxu0 %v3729
        %v3806 = vpop.f32.mrb[0].mxu0
        %v3807 = vadd.f32 0.0, %v3806
        %v3808 = vpop.f32.mrb[0].mxu0
        %3809 = vmatprep.mubr.f32.mxu0 0.0
        %3810 = vmatmul.mubr.f32.gmra.mrb[0].mxu0 %v3732
        %v3811 = vpop.f32.mrb[0].mxu0
        %v3812 = vadd.f32 0.0, %v3811
        %v3813 = vpop.f32.mrb[0].mxu0
        %3814 = vmatprep.mubr.f32.mxu0 0.0
        %3815 = vmatmul.mubr.f32.gmra.mrb[0].mxu0 %v3735
        %v3816 = vpop.f32.mrb[0].mxu0
        %v3817 = vadd.f32 0.0, %v3816
        %v3818 = vpop.f32.mrb[0].mxu0
        %3819 = vmatprep.mubr.f32.mxu0 0.0
        %3820 = vmatmul.mubr.f32.gmra.mrb[0].mxu0 %v3738
        %v3821 = vpop.f32.mrb[0].mxu0
        %v3822 = vadd.f32 0.0, %v3821
        %v3823 = vpop.f32.mrb[0].mxu0
        %3824 = vdwg.mxu0
        %v3826 = vsel %vm837, %v3807, 0
        %v3829 = vsel %vm837, %v3812, 0
        %v3832 = vsel %vm837, %v3817, 0
        %v3835 = vsel %vm837, %v3822, 0
        %3837 = vmatprep.subr.mxu0 0.0
        %3838 = vmatpush1.msra.mxu0 %v1959
        %3839 = vmatprep.subr.mxu0 0.0
        %3840 = vmatpush1.msra.mxu0 %v1960
        %3841 = vmatprep.subr.mxu0 0.0
        %3842 = vmatpush1.msra.mxu0 0.0
        %3843 = vmatprep.subr.mxu0 0.0
        %3844 = vmatpush1.msra.mxu0 0.0
        %3845 = vmatprep.subr.mxu0 0.0
        %3846 = vmatpush1.msra.mxu0 0.0
        %3847 = vmatprep.subr.mxu0 0.0
        %3848 = vmatpush1.msra.mxu0 0.0
        %3849 = vmatprep.subr.mxu0 0.0
        %3850 = vmatpush1.msra.mxu0 0.0
        %3851 = vmatprep.subr.mxu0 0.0
        %3852 = vmatpush1.msra.mxu0 0.0
        %3853 = vmatprep.subr.mxu0 0.0
        %3854 = vmatpush1.msra.mxu0 0.0
        %3855 = vmatprep.subr.mxu0 0.0
        %3856 = vmatpush1.msra.mxu0 0.0
        %3857 = vmatprep.subr.mxu0 0.0
        %3858 = vmatpush1.msra.mxu0 0.0
        %3859 = vmatprep.subr.mxu0 0.0
        %3860 = vmatpush1.msra.mxu0 0.0
        %3861 = vmatprep.subr.mxu0 0.0
        %3862 = vmatpush1.msra.mxu0 0.0
        %3863 = vmatprep.subr.mxu0 0.0
        %3864 = vmatpush1.msra.mxu0 0.0
        %3865 = vmatprep.subr.mxu0 0.0
        %3866 = vmatpush1.msra.mxu0 0.0
        %3867 = vmatprep.subr.mxu0 0.0
        %3868 = vmatpush1.msra.mxu0 0.0
        %3869 = vmatprep.subr.mxu0 0.0
        %3870 = vmatpush1.msra.mxu0 0.0
        %3871 = vmatprep.subr.mxu0 0.0
        %3872 = vmatpush1.msra.mxu0 0.0
        %3873 = vmatprep.subr.mxu0 0.0
        %3874 = vmatpush1.msra.mxu0 0.0
        %3875 = vmatprep.subr.mxu0 0.0
        %3876 = vmatpush1.msra.mxu0 0.0
        %3877 = vmatprep.subr.mxu0 0.0
        %3878 = vmatpush1.msra.mxu0 0.0
        %3879 = vmatprep.subr.mxu0 0.0
        %3880 = vmatpush1.msra.mxu0 0.0
        %3881 = vmatprep.subr.mxu0 0.0
        %3882 = vmatpush1.msra.mxu0 0.0
        %3883 = vmatprep.subr.mxu0 0.0
        %3884 = vmatpush1.msra.mxu0 0.0
        %3885 = vmatprep.subr.mxu0 0.0
        %3886 = vmatpush1.msra.mxu0 0.0
        %3887 = vmatprep.subr.mxu0 0.0
        %3888 = vmatpush1.msra.mxu0 0.0
        %3889 = vmatprep.subr.mxu0 0.0
        %3890 = vmatpush1.msra.mxu0 0.0
        %3891 = vmatprep.subr.mxu0 0.0
        %3892 = vmatpush1.msra.mxu0 0.0
        %3893 = vmatprep.subr.mxu0 0.0
        %3894 = vmatpush1.msra.mxu0 0.0
        %3895 = vmatprep.subr.mxu0 0.0
        %3896 = vmatpush1.msra.mxu0 0.0
        %3897 = vmatprep.subr.mxu0 0.0
        %3898 = vmatpush1.msra.mxu0 0.0
        %3899 = vmatprep.subr.mxu0 0.0
        %3900 = vmatpush1.msra.mxu0 0.0
        %3901 = vmatprep.mubr.f32.mxu0 0.0
        %3902 = vmatmul.mubr.f32.gmra.mrb[0].mxu0 %v3826
        %v3903 = vpop.f32.mrb[0].mxu0
        %v3904 = vadd.f32 0.0, %v3903
        %v3905 = vpop.f32.mrb[0].mxu0
        %3906 = vmatprep.mubr.f32.mxu0 0.0
        %3907 = vmatmul.mubr.f32.gmra.mrb[0].mxu0 %v3829
        %v3908 = vpop.f32.mrb[0].mxu0
        %v3909 = vadd.f32 0.0, %v3908
        %v3910 = vpop.f32.mrb[0].mxu0
        %3911 = vmatprep.mubr.f32.mxu0 0.0
        %3912 = vmatmul.mubr.f32.gmra.mrb[0].mxu0 %v3832
        %v3913 = vpop.f32.mrb[0].mxu0
        %v3914 = vadd.f32 0.0, %v3913
        %v3915 = vpop.f32.mrb[0].mxu0
        %3916 = vmatprep.mubr.f32.mxu0 0.0
        %3917 = vmatmul.mubr.f32.gmra.mrb[0].mxu0 %v3835
        %v3918 = vpop.f32.mrb[0].mxu0
        %v3919 = vadd.f32 0.0, %v3918
        %v3920 = vpop.f32.mrb[0].mxu0
        %3921 = vdwg.mxu0
        %v3922 = vadd.f32 %v3719, %v3904
        %v3923 = vadd.f32 %v3720, %v3909
        %v3924 = vadd.f32 %v3721, %v3914
        %v3925 = vadd.f32 %v3722, %v3919
        %s3926 = scalar_lea.vmem [#allocation8], 224
        %v3927 = vld [vmem:[%s3926] sm:$0xff]
        %v3928 = vld [vmem:[%s3926 + $0x8] sm:$0xff]
        %v3929 = vld [vmem:[%s3926 + $0x10] sm:$0xff]
        %v3930 = vld [vmem:[%s3926 + $0x18] sm:$0xff]
        %v3932 = vsel %vm632, %v3927, 0
        %v3935 = vsel %vm632, %v3928, 0
        %v3938 = vsel %vm632, %v3929, 0
        %v3941 = vsel %vm632, %v3930, 0
        %3943 = vmatprep.subr.mxu0 0.0
        %3944 = vmatpush1.msra.mxu0 %v2510
        %3945 = vmatprep.subr.mxu0 0.0
        %3946 = vmatpush1.msra.mxu0 %v2511
        %3947 = vmatprep.subr.mxu0 0.0
        %3948 = vmatpush1.msra.mxu0 %v2512
        %3949 = vmatprep.subr.mxu0 0.0
        %3950 = vmatpush1.msra.mxu0 %v2513
        %3951 = vmatprep.subr.mxu0 0.0
        %3952 = vmatpush1.msra.mxu0 0.0
        %3953 = vmatprep.subr.mxu0 0.0
        %3954 = vmatpush1.msra.mxu0 0.0
        %3955 = vmatprep.subr.mxu0 0.0
        %3956 = vmatpush1.msra.mxu0 0.0
        %3957 = vmatprep.subr.mxu0 0.0
        %3958 = vmatpush1.msra.mxu0 0.0
        %3959 = vmatprep.subr.mxu0 0.0
        %3960 = vmatpush1.msra.mxu0 0.0
        %3961 = vmatprep.subr.mxu0 0.0
        %3962 = vmatpush1.msra.mxu0 0.0
        %3963 = vmatprep.subr.mxu0 0.0
        %3964 = vmatpush1.msra.mxu0 0.0
        %3965 = vmatprep.subr.mxu0 0.0
        %3966 = vmatpush1.msra.mxu0 0.0
        %3967 = vmatprep.subr.mxu0 0.0
        %3968 = vmatpush1.msra.mxu0 0.0
        %3969 = vmatprep.subr.mxu0 0.0
        %3970 = vmatpush1.msra.mxu0 0.0
        %3971 = vmatprep.subr.mxu0 0.0
        %3972 = vmatpush1.msra.mxu0 0.0
        %3973 = vmatprep.subr.mxu0 0.0
        %3974 = vmatpush1.msra.mxu0 0.0
        %3975 = vmatprep.subr.mxu0 0.0
        %3976 = vmatpush1.msra.mxu0 0.0
        %3977 = vmatprep.subr.mxu0 0.0
        %3978 = vmatpush1.msra.mxu0 0.0
        %3979 = vmatprep.subr.mxu0 0.0
        %3980 = vmatpush1.msra.mxu0 0.0
        %3981 = vmatprep.subr.mxu0 0.0
        %3982 = vmatpush1.msra.mxu0 0.0
        %3983 = vmatprep.subr.mxu0 0.0
        %3984 = vmatpush1.msra.mxu0 0.0
        %3985 = vmatprep.subr.mxu0 0.0
        %3986 = vmatpush1.msra.mxu0 0.0
        %3987 = vmatprep.subr.mxu0 0.0
        %3988 = vmatpush1.msra.mxu0 0.0
        %3989 = vmatprep.subr.mxu0 0.0
        %3990 = vmatpush1.msra.mxu0 0.0
        %3991 = vmatprep.subr.mxu0 0.0
        %3992 = vmatpush1.msra.mxu0 0.0
        %3993 = vmatprep.subr.mxu0 0.0
        %3994 = vmatpush1.msra.mxu0 0.0
        %3995 = vmatprep.subr.mxu0 0.0
        %3996 = vmatpush1.msra.mxu0 0.0
        %3997 = vmatprep.subr.mxu0 0.0
        %3998 = vmatpush1.msra.mxu0 0.0
        %3999 = vmatprep.subr.mxu0 0.0
        %4000 = vmatpush1.msra.mxu0 0.0
        %4001 = vmatprep.subr.mxu0 0.0
        %4002 = vmatpush1.msra.mxu0 0.0
        %4003 = vmatprep.subr.mxu0 0.0
        %4004 = vmatpush1.msra.mxu0 0.0
        %4005 = vmatprep.subr.mxu0 0.0
        %4006 = vmatpush1.msra.mxu0 0.0
        %4007 = vmatprep.mubr.f32.mxu0 0.0
        %4008 = vmatmul.mubr.f32.gmra.mrb[0].mxu0 %v3932
        %v4009 = vpop.f32.mrb[0].mxu0
        %v4010 = vadd.f32 0.0, %v4009
        %v4011 = vpop.f32.mrb[0].mxu0
        %4012 = vmatprep.mubr.f32.mxu0 0.0
        %4013 = vmatmul.mubr.f32.gmra.mrb[0].mxu0 %v3935
        %v4014 = vpop.f32.mrb[0].mxu0
        %v4015 = vadd.f32 0.0, %v4014
        %v4016 = vpop.f32.mrb[0].mxu0
        %4017 = vmatprep.mubr.f32.mxu0 0.0
        %4018 = vmatmul.mubr.f32.gmra.mrb[0].mxu0 %v3938
        %v4019 = vpop.f32.mrb[0].mxu0
        %v4020 = vadd.f32 0.0, %v4019
        %v4021 = vpop.f32.mrb[0].mxu0
        %4022 = vmatprep.mubr.f32.mxu0 0.0
        %4023 = vmatmul.mubr.f32.gmra.mrb[0].mxu0 %v3941
        %v4024 = vpop.f32.mrb[0].mxu0
        %v4025 = vadd.f32 0.0, %v4024
        %v4026 = vpop.f32.mrb[0].mxu0
        %4027 = vdwg.mxu0
        %v4029 = vsel %vm837, %v4010, 0
        %v4032 = vsel %vm837, %v4015, 0
        %v4035 = vsel %vm837, %v4020, 0
        %v4038 = vsel %vm837, %v4025, 0
        %4040 = vmatprep.subr.mxu0 0.0
        %4041 = vmatpush1.msra.mxu0 %v2165
        %4042 = vmatprep.subr.mxu0 0.0
        %4043 = vmatpush1.msra.mxu0 %v2166
        %4044 = vmatprep.subr.mxu0 0.0
        %4045 = vmatpush1.msra.mxu0 0.0
        %4046 = vmatprep.subr.mxu0 0.0
        %4047 = vmatpush1.msra.mxu0 0.0
        %4048 = vmatprep.subr.mxu0 0.0
        %4049 = vmatpush1.msra.mxu0 0.0
        %4050 = vmatprep.subr.mxu0 0.0
        %4051 = vmatpush1.msra.mxu0 0.0
        %4052 = vmatprep.subr.mxu0 0.0
        %4053 = vmatpush1.msra.mxu0 0.0
        %4054 = vmatprep.subr.mxu0 0.0
        %4055 = vmatpush1.msra.mxu0 0.0
        %4056 = vmatprep.subr.mxu0 0.0
        %4057 = vmatpush1.msra.mxu0 0.0
        %4058 = vmatprep.subr.mxu0 0.0
        %4059 = vmatpush1.msra.mxu0 0.0
        %4060 = vmatprep.subr.mxu0 0.0
        %4061 = vmatpush1.msra.mxu0 0.0
        %4062 = vmatprep.subr.mxu0 0.0
        %4063 = vmatpush1.msra.mxu0 0.0
        %4064 = vmatprep.subr.mxu0 0.0
        %4065 = vmatpush1.msra.mxu0 0.0
        %4066 = vmatprep.subr.mxu0 0.0
        %4067 = vmatpush1.msra.mxu0 0.0
        %4068 = vmatprep.subr.mxu0 0.0
        %4069 = vmatpush1.msra.mxu0 0.0
        %4070 = vmatprep.subr.mxu0 0.0
        %4071 = vmatpush1.msra.mxu0 0.0
        %4072 = vmatprep.subr.mxu0 0.0
        %4073 = vmatpush1.msra.mxu0 0.0
        %4074 = vmatprep.subr.mxu0 0.0
        %4075 = vmatpush1.msra.mxu0 0.0
        %4076 = vmatprep.subr.mxu0 0.0
        %4077 = vmatpush1.msra.mxu0 0.0
        %4078 = vmatprep.subr.mxu0 0.0
        %4079 = vmatpush1.msra.mxu0 0.0
        %4080 = vmatprep.subr.mxu0 0.0
        %4081 = vmatpush1.msra.mxu0 0.0
        %4082 = vmatprep.subr.mxu0 0.0
        %4083 = vmatpush1.msra.mxu0 0.0
        %4084 = vmatprep.subr.mxu0 0.0
        %4085 = vmatpush1.msra.mxu0 0.0
        %4086 = vmatprep.subr.mxu0 0.0
        %4087 = vmatpush1.msra.mxu0 0.0
        %4088 = vmatprep.subr.mxu0 0.0
        %4089 = vmatpush1.msra.mxu0 0.0
        %4090 = vmatprep.subr.mxu0 0.0
        %4091 = vmatpush1.msra.mxu0 0.0
        %4092 = vmatprep.subr.mxu0 0.0
        %4093 = vmatpush1.msra.mxu0 0.0
        %4094 = vmatprep.subr.mxu0 0.0
        %4095 = vmatpush1.msra.mxu0 0.0
        %4096 = vmatprep.subr.mxu0 0.0
        %4097 = vmatpush1.msra.mxu0 0.0
        %4098 = vmatprep.subr.mxu0 0.0
        %4099 = vmatpush1.msra.mxu0 0.0
        %4100 = vmatprep.subr.mxu0 0.0
        %4101 = vmatpush1.msra.mxu0 0.0
        %4102 = vmatprep.subr.mxu0 0.0
        %4103 = vmatpush1.msra.mxu0 0.0
        %4104 = vmatprep.mubr.f32.mxu0 0.0
        %4105 = vmatmul.mubr.f32.gmra.mrb[0].mxu0 %v4029
        %v4106 = vpop.f32.mrb[0].mxu0
        %v4107 = vadd.f32 0.0, %v4106
        %v4108 = vpop.f32.mrb[0].mxu0
        %4109 = vmatprep.mubr.f32.mxu0 0.0
        %4110 = vmatmul.mubr.f32.gmra.mrb[0].mxu0 %v4032
        %v4111 = vpop.f32.mrb[0].mxu0
        %v4112 = vadd.f32 0.0, %v4111
        %v4113 = vpop.f32.mrb[0].mxu0
        %4114 = vmatprep.mubr.f32.mxu0 0.0
        %4115 = vmatmul.mubr.f32.gmra.mrb[0].mxu0 %v4035
        %v4116 = vpop.f32.mrb[0].mxu0
        %v4117 = vadd.f32 0.0, %v4116
        %v4118 = vpop.f32.mrb[0].mxu0
        %4119 = vmatprep.mubr.f32.mxu0 0.0
        %4120 = vmatmul.mubr.f32.gmra.mrb[0].mxu0 %v4038
        %v4121 = vpop.f32.mrb[0].mxu0
        %v4122 = vadd.f32 0.0, %v4121
        %v4123 = vpop.f32.mrb[0].mxu0
        %4124 = vdwg.mxu0
        %v4125 = vadd.f32 %v3922, %v4107
        %v4126 = vadd.f32 %v3923, %v4112
        %v4127 = vadd.f32 %v3924, %v4117
        %v4128 = vadd.f32 %v3925, %v4122
        %s4129 = scalar_lea.vmem [#allocation8], 256
        %v4130 = vld [vmem:[%s4129] sm:$0xff]
        %v4131 = vld [vmem:[%s4129 + $0x8] sm:$0xff]
        %v4132 = vld [vmem:[%s4129 + $0x10] sm:$0xff]
        %v4133 = vld [vmem:[%s4129 + $0x18] sm:$0xff]
        %v4135 = vsel %vm632, %v4130, 0
        %v4138 = vsel %vm632, %v4131, 0
        %v4141 = vsel %vm632, %v4132, 0
        %v4144 = vsel %vm632, %v4133, 0
        %4146 = vmatprep.subr.mxu0 0.0
        %4147 = vmatpush1.msra.mxu0 %v2510
        %4148 = vmatprep.subr.mxu0 0.0
        %4149 = vmatpush1.msra.mxu0 %v2511
        %4150 = vmatprep.subr.mxu0 0.0
        %4151 = vmatpush1.msra.mxu0 %v2512
        %4152 = vmatprep.subr.mxu0 0.0
        %4153 = vmatpush1.msra.mxu0 %v2513
        %4154 = vmatprep.subr.mxu0 0.0
        %4155 = vmatpush1.msra.mxu0 0.0
        %4156 = vmatprep.subr.mxu0 0.0
        %4157 = vmatpush1.msra.mxu0 0.0
        %4158 = vmatprep.subr.mxu0 0.0
        %4159 = vmatpush1.msra.mxu0 0.0
        %4160 = vmatprep.subr.mxu0 0.0
        %4161 = vmatpush1.msra.mxu0 0.0
        %4162 = vmatprep.subr.mxu0 0.0
        %4163 = vmatpush1.msra.mxu0 0.0
        %4164 = vmatprep.subr.mxu0 0.0
        %4165 = vmatpush1.msra.mxu0 0.0
        %4166 = vmatprep.subr.mxu0 0.0
        %4167 = vmatpush1.msra.mxu0 0.0
        %4168 = vmatprep.subr.mxu0 0.0
        %4169 = vmatpush1.msra.mxu0 0.0
        %4170 = vmatprep.subr.mxu0 0.0
        %4171 = vmatpush1.msra.mxu0 0.0
        %4172 = vmatprep.subr.mxu0 0.0
        %4173 = vmatpush1.msra.mxu0 0.0
        %4174 = vmatprep.subr.mxu0 0.0
        %4175 = vmatpush1.msra.mxu0 0.0
        %4176 = vmatprep.subr.mxu0 0.0
        %4177 = vmatpush1.msra.mxu0 0.0
        %4178 = vmatprep.subr.mxu0 0.0
        %4179 = vmatpush1.msra.mxu0 0.0
        %4180 = vmatprep.subr.mxu0 0.0
        %4181 = vmatpush1.msra.mxu0 0.0
        %4182 = vmatprep.subr.mxu0 0.0
        %4183 = vmatpush1.msra.mxu0 0.0
        %4184 = vmatprep.subr.mxu0 0.0
        %4185 = vmatpush1.msra.mxu0 0.0
        %4186 = vmatprep.subr.mxu0 0.0
        %4187 = vmatpush1.msra.mxu0 0.0
        %4188 = vmatprep.subr.mxu0 0.0
        %4189 = vmatpush1.msra.mxu0 0.0
        %4190 = vmatprep.subr.mxu0 0.0
        %4191 = vmatpush1.msra.mxu0 0.0
        %4192 = vmatprep.subr.mxu0 0.0
        %4193 = vmatpush1.msra.mxu0 0.0
        %4194 = vmatprep.subr.mxu0 0.0
        %4195 = vmatpush1.msra.mxu0 0.0
        %4196 = vmatprep.subr.mxu0 0.0
        %4197 = vmatpush1.msra.mxu0 0.0
        %4198 = vmatprep.subr.mxu0 0.0
        %4199 = vmatpush1.msra.mxu0 0.0
        %4200 = vmatprep.subr.mxu0 0.0
        %4201 = vmatpush1.msra.mxu0 0.0
        %4202 = vmatprep.subr.mxu0 0.0
        %4203 = vmatpush1.msra.mxu0 0.0
        %4204 = vmatprep.subr.mxu0 0.0
        %4205 = vmatpush1.msra.mxu0 0.0
        %4206 = vmatprep.subr.mxu0 0.0
        %4207 = vmatpush1.msra.mxu0 0.0
        %4208 = vmatprep.subr.mxu0 0.0
        %4209 = vmatpush1.msra.mxu0 0.0
        %4210 = vmatprep.mubr.f32.mxu0 0.0
        %4211 = vmatmul.mubr.f32.gmra.mrb[0].mxu0 %v4135
        %v4212 = vpop.f32.mrb[0].mxu0
        %v4213 = vadd.f32 0.0, %v4212
        %v4214 = vpop.f32.mrb[0].mxu0
        %4215 = vmatprep.mubr.f32.mxu0 0.0
        %4216 = vmatmul.mubr.f32.gmra.mrb[0].mxu0 %v4138
        %v4217 = vpop.f32.mrb[0].mxu0
        %v4218 = vadd.f32 0.0, %v4217
        %v4219 = vpop.f32.mrb[0].mxu0
        %4220 = vmatprep.mubr.f32.mxu0 0.0
        %4221 = vmatmul.mubr.f32.gmra.mrb[0].mxu0 %v4141
        %v4222 = vpop.f32.mrb[0].mxu0
        %v4223 = vadd.f32 0.0, %v4222
        %v4224 = vpop.f32.mrb[0].mxu0
        %4225 = vmatprep.mubr.f32.mxu0 0.0
        %4226 = vmatmul.mubr.f32.gmra.mrb[0].mxu0 %v4144
        %v4227 = vpop.f32.mrb[0].mxu0
        %v4228 = vadd.f32 0.0, %v4227
        %v4229 = vpop.f32.mrb[0].mxu0
        %4230 = vdwg.mxu0
        %v4232 = vsel %vm837, %v4213, 0
        %v4235 = vsel %vm837, %v4218, 0
        %v4238 = vsel %vm837, %v4223, 0
        %v4241 = vsel %vm837, %v4228, 0
        %4243 = vmatprep.subr.mxu0 0.0
        %4244 = vmatpush1.msra.mxu0 %v2371
        %4245 = vmatprep.subr.mxu0 0.0
        %4246 = vmatpush1.msra.mxu0 %v2372
        %4247 = vmatprep.subr.mxu0 0.0
        %4248 = vmatpush1.msra.mxu0 0.0
        %4249 = vmatprep.subr.mxu0 0.0
        %4250 = vmatpush1.msra.mxu0 0.0
        %4251 = vmatprep.subr.mxu0 0.0
        %4252 = vmatpush1.msra.mxu0 0.0
        %4253 = vmatprep.subr.mxu0 0.0
        %4254 = vmatpush1.msra.mxu0 0.0
        %4255 = vmatprep.subr.mxu0 0.0
        %4256 = vmatpush1.msra.mxu0 0.0
        %4257 = vmatprep.subr.mxu0 0.0
        %4258 = vmatpush1.msra.mxu0 0.0
        %4259 = vmatprep.subr.mxu0 0.0
        %4260 = vmatpush1.msra.mxu0 0.0
        %4261 = vmatprep.subr.mxu0 0.0
        %4262 = vmatpush1.msra.mxu0 0.0
        %4263 = vmatprep.subr.mxu0 0.0
        %4264 = vmatpush1.msra.mxu0 0.0
        %4265 = vmatprep.subr.mxu0 0.0
        %4266 = vmatpush1.msra.mxu0 0.0
        %4267 = vmatprep.subr.mxu0 0.0
        %4268 = vmatpush1.msra.mxu0 0.0
        %4269 = vmatprep.subr.mxu0 0.0
        %4270 = vmatpush1.msra.mxu0 0.0
        %4271 = vmatprep.subr.mxu0 0.0
        %4272 = vmatpush1.msra.mxu0 0.0
        %4273 = vmatprep.subr.mxu0 0.0
        %4274 = vmatpush1.msra.mxu0 0.0
        %4275 = vmatprep.subr.mxu0 0.0
        %4276 = vmatpush1.msra.mxu0 0.0
        %4277 = vmatprep.subr.mxu0 0.0
        %4278 = vmatpush1.msra.mxu0 0.0
        %4279 = vmatprep.subr.mxu0 0.0
        %4280 = vmatpush1.msra.mxu0 0.0
        %4281 = vmatprep.subr.mxu0 0.0
        %4282 = vmatpush1.msra.mxu0 0.0
        %4283 = vmatprep.subr.mxu0 0.0
        %4284 = vmatpush1.msra.mxu0 0.0
        %4285 = vmatprep.subr.mxu0 0.0
        %4286 = vmatpush1.msra.mxu0 0.0
        %4287 = vmatprep.subr.mxu0 0.0
        %4288 = vmatpush1.msra.mxu0 0.0
        %4289 = vmatprep.subr.mxu0 0.0
        %4290 = vmatpush1.msra.mxu0 0.0
        %4291 = vmatprep.subr.mxu0 0.0
        %4292 = vmatpush1.msra.mxu0 0.0
        %4293 = vmatprep.subr.mxu0 0.0
        %4294 = vmatpush1.msra.mxu0 0.0
        %4295 = vmatprep.subr.mxu0 0.0
        %4296 = vmatpush1.msra.mxu0 0.0
        %4297 = vmatprep.subr.mxu0 0.0
        %4298 = vmatpush1.msra.mxu0 0.0
        %4299 = vmatprep.subr.mxu0 0.0
        %4300 = vmatpush1.msra.mxu0 0.0
        %4301 = vmatprep.subr.mxu0 0.0
        %4302 = vmatpush1.msra.mxu0 0.0
        %4303 = vmatprep.subr.mxu0 0.0
        %4304 = vmatpush1.msra.mxu0 0.0
        %4305 = vmatprep.subr.mxu0 0.0
        %4306 = vmatpush1.msra.mxu0 0.0
        %4307 = vmatprep.mubr.f32.mxu0 0.0
        %4308 = vmatmul.mubr.f32.gmra.mrb[0].mxu0 %v4232
        %v4309 = vpop.f32.mrb[0].mxu0
        %v4310 = vadd.f32 0.0, %v4309
        %v4311 = vpop.f32.mrb[0].mxu0
        %4312 = vmatprep.mubr.f32.mxu0 0.0
        %4313 = vmatmul.mubr.f32.gmra.mrb[0].mxu0 %v4235
        %v4314 = vpop.f32.mrb[0].mxu0
        %v4315 = vadd.f32 0.0, %v4314
        %v4316 = vpop.f32.mrb[0].mxu0
        %4317 = vmatprep.mubr.f32.mxu0 0.0
        %4318 = vmatmul.mubr.f32.gmra.mrb[0].mxu0 %v4238
        %v4319 = vpop.f32.mrb[0].mxu0
        %v4320 = vadd.f32 0.0, %v4319
        %v4321 = vpop.f32.mrb[0].mxu0
        %4322 = vmatprep.mubr.f32.mxu0 0.0
        %4323 = vmatmul.mubr.f32.gmra.mrb[0].mxu0 %v4241
        %v4324 = vpop.f32.mrb[0].mxu0
        %v4325 = vadd.f32 0.0, %v4324
        %v4326 = vpop.f32.mrb[0].mxu0
        %4327 = vdwg.mxu0
        %v4328 = vadd.f32 %v4125, %v4310
        %v4329 = vadd.f32 %v4126, %v4315
        %v4330 = vadd.f32 %v4127, %v4320
        %v4331 = vadd.f32 %v4128, %v4325
        %v4332 = vld [vmem:[%s5] sm:$0xff]
        %v4333 = vld [vmem:[%s5 + $0x8] sm:$0xff]
        %v4334 = vld [vmem:[%s5 + $0x10] sm:$0xff]
        %v4335 = vld [vmem:[%s5 + $0x18] sm:$0xff]
        %4337 = vset.pattern.permute.xlu0 0
        %4338 = vperm.xlu0 %4337, %v4332
        %v4339 = vpop.permute.xlu0 %4338
        %4342 = vset.pattern.permute.xlu0 0
        %4343 = vperm.xlu0 %4342, %v4333
        %v4344 = vpop.permute.xlu0 %4343
        %4347 = vset.pattern.permute.xlu0 0
        %4348 = vperm.xlu0 %4347, %v4334
        %v4349 = vpop.permute.xlu0 %4348
        %4352 = vset.pattern.permute.xlu0 0
        %4353 = vperm.xlu0 %4352, %v4335
        %v4354 = vpop.permute.xlu0 %4353
        %v4356 = vadd.f32 %v4328, %v4339
        %v4357 = vadd.f32 %v4329, %v4344
        %v4358 = vadd.f32 %v4330, %v4349
        %v4359 = vadd.f32 %v4331, %v4354
        %vm4360 = vcmp.ge.f32.partialorder %v4356, 0.0
        %vm4361 = vcmp.ge.f32.partialorder %v4357, 0.0
        %vm4362 = vcmp.ge.f32.partialorder %v4358, 0.0
        %vm4363 = vcmp.ge.f32.partialorder %v4359, 0.0
        %v4364 = vmul.f32 %v4356, 0.2
        %v4365 = vmul.f32 %v4357, 0.2
        %v4366 = vmul.f32 %v4358, 0.2
        %v4367 = vmul.f32 %v4359, 0.2
        %v4368 = vsel %vm4360, %v4356, %v4364
        %v4369 = vsel %vm4361, %v4357, %v4365
        %v4370 = vsel %vm4362, %v4358, %v4366
        %v4371 = vsel %vm4363, %v4359, %v4367
        %v4372 = vld [vmem:[%s7] sm:$0xff]
        %v4373 = vld [vmem:[%s7 + $0x8] sm:$0xff]
        %v4375 = vsel %vm837, %v4368, 0
        %v4378 = vsel %vm837, %v4369, 0
        %v4381 = vsel %vm837, %v4370, 0
        %v4384 = vsel %vm837, %v4371, 0
        %4386 = vmatprep.subr.mxu0 0.0
        %4387 = vmatpush1.msra.mxu0 %v4372
        %4388 = vmatprep.subr.mxu0 0.0
        %4389 = vmatpush1.msra.mxu0 %v4373
        %4390 = vmatprep.subr.mxu0 0.0
        %4391 = vmatpush1.msra.mxu0 0.0
        %4392 = vmatprep.subr.mxu0 0.0
        %4393 = vmatpush1.msra.mxu0 0.0
        %4394 = vmatprep.subr.mxu0 0.0
        %4395 = vmatpush1.msra.mxu0 0.0
        %4396 = vmatprep.subr.mxu0 0.0
        %4397 = vmatpush1.msra.mxu0 0.0
        %4398 = vmatprep.subr.mxu0 0.0
        %4399 = vmatpush1.msra.mxu0 0.0
        %4400 = vmatprep.subr.mxu0 0.0
        %4401 = vmatpush1.msra.mxu0 0.0
        %4402 = vmatprep.subr.mxu0 0.0
        %4403 = vmatpush1.msra.mxu0 0.0
        %4404 = vmatprep.subr.mxu0 0.0
        %4405 = vmatpush1.msra.mxu0 0.0
        %4406 = vmatprep.subr.mxu0 0.0
        %4407 = vmatpush1.msra.mxu0 0.0
        %4408 = vmatprep.subr.mxu0 0.0
        %4409 = vmatpush1.msra.mxu0 0.0
        %4410 = vmatprep.subr.mxu0 0.0
        %4411 = vmatpush1.msra.mxu0 0.0
        %4412 = vmatprep.subr.mxu0 0.0
        %4413 = vmatpush1.msra.mxu0 0.0
        %4414 = vmatprep.subr.mxu0 0.0
        %4415 = vmatpush1.msra.mxu0 0.0
        %4416 = vmatprep.subr.mxu0 0.0
        %4417 = vmatpush1.msra.mxu0 0.0
        %4418 = vmatprep.subr.mxu0 0.0
        %4419 = vmatpush1.msra.mxu0 0.0
        %4420 = vmatprep.subr.mxu0 0.0
        %4421 = vmatpush1.msra.mxu0 0.0
        %4422 = vmatprep.subr.mxu0 0.0
        %4423 = vmatpush1.msra.mxu0 0.0
        %4424 = vmatprep.subr.mxu0 0.0
        %4425 = vmatpush1.msra.mxu0 0.0
        %4426 = vmatprep.subr.mxu0 0.0
        %4427 = vmatpush1.msra.mxu0 0.0
        %4428 = vmatprep.subr.mxu0 0.0
        %4429 = vmatpush1.msra.mxu0 0.0
        %4430 = vmatprep.subr.mxu0 0.0
        %4431 = vmatpush1.msra.mxu0 0.0
        %4432 = vmatprep.subr.mxu0 0.0
        %4433 = vmatpush1.msra.mxu0 0.0
        %4434 = vmatprep.subr.mxu0 0.0
        %4435 = vmatpush1.msra.mxu0 0.0
        %4436 = vmatprep.subr.mxu0 0.0
        %4437 = vmatpush1.msra.mxu0 0.0
        %4438 = vmatprep.subr.mxu0 0.0
        %4439 = vmatpush1.msra.mxu0 0.0
        %4440 = vmatprep.subr.mxu0 0.0
        %4441 = vmatpush1.msra.mxu0 0.0
        %4442 = vmatprep.subr.mxu0 0.0
        %4443 = vmatpush1.msra.mxu0 0.0
        %4444 = vmatprep.subr.mxu0 0.0
        %4445 = vmatpush1.msra.mxu0 0.0
        %4446 = vmatprep.subr.mxu0 0.0
        %4447 = vmatpush1.msra.mxu0 0.0
        %4448 = vmatprep.subr.mxu0 0.0
        %4449 = vmatpush1.msra.mxu0 0.0
        %4450 = vmatprep.mubr.f32.mxu0 0.0
        %4451 = vmatmul.mubr.f32.gmra.mrb[0].mxu0 %v4375
        %v4452 = vpop.f32.mrb[0].mxu0
        %v4453 = vadd.f32 0.0, %v4452
        %v4454 = vpop.f32.mrb[0].mxu0
        %4455 = vmatprep.mubr.f32.mxu0 0.0
        %4456 = vmatmul.mubr.f32.gmra.mrb[0].mxu0 %v4378
        %v4457 = vpop.f32.mrb[0].mxu0
        %v4458 = vadd.f32 0.0, %v4457
        %v4459 = vpop.f32.mrb[0].mxu0
        %4460 = vmatprep.mubr.f32.mxu0 0.0
        %4461 = vmatmul.mubr.f32.gmra.mrb[0].mxu0 %v4381
        %v4462 = vpop.f32.mrb[0].mxu0
        %v4463 = vadd.f32 0.0, %v4462
        %v4464 = vpop.f32.mrb[0].mxu0
        %4465 = vmatprep.mubr.f32.mxu0 0.0
        %4466 = vmatmul.mubr.f32.gmra.mrb[0].mxu0 %v4384
        %v4467 = vpop.f32.mrb[0].mxu0
        %v4468 = vadd.f32 0.0, %v4467
        %v4469 = vpop.f32.mrb[0].mxu0
        %4470 = vdwg.mxu0
        %v4471 = vld [vmem:[#allocation10] sm:$0xff]
        %v4472 = vld [vmem:[#allocation10 + $0x8] sm:$0xff]
        %v4474 = vsel %vm632, %v4471, 0
        %v4477 = vsel %vm632, %v4472, 0
        %4479 = vmatprep.subr.mxu0 0.0
        %4480 = vmatpush1.msra.mxu0 %v4453
        %4481 = vmatprep.subr.mxu0 0.0
        %4482 = vmatpush1.msra.mxu0 %v4458
        %4483 = vmatprep.subr.mxu0 0.0
        %4484 = vmatpush1.msra.mxu0 %v4463
        %4485 = vmatprep.subr.mxu0 0.0
        %4486 = vmatpush1.msra.mxu0 %v4468
        %4487 = vmatprep.subr.mxu0 0.0
        %4488 = vmatpush1.msra.mxu0 0.0
        %4489 = vmatprep.subr.mxu0 0.0
        %4490 = vmatpush1.msra.mxu0 0.0
        %4491 = vmatprep.subr.mxu0 0.0
        %4492 = vmatpush1.msra.mxu0 0.0
        %4493 = vmatprep.subr.mxu0 0.0
        %4494 = vmatpush1.msra.mxu0 0.0
        %4495 = vmatprep.subr.mxu0 0.0
        %4496 = vmatpush1.msra.mxu0 0.0
        %4497 = vmatprep.subr.mxu0 0.0
        %4498 = vmatpush1.msra.mxu0 0.0
        %4499 = vmatprep.subr.mxu0 0.0
        %4500 = vmatpush1.msra.mxu0 0.0
        %4501 = vmatprep.subr.mxu0 0.0
        %4502 = vmatpush1.msra.mxu0 0.0
        %4503 = vmatprep.subr.mxu0 0.0
        %4504 = vmatpush1.msra.mxu0 0.0
        %4505 = vmatprep.subr.mxu0 0.0
        %4506 = vmatpush1.msra.mxu0 0.0
        %4507 = vmatprep.subr.mxu0 0.0
        %4508 = vmatpush1.msra.mxu0 0.0
        %4509 = vmatprep.subr.mxu0 0.0
        %4510 = vmatpush1.msra.mxu0 0.0
        %4511 = vmatprep.subr.mxu0 0.0
        %4512 = vmatpush1.msra.mxu0 0.0
        %4513 = vmatprep.subr.mxu0 0.0
        %4514 = vmatpush1.msra.mxu0 0.0
        %4515 = vmatprep.subr.mxu0 0.0
        %4516 = vmatpush1.msra.mxu0 0.0
        %4517 = vmatprep.subr.mxu0 0.0
        %4518 = vmatpush1.msra.mxu0 0.0
        %4519 = vmatprep.subr.mxu0 0.0
        %4520 = vmatpush1.msra.mxu0 0.0
        %4521 = vmatprep.subr.mxu0 0.0
        %4522 = vmatpush1.msra.mxu0 0.0
        %4523 = vmatprep.subr.mxu0 0.0
        %4524 = vmatpush1.msra.mxu0 0.0
        %4525 = vmatprep.subr.mxu0 0.0
        %4526 = vmatpush1.msra.mxu0 0.0
        %4527 = vmatprep.subr.mxu0 0.0
        %4528 = vmatpush1.msra.mxu0 0.0
        %4529 = vmatprep.subr.mxu0 0.0
        %4530 = vmatpush1.msra.mxu0 0.0
        %4531 = vmatprep.subr.mxu0 0.0
        %4532 = vmatpush1.msra.mxu0 0.0
        %4533 = vmatprep.subr.mxu0 0.0
        %4534 = vmatpush1.msra.mxu0 0.0
        %4535 = vmatprep.subr.mxu0 0.0
        %4536 = vmatpush1.msra.mxu0 0.0
        %4537 = vmatprep.subr.mxu0 0.0
        %4538 = vmatpush1.msra.mxu0 0.0
        %4539 = vmatprep.subr.mxu0 0.0
        %4540 = vmatpush1.msra.mxu0 0.0
        %4541 = vmatprep.subr.mxu0 0.0
        %4542 = vmatpush1.msra.mxu0 0.0
        %4543 = vmatprep.mubr.f32.mxu0 0.0
        %4544 = vmatmul.mubr.f32.gmra.mrb[0].mxu0 %v4474
        %v4545 = vpop.f32.mrb[0].mxu0
        %v4546 = vadd.f32 0.0, %v4545
        %v4547 = vpop.f32.mrb[0].mxu0
        %4548 = vmatprep.mubr.f32.mxu0 0.0
        %4549 = vmatmul.mubr.f32.gmra.mrb[0].mxu0 %v4477
        %v4550 = vpop.f32.mrb[0].mxu0
        %v4551 = vadd.f32 0.0, %v4550
        %v4552 = vpop.f32.mrb[0].mxu0
        %4553 = vdwg.mxu0
        %v4554 = vld [vmem:[#allocation13] sm:$0xff]
        %v4555 = vld [vmem:[#allocation13 + $0x8] sm:$0xff]
        %v4556 = vld [vmem:[#allocation13 + $0x10] sm:$0xff]
        %v4557 = vld [vmem:[#allocation13 + $0x18] sm:$0xff]
        %v4558 = vld [vmem:[#allocation13 + $0x20] sm:$0xff]
        %v4559 = vld [vmem:[#allocation13 + $0x28] sm:$0xff]
        %v4560 = vld [vmem:[#allocation13 + $0x30] sm:$0xff]
        %v4561 = vld [vmem:[#allocation13 + $0x38] sm:$0xff]
        %s4562 = scalar_lea.vmem [#allocation10], 16
        %v4563 = vld [vmem:[%s4562] sm:$0xff]
        %v4564 = vld [vmem:[%s4562 + $0x8] sm:$0xff]
        %v4566 = vsel %vm632, %v4563, 0
        %v4569 = vsel %vm632, %v4564, 0
        %4571 = vmatprep.subr.mxu0 0.0
        %4572 = vmatpush1.msra.mxu0 %v4453
        %4573 = vmatprep.subr.mxu0 0.0
        %4574 = vmatpush1.msra.mxu0 %v4458
        %4575 = vmatprep.subr.mxu0 0.0
        %4576 = vmatpush1.msra.mxu0 %v4463
        %4577 = vmatprep.subr.mxu0 0.0
        %4578 = vmatpush1.msra.mxu0 %v4468
        %4579 = vmatprep.subr.mxu0 0.0
        %4580 = vmatpush1.msra.mxu0 0.0
        %4581 = vmatprep.subr.mxu0 0.0
        %4582 = vmatpush1.msra.mxu0 0.0
        %4583 = vmatprep.subr.mxu0 0.0
        %4584 = vmatpush1.msra.mxu0 0.0
        %4585 = vmatprep.subr.mxu0 0.0
        %4586 = vmatpush1.msra.mxu0 0.0
        %4587 = vmatprep.subr.mxu0 0.0
        %4588 = vmatpush1.msra.mxu0 0.0
        %4589 = vmatprep.subr.mxu0 0.0
        %4590 = vmatpush1.msra.mxu0 0.0
        %4591 = vmatprep.subr.mxu0 0.0
        %4592 = vmatpush1.msra.mxu0 0.0
        %4593 = vmatprep.subr.mxu0 0.0
        %4594 = vmatpush1.msra.mxu0 0.0
        %4595 = vmatprep.subr.mxu0 0.0
        %4596 = vmatpush1.msra.mxu0 0.0
        %4597 = vmatprep.subr.mxu0 0.0
        %4598 = vmatpush1.msra.mxu0 0.0
        %4599 = vmatprep.subr.mxu0 0.0
        %4600 = vmatpush1.msra.mxu0 0.0
        %4601 = vmatprep.subr.mxu0 0.0
        %4602 = vmatpush1.msra.mxu0 0.0
        %4603 = vmatprep.subr.mxu0 0.0
        %4604 = vmatpush1.msra.mxu0 0.0
        %4605 = vmatprep.subr.mxu0 0.0
        %4606 = vmatpush1.msra.mxu0 0.0
        %4607 = vmatprep.subr.mxu0 0.0
        %4608 = vmatpush1.msra.mxu0 0.0
        %4609 = vmatprep.subr.mxu0 0.0
        %4610 = vmatpush1.msra.mxu0 0.0
        %4611 = vmatprep.subr.mxu0 0.0
        %4612 = vmatpush1.msra.mxu0 0.0
        %4613 = vmatprep.subr.mxu0 0.0
        %4614 = vmatpush1.msra.mxu0 0.0
        %4615 = vmatprep.subr.mxu0 0.0
        %4616 = vmatpush1.msra.mxu0 0.0
        %4617 = vmatprep.subr.mxu0 0.0
        %4618 = vmatpush1.msra.mxu0 0.0
        %4619 = vmatprep.subr.mxu0 0.0
        %4620 = vmatpush1.msra.mxu0 0.0
        %4621 = vmatprep.subr.mxu0 0.0
        %4622 = vmatpush1.msra.mxu0 0.0
        %4623 = vmatprep.subr.mxu0 0.0
        %4624 = vmatpush1.msra.mxu0 0.0
        %4625 = vmatprep.subr.mxu0 0.0
        %4626 = vmatpush1.msra.mxu0 0.0
        %4627 = vmatprep.subr.mxu0 0.0
        %4628 = vmatpush1.msra.mxu0 0.0
        %4629 = vmatprep.subr.mxu0 0.0
        %4630 = vmatpush1.msra.mxu0 0.0
        %4631 = vmatprep.subr.mxu0 0.0
        %4632 = vmatpush1.msra.mxu0 0.0
        %4633 = vmatprep.subr.mxu0 0.0
        %4634 = vmatpush1.msra.mxu0 0.0
        %4635 = vmatprep.mubr.f32.mxu0 0.0
        %4636 = vmatmul.mubr.f32.gmra.mrb[0].mxu0 %v4566
        %v4637 = vpop.f32.mrb[0].mxu0
        %v4638 = vadd.f32 0.0, %v4637
        %v4639 = vpop.f32.mrb[0].mxu0
        %4640 = vmatprep.mubr.f32.mxu0 0.0
        %4641 = vmatmul.mubr.f32.gmra.mrb[0].mxu0 %v4569
        %v4642 = vpop.f32.mrb[0].mxu0
        %v4643 = vadd.f32 0.0, %v4642
        %v4644 = vpop.f32.mrb[0].mxu0
        %4645 = vdwg.mxu0
        %s4646 = scalar_lea.vmem [#allocation13], 64
        %v4647 = vld [vmem:[%s4646] sm:$0xff]
        %v4648 = vld [vmem:[%s4646 + $0x8] sm:$0xff]
        %v4649 = vld [vmem:[%s4646 + $0x10] sm:$0xff]
        %v4650 = vld [vmem:[%s4646 + $0x18] sm:$0xff]
        %v4651 = vld [vmem:[%s4646 + $0x20] sm:$0xff]
        %v4652 = vld [vmem:[%s4646 + $0x28] sm:$0xff]
        %v4653 = vld [vmem:[%s4646 + $0x30] sm:$0xff]
        %v4654 = vld [vmem:[%s4646 + $0x38] sm:$0xff]
        %vm4655 = vcmask 523264
        %v4657 = vsel %vm4655, %v4638, 0
        %v4660 = vsel %vm4655, %v4643, 0
        %4662 = vmatprep.subr.mxu0 0.0
        %4663 = vmatpush1.msra.mxu0 %v4647
        %4664 = vmatprep.subr.mxu0 0.0
        %4665 = vmatpush1.msra.mxu0 %v4648
        %4666 = vmatprep.subr.mxu0 0.0
        %4667 = vmatpush1.msra.mxu0 %v4649
        %4668 = vmatprep.subr.mxu0 0.0
        %4669 = vmatpush1.msra.mxu0 %v4650
        %4670 = vmatprep.subr.mxu0 0.0
        %4671 = vmatpush1.msra.mxu0 %v4651
        %4672 = vmatprep.subr.mxu0 0.0
        %4673 = vmatpush1.msra.mxu0 %v4652
        %4674 = vmatprep.subr.mxu0 0.0
        %4675 = vmatpush1.msra.mxu0 %v4653
        %4676 = vmatprep.subr.mxu0 0.0
        %4677 = vmatpush1.msra.mxu0 %v4654
        %4678 = vmatprep.subr.mxu0 0.0
        %4679 = vmatpush1.msra.mxu0 0.0
        %4680 = vmatprep.subr.mxu0 0.0
        %4681 = vmatpush1.msra.mxu0 0.0
        %4682 = vmatprep.subr.mxu0 0.0
        %4683 = vmatpush1.msra.mxu0 0.0
        %4684 = vmatprep.subr.mxu0 0.0
        %4685 = vmatpush1.msra.mxu0 0.0
        %4686 = vmatprep.subr.mxu0 0.0
        %4687 = vmatpush1.msra.mxu0 0.0
        %4688 = vmatprep.subr.mxu0 0.0
        %4689 = vmatpush1.msra.mxu0 0.0
        %4690 = vmatprep.subr.mxu0 0.0
        %4691 = vmatpush1.msra.mxu0 0.0
        %4692 = vmatprep.subr.mxu0 0.0
        %4693 = vmatpush1.msra.mxu0 0.0
        %4694 = vmatprep.subr.mxu0 0.0
        %4695 = vmatpush1.msra.mxu0 0.0
        %4696 = vmatprep.subr.mxu0 0.0
        %4697 = vmatpush1.msra.mxu0 0.0
        %4698 = vmatprep.subr.mxu0 0.0
        %4699 = vmatpush1.msra.mxu0 0.0
        %4700 = vmatprep.subr.mxu0 0.0
        %4701 = vmatpush1.msra.mxu0 0.0
        %4702 = vmatprep.subr.mxu0 0.0
        %4703 = vmatpush1.msra.mxu0 0.0
        %4704 = vmatprep.subr.mxu0 0.0
        %4705 = vmatpush1.msra.mxu0 0.0
        %4706 = vmatprep.subr.mxu0 0.0
        %4707 = vmatpush1.msra.mxu0 0.0
        %4708 = vmatprep.subr.mxu0 0.0
        %4709 = vmatpush1.msra.mxu0 0.0
        %4710 = vmatprep.subr.mxu0 0.0
        %4711 = vmatpush1.msra.mxu0 0.0
        %4712 = vmatprep.subr.mxu0 0.0
        %4713 = vmatpush1.msra.mxu0 0.0
        %4714 = vmatprep.subr.mxu0 0.0
        %4715 = vmatpush1.msra.mxu0 0.0
        %4716 = vmatprep.subr.mxu0 0.0
        %4717 = vmatpush1.msra.mxu0 0.0
        %4718 = vmatprep.subr.mxu0 0.0
        %4719 = vmatpush1.msra.mxu0 0.0
        %4720 = vmatprep.subr.mxu0 0.0
        %4721 = vmatpush1.msra.mxu0 0.0
        %4722 = vmatprep.subr.mxu0 0.0
        %4723 = vmatpush1.msra.mxu0 0.0
        %4724 = vmatprep.subr.mxu0 0.0
        %4725 = vmatpush1.msra.mxu0 0.0
        %4726 = vmatprep.mubr.f32.mxu0 0.0
        %4727 = vmatmul.mubr.f32.gmra.mrb[0].mxu0 %v4657
        %v4728 = vpop.f32.mrb[0].mxu0
        %v4729 = vadd.f32 0.0, %v4728
        %v4730 = vpop.f32.mrb[0].mxu0
        %4731 = vmatprep.mubr.f32.mxu0 0.0
        %4732 = vmatmul.mubr.f32.gmra.mrb[0].mxu0 %v4660
        %v4733 = vpop.f32.mrb[0].mxu0
        %v4734 = vadd.f32 0.0, %v4733
        %v4735 = vpop.f32.mrb[0].mxu0
        %4736 = vdwg.mxu0
        %v4738 = vsel %vm4655, %v4546, 0
        %v4741 = vsel %vm4655, %v4551, 0
        %4743 = vmatprep.subr.mxu0 0.0
        %4744 = vmatpush1.msra.mxu0 %v4554
        %4745 = vmatprep.subr.mxu0 0.0
        %4746 = vmatpush1.msra.mxu0 %v4555
        %4747 = vmatprep.subr.mxu0 0.0
        %4748 = vmatpush1.msra.mxu0 %v4556
        %4749 = vmatprep.subr.mxu0 0.0
        %4750 = vmatpush1.msra.mxu0 %v4557
        %4751 = vmatprep.subr.mxu0 0.0
        %4752 = vmatpush1.msra.mxu0 %v4558
        %4753 = vmatprep.subr.mxu0 0.0
        %4754 = vmatpush1.msra.mxu0 %v4559
        %4755 = vmatprep.subr.mxu0 0.0
        %4756 = vmatpush1.msra.mxu0 %v4560
        %4757 = vmatprep.subr.mxu0 0.0
        %4758 = vmatpush1.msra.mxu0 %v4561
        %4759 = vmatprep.subr.mxu0 0.0
        %4760 = vmatpush1.msra.mxu0 0.0
        %4761 = vmatprep.subr.mxu0 0.0
        %4762 = vmatpush1.msra.mxu0 0.0
        %4763 = vmatprep.subr.mxu0 0.0
        %4764 = vmatpush1.msra.mxu0 0.0
        %4765 = vmatprep.subr.mxu0 0.0
        %4766 = vmatpush1.msra.mxu0 0.0
        %4767 = vmatprep.subr.mxu0 0.0
        %4768 = vmatpush1.msra.mxu0 0.0
        %4769 = vmatprep.subr.mxu0 0.0
        %4770 = vmatpush1.msra.mxu0 0.0
        %4771 = vmatprep.subr.mxu0 0.0
        %4772 = vmatpush1.msra.mxu0 0.0
        %4773 = vmatprep.subr.mxu0 0.0
        %4774 = vmatpush1.msra.mxu0 0.0
        %4775 = vmatprep.subr.mxu0 0.0
        %4776 = vmatpush1.msra.mxu0 0.0
        %4777 = vmatprep.subr.mxu0 0.0
        %4778 = vmatpush1.msra.mxu0 0.0
        %4779 = vmatprep.subr.mxu0 0.0
        %4780 = vmatpush1.msra.mxu0 0.0
        %4781 = vmatprep.subr.mxu0 0.0
        %4782 = vmatpush1.msra.mxu0 0.0
        %4783 = vmatprep.subr.mxu0 0.0
        %4784 = vmatpush1.msra.mxu0 0.0
        %4785 = vmatprep.subr.mxu0 0.0
        %4786 = vmatpush1.msra.mxu0 0.0
        %4787 = vmatprep.subr.mxu0 0.0
        %4788 = vmatpush1.msra.mxu0 0.0
        %4789 = vmatprep.subr.mxu0 0.0
        %4790 = vmatpush1.msra.mxu0 0.0
        %4791 = vmatprep.subr.mxu0 0.0
        %4792 = vmatpush1.msra.mxu0 0.0
        %4793 = vmatprep.subr.mxu0 0.0
        %4794 = vmatpush1.msra.mxu0 0.0
        %4795 = vmatprep.subr.mxu0 0.0
        %4796 = vmatpush1.msra.mxu0 0.0
        %4797 = vmatprep.subr.mxu0 0.0
        %4798 = vmatpush1.msra.mxu0 0.0
        %4799 = vmatprep.subr.mxu0 0.0
        %4800 = vmatpush1.msra.mxu0 0.0
        %4801 = vmatprep.subr.mxu0 0.0
        %4802 = vmatpush1.msra.mxu0 0.0
        %4803 = vmatprep.subr.mxu0 0.0
        %4804 = vmatpush1.msra.mxu0 0.0
        %4805 = vmatprep.subr.mxu0 0.0
        %4806 = vmatpush1.msra.mxu0 0.0
        %4807 = vmatprep.mubr.f32.mxu0 0.0
        %4808 = vmatmul.mubr.f32.gmra.mrb[0].mxu0 %v4738
        %v4809 = vpop.f32.mrb[0].mxu0
        %v4810 = vadd.f32 %v4729, %v4809
        %v4811 = vpop.f32.mrb[0].mxu0
        %4812 = vmatprep.mubr.f32.mxu0 0.0
        %4813 = vmatmul.mubr.f32.gmra.mrb[0].mxu0 %v4741
        %v4814 = vpop.f32.mrb[0].mxu0
        %v4815 = vadd.f32 %v4734, %v4814
        %v4816 = vpop.f32.mrb[0].mxu0
        %4817 = vdwg.mxu0
        %s4818 = scalar_lea.vmem [#allocation10], 32
        %v4819 = vld [vmem:[%s4818] sm:$0xff]
        %v4820 = vld [vmem:[%s4818 + $0x8] sm:$0xff]
        %v4822 = vsel %vm632, %v4819, 0
        %v4825 = vsel %vm632, %v4820, 0
        %4827 = vmatprep.subr.mxu0 0.0
        %4828 = vmatpush1.msra.mxu0 %v4453
        %4829 = vmatprep.subr.mxu0 0.0
        %4830 = vmatpush1.msra.mxu0 %v4458
        %4831 = vmatprep.subr.mxu0 0.0
        %4832 = vmatpush1.msra.mxu0 %v4463
        %4833 = vmatprep.subr.mxu0 0.0
        %4834 = vmatpush1.msra.mxu0 %v4468
        %4835 = vmatprep.subr.mxu0 0.0
        %4836 = vmatpush1.msra.mxu0 0.0
        %4837 = vmatprep.subr.mxu0 0.0
        %4838 = vmatpush1.msra.mxu0 0.0
        %4839 = vmatprep.subr.mxu0 0.0
        %4840 = vmatpush1.msra.mxu0 0.0
        %4841 = vmatprep.subr.mxu0 0.0
        %4842 = vmatpush1.msra.mxu0 0.0
        %4843 = vmatprep.subr.mxu0 0.0
        %4844 = vmatpush1.msra.mxu0 0.0
        %4845 = vmatprep.subr.mxu0 0.0
        %4846 = vmatpush1.msra.mxu0 0.0
        %4847 = vmatprep.subr.mxu0 0.0
        %4848 = vmatpush1.msra.mxu0 0.0
        %4849 = vmatprep.subr.mxu0 0.0
        %4850 = vmatpush1.msra.mxu0 0.0
        %4851 = vmatprep.subr.mxu0 0.0
        %4852 = vmatpush1.msra.mxu0 0.0
        %4853 = vmatprep.subr.mxu0 0.0
        %4854 = vmatpush1.msra.mxu0 0.0
        %4855 = vmatprep.subr.mxu0 0.0
        %4856 = vmatpush1.msra.mxu0 0.0
        %4857 = vmatprep.subr.mxu0 0.0
        %4858 = vmatpush1.msra.mxu0 0.0
        %4859 = vmatprep.subr.mxu0 0.0
        %4860 = vmatpush1.msra.mxu0 0.0
        %4861 = vmatprep.subr.mxu0 0.0
        %4862 = vmatpush1.msra.mxu0 0.0
        %4863 = vmatprep.subr.mxu0 0.0
        %4864 = vmatpush1.msra.mxu0 0.0
        %4865 = vmatprep.subr.mxu0 0.0
        %4866 = vmatpush1.msra.mxu0 0.0
        %4867 = vmatprep.subr.mxu0 0.0
        %4868 = vmatpush1.msra.mxu0 0.0
        %4869 = vmatprep.subr.mxu0 0.0
        %4870 = vmatpush1.msra.mxu0 0.0
        %4871 = vmatprep.subr.mxu0 0.0
        %4872 = vmatpush1.msra.mxu0 0.0
        %4873 = vmatprep.subr.mxu0 0.0
        %4874 = vmatpush1.msra.mxu0 0.0
        %4875 = vmatprep.subr.mxu0 0.0
        %4876 = vmatpush1.msra.mxu0 0.0
        %4877 = vmatprep.subr.mxu0 0.0
        %4878 = vmatpush1.msra.mxu0 0.0
        %4879 = vmatprep.subr.mxu0 0.0
        %4880 = vmatpush1.msra.mxu0 0.0
        %4881 = vmatprep.subr.mxu0 0.0
        %4882 = vmatpush1.msra.mxu0 0.0
        %4883 = vmatprep.subr.mxu0 0.0
        %4884 = vmatpush1.msra.mxu0 0.0
        %4885 = vmatprep.subr.mxu0 0.0
        %4886 = vmatpush1.msra.mxu0 0.0
        %4887 = vmatprep.subr.mxu0 0.0
        %4888 = vmatpush1.msra.mxu0 0.0
        %4889 = vmatprep.subr.mxu0 0.0
        %4890 = vmatpush1.msra.mxu0 0.0
        %4891 = vmatprep.mubr.f32.mxu0 0.0
        %4892 = vmatmul.mubr.f32.gmra.mrb[0].mxu0 %v4822
        %v4893 = vpop.f32.mrb[0].mxu0
        %v4894 = vadd.f32 0.0, %v4893
        %v4895 = vpop.f32.mrb[0].mxu0
        %4896 = vmatprep.mubr.f32.mxu0 0.0
        %4897 = vmatmul.mubr.f32.gmra.mrb[0].mxu0 %v4825
        %v4898 = vpop.f32.mrb[0].mxu0
        %v4899 = vadd.f32 0.0, %v4898
        %v4900 = vpop.f32.mrb[0].mxu0
        %4901 = vdwg.mxu0
        %s4902 = scalar_lea.vmem [#allocation13], 128
        %v4903 = vld [vmem:[%s4902] sm:$0xff]
        %v4904 = vld [vmem:[%s4902 + $0x8] sm:$0xff]
        %v4905 = vld [vmem:[%s4902 + $0x10] sm:$0xff]
        %v4906 = vld [vmem:[%s4902 + $0x18] sm:$0xff]
        %v4907 = vld [vmem:[%s4902 + $0x20] sm:$0xff]
        %v4908 = vld [vmem:[%s4902 + $0x28] sm:$0xff]
        %v4909 = vld [vmem:[%s4902 + $0x30] sm:$0xff]
        %v4910 = vld [vmem:[%s4902 + $0x38] sm:$0xff]
        %v4912 = vsel %vm4655, %v4894, 0
        %v4915 = vsel %vm4655, %v4899, 0
        %4917 = vmatprep.subr.mxu0 0.0
        %4918 = vmatpush1.msra.mxu0 %v4903
        %4919 = vmatprep.subr.mxu0 0.0
        %4920 = vmatpush1.msra.mxu0 %v4904
        %4921 = vmatprep.subr.mxu0 0.0
        %4922 = vmatpush1.msra.mxu0 %v4905
        %4923 = vmatprep.subr.mxu0 0.0
        %4924 = vmatpush1.msra.mxu0 %v4906
        %4925 = vmatprep.subr.mxu0 0.0
        %4926 = vmatpush1.msra.mxu0 %v4907
        %4927 = vmatprep.subr.mxu0 0.0
        %4928 = vmatpush1.msra.mxu0 %v4908
        %4929 = vmatprep.subr.mxu0 0.0
        %4930 = vmatpush1.msra.mxu0 %v4909
        %4931 = vmatprep.subr.mxu0 0.0
        %4932 = vmatpush1.msra.mxu0 %v4910
        %4933 = vmatprep.subr.mxu0 0.0
        %4934 = vmatpush1.msra.mxu0 0.0
        %4935 = vmatprep.subr.mxu0 0.0
        %4936 = vmatpush1.msra.mxu0 0.0
        %4937 = vmatprep.subr.mxu0 0.0
        %4938 = vmatpush1.msra.mxu0 0.0
        %4939 = vmatprep.subr.mxu0 0.0
        %4940 = vmatpush1.msra.mxu0 0.0
        %4941 = vmatprep.subr.mxu0 0.0
        %4942 = vmatpush1.msra.mxu0 0.0
        %4943 = vmatprep.subr.mxu0 0.0
        %4944 = vmatpush1.msra.mxu0 0.0
        %4945 = vmatprep.subr.mxu0 0.0
        %4946 = vmatpush1.msra.mxu0 0.0
        %4947 = vmatprep.subr.mxu0 0.0
        %4948 = vmatpush1.msra.mxu0 0.0
        %4949 = vmatprep.subr.mxu0 0.0
        %4950 = vmatpush1.msra.mxu0 0.0
        %4951 = vmatprep.subr.mxu0 0.0
        %4952 = vmatpush1.msra.mxu0 0.0
        %4953 = vmatprep.subr.mxu0 0.0
        %4954 = vmatpush1.msra.mxu0 0.0
        %4955 = vmatprep.subr.mxu0 0.0
        %4956 = vmatpush1.msra.mxu0 0.0
        %4957 = vmatprep.subr.mxu0 0.0
        %4958 = vmatpush1.msra.mxu0 0.0
        %4959 = vmatprep.subr.mxu0 0.0
        %4960 = vmatpush1.msra.mxu0 0.0
        %4961 = vmatprep.subr.mxu0 0.0
        %4962 = vmatpush1.msra.mxu0 0.0
        %4963 = vmatprep.subr.mxu0 0.0
        %4964 = vmatpush1.msra.mxu0 0.0
        %4965 = vmatprep.subr.mxu0 0.0
        %4966 = vmatpush1.msra.mxu0 0.0
        %4967 = vmatprep.subr.mxu0 0.0
        %4968 = vmatpush1.msra.mxu0 0.0
        %4969 = vmatprep.subr.mxu0 0.0
        %4970 = vmatpush1.msra.mxu0 0.0
        %4971 = vmatprep.subr.mxu0 0.0
        %4972 = vmatpush1.msra.mxu0 0.0
        %4973 = vmatprep.subr.mxu0 0.0
        %4974 = vmatpush1.msra.mxu0 0.0
        %4975 = vmatprep.subr.mxu0 0.0
        %4976 = vmatpush1.msra.mxu0 0.0
        %4977 = vmatprep.subr.mxu0 0.0
        %4978 = vmatpush1.msra.mxu0 0.0
        %4979 = vmatprep.subr.mxu0 0.0
        %4980 = vmatpush1.msra.mxu0 0.0
        %4981 = vmatprep.mubr.f32.mxu0 0.0
        %4982 = vmatmul.mubr.f32.gmra.mrb[0].mxu0 %v4912
        %v4983 = vpop.f32.mrb[0].mxu0
        %v4984 = vadd.f32 0.0, %v4983
        %v4985 = vpop.f32.mrb[0].mxu0
        %4986 = vmatprep.mubr.f32.mxu0 0.0
        %4987 = vmatmul.mubr.f32.gmra.mrb[0].mxu0 %v4915
        %v4988 = vpop.f32.mrb[0].mxu0
        %v4989 = vadd.f32 0.0, %v4988
        %v4990 = vpop.f32.mrb[0].mxu0
        %4991 = vdwg.mxu0
        %v4992 = vadd.f32 %v4810, %v4984
        %v4993 = vadd.f32 %v4815, %v4989
        %s4994 = scalar_lea.vmem [#allocation10], 48
        %v4995 = vld [vmem:[%s4994] sm:$0xff]
        %v4996 = vld [vmem:[%s4994 + $0x8] sm:$0xff]
        %v4998 = vsel %vm632, %v4995, 0
        %v5001 = vsel %vm632, %v4996, 0
        %5003 = vmatprep.subr.mxu0 0.0
        %5004 = vmatpush1.msra.mxu0 %v4453
        %5005 = vmatprep.subr.mxu0 0.0
        %5006 = vmatpush1.msra.mxu0 %v4458
        %5007 = vmatprep.subr.mxu0 0.0
        %5008 = vmatpush1.msra.mxu0 %v4463
        %5009 = vmatprep.subr.mxu0 0.0
        %5010 = vmatpush1.msra.mxu0 %v4468
        %5011 = vmatprep.subr.mxu0 0.0
        %5012 = vmatpush1.msra.mxu0 0.0
        %5013 = vmatprep.subr.mxu0 0.0
        %5014 = vmatpush1.msra.mxu0 0.0
        %5015 = vmatprep.subr.mxu0 0.0
        %5016 = vmatpush1.msra.mxu0 0.0
        %5017 = vmatprep.subr.mxu0 0.0
        %5018 = vmatpush1.msra.mxu0 0.0
        %5019 = vmatprep.subr.mxu0 0.0
        %5020 = vmatpush1.msra.mxu0 0.0
        %5021 = vmatprep.subr.mxu0 0.0
        %5022 = vmatpush1.msra.mxu0 0.0
        %5023 = vmatprep.subr.mxu0 0.0
        %5024 = vmatpush1.msra.mxu0 0.0
        %5025 = vmatprep.subr.mxu0 0.0
        %5026 = vmatpush1.msra.mxu0 0.0
        %5027 = vmatprep.subr.mxu0 0.0
        %5028 = vmatpush1.msra.mxu0 0.0
        %5029 = vmatprep.subr.mxu0 0.0
        %5030 = vmatpush1.msra.mxu0 0.0
        %5031 = vmatprep.subr.mxu0 0.0
        %5032 = vmatpush1.msra.mxu0 0.0
        %5033 = vmatprep.subr.mxu0 0.0
        %5034 = vmatpush1.msra.mxu0 0.0
        %5035 = vmatprep.subr.mxu0 0.0
        %5036 = vmatpush1.msra.mxu0 0.0
        %5037 = vmatprep.subr.mxu0 0.0
        %5038 = vmatpush1.msra.mxu0 0.0
        %5039 = vmatprep.subr.mxu0 0.0
        %5040 = vmatpush1.msra.mxu0 0.0
        %5041 = vmatprep.subr.mxu0 0.0
        %5042 = vmatpush1.msra.mxu0 0.0
        %5043 = vmatprep.subr.mxu0 0.0
        %5044 = vmatpush1.msra.mxu0 0.0
        %5045 = vmatprep.subr.mxu0 0.0
        %5046 = vmatpush1.msra.mxu0 0.0
        %5047 = vmatprep.subr.mxu0 0.0
        %5048 = vmatpush1.msra.mxu0 0.0
        %5049 = vmatprep.subr.mxu0 0.0
        %5050 = vmatpush1.msra.mxu0 0.0
        %5051 = vmatprep.subr.mxu0 0.0
        %5052 = vmatpush1.msra.mxu0 0.0
        %5053 = vmatprep.subr.mxu0 0.0
        %5054 = vmatpush1.msra.mxu0 0.0
        %5055 = vmatprep.subr.mxu0 0.0
        %5056 = vmatpush1.msra.mxu0 0.0
        %5057 = vmatprep.subr.mxu0 0.0
        %5058 = vmatpush1.msra.mxu0 0.0
        %5059 = vmatprep.subr.mxu0 0.0
        %5060 = vmatpush1.msra.mxu0 0.0
        %5061 = vmatprep.subr.mxu0 0.0
        %5062 = vmatpush1.msra.mxu0 0.0
        %5063 = vmatprep.subr.mxu0 0.0
        %5064 = vmatpush1.msra.mxu0 0.0
        %5065 = vmatprep.subr.mxu0 0.0
        %5066 = vmatpush1.msra.mxu0 0.0
        %5067 = vmatprep.mubr.f32.mxu0 0.0
        %5068 = vmatmul.mubr.f32.gmra.mrb[0].mxu0 %v4998
        %v5069 = vpop.f32.mrb[0].mxu0
        %v5070 = vadd.f32 0.0, %v5069
        %v5071 = vpop.f32.mrb[0].mxu0
        %5072 = vmatprep.mubr.f32.mxu0 0.0
        %5073 = vmatmul.mubr.f32.gmra.mrb[0].mxu0 %v5001
        %v5074 = vpop.f32.mrb[0].mxu0
        %v5075 = vadd.f32 0.0, %v5074
        %v5076 = vpop.f32.mrb[0].mxu0
        %5077 = vdwg.mxu0
        %s5078 = scalar_lea.vmem [#allocation13], 192
        %v5079 = vld [vmem:[%s5078] sm:$0xff]
        %v5080 = vld [vmem:[%s5078 + $0x8] sm:$0xff]
        %v5081 = vld [vmem:[%s5078 + $0x10] sm:$0xff]
        %v5082 = vld [vmem:[%s5078 + $0x18] sm:$0xff]
        %v5083 = vld [vmem:[%s5078 + $0x20] sm:$0xff]
        %v5084 = vld [vmem:[%s5078 + $0x28] sm:$0xff]
        %v5085 = vld [vmem:[%s5078 + $0x30] sm:$0xff]
        %v5086 = vld [vmem:[%s5078 + $0x38] sm:$0xff]
        %v5088 = vsel %vm4655, %v5070, 0
        %v5091 = vsel %vm4655, %v5075, 0
        %5093 = vmatprep.subr.mxu0 0.0
        %5094 = vmatpush1.msra.mxu0 %v5079
        %5095 = vmatprep.subr.mxu0 0.0
        %5096 = vmatpush1.msra.mxu0 %v5080
        %5097 = vmatprep.subr.mxu0 0.0
        %5098 = vmatpush1.msra.mxu0 %v5081
        %5099 = vmatprep.subr.mxu0 0.0
        %5100 = vmatpush1.msra.mxu0 %v5082
        %5101 = vmatprep.subr.mxu0 0.0
        %5102 = vmatpush1.msra.mxu0 %v5083
        %5103 = vmatprep.subr.mxu0 0.0
        %5104 = vmatpush1.msra.mxu0 %v5084
        %5105 = vmatprep.subr.mxu0 0.0
        %5106 = vmatpush1.msra.mxu0 %v5085
        %5107 = vmatprep.subr.mxu0 0.0
        %5108 = vmatpush1.msra.mxu0 %v5086
        %5109 = vmatprep.subr.mxu0 0.0
        %5110 = vmatpush1.msra.mxu0 0.0
        %5111 = vmatprep.subr.mxu0 0.0
        %5112 = vmatpush1.msra.mxu0 0.0
        %5113 = vmatprep.subr.mxu0 0.0
        %5114 = vmatpush1.msra.mxu0 0.0
        %5115 = vmatprep.subr.mxu0 0.0
        %5116 = vmatpush1.msra.mxu0 0.0
        %5117 = vmatprep.subr.mxu0 0.0
        %5118 = vmatpush1.msra.mxu0 0.0
        %5119 = vmatprep.subr.mxu0 0.0
        %5120 = vmatpush1.msra.mxu0 0.0
        %5121 = vmatprep.subr.mxu0 0.0
        %5122 = vmatpush1.msra.mxu0 0.0
        %5123 = vmatprep.subr.mxu0 0.0
        %5124 = vmatpush1.msra.mxu0 0.0
        %5125 = vmatprep.subr.mxu0 0.0
        %5126 = vmatpush1.msra.mxu0 0.0
        %5127 = vmatprep.subr.mxu0 0.0
        %5128 = vmatpush1.msra.mxu0 0.0
        %5129 = vmatprep.subr.mxu0 0.0
        %5130 = vmatpush1.msra.mxu0 0.0
        %5131 = vmatprep.subr.mxu0 0.0
        %5132 = vmatpush1.msra.mxu0 0.0
        %5133 = vmatprep.subr.mxu0 0.0
        %5134 = vmatpush1.msra.mxu0 0.0
        %5135 = vmatprep.subr.mxu0 0.0
        %5136 = vmatpush1.msra.mxu0 0.0
        %5137 = vmatprep.subr.mxu0 0.0
        %5138 = vmatpush1.msra.mxu0 0.0
        %5139 = vmatprep.subr.mxu0 0.0
        %5140 = vmatpush1.msra.mxu0 0.0
        %5141 = vmatprep.subr.mxu0 0.0
        %5142 = vmatpush1.msra.mxu0 0.0
        %5143 = vmatprep.subr.mxu0 0.0
        %5144 = vmatpush1.msra.mxu0 0.0
        %5145 = vmatprep.subr.mxu0 0.0
        %5146 = vmatpush1.msra.mxu0 0.0
        %5147 = vmatprep.subr.mxu0 0.0
        %5148 = vmatpush1.msra.mxu0 0.0
        %5149 = vmatprep.subr.mxu0 0.0
        %5150 = vmatpush1.msra.mxu0 0.0
        %5151 = vmatprep.subr.mxu0 0.0
        %5152 = vmatpush1.msra.mxu0 0.0
        %5153 = vmatprep.subr.mxu0 0.0
        %5154 = vmatpush1.msra.mxu0 0.0
        %5155 = vmatprep.subr.mxu0 0.0
        %5156 = vmatpush1.msra.mxu0 0.0
        %5157 = vmatprep.mubr.f32.mxu0 0.0
        %5158 = vmatmul.mubr.f32.gmra.mrb[0].mxu0 %v5088
        %v5159 = vpop.f32.mrb[0].mxu0
        %v5160 = vadd.f32 0.0, %v5159
        %v5161 = vpop.f32.mrb[0].mxu0
        %5162 = vmatprep.mubr.f32.mxu0 0.0
        %5163 = vmatmul.mubr.f32.gmra.mrb[0].mxu0 %v5091
        %v5164 = vpop.f32.mrb[0].mxu0
        %v5165 = vadd.f32 0.0, %v5164
        %v5166 = vpop.f32.mrb[0].mxu0
        %5167 = vdwg.mxu0
        %v5168 = vadd.f32 %v4992, %v5160
        %v5169 = vadd.f32 %v4993, %v5165
        %s5170 = scalar_lea.vmem [#allocation10], 64
        %v5171 = vld [vmem:[%s5170] sm:$0xff]
        %v5172 = vld [vmem:[%s5170 + $0x8] sm:$0xff]
        %v5174 = vsel %vm632, %v5171, 0
        %v5177 = vsel %vm632, %v5172, 0
        %5179 = vmatprep.subr.mxu0 0.0
        %5180 = vmatpush1.msra.mxu0 %v4453
        %5181 = vmatprep.subr.mxu0 0.0
        %5182 = vmatpush1.msra.mxu0 %v4458
        %5183 = vmatprep.subr.mxu0 0.0
        %5184 = vmatpush1.msra.mxu0 %v4463
        %5185 = vmatprep.subr.mxu0 0.0
        %5186 = vmatpush1.msra.mxu0 %v4468
        %5187 = vmatprep.subr.mxu0 0.0
        %5188 = vmatpush1.msra.mxu0 0.0
        %5189 = vmatprep.subr.mxu0 0.0
        %5190 = vmatpush1.msra.mxu0 0.0
        %5191 = vmatprep.subr.mxu0 0.0
        %5192 = vmatpush1.msra.mxu0 0.0
        %5193 = vmatprep.subr.mxu0 0.0
        %5194 = vmatpush1.msra.mxu0 0.0
        %5195 = vmatprep.subr.mxu0 0.0
        %5196 = vmatpush1.msra.mxu0 0.0
        %5197 = vmatprep.subr.mxu0 0.0
        %5198 = vmatpush1.msra.mxu0 0.0
        %5199 = vmatprep.subr.mxu0 0.0
        %5200 = vmatpush1.msra.mxu0 0.0
        %5201 = vmatprep.subr.mxu0 0.0
        %5202 = vmatpush1.msra.mxu0 0.0
        %5203 = vmatprep.subr.mxu0 0.0
        %5204 = vmatpush1.msra.mxu0 0.0
        %5205 = vmatprep.subr.mxu0 0.0
        %5206 = vmatpush1.msra.mxu0 0.0
        %5207 = vmatprep.subr.mxu0 0.0
        %5208 = vmatpush1.msra.mxu0 0.0
        %5209 = vmatprep.subr.mxu0 0.0
        %5210 = vmatpush1.msra.mxu0 0.0
        %5211 = vmatprep.subr.mxu0 0.0
        %5212 = vmatpush1.msra.mxu0 0.0
        %5213 = vmatprep.subr.mxu0 0.0
        %5214 = vmatpush1.msra.mxu0 0.0
        %5215 = vmatprep.subr.mxu0 0.0
        %5216 = vmatpush1.msra.mxu0 0.0
        %5217 = vmatprep.subr.mxu0 0.0
        %5218 = vmatpush1.msra.mxu0 0.0
        %5219 = vmatprep.subr.mxu0 0.0
        %5220 = vmatpush1.msra.mxu0 0.0
        %5221 = vmatprep.subr.mxu0 0.0
        %5222 = vmatpush1.msra.mxu0 0.0
        %5223 = vmatprep.subr.mxu0 0.0
        %5224 = vmatpush1.msra.mxu0 0.0
        %5225 = vmatprep.subr.mxu0 0.0
        %5226 = vmatpush1.msra.mxu0 0.0
        %5227 = vmatprep.subr.mxu0 0.0
        %5228 = vmatpush1.msra.mxu0 0.0
        %5229 = vmatprep.subr.mxu0 0.0
        %5230 = vmatpush1.msra.mxu0 0.0
        %5231 = vmatprep.subr.mxu0 0.0
        %5232 = vmatpush1.msra.mxu0 0.0
        %5233 = vmatprep.subr.mxu0 0.0
        %5234 = vmatpush1.msra.mxu0 0.0
        %5235 = vmatprep.subr.mxu0 0.0
        %5236 = vmatpush1.msra.mxu0 0.0
        %5237 = vmatprep.subr.mxu0 0.0
        %5238 = vmatpush1.msra.mxu0 0.0
        %5239 = vmatprep.subr.mxu0 0.0
        %5240 = vmatpush1.msra.mxu0 0.0
        %5241 = vmatprep.subr.mxu0 0.0
        %5242 = vmatpush1.msra.mxu0 0.0
        %5243 = vmatprep.mubr.f32.mxu0 0.0
        %5244 = vmatmul.mubr.f32.gmra.mrb[0].mxu0 %v5174
        %v5245 = vpop.f32.mrb[0].mxu0
        %v5246 = vadd.f32 0.0, %v5245
        %v5247 = vpop.f32.mrb[0].mxu0
        %5248 = vmatprep.mubr.f32.mxu0 0.0
        %5249 = vmatmul.mubr.f32.gmra.mrb[0].mxu0 %v5177
        %v5250 = vpop.f32.mrb[0].mxu0
        %v5251 = vadd.f32 0.0, %v5250
        %v5252 = vpop.f32.mrb[0].mxu0
        %5253 = vdwg.mxu0
        %s5254 = scalar_lea.vmem [#allocation13], 256
        %v5255 = vld [vmem:[%s5254] sm:$0xff]
        %v5256 = vld [vmem:[%s5254 + $0x8] sm:$0xff]
        %v5257 = vld [vmem:[%s5254 + $0x10] sm:$0xff]
        %v5258 = vld [vmem:[%s5254 + $0x18] sm:$0xff]
        %v5259 = vld [vmem:[%s5254 + $0x20] sm:$0xff]
        %v5260 = vld [vmem:[%s5254 + $0x28] sm:$0xff]
        %v5261 = vld [vmem:[%s5254 + $0x30] sm:$0xff]
        %v5262 = vld [vmem:[%s5254 + $0x38] sm:$0xff]
        %v5264 = vsel %vm4655, %v5246, 0
        %v5267 = vsel %vm4655, %v5251, 0
        %5269 = vmatprep.subr.mxu0 0.0
        %5270 = vmatpush1.msra.mxu0 %v5255
        %5271 = vmatprep.subr.mxu0 0.0
        %5272 = vmatpush1.msra.mxu0 %v5256
        %5273 = vmatprep.subr.mxu0 0.0
        %5274 = vmatpush1.msra.mxu0 %v5257
        %5275 = vmatprep.subr.mxu0 0.0
        %5276 = vmatpush1.msra.mxu0 %v5258
        %5277 = vmatprep.subr.mxu0 0.0
        %5278 = vmatpush1.msra.mxu0 %v5259
        %5279 = vmatprep.subr.mxu0 0.0
        %5280 = vmatpush1.msra.mxu0 %v5260
        %5281 = vmatprep.subr.mxu0 0.0
        %5282 = vmatpush1.msra.mxu0 %v5261
        %5283 = vmatprep.subr.mxu0 0.0
        %5284 = vmatpush1.msra.mxu0 %v5262
        %5285 = vmatprep.subr.mxu0 0.0
        %5286 = vmatpush1.msra.mxu0 0.0
        %5287 = vmatprep.subr.mxu0 0.0
        %5288 = vmatpush1.msra.mxu0 0.0
        %5289 = vmatprep.subr.mxu0 0.0
        %5290 = vmatpush1.msra.mxu0 0.0
        %5291 = vmatprep.subr.mxu0 0.0
        %5292 = vmatpush1.msra.mxu0 0.0
        %5293 = vmatprep.subr.mxu0 0.0
        %5294 = vmatpush1.msra.mxu0 0.0
        %5295 = vmatprep.subr.mxu0 0.0
        %5296 = vmatpush1.msra.mxu0 0.0
        %5297 = vmatprep.subr.mxu0 0.0
        %5298 = vmatpush1.msra.mxu0 0.0
        %5299 = vmatprep.subr.mxu0 0.0
        %5300 = vmatpush1.msra.mxu0 0.0
        %5301 = vmatprep.subr.mxu0 0.0
        %5302 = vmatpush1.msra.mxu0 0.0
        %5303 = vmatprep.subr.mxu0 0.0
        %5304 = vmatpush1.msra.mxu0 0.0
        %5305 = vmatprep.subr.mxu0 0.0
        %5306 = vmatpush1.msra.mxu0 0.0
        %5307 = vmatprep.subr.mxu0 0.0
        %5308 = vmatpush1.msra.mxu0 0.0
        %5309 = vmatprep.subr.mxu0 0.0
        %5310 = vmatpush1.msra.mxu0 0.0
        %5311 = vmatprep.subr.mxu0 0.0
        %5312 = vmatpush1.msra.mxu0 0.0
        %5313 = vmatprep.subr.mxu0 0.0
        %5314 = vmatpush1.msra.mxu0 0.0
        %5315 = vmatprep.subr.mxu0 0.0
        %5316 = vmatpush1.msra.mxu0 0.0
        %5317 = vmatprep.subr.mxu0 0.0
        %5318 = vmatpush1.msra.mxu0 0.0
        %5319 = vmatprep.subr.mxu0 0.0
        %5320 = vmatpush1.msra.mxu0 0.0
        %5321 = vmatprep.subr.mxu0 0.0
        %5322 = vmatpush1.msra.mxu0 0.0
        %5323 = vmatprep.subr.mxu0 0.0
        %5324 = vmatpush1.msra.mxu0 0.0
        %5325 = vmatprep.subr.mxu0 0.0
        %5326 = vmatpush1.msra.mxu0 0.0
        %5327 = vmatprep.subr.mxu0 0.0
        %5328 = vmatpush1.msra.mxu0 0.0
        %5329 = vmatprep.subr.mxu0 0.0
        %5330 = vmatpush1.msra.mxu0 0.0
        %5331 = vmatprep.subr.mxu0 0.0
        %5332 = vmatpush1.msra.mxu0 0.0
        %5333 = vmatprep.mubr.f32.mxu0 0.0
        %5334 = vmatmul.mubr.f32.gmra.mrb[0].mxu0 %v5264
        %v5335 = vpop.f32.mrb[0].mxu0
        %v5336 = vadd.f32 0.0, %v5335
        %v5337 = vpop.f32.mrb[0].mxu0
        %5338 = vmatprep.mubr.f32.mxu0 0.0
        %5339 = vmatmul.mubr.f32.gmra.mrb[0].mxu0 %v5267
        %v5340 = vpop.f32.mrb[0].mxu0
        %v5341 = vadd.f32 0.0, %v5340
        %v5342 = vpop.f32.mrb[0].mxu0
        %5343 = vdwg.mxu0
        %v5344 = vadd.f32 %v5168, %v5336
        %v5345 = vadd.f32 %v5169, %v5341
        %s5346 = scalar_lea.vmem [#allocation10], 80
        %v5347 = vld [vmem:[%s5346] sm:$0xff]
        %v5348 = vld [vmem:[%s5346 + $0x8] sm:$0xff]
        %v5350 = vsel %vm632, %v5347, 0
        %v5353 = vsel %vm632, %v5348, 0
        %5355 = vmatprep.subr.mxu0 0.0
        %5356 = vmatpush1.msra.mxu0 %v4453
        %5357 = vmatprep.subr.mxu0 0.0
        %5358 = vmatpush1.msra.mxu0 %v4458
        %5359 = vmatprep.subr.mxu0 0.0
        %5360 = vmatpush1.msra.mxu0 %v4463
        %5361 = vmatprep.subr.mxu0 0.0
        %5362 = vmatpush1.msra.mxu0 %v4468
        %5363 = vmatprep.subr.mxu0 0.0
        %5364 = vmatpush1.msra.mxu0 0.0
        %5365 = vmatprep.subr.mxu0 0.0
        %5366 = vmatpush1.msra.mxu0 0.0
        %5367 = vmatprep.subr.mxu0 0.0
        %5368 = vmatpush1.msra.mxu0 0.0
        %5369 = vmatprep.subr.mxu0 0.0
        %5370 = vmatpush1.msra.mxu0 0.0
        %5371 = vmatprep.subr.mxu0 0.0
        %5372 = vmatpush1.msra.mxu0 0.0
        %5373 = vmatprep.subr.mxu0 0.0
        %5374 = vmatpush1.msra.mxu0 0.0
        %5375 = vmatprep.subr.mxu0 0.0
        %5376 = vmatpush1.msra.mxu0 0.0
        %5377 = vmatprep.subr.mxu0 0.0
        %5378 = vmatpush1.msra.mxu0 0.0
        %5379 = vmatprep.subr.mxu0 0.0
        %5380 = vmatpush1.msra.mxu0 0.0
        %5381 = vmatprep.subr.mxu0 0.0
        %5382 = vmatpush1.msra.mxu0 0.0
        %5383 = vmatprep.subr.mxu0 0.0
        %5384 = vmatpush1.msra.mxu0 0.0
        %5385 = vmatprep.subr.mxu0 0.0
        %5386 = vmatpush1.msra.mxu0 0.0
        %5387 = vmatprep.subr.mxu0 0.0
        %5388 = vmatpush1.msra.mxu0 0.0
        %5389 = vmatprep.subr.mxu0 0.0
        %5390 = vmatpush1.msra.mxu0 0.0
        %5391 = vmatprep.subr.mxu0 0.0
        %5392 = vmatpush1.msra.mxu0 0.0
        %5393 = vmatprep.subr.mxu0 0.0
        %5394 = vmatpush1.msra.mxu0 0.0
        %5395 = vmatprep.subr.mxu0 0.0
        %5396 = vmatpush1.msra.mxu0 0.0
        %5397 = vmatprep.subr.mxu0 0.0
        %5398 = vmatpush1.msra.mxu0 0.0
        %5399 = vmatprep.subr.mxu0 0.0
        %5400 = vmatpush1.msra.mxu0 0.0
        %5401 = vmatprep.subr.mxu0 0.0
        %5402 = vmatpush1.msra.mxu0 0.0
        %5403 = vmatprep.subr.mxu0 0.0
        %5404 = vmatpush1.msra.mxu0 0.0
        %5405 = vmatprep.subr.mxu0 0.0
        %5406 = vmatpush1.msra.mxu0 0.0
        %5407 = vmatprep.subr.mxu0 0.0
        %5408 = vmatpush1.msra.mxu0 0.0
        %5409 = vmatprep.subr.mxu0 0.0
        %5410 = vmatpush1.msra.mxu0 0.0
        %5411 = vmatprep.subr.mxu0 0.0
        %5412 = vmatpush1.msra.mxu0 0.0
        %5413 = vmatprep.subr.mxu0 0.0
        %5414 = vmatpush1.msra.mxu0 0.0
        %5415 = vmatprep.subr.mxu0 0.0
        %5416 = vmatpush1.msra.mxu0 0.0
        %5417 = vmatprep.subr.mxu0 0.0
        %5418 = vmatpush1.msra.mxu0 0.0
        %5419 = vmatprep.mubr.f32.mxu0 0.0
        %5420 = vmatmul.mubr.f32.gmra.mrb[0].mxu0 %v5350
        %v5421 = vpop.f32.mrb[0].mxu0
        %v5422 = vadd.f32 0.0, %v5421
        %v5423 = vpop.f32.mrb[0].mxu0
        %5424 = vmatprep.mubr.f32.mxu0 0.0
        %5425 = vmatmul.mubr.f32.gmra.mrb[0].mxu0 %v5353
        %v5426 = vpop.f32.mrb[0].mxu0
        %v5427 = vadd.f32 0.0, %v5426
        %v5428 = vpop.f32.mrb[0].mxu0
        %5429 = vdwg.mxu0
        %s5430 = scalar_lea.vmem [#allocation13], 320
        %v5431 = vld [vmem:[%s5430] sm:$0xff]
        %v5432 = vld [vmem:[%s5430 + $0x8] sm:$0xff]
        %v5433 = vld [vmem:[%s5430 + $0x10] sm:$0xff]
        %v5434 = vld [vmem:[%s5430 + $0x18] sm:$0xff]
        %v5435 = vld [vmem:[%s5430 + $0x20] sm:$0xff]
        %v5436 = vld [vmem:[%s5430 + $0x28] sm:$0xff]
        %v5437 = vld [vmem:[%s5430 + $0x30] sm:$0xff]
        %v5438 = vld [vmem:[%s5430 + $0x38] sm:$0xff]
        %v5440 = vsel %vm4655, %v5422, 0
        %v5443 = vsel %vm4655, %v5427, 0
        %5445 = vmatprep.subr.mxu0 0.0
        %5446 = vmatpush1.msra.mxu0 %v5431
        %5447 = vmatprep.subr.mxu0 0.0
        %5448 = vmatpush1.msra.mxu0 %v5432
        %5449 = vmatprep.subr.mxu0 0.0
        %5450 = vmatpush1.msra.mxu0 %v5433
        %5451 = vmatprep.subr.mxu0 0.0
        %5452 = vmatpush1.msra.mxu0 %v5434
        %5453 = vmatprep.subr.mxu0 0.0
        %5454 = vmatpush1.msra.mxu0 %v5435
        %5455 = vmatprep.subr.mxu0 0.0
        %5456 = vmatpush1.msra.mxu0 %v5436
        %5457 = vmatprep.subr.mxu0 0.0
        %5458 = vmatpush1.msra.mxu0 %v5437
        %5459 = vmatprep.subr.mxu0 0.0
        %5460 = vmatpush1.msra.mxu0 %v5438
        %5461 = vmatprep.subr.mxu0 0.0
        %5462 = vmatpush1.msra.mxu0 0.0
        %5463 = vmatprep.subr.mxu0 0.0
        %5464 = vmatpush1.msra.mxu0 0.0
        %5465 = vmatprep.subr.mxu0 0.0
        %5466 = vmatpush1.msra.mxu0 0.0
        %5467 = vmatprep.subr.mxu0 0.0
        %5468 = vmatpush1.msra.mxu0 0.0
        %5469 = vmatprep.subr.mxu0 0.0
        %5470 = vmatpush1.msra.mxu0 0.0
        %5471 = vmatprep.subr.mxu0 0.0
        %5472 = vmatpush1.msra.mxu0 0.0
        %5473 = vmatprep.subr.mxu0 0.0
        %5474 = vmatpush1.msra.mxu0 0.0
        %5475 = vmatprep.subr.mxu0 0.0
        %5476 = vmatpush1.msra.mxu0 0.0
        %5477 = vmatprep.subr.mxu0 0.0
        %5478 = vmatpush1.msra.mxu0 0.0
        %5479 = vmatprep.subr.mxu0 0.0
        %5480 = vmatpush1.msra.mxu0 0.0
        %5481 = vmatprep.subr.mxu0 0.0
        %5482 = vmatpush1.msra.mxu0 0.0
        %5483 = vmatprep.subr.mxu0 0.0
        %5484 = vmatpush1.msra.mxu0 0.0
        %5485 = vmatprep.subr.mxu0 0.0
        %5486 = vmatpush1.msra.mxu0 0.0
        %5487 = vmatprep.subr.mxu0 0.0
        %5488 = vmatpush1.msra.mxu0 0.0
        %5489 = vmatprep.subr.mxu0 0.0
        %5490 = vmatpush1.msra.mxu0 0.0
        %5491 = vmatprep.subr.mxu0 0.0
        %5492 = vmatpush1.msra.mxu0 0.0
        %5493 = vmatprep.subr.mxu0 0.0
        %5494 = vmatpush1.msra.mxu0 0.0
        %5495 = vmatprep.subr.mxu0 0.0
        %5496 = vmatpush1.msra.mxu0 0.0
        %5497 = vmatprep.subr.mxu0 0.0
        %5498 = vmatpush1.msra.mxu0 0.0
        %5499 = vmatprep.subr.mxu0 0.0
        %5500 = vmatpush1.msra.mxu0 0.0
        %5501 = vmatprep.subr.mxu0 0.0
        %5502 = vmatpush1.msra.mxu0 0.0
        %5503 = vmatprep.subr.mxu0 0.0
        %5504 = vmatpush1.msra.mxu0 0.0
        %5505 = vmatprep.subr.mxu0 0.0
        %5506 = vmatpush1.msra.mxu0 0.0
        %5507 = vmatprep.subr.mxu0 0.0
        %5508 = vmatpush1.msra.mxu0 0.0
        %5509 = vmatprep.mubr.f32.mxu0 0.0
        %5510 = vmatmul.mubr.f32.gmra.mrb[0].mxu0 %v5440
        %v5511 = vpop.f32.mrb[0].mxu0
        %v5512 = vadd.f32 0.0, %v5511
        %v5513 = vpop.f32.mrb[0].mxu0
        %5514 = vmatprep.mubr.f32.mxu0 0.0
        %5515 = vmatmul.mubr.f32.gmra.mrb[0].mxu0 %v5443
        %v5516 = vpop.f32.mrb[0].mxu0
        %v5517 = vadd.f32 0.0, %v5516
        %v5518 = vpop.f32.mrb[0].mxu0
        %5519 = vdwg.mxu0
        %v5520 = vadd.f32 %v5344, %v5512
        %v5521 = vadd.f32 %v5345, %v5517
        %s5522 = scalar_lea.vmem [#allocation10], 96
        %v5523 = vld [vmem:[%s5522] sm:$0xff]
        %v5524 = vld [vmem:[%s5522 + $0x8] sm:$0xff]
        %v5526 = vsel %vm632, %v5523, 0
        %v5529 = vsel %vm632, %v5524, 0
        %5531 = vmatprep.subr.mxu0 0.0
        %5532 = vmatpush1.msra.mxu0 %v4453
        %5533 = vmatprep.subr.mxu0 0.0
        %5534 = vmatpush1.msra.mxu0 %v4458
        %5535 = vmatprep.subr.mxu0 0.0
        %5536 = vmatpush1.msra.mxu0 %v4463
        %5537 = vmatprep.subr.mxu0 0.0
        %5538 = vmatpush1.msra.mxu0 %v4468
        %5539 = vmatprep.subr.mxu0 0.0
        %5540 = vmatpush1.msra.mxu0 0.0
        %5541 = vmatprep.subr.mxu0 0.0
        %5542 = vmatpush1.msra.mxu0 0.0
        %5543 = vmatprep.subr.mxu0 0.0
        %5544 = vmatpush1.msra.mxu0 0.0
        %5545 = vmatprep.subr.mxu0 0.0
        %5546 = vmatpush1.msra.mxu0 0.0
        %5547 = vmatprep.subr.mxu0 0.0
        %5548 = vmatpush1.msra.mxu0 0.0
        %5549 = vmatprep.subr.mxu0 0.0
        %5550 = vmatpush1.msra.mxu0 0.0
        %5551 = vmatprep.subr.mxu0 0.0
        %5552 = vmatpush1.msra.mxu0 0.0
        %5553 = vmatprep.subr.mxu0 0.0
        %5554 = vmatpush1.msra.mxu0 0.0
        %5555 = vmatprep.subr.mxu0 0.0
        %5556 = vmatpush1.msra.mxu0 0.0
        %5557 = vmatprep.subr.mxu0 0.0
        %5558 = vmatpush1.msra.mxu0 0.0
        %5559 = vmatprep.subr.mxu0 0.0
        %5560 = vmatpush1.msra.mxu0 0.0
        %5561 = vmatprep.subr.mxu0 0.0
        %5562 = vmatpush1.msra.mxu0 0.0
        %5563 = vmatprep.subr.mxu0 0.0
        %5564 = vmatpush1.msra.mxu0 0.0
        %5565 = vmatprep.subr.mxu0 0.0
        %5566 = vmatpush1.msra.mxu0 0.0
        %5567 = vmatprep.subr.mxu0 0.0
        %5568 = vmatpush1.msra.mxu0 0.0
        %5569 = vmatprep.subr.mxu0 0.0
        %5570 = vmatpush1.msra.mxu0 0.0
        %5571 = vmatprep.subr.mxu0 0.0
        %5572 = vmatpush1.msra.mxu0 0.0
        %5573 = vmatprep.subr.mxu0 0.0
        %5574 = vmatpush1.msra.mxu0 0.0
        %5575 = vmatprep.subr.mxu0 0.0
        %5576 = vmatpush1.msra.mxu0 0.0
        %5577 = vmatprep.subr.mxu0 0.0
        %5578 = vmatpush1.msra.mxu0 0.0
        %5579 = vmatprep.subr.mxu0 0.0
        %5580 = vmatpush1.msra.mxu0 0.0
        %5581 = vmatprep.subr.mxu0 0.0
        %5582 = vmatpush1.msra.mxu0 0.0
        %5583 = vmatprep.subr.mxu0 0.0
        %5584 = vmatpush1.msra.mxu0 0.0
        %5585 = vmatprep.subr.mxu0 0.0
        %5586 = vmatpush1.msra.mxu0 0.0
        %5587 = vmatprep.subr.mxu0 0.0
        %5588 = vmatpush1.msra.mxu0 0.0
        %5589 = vmatprep.subr.mxu0 0.0
        %5590 = vmatpush1.msra.mxu0 0.0
        %5591 = vmatprep.subr.mxu0 0.0
        %5592 = vmatpush1.msra.mxu0 0.0
        %5593 = vmatprep.subr.mxu0 0.0
        %5594 = vmatpush1.msra.mxu0 0.0
        %5595 = vmatprep.mubr.f32.mxu0 0.0
        %5596 = vmatmul.mubr.f32.gmra.mrb[0].mxu0 %v5526
        %v5597 = vpop.f32.mrb[0].mxu0
        %v5598 = vadd.f32 0.0, %v5597
        %v5599 = vpop.f32.mrb[0].mxu0
        %5600 = vmatprep.mubr.f32.mxu0 0.0
        %5601 = vmatmul.mubr.f32.gmra.mrb[0].mxu0 %v5529
        %v5602 = vpop.f32.mrb[0].mxu0
        %v5603 = vadd.f32 0.0, %v5602
        %v5604 = vpop.f32.mrb[0].mxu0
        %5605 = vdwg.mxu0
        %s5606 = scalar_lea.vmem [#allocation13], 384
        %v5607 = vld [vmem:[%s5606] sm:$0xff]
        %v5608 = vld [vmem:[%s5606 + $0x8] sm:$0xff]
        %v5609 = vld [vmem:[%s5606 + $0x10] sm:$0xff]
        %v5610 = vld [vmem:[%s5606 + $0x18] sm:$0xff]
        %v5611 = vld [vmem:[%s5606 + $0x20] sm:$0xff]
        %v5612 = vld [vmem:[%s5606 + $0x28] sm:$0xff]
        %v5613 = vld [vmem:[%s5606 + $0x30] sm:$0xff]
        %v5614 = vld [vmem:[%s5606 + $0x38] sm:$0xff]
        %v5616 = vsel %vm4655, %v5598, 0
        %v5619 = vsel %vm4655, %v5603, 0
        %5621 = vmatprep.subr.mxu0 0.0
        %5622 = vmatpush1.msra.mxu0 %v5607
        %5623 = vmatprep.subr.mxu0 0.0
        %5624 = vmatpush1.msra.mxu0 %v5608
        %5625 = vmatprep.subr.mxu0 0.0
        %5626 = vmatpush1.msra.mxu0 %v5609
        %5627 = vmatprep.subr.mxu0 0.0
        %5628 = vmatpush1.msra.mxu0 %v5610
        %5629 = vmatprep.subr.mxu0 0.0
        %5630 = vmatpush1.msra.mxu0 %v5611
        %5631 = vmatprep.subr.mxu0 0.0
        %5632 = vmatpush1.msra.mxu0 %v5612
        %5633 = vmatprep.subr.mxu0 0.0
        %5634 = vmatpush1.msra.mxu0 %v5613
        %5635 = vmatprep.subr.mxu0 0.0
        %5636 = vmatpush1.msra.mxu0 %v5614
        %5637 = vmatprep.subr.mxu0 0.0
        %5638 = vmatpush1.msra.mxu0 0.0
        %5639 = vmatprep.subr.mxu0 0.0
        %5640 = vmatpush1.msra.mxu0 0.0
        %5641 = vmatprep.subr.mxu0 0.0
        %5642 = vmatpush1.msra.mxu0 0.0
        %5643 = vmatprep.subr.mxu0 0.0
        %5644 = vmatpush1.msra.mxu0 0.0
        %5645 = vmatprep.subr.mxu0 0.0
        %5646 = vmatpush1.msra.mxu0 0.0
        %5647 = vmatprep.subr.mxu0 0.0
        %5648 = vmatpush1.msra.mxu0 0.0
        %5649 = vmatprep.subr.mxu0 0.0
        %5650 = vmatpush1.msra.mxu0 0.0
        %5651 = vmatprep.subr.mxu0 0.0
        %5652 = vmatpush1.msra.mxu0 0.0
        %5653 = vmatprep.subr.mxu0 0.0
        %5654 = vmatpush1.msra.mxu0 0.0
        %5655 = vmatprep.subr.mxu0 0.0
        %5656 = vmatpush1.msra.mxu0 0.0
        %5657 = vmatprep.subr.mxu0 0.0
        %5658 = vmatpush1.msra.mxu0 0.0
        %5659 = vmatprep.subr.mxu0 0.0
        %5660 = vmatpush1.msra.mxu0 0.0
        %5661 = vmatprep.subr.mxu0 0.0
        %5662 = vmatpush1.msra.mxu0 0.0
        %5663 = vmatprep.subr.mxu0 0.0
        %5664 = vmatpush1.msra.mxu0 0.0
        %5665 = vmatprep.subr.mxu0 0.0
        %5666 = vmatpush1.msra.mxu0 0.0
        %5667 = vmatprep.subr.mxu0 0.0
        %5668 = vmatpush1.msra.mxu0 0.0
        %5669 = vmatprep.subr.mxu0 0.0
        %5670 = vmatpush1.msra.mxu0 0.0
        %5671 = vmatprep.subr.mxu0 0.0
        %5672 = vmatpush1.msra.mxu0 0.0
        %5673 = vmatprep.subr.mxu0 0.0
        %5674 = vmatpush1.msra.mxu0 0.0
        %5675 = vmatprep.subr.mxu0 0.0
        %5676 = vmatpush1.msra.mxu0 0.0
        %5677 = vmatprep.subr.mxu0 0.0
        %5678 = vmatpush1.msra.mxu0 0.0
        %5679 = vmatprep.subr.mxu0 0.0
        %5680 = vmatpush1.msra.mxu0 0.0
        %5681 = vmatprep.subr.mxu0 0.0
        %5682 = vmatpush1.msra.mxu0 0.0
        %5683 = vmatprep.subr.mxu0 0.0
        %5684 = vmatpush1.msra.mxu0 0.0
        %5685 = vmatprep.mubr.f32.mxu0 0.0
        %5686 = vmatmul.mubr.f32.gmra.mrb[0].mxu0 %v5616
        %v5687 = vpop.f32.mrb[0].mxu0
        %v5688 = vadd.f32 0.0, %v5687
        %v5689 = vpop.f32.mrb[0].mxu0
        %5690 = vmatprep.mubr.f32.mxu0 0.0
        %5691 = vmatmul.mubr.f32.gmra.mrb[0].mxu0 %v5619
        %v5692 = vpop.f32.mrb[0].mxu0
        %v5693 = vadd.f32 0.0, %v5692
        %v5694 = vpop.f32.mrb[0].mxu0
        %5695 = vdwg.mxu0
        %v5696 = vadd.f32 %v5520, %v5688
        %v5697 = vadd.f32 %v5521, %v5693
        %s5698 = scalar_lea.vmem [#allocation10], 112
        %v5699 = vld [vmem:[%s5698] sm:$0xff]
        %v5700 = vld [vmem:[%s5698 + $0x8] sm:$0xff]
        %v5702 = vsel %vm632, %v5699, 0
        %v5705 = vsel %vm632, %v5700, 0
        %5707 = vmatprep.subr.mxu0 0.0
        %5708 = vmatpush1.msra.mxu0 %v4453
        %5709 = vmatprep.subr.mxu0 0.0
        %5710 = vmatpush1.msra.mxu0 %v4458
        %5711 = vmatprep.subr.mxu0 0.0
        %5712 = vmatpush1.msra.mxu0 %v4463
        %5713 = vmatprep.subr.mxu0 0.0
        %5714 = vmatpush1.msra.mxu0 %v4468
        %5715 = vmatprep.subr.mxu0 0.0
        %5716 = vmatpush1.msra.mxu0 0.0
        %5717 = vmatprep.subr.mxu0 0.0
        %5718 = vmatpush1.msra.mxu0 0.0
        %5719 = vmatprep.subr.mxu0 0.0
        %5720 = vmatpush1.msra.mxu0 0.0
        %5721 = vmatprep.subr.mxu0 0.0
        %5722 = vmatpush1.msra.mxu0 0.0
        %5723 = vmatprep.subr.mxu0 0.0
        %5724 = vmatpush1.msra.mxu0 0.0
        %5725 = vmatprep.subr.mxu0 0.0
        %5726 = vmatpush1.msra.mxu0 0.0
        %5727 = vmatprep.subr.mxu0 0.0
        %5728 = vmatpush1.msra.mxu0 0.0
        %5729 = vmatprep.subr.mxu0 0.0
        %5730 = vmatpush1.msra.mxu0 0.0
        %5731 = vmatprep.subr.mxu0 0.0
        %5732 = vmatpush1.msra.mxu0 0.0
        %5733 = vmatprep.subr.mxu0 0.0
        %5734 = vmatpush1.msra.mxu0 0.0
        %5735 = vmatprep.subr.mxu0 0.0
        %5736 = vmatpush1.msra.mxu0 0.0
        %5737 = vmatprep.subr.mxu0 0.0
        %5738 = vmatpush1.msra.mxu0 0.0
        %5739 = vmatprep.subr.mxu0 0.0
        %5740 = vmatpush1.msra.mxu0 0.0
        %5741 = vmatprep.subr.mxu0 0.0
        %5742 = vmatpush1.msra.mxu0 0.0
        %5743 = vmatprep.subr.mxu0 0.0
        %5744 = vmatpush1.msra.mxu0 0.0
        %5745 = vmatprep.subr.mxu0 0.0
        %5746 = vmatpush1.msra.mxu0 0.0
        %5747 = vmatprep.subr.mxu0 0.0
        %5748 = vmatpush1.msra.mxu0 0.0
        %5749 = vmatprep.subr.mxu0 0.0
        %5750 = vmatpush1.msra.mxu0 0.0
        %5751 = vmatprep.subr.mxu0 0.0
        %5752 = vmatpush1.msra.mxu0 0.0
        %5753 = vmatprep.subr.mxu0 0.0
        %5754 = vmatpush1.msra.mxu0 0.0
        %5755 = vmatprep.subr.mxu0 0.0
        %5756 = vmatpush1.msra.mxu0 0.0
        %5757 = vmatprep.subr.mxu0 0.0
        %5758 = vmatpush1.msra.mxu0 0.0
        %5759 = vmatprep.subr.mxu0 0.0
        %5760 = vmatpush1.msra.mxu0 0.0
        %5761 = vmatprep.subr.mxu0 0.0
        %5762 = vmatpush1.msra.mxu0 0.0
        %5763 = vmatprep.subr.mxu0 0.0
        %5764 = vmatpush1.msra.mxu0 0.0
        %5765 = vmatprep.subr.mxu0 0.0
        %5766 = vmatpush1.msra.mxu0 0.0
        %5767 = vmatprep.subr.mxu0 0.0
        %5768 = vmatpush1.msra.mxu0 0.0
        %5769 = vmatprep.subr.mxu0 0.0
        %5770 = vmatpush1.msra.mxu0 0.0
        %5771 = vmatprep.mubr.f32.mxu0 0.0
        %5772 = vmatmul.mubr.f32.gmra.mrb[0].mxu0 %v5702
        %v5773 = vpop.f32.mrb[0].mxu0
        %v5774 = vadd.f32 0.0, %v5773
        %v5775 = vpop.f32.mrb[0].mxu0
        %5776 = vmatprep.mubr.f32.mxu0 0.0
        %5777 = vmatmul.mubr.f32.gmra.mrb[0].mxu0 %v5705
        %v5778 = vpop.f32.mrb[0].mxu0
        %v5779 = vadd.f32 0.0, %v5778
        %v5780 = vpop.f32.mrb[0].mxu0
        %5781 = vdwg.mxu0
        %s5782 = scalar_lea.vmem [#allocation13], 448
        %v5783 = vld [vmem:[%s5782] sm:$0xff]
        %v5784 = vld [vmem:[%s5782 + $0x8] sm:$0xff]
        %v5785 = vld [vmem:[%s5782 + $0x10] sm:$0xff]
        %v5786 = vld [vmem:[%s5782 + $0x18] sm:$0xff]
        %v5787 = vld [vmem:[%s5782 + $0x20] sm:$0xff]
        %v5788 = vld [vmem:[%s5782 + $0x28] sm:$0xff]
        %v5789 = vld [vmem:[%s5782 + $0x30] sm:$0xff]
        %v5790 = vld [vmem:[%s5782 + $0x38] sm:$0xff]
        %v5792 = vsel %vm4655, %v5774, 0
        %v5795 = vsel %vm4655, %v5779, 0
        %5797 = vmatprep.subr.mxu0 0.0
        %5798 = vmatpush1.msra.mxu0 %v5783
        %5799 = vmatprep.subr.mxu0 0.0
        %5800 = vmatpush1.msra.mxu0 %v5784
        %5801 = vmatprep.subr.mxu0 0.0
        %5802 = vmatpush1.msra.mxu0 %v5785
        %5803 = vmatprep.subr.mxu0 0.0
        %5804 = vmatpush1.msra.mxu0 %v5786
        %5805 = vmatprep.subr.mxu0 0.0
        %5806 = vmatpush1.msra.mxu0 %v5787
        %5807 = vmatprep.subr.mxu0 0.0
        %5808 = vmatpush1.msra.mxu0 %v5788
        %5809 = vmatprep.subr.mxu0 0.0
        %5810 = vmatpush1.msra.mxu0 %v5789
        %5811 = vmatprep.subr.mxu0 0.0
        %5812 = vmatpush1.msra.mxu0 %v5790
        %5813 = vmatprep.subr.mxu0 0.0
        %5814 = vmatpush1.msra.mxu0 0.0
        %5815 = vmatprep.subr.mxu0 0.0
        %5816 = vmatpush1.msra.mxu0 0.0
        %5817 = vmatprep.subr.mxu0 0.0
        %5818 = vmatpush1.msra.mxu0 0.0
        %5819 = vmatprep.subr.mxu0 0.0
        %5820 = vmatpush1.msra.mxu0 0.0
        %5821 = vmatprep.subr.mxu0 0.0
        %5822 = vmatpush1.msra.mxu0 0.0
        %5823 = vmatprep.subr.mxu0 0.0
        %5824 = vmatpush1.msra.mxu0 0.0
        %5825 = vmatprep.subr.mxu0 0.0
        %5826 = vmatpush1.msra.mxu0 0.0
        %5827 = vmatprep.subr.mxu0 0.0
        %5828 = vmatpush1.msra.mxu0 0.0
        %5829 = vmatprep.subr.mxu0 0.0
        %5830 = vmatpush1.msra.mxu0 0.0
        %5831 = vmatprep.subr.mxu0 0.0
        %5832 = vmatpush1.msra.mxu0 0.0
        %5833 = vmatprep.subr.mxu0 0.0
        %5834 = vmatpush1.msra.mxu0 0.0
        %5835 = vmatprep.subr.mxu0 0.0
        %5836 = vmatpush1.msra.mxu0 0.0
        %5837 = vmatprep.subr.mxu0 0.0
        %5838 = vmatpush1.msra.mxu0 0.0
        %5839 = vmatprep.subr.mxu0 0.0
        %5840 = vmatpush1.msra.mxu0 0.0
        %5841 = vmatprep.subr.mxu0 0.0
        %5842 = vmatpush1.msra.mxu0 0.0
        %5843 = vmatprep.subr.mxu0 0.0
        %5844 = vmatpush1.msra.mxu0 0.0
        %5845 = vmatprep.subr.mxu0 0.0
        %5846 = vmatpush1.msra.mxu0 0.0
        %5847 = vmatprep.subr.mxu0 0.0
        %5848 = vmatpush1.msra.mxu0 0.0
        %5849 = vmatprep.subr.mxu0 0.0
        %5850 = vmatpush1.msra.mxu0 0.0
        %5851 = vmatprep.subr.mxu0 0.0
        %5852 = vmatpush1.msra.mxu0 0.0
        %5853 = vmatprep.subr.mxu0 0.0
        %5854 = vmatpush1.msra.mxu0 0.0
        %5855 = vmatprep.subr.mxu0 0.0
        %5856 = vmatpush1.msra.mxu0 0.0
        %5857 = vmatprep.subr.mxu0 0.0
        %5858 = vmatpush1.msra.mxu0 0.0
        %5859 = vmatprep.subr.mxu0 0.0
        %5860 = vmatpush1.msra.mxu0 0.0
        %5861 = vmatprep.mubr.f32.mxu0 0.0
        %5862 = vmatmul.mubr.f32.gmra.mrb[0].mxu0 %v5792
        %v5863 = vpop.f32.mrb[0].mxu0
        %v5864 = vadd.f32 0.0, %v5863
        %v5865 = vpop.f32.mrb[0].mxu0
        %5866 = vmatprep.mubr.f32.mxu0 0.0
        %5867 = vmatmul.mubr.f32.gmra.mrb[0].mxu0 %v5795
        %v5868 = vpop.f32.mrb[0].mxu0
        %v5869 = vadd.f32 0.0, %v5868
        %v5870 = vpop.f32.mrb[0].mxu0
        %5871 = vdwg.mxu0
        %v5872 = vadd.f32 %v5696, %v5864
        %v5873 = vadd.f32 %v5697, %v5869
        %s5874 = scalar_lea.vmem [#allocation10], 128
        %v5875 = vld [vmem:[%s5874] sm:$0xff]
        %v5876 = vld [vmem:[%s5874 + $0x8] sm:$0xff]
        %v5878 = vsel %vm632, %v5875, 0
        %v5881 = vsel %vm632, %v5876, 0
        %5883 = vmatprep.subr.mxu0 0.0
        %5884 = vmatpush1.msra.mxu0 %v4453
        %5885 = vmatprep.subr.mxu0 0.0
        %5886 = vmatpush1.msra.mxu0 %v4458
        %5887 = vmatprep.subr.mxu0 0.0
        %5888 = vmatpush1.msra.mxu0 %v4463
        %5889 = vmatprep.subr.mxu0 0.0
        %5890 = vmatpush1.msra.mxu0 %v4468
        %5891 = vmatprep.subr.mxu0 0.0
        %5892 = vmatpush1.msra.mxu0 0.0
        %5893 = vmatprep.subr.mxu0 0.0
        %5894 = vmatpush1.msra.mxu0 0.0
        %5895 = vmatprep.subr.mxu0 0.0
        %5896 = vmatpush1.msra.mxu0 0.0
        %5897 = vmatprep.subr.mxu0 0.0
        %5898 = vmatpush1.msra.mxu0 0.0
        %5899 = vmatprep.subr.mxu0 0.0
        %5900 = vmatpush1.msra.mxu0 0.0
        %5901 = vmatprep.subr.mxu0 0.0
        %5902 = vmatpush1.msra.mxu0 0.0
        %5903 = vmatprep.subr.mxu0 0.0
        %5904 = vmatpush1.msra.mxu0 0.0
        %5905 = vmatprep.subr.mxu0 0.0
        %5906 = vmatpush1.msra.mxu0 0.0
        %5907 = vmatprep.subr.mxu0 0.0
        %5908 = vmatpush1.msra.mxu0 0.0
        %5909 = vmatprep.subr.mxu0 0.0
        %5910 = vmatpush1.msra.mxu0 0.0
        %5911 = vmatprep.subr.mxu0 0.0
        %5912 = vmatpush1.msra.mxu0 0.0
        %5913 = vmatprep.subr.mxu0 0.0
        %5914 = vmatpush1.msra.mxu0 0.0
        %5915 = vmatprep.subr.mxu0 0.0
        %5916 = vmatpush1.msra.mxu0 0.0
        %5917 = vmatprep.subr.mxu0 0.0
        %5918 = vmatpush1.msra.mxu0 0.0
        %5919 = vmatprep.subr.mxu0 0.0
        %5920 = vmatpush1.msra.mxu0 0.0
        %5921 = vmatprep.subr.mxu0 0.0
        %5922 = vmatpush1.msra.mxu0 0.0
        %5923 = vmatprep.subr.mxu0 0.0
        %5924 = vmatpush1.msra.mxu0 0.0
        %5925 = vmatprep.subr.mxu0 0.0
        %5926 = vmatpush1.msra.mxu0 0.0
        %5927 = vmatprep.subr.mxu0 0.0
        %5928 = vmatpush1.msra.mxu0 0.0
        %5929 = vmatprep.subr.mxu0 0.0
        %5930 = vmatpush1.msra.mxu0 0.0
        %5931 = vmatprep.subr.mxu0 0.0
        %5932 = vmatpush1.msra.mxu0 0.0
        %5933 = vmatprep.subr.mxu0 0.0
        %5934 = vmatpush1.msra.mxu0 0.0
        %5935 = vmatprep.subr.mxu0 0.0
        %5936 = vmatpush1.msra.mxu0 0.0
        %5937 = vmatprep.subr.mxu0 0.0
        %5938 = vmatpush1.msra.mxu0 0.0
        %5939 = vmatprep.subr.mxu0 0.0
        %5940 = vmatpush1.msra.mxu0 0.0
        %5941 = vmatprep.subr.mxu0 0.0
        %5942 = vmatpush1.msra.mxu0 0.0
        %5943 = vmatprep.subr.mxu0 0.0
        %5944 = vmatpush1.msra.mxu0 0.0
        %5945 = vmatprep.subr.mxu0 0.0
        %5946 = vmatpush1.msra.mxu0 0.0
        %5947 = vmatprep.mubr.f32.mxu0 0.0
        %5948 = vmatmul.mubr.f32.gmra.mrb[0].mxu0 %v5878
        %v5949 = vpop.f32.mrb[0].mxu0
        %v5950 = vadd.f32 0.0, %v5949
        %v5951 = vpop.f32.mrb[0].mxu0
        %5952 = vmatprep.mubr.f32.mxu0 0.0
        %5953 = vmatmul.mubr.f32.gmra.mrb[0].mxu0 %v5881
        %v5954 = vpop.f32.mrb[0].mxu0
        %v5955 = vadd.f32 0.0, %v5954
        %v5956 = vpop.f32.mrb[0].mxu0
        %5957 = vdwg.mxu0
        %s5958 = scalar_lea.vmem [#allocation13], 512
        %v5959 = vld [vmem:[%s5958] sm:$0xff]
        %v5960 = vld [vmem:[%s5958 + $0x8] sm:$0xff]
        %v5961 = vld [vmem:[%s5958 + $0x10] sm:$0xff]
        %v5962 = vld [vmem:[%s5958 + $0x18] sm:$0xff]
        %v5963 = vld [vmem:[%s5958 + $0x20] sm:$0xff]
        %v5964 = vld [vmem:[%s5958 + $0x28] sm:$0xff]
        %v5965 = vld [vmem:[%s5958 + $0x30] sm:$0xff]
        %v5966 = vld [vmem:[%s5958 + $0x38] sm:$0xff]
        %v5968 = vsel %vm4655, %v5950, 0
        %v5971 = vsel %vm4655, %v5955, 0
        %5973 = vmatprep.subr.mxu0 0.0
        %5974 = vmatpush1.msra.mxu0 %v5959
        %5975 = vmatprep.subr.mxu0 0.0
        %5976 = vmatpush1.msra.mxu0 %v5960
        %5977 = vmatprep.subr.mxu0 0.0
        %5978 = vmatpush1.msra.mxu0 %v5961
        %5979 = vmatprep.subr.mxu0 0.0
        %5980 = vmatpush1.msra.mxu0 %v5962
        %5981 = vmatprep.subr.mxu0 0.0
        %5982 = vmatpush1.msra.mxu0 %v5963
        %5983 = vmatprep.subr.mxu0 0.0
        %5984 = vmatpush1.msra.mxu0 %v5964
        %5985 = vmatprep.subr.mxu0 0.0
        %5986 = vmatpush1.msra.mxu0 %v5965
        %5987 = vmatprep.subr.mxu0 0.0
        %5988 = vmatpush1.msra.mxu0 %v5966
        %5989 = vmatprep.subr.mxu0 0.0
        %5990 = vmatpush1.msra.mxu0 0.0
        %5991 = vmatprep.subr.mxu0 0.0
        %5992 = vmatpush1.msra.mxu0 0.0
        %5993 = vmatprep.subr.mxu0 0.0
        %5994 = vmatpush1.msra.mxu0 0.0
        %5995 = vmatprep.subr.mxu0 0.0
        %5996 = vmatpush1.msra.mxu0 0.0
        %5997 = vmatprep.subr.mxu0 0.0
        %5998 = vmatpush1.msra.mxu0 0.0
        %5999 = vmatprep.subr.mxu0 0.0
        %6000 = vmatpush1.msra.mxu0 0.0
        %6001 = vmatprep.subr.mxu0 0.0
        %6002 = vmatpush1.msra.mxu0 0.0
        %6003 = vmatprep.subr.mxu0 0.0
        %6004 = vmatpush1.msra.mxu0 0.0
        %6005 = vmatprep.subr.mxu0 0.0
        %6006 = vmatpush1.msra.mxu0 0.0
        %6007 = vmatprep.subr.mxu0 0.0
        %6008 = vmatpush1.msra.mxu0 0.0
        %6009 = vmatprep.subr.mxu0 0.0
        %6010 = vmatpush1.msra.mxu0 0.0
        %6011 = vmatprep.subr.mxu0 0.0
        %6012 = vmatpush1.msra.mxu0 0.0
        %6013 = vmatprep.subr.mxu0 0.0
        %6014 = vmatpush1.msra.mxu0 0.0
        %6015 = vmatprep.subr.mxu0 0.0
        %6016 = vmatpush1.msra.mxu0 0.0
        %6017 = vmatprep.subr.mxu0 0.0
        %6018 = vmatpush1.msra.mxu0 0.0
        %6019 = vmatprep.subr.mxu0 0.0
        %6020 = vmatpush1.msra.mxu0 0.0
        %6021 = vmatprep.subr.mxu0 0.0
        %6022 = vmatpush1.msra.mxu0 0.0
        %6023 = vmatprep.subr.mxu0 0.0
        %6024 = vmatpush1.msra.mxu0 0.0
        %6025 = vmatprep.subr.mxu0 0.0
        %6026 = vmatpush1.msra.mxu0 0.0
        %6027 = vmatprep.subr.mxu0 0.0
        %6028 = vmatpush1.msra.mxu0 0.0
        %6029 = vmatprep.subr.mxu0 0.0
        %6030 = vmatpush1.msra.mxu0 0.0
        %6031 = vmatprep.subr.mxu0 0.0
        %6032 = vmatpush1.msra.mxu0 0.0
        %6033 = vmatprep.subr.mxu0 0.0
        %6034 = vmatpush1.msra.mxu0 0.0
        %6035 = vmatprep.subr.mxu0 0.0
        %6036 = vmatpush1.msra.mxu0 0.0
        %6037 = vmatprep.mubr.f32.mxu0 0.0
        %6038 = vmatmul.mubr.f32.gmra.mrb[0].mxu0 %v5968
        %v6039 = vpop.f32.mrb[0].mxu0
        %v6040 = vadd.f32 0.0, %v6039
        %v6041 = vpop.f32.mrb[0].mxu0
        %6042 = vmatprep.mubr.f32.mxu0 0.0
        %6043 = vmatmul.mubr.f32.gmra.mrb[0].mxu0 %v5971
        %v6044 = vpop.f32.mrb[0].mxu0
        %v6045 = vadd.f32 0.0, %v6044
        %v6046 = vpop.f32.mrb[0].mxu0
        %6047 = vdwg.mxu0
        %v6048 = vadd.f32 %v5872, %v6040
        %v6049 = vadd.f32 %v5873, %v6045
        %v6050 = vld [vmem:[%s9] sm:$0xff]
        %v6051 = vld [vmem:[%s9 + $0x8] sm:$0xff]
        %6053 = vset.pattern.permute.xlu0 0
        %6054 = vperm.xlu0 %6053, %v6050
        %v6055 = vpop.permute.xlu0 %6054
        %6058 = vset.pattern.permute.xlu0 0
        %6059 = vperm.xlu0 %6058, %v6051
        %v6060 = vpop.permute.xlu0 %6059
        %v6062 = vadd.f32 %v6048, %v6055
        %v6063 = vadd.f32 %v6049, %v6060
        %vm6064 = vcmp.ge.f32.partialorder %v6062, 0.0
        %vm6065 = vcmp.ge.f32.partialorder %v6063, 0.0
        %v6066 = vmul.f32 %v6062, 0.2
        %v6067 = vmul.f32 %v6063, 0.2
        %v6068 = vsel %vm6064, %v6062, %v6066
        %v6069 = vsel %vm6065, %v6063, %v6067
        %v6070 = vld [vmem:[#allocation11] sm:$0xff]
        %v6071 = vld [vmem:[#allocation11 + $0x8] sm:$0xff]
        %v6073 = vsel %vm837, %v6070, 0
        %v6076 = vsel %vm837, %v6071, 0
        %6078 = vmatprep.subr.mxu0 0.0
        %6079 = vmatpush1.msra.mxu0 %v6068
        %6080 = vmatprep.subr.mxu0 0.0
        %6081 = vmatpush1.msra.mxu0 %v6069
        %6082 = vmatprep.subr.mxu0 0.0
        %6083 = vmatpush1.msra.mxu0 0.0
        %6084 = vmatprep.subr.mxu0 0.0
        %6085 = vmatpush1.msra.mxu0 0.0
        %6086 = vmatprep.subr.mxu0 0.0
        %6087 = vmatpush1.msra.mxu0 0.0
        %6088 = vmatprep.subr.mxu0 0.0
        %6089 = vmatpush1.msra.mxu0 0.0
        %6090 = vmatprep.subr.mxu0 0.0
        %6091 = vmatpush1.msra.mxu0 0.0
        %6092 = vmatprep.subr.mxu0 0.0
        %6093 = vmatpush1.msra.mxu0 0.0
        %6094 = vmatprep.subr.mxu0 0.0
        %6095 = vmatpush1.msra.mxu0 0.0
        %6096 = vmatprep.subr.mxu0 0.0
        %6097 = vmatpush1.msra.mxu0 0.0
        %6098 = vmatprep.subr.mxu0 0.0
        %6099 = vmatpush1.msra.mxu0 0.0
        %6100 = vmatprep.subr.mxu0 0.0
        %6101 = vmatpush1.msra.mxu0 0.0
        %6102 = vmatprep.subr.mxu0 0.0
        %6103 = vmatpush1.msra.mxu0 0.0
        %6104 = vmatprep.subr.mxu0 0.0
        %6105 = vmatpush1.msra.mxu0 0.0
        %6106 = vmatprep.subr.mxu0 0.0
        %6107 = vmatpush1.msra.mxu0 0.0
        %6108 = vmatprep.subr.mxu0 0.0
        %6109 = vmatpush1.msra.mxu0 0.0
        %6110 = vmatprep.subr.mxu0 0.0
        %6111 = vmatpush1.msra.mxu0 0.0
        %6112 = vmatprep.subr.mxu0 0.0
        %6113 = vmatpush1.msra.mxu0 0.0
        %6114 = vmatprep.subr.mxu0 0.0
        %6115 = vmatpush1.msra.mxu0 0.0
        %6116 = vmatprep.subr.mxu0 0.0
        %6117 = vmatpush1.msra.mxu0 0.0
        %6118 = vmatprep.subr.mxu0 0.0
        %6119 = vmatpush1.msra.mxu0 0.0
        %6120 = vmatprep.subr.mxu0 0.0
        %6121 = vmatpush1.msra.mxu0 0.0
        %6122 = vmatprep.subr.mxu0 0.0
        %6123 = vmatpush1.msra.mxu0 0.0
        %6124 = vmatprep.subr.mxu0 0.0
        %6125 = vmatpush1.msra.mxu0 0.0
        %6126 = vmatprep.subr.mxu0 0.0
        %6127 = vmatpush1.msra.mxu0 0.0
        %6128 = vmatprep.subr.mxu0 0.0
        %6129 = vmatpush1.msra.mxu0 0.0
        %6130 = vmatprep.subr.mxu0 0.0
        %6131 = vmatpush1.msra.mxu0 0.0
        %6132 = vmatprep.subr.mxu0 0.0
        %6133 = vmatpush1.msra.mxu0 0.0
        %6134 = vmatprep.subr.mxu0 0.0
        %6135 = vmatpush1.msra.mxu0 0.0
        %6136 = vmatprep.subr.mxu0 0.0
        %6137 = vmatpush1.msra.mxu0 0.0
        %6138 = vmatprep.subr.mxu0 0.0
        %6139 = vmatpush1.msra.mxu0 0.0
        %6140 = vmatprep.subr.mxu0 0.0
        %6141 = vmatpush1.msra.mxu0 0.0
        %6142 = vmatprep.mubr.f32.mxu0 0.0
        %6143 = vmatmul.mubr.f32.gmra.mrb[0].mxu0 %v6073
        %v6144 = vpop.f32.mrb[0].mxu0
        %v6145 = vadd.f32 0.0, %v6144
        %v6146 = vpop.f32.mrb[0].mxu0
        %6147 = vmatprep.mubr.f32.mxu0 0.0
        %6148 = vmatmul.mubr.f32.gmra.mrb[0].mxu0 %v6076
        %v6149 = vpop.f32.mrb[0].mxu0
        %v6150 = vadd.f32 0.0, %v6149
        %v6151 = vpop.f32.mrb[0].mxu0
        %6152 = vdwg.mxu0
        %s6153 = scalar_lea.vmem [#allocation11], 16
        %v6154 = vld [vmem:[%s6153] sm:$0xff]
        %v6155 = vld [vmem:[%s6153 + $0x8] sm:$0xff]
        %v6157 = vsel %vm837, %v6154, 0
        %v6160 = vsel %vm837, %v6155, 0
        %6162 = vmatprep.subr.mxu0 0.0
        %6163 = vmatpush1.msra.mxu0 %v6068
        %6164 = vmatprep.subr.mxu0 0.0
        %6165 = vmatpush1.msra.mxu0 %v6069
        %6166 = vmatprep.subr.mxu0 0.0
        %6167 = vmatpush1.msra.mxu0 0.0
        %6168 = vmatprep.subr.mxu0 0.0
        %6169 = vmatpush1.msra.mxu0 0.0
        %6170 = vmatprep.subr.mxu0 0.0
        %6171 = vmatpush1.msra.mxu0 0.0
        %6172 = vmatprep.subr.mxu0 0.0
        %6173 = vmatpush1.msra.mxu0 0.0
        %6174 = vmatprep.subr.mxu0 0.0
        %6175 = vmatpush1.msra.mxu0 0.0
        %6176 = vmatprep.subr.mxu0 0.0
        %6177 = vmatpush1.msra.mxu0 0.0
        %6178 = vmatprep.subr.mxu0 0.0
        %6179 = vmatpush1.msra.mxu0 0.0
        %6180 = vmatprep.subr.mxu0 0.0
        %6181 = vmatpush1.msra.mxu0 0.0
        %6182 = vmatprep.subr.mxu0 0.0
        %6183 = vmatpush1.msra.mxu0 0.0
        %6184 = vmatprep.subr.mxu0 0.0
        %6185 = vmatpush1.msra.mxu0 0.0
        %6186 = vmatprep.subr.mxu0 0.0
        %6187 = vmatpush1.msra.mxu0 0.0
        %6188 = vmatprep.subr.mxu0 0.0
        %6189 = vmatpush1.msra.mxu0 0.0
        %6190 = vmatprep.subr.mxu0 0.0
        %6191 = vmatpush1.msra.mxu0 0.0
        %6192 = vmatprep.subr.mxu0 0.0
        %6193 = vmatpush1.msra.mxu0 0.0
        %6194 = vmatprep.subr.mxu0 0.0
        %6195 = vmatpush1.msra.mxu0 0.0
        %6196 = vmatprep.subr.mxu0 0.0
        %6197 = vmatpush1.msra.mxu0 0.0
        %6198 = vmatprep.subr.mxu0 0.0
        %6199 = vmatpush1.msra.mxu0 0.0
        %6200 = vmatprep.subr.mxu0 0.0
        %6201 = vmatpush1.msra.mxu0 0.0
        %6202 = vmatprep.subr.mxu0 0.0
        %6203 = vmatpush1.msra.mxu0 0.0
        %6204 = vmatprep.subr.mxu0 0.0
        %6205 = vmatpush1.msra.mxu0 0.0
        %6206 = vmatprep.subr.mxu0 0.0
        %6207 = vmatpush1.msra.mxu0 0.0
        %6208 = vmatprep.subr.mxu0 0.0
        %6209 = vmatpush1.msra.mxu0 0.0
        %6210 = vmatprep.subr.mxu0 0.0
        %6211 = vmatpush1.msra.mxu0 0.0
        %6212 = vmatprep.subr.mxu0 0.0
        %6213 = vmatpush1.msra.mxu0 0.0
        %6214 = vmatprep.subr.mxu0 0.0
        %6215 = vmatpush1.msra.mxu0 0.0
        %6216 = vmatprep.subr.mxu0 0.0
        %6217 = vmatpush1.msra.mxu0 0.0
        %6218 = vmatprep.subr.mxu0 0.0
        %6219 = vmatpush1.msra.mxu0 0.0
        %6220 = vmatprep.subr.mxu0 0.0
        %6221 = vmatpush1.msra.mxu0 0.0
        %6222 = vmatprep.subr.mxu0 0.0
        %6223 = vmatpush1.msra.mxu0 0.0
        %6224 = vmatprep.subr.mxu0 0.0
        %6225 = vmatpush1.msra.mxu0 0.0
        %6226 = vmatprep.mubr.f32.mxu0 0.0
        %6227 = vmatmul.mubr.f32.gmra.mrb[0].mxu0 %v6157
        %v6228 = vpop.f32.mrb[0].mxu0
        %v6229 = vadd.f32 0.0, %v6228
        %v6230 = vpop.f32.mrb[0].mxu0
        %6231 = vmatprep.mubr.f32.mxu0 0.0
        %6232 = vmatmul.mubr.f32.gmra.mrb[0].mxu0 %v6160
        %v6233 = vpop.f32.mrb[0].mxu0
        %v6234 = vadd.f32 0.0, %v6233
        %v6235 = vpop.f32.mrb[0].mxu0
        %6236 = vdwg.mxu0
        %v6238 = vsel %vm4655, %v6229, 0
        %v6241 = vsel %vm4655, %v6234, 0
        %6243 = vmatprep.subr.mxu0 0.0
        %6244 = vmatpush1.msra.mxu0 %v4647
        %6245 = vmatprep.subr.mxu0 0.0
        %6246 = vmatpush1.msra.mxu0 %v4648
        %6247 = vmatprep.subr.mxu0 0.0
        %6248 = vmatpush1.msra.mxu0 %v4649
        %6249 = vmatprep.subr.mxu0 0.0
        %6250 = vmatpush1.msra.mxu0 %v4650
        %6251 = vmatprep.subr.mxu0 0.0
        %6252 = vmatpush1.msra.mxu0 %v4651
        %6253 = vmatprep.subr.mxu0 0.0
        %6254 = vmatpush1.msra.mxu0 %v4652
        %6255 = vmatprep.subr.mxu0 0.0
        %6256 = vmatpush1.msra.mxu0 %v4653
        %6257 = vmatprep.subr.mxu0 0.0
        %6258 = vmatpush1.msra.mxu0 %v4654
        %6259 = vmatprep.subr.mxu0 0.0
        %6260 = vmatpush1.msra.mxu0 0.0
        %6261 = vmatprep.subr.mxu0 0.0
        %6262 = vmatpush1.msra.mxu0 0.0
        %6263 = vmatprep.subr.mxu0 0.0
        %6264 = vmatpush1.msra.mxu0 0.0
        %6265 = vmatprep.subr.mxu0 0.0
        %6266 = vmatpush1.msra.mxu0 0.0
        %6267 = vmatprep.subr.mxu0 0.0
        %6268 = vmatpush1.msra.mxu0 0.0
        %6269 = vmatprep.subr.mxu0 0.0
        %6270 = vmatpush1.msra.mxu0 0.0
        %6271 = vmatprep.subr.mxu0 0.0
        %6272 = vmatpush1.msra.mxu0 0.0
        %6273 = vmatprep.subr.mxu0 0.0
        %6274 = vmatpush1.msra.mxu0 0.0
        %6275 = vmatprep.subr.mxu0 0.0
        %6276 = vmatpush1.msra.mxu0 0.0
        %6277 = vmatprep.subr.mxu0 0.0
        %6278 = vmatpush1.msra.mxu0 0.0
        %6279 = vmatprep.subr.mxu0 0.0
        %6280 = vmatpush1.msra.mxu0 0.0
        %6281 = vmatprep.subr.mxu0 0.0
        %6282 = vmatpush1.msra.mxu0 0.0
        %6283 = vmatprep.subr.mxu0 0.0
        %6284 = vmatpush1.msra.mxu0 0.0
        %6285 = vmatprep.subr.mxu0 0.0
        %6286 = vmatpush1.msra.mxu0 0.0
        %6287 = vmatprep.subr.mxu0 0.0
        %6288 = vmatpush1.msra.mxu0 0.0
        %6289 = vmatprep.subr.mxu0 0.0
        %6290 = vmatpush1.msra.mxu0 0.0
        %6291 = vmatprep.subr.mxu0 0.0
        %6292 = vmatpush1.msra.mxu0 0.0
        %6293 = vmatprep.subr.mxu0 0.0
        %6294 = vmatpush1.msra.mxu0 0.0
        %6295 = vmatprep.subr.mxu0 0.0
        %6296 = vmatpush1.msra.mxu0 0.0
        %6297 = vmatprep.subr.mxu0 0.0
        %6298 = vmatpush1.msra.mxu0 0.0
        %6299 = vmatprep.subr.mxu0 0.0
        %6300 = vmatpush1.msra.mxu0 0.0
        %6301 = vmatprep.subr.mxu0 0.0
        %6302 = vmatpush1.msra.mxu0 0.0
        %6303 = vmatprep.subr.mxu0 0.0
        %6304 = vmatpush1.msra.mxu0 0.0
        %6305 = vmatprep.subr.mxu0 0.0
        %6306 = vmatpush1.msra.mxu0 0.0
        %6307 = vmatprep.mubr.f32.mxu0 0.0
        %6308 = vmatmul.mubr.f32.gmra.mrb[0].mxu0 %v6238
        %v6309 = vpop.f32.mrb[0].mxu0
        %v6310 = vadd.f32 0.0, %v6309
        %v6311 = vpop.f32.mrb[0].mxu0
        %6312 = vmatprep.mubr.f32.mxu0 0.0
        %6313 = vmatmul.mubr.f32.gmra.mrb[0].mxu0 %v6241
        %v6314 = vpop.f32.mrb[0].mxu0
        %v6315 = vadd.f32 0.0, %v6314
        %v6316 = vpop.f32.mrb[0].mxu0
        %6317 = vdwg.mxu0
        %v6319 = vsel %vm4655, %v6145, 0
        %v6322 = vsel %vm4655, %v6150, 0
        %6324 = vmatprep.subr.mxu0 0.0
        %6325 = vmatpush1.msra.mxu0 %v4554
        %6326 = vmatprep.subr.mxu0 0.0
        %6327 = vmatpush1.msra.mxu0 %v4555
        %6328 = vmatprep.subr.mxu0 0.0
        %6329 = vmatpush1.msra.mxu0 %v4556
        %6330 = vmatprep.subr.mxu0 0.0
        %6331 = vmatpush1.msra.mxu0 %v4557
        %6332 = vmatprep.subr.mxu0 0.0
        %6333 = vmatpush1.msra.mxu0 %v4558
        %6334 = vmatprep.subr.mxu0 0.0
        %6335 = vmatpush1.msra.mxu0 %v4559
        %6336 = vmatprep.subr.mxu0 0.0
        %6337 = vmatpush1.msra.mxu0 %v4560
        %6338 = vmatprep.subr.mxu0 0.0
        %6339 = vmatpush1.msra.mxu0 %v4561
        %6340 = vmatprep.subr.mxu0 0.0
        %6341 = vmatpush1.msra.mxu0 0.0
        %6342 = vmatprep.subr.mxu0 0.0
        %6343 = vmatpush1.msra.mxu0 0.0
        %6344 = vmatprep.subr.mxu0 0.0
        %6345 = vmatpush1.msra.mxu0 0.0
        %6346 = vmatprep.subr.mxu0 0.0
        %6347 = vmatpush1.msra.mxu0 0.0
        %6348 = vmatprep.subr.mxu0 0.0
        %6349 = vmatpush1.msra.mxu0 0.0
        %6350 = vmatprep.subr.mxu0 0.0
        %6351 = vmatpush1.msra.mxu0 0.0
        %6352 = vmatprep.subr.mxu0 0.0
        %6353 = vmatpush1.msra.mxu0 0.0
        %6354 = vmatprep.subr.mxu0 0.0
        %6355 = vmatpush1.msra.mxu0 0.0
        %6356 = vmatprep.subr.mxu0 0.0
        %6357 = vmatpush1.msra.mxu0 0.0
        %6358 = vmatprep.subr.mxu0 0.0
        %6359 = vmatpush1.msra.mxu0 0.0
        %6360 = vmatprep.subr.mxu0 0.0
        %6361 = vmatpush1.msra.mxu0 0.0
        %6362 = vmatprep.subr.mxu0 0.0
        %6363 = vmatpush1.msra.mxu0 0.0
        %6364 = vmatprep.subr.mxu0 0.0
        %6365 = vmatpush1.msra.mxu0 0.0
        %6366 = vmatprep.subr.mxu0 0.0
        %6367 = vmatpush1.msra.mxu0 0.0
        %6368 = vmatprep.subr.mxu0 0.0
        %6369 = vmatpush1.msra.mxu0 0.0
        %6370 = vmatprep.subr.mxu0 0.0
        %6371 = vmatpush1.msra.mxu0 0.0
        %6372 = vmatprep.subr.mxu0 0.0
        %6373 = vmatpush1.msra.mxu0 0.0
        %6374 = vmatprep.subr.mxu0 0.0
        %6375 = vmatpush1.msra.mxu0 0.0
        %6376 = vmatprep.subr.mxu0 0.0
        %6377 = vmatpush1.msra.mxu0 0.0
        %6378 = vmatprep.subr.mxu0 0.0
        %6379 = vmatpush1.msra.mxu0 0.0
        %6380 = vmatprep.subr.mxu0 0.0
        %6381 = vmatpush1.msra.mxu0 0.0
        %6382 = vmatprep.subr.mxu0 0.0
        %6383 = vmatpush1.msra.mxu0 0.0
        %6384 = vmatprep.subr.mxu0 0.0
        %6385 = vmatpush1.msra.mxu0 0.0
        %6386 = vmatprep.subr.mxu0 0.0
        %6387 = vmatpush1.msra.mxu0 0.0
        %6388 = vmatprep.mubr.f32.mxu0 0.0
        %6389 = vmatmul.mubr.f32.gmra.mrb[0].mxu0 %v6319
        %v6390 = vpop.f32.mrb[0].mxu0
        %v6391 = vadd.f32 %v6310, %v6390
        %v6392 = vpop.f32.mrb[0].mxu0
        %6393 = vmatprep.mubr.f32.mxu0 0.0
        %6394 = vmatmul.mubr.f32.gmra.mrb[0].mxu0 %v6322
        %v6395 = vpop.f32.mrb[0].mxu0
        %v6396 = vadd.f32 %v6315, %v6395
        %v6397 = vpop.f32.mrb[0].mxu0
        %6398 = vdwg.mxu0
        %s6399 = scalar_lea.vmem [#allocation11], 32
        %v6400 = vld [vmem:[%s6399] sm:$0xff]
        %v6401 = vld [vmem:[%s6399 + $0x8] sm:$0xff]
        %v6403 = vsel %vm837, %v6400, 0
        %v6406 = vsel %vm837, %v6401, 0
        %6408 = vmatprep.subr.mxu0 0.0
        %6409 = vmatpush1.msra.mxu0 %v6068
        %6410 = vmatprep.subr.mxu0 0.0
        %6411 = vmatpush1.msra.mxu0 %v6069
        %6412 = vmatprep.subr.mxu0 0.0
        %6413 = vmatpush1.msra.mxu0 0.0
        %6414 = vmatprep.subr.mxu0 0.0
        %6415 = vmatpush1.msra.mxu0 0.0
        %6416 = vmatprep.subr.mxu0 0.0
        %6417 = vmatpush1.msra.mxu0 0.0
        %6418 = vmatprep.subr.mxu0 0.0
        %6419 = vmatpush1.msra.mxu0 0.0
        %6420 = vmatprep.subr.mxu0 0.0
        %6421 = vmatpush1.msra.mxu0 0.0
        %6422 = vmatprep.subr.mxu0 0.0
        %6423 = vmatpush1.msra.mxu0 0.0
        %6424 = vmatprep.subr.mxu0 0.0
        %6425 = vmatpush1.msra.mxu0 0.0
        %6426 = vmatprep.subr.mxu0 0.0
        %6427 = vmatpush1.msra.mxu0 0.0
        %6428 = vmatprep.subr.mxu0 0.0
        %6429 = vmatpush1.msra.mxu0 0.0
        %6430 = vmatprep.subr.mxu0 0.0
        %6431 = vmatpush1.msra.mxu0 0.0
        %6432 = vmatprep.subr.mxu0 0.0
        %6433 = vmatpush1.msra.mxu0 0.0
        %6434 = vmatprep.subr.mxu0 0.0
        %6435 = vmatpush1.msra.mxu0 0.0
        %6436 = vmatprep.subr.mxu0 0.0
        %6437 = vmatpush1.msra.mxu0 0.0
        %6438 = vmatprep.subr.mxu0 0.0
        %6439 = vmatpush1.msra.mxu0 0.0
        %6440 = vmatprep.subr.mxu0 0.0
        %6441 = vmatpush1.msra.mxu0 0.0
        %6442 = vmatprep.subr.mxu0 0.0
        %6443 = vmatpush1.msra.mxu0 0.0
        %6444 = vmatprep.subr.mxu0 0.0
        %6445 = vmatpush1.msra.mxu0 0.0
        %6446 = vmatprep.subr.mxu0 0.0
        %6447 = vmatpush1.msra.mxu0 0.0
        %6448 = vmatprep.subr.mxu0 0.0
        %6449 = vmatpush1.msra.mxu0 0.0
        %6450 = vmatprep.subr.mxu0 0.0
        %6451 = vmatpush1.msra.mxu0 0.0
        %6452 = vmatprep.subr.mxu0 0.0
        %6453 = vmatpush1.msra.mxu0 0.0
        %6454 = vmatprep.subr.mxu0 0.0
        %6455 = vmatpush1.msra.mxu0 0.0
        %6456 = vmatprep.subr.mxu0 0.0
        %6457 = vmatpush1.msra.mxu0 0.0
        %6458 = vmatprep.subr.mxu0 0.0
        %6459 = vmatpush1.msra.mxu0 0.0
        %6460 = vmatprep.subr.mxu0 0.0
        %6461 = vmatpush1.msra.mxu0 0.0
        %6462 = vmatprep.subr.mxu0 0.0
        %6463 = vmatpush1.msra.mxu0 0.0
        %6464 = vmatprep.subr.mxu0 0.0
        %6465 = vmatpush1.msra.mxu0 0.0
        %6466 = vmatprep.subr.mxu0 0.0
        %6467 = vmatpush1.msra.mxu0 0.0
        %6468 = vmatprep.subr.mxu0 0.0
        %6469 = vmatpush1.msra.mxu0 0.0
        %6470 = vmatprep.subr.mxu0 0.0
        %6471 = vmatpush1.msra.mxu0 0.0
        %6472 = vmatprep.mubr.f32.mxu0 0.0
        %6473 = vmatmul.mubr.f32.gmra.mrb[0].mxu0 %v6403
        %v6474 = vpop.f32.mrb[0].mxu0
        %v6475 = vadd.f32 0.0, %v6474
        %v6476 = vpop.f32.mrb[0].mxu0
        %6477 = vmatprep.mubr.f32.mxu0 0.0
        %6478 = vmatmul.mubr.f32.gmra.mrb[0].mxu0 %v6406
        %v6479 = vpop.f32.mrb[0].mxu0
        %v6480 = vadd.f32 0.0, %v6479
        %v6481 = vpop.f32.mrb[0].mxu0
        %6482 = vdwg.mxu0
        %v6484 = vsel %vm4655, %v6475, 0
        %v6487 = vsel %vm4655, %v6480, 0
        %6489 = vmatprep.subr.mxu0 0.0
        %6490 = vmatpush1.msra.mxu0 %v4903
        %6491 = vmatprep.subr.mxu0 0.0
        %6492 = vmatpush1.msra.mxu0 %v4904
        %6493 = vmatprep.subr.mxu0 0.0
        %6494 = vmatpush1.msra.mxu0 %v4905
        %6495 = vmatprep.subr.mxu0 0.0
        %6496 = vmatpush1.msra.mxu0 %v4906
        %6497 = vmatprep.subr.mxu0 0.0
        %6498 = vmatpush1.msra.mxu0 %v4907
        %6499 = vmatprep.subr.mxu0 0.0
        %6500 = vmatpush1.msra.mxu0 %v4908
        %6501 = vmatprep.subr.mxu0 0.0
        %6502 = vmatpush1.msra.mxu0 %v4909
        %6503 = vmatprep.subr.mxu0 0.0
        %6504 = vmatpush1.msra.mxu0 %v4910
        %6505 = vmatprep.subr.mxu0 0.0
        %6506 = vmatpush1.msra.mxu0 0.0
        %6507 = vmatprep.subr.mxu0 0.0
        %6508 = vmatpush1.msra.mxu0 0.0
        %6509 = vmatprep.subr.mxu0 0.0
        %6510 = vmatpush1.msra.mxu0 0.0
        %6511 = vmatprep.subr.mxu0 0.0
        %6512 = vmatpush1.msra.mxu0 0.0
        %6513 = vmatprep.subr.mxu0 0.0
        %6514 = vmatpush1.msra.mxu0 0.0
        %6515 = vmatprep.subr.mxu0 0.0
        %6516 = vmatpush1.msra.mxu0 0.0
        %6517 = vmatprep.subr.mxu0 0.0
        %6518 = vmatpush1.msra.mxu0 0.0
        %6519 = vmatprep.subr.mxu0 0.0
        %6520 = vmatpush1.msra.mxu0 0.0
        %6521 = vmatprep.subr.mxu0 0.0
        %6522 = vmatpush1.msra.mxu0 0.0
        %6523 = vmatprep.subr.mxu0 0.0
        %6524 = vmatpush1.msra.mxu0 0.0
        %6525 = vmatprep.subr.mxu0 0.0
        %6526 = vmatpush1.msra.mxu0 0.0
        %6527 = vmatprep.subr.mxu0 0.0
        %6528 = vmatpush1.msra.mxu0 0.0
        %6529 = vmatprep.subr.mxu0 0.0
        %6530 = vmatpush1.msra.mxu0 0.0
        %6531 = vmatprep.subr.mxu0 0.0
        %6532 = vmatpush1.msra.mxu0 0.0
        %6533 = vmatprep.subr.mxu0 0.0
        %6534 = vmatpush1.msra.mxu0 0.0
        %6535 = vmatprep.subr.mxu0 0.0
        %6536 = vmatpush1.msra.mxu0 0.0
        %6537 = vmatprep.subr.mxu0 0.0
        %6538 = vmatpush1.msra.mxu0 0.0
        %6539 = vmatprep.subr.mxu0 0.0
        %6540 = vmatpush1.msra.mxu0 0.0
        %6541 = vmatprep.subr.mxu0 0.0
        %6542 = vmatpush1.msra.mxu0 0.0
        %6543 = vmatprep.subr.mxu0 0.0
        %6544 = vmatpush1.msra.mxu0 0.0
        %6545 = vmatprep.subr.mxu0 0.0
        %6546 = vmatpush1.msra.mxu0 0.0
        %6547 = vmatprep.subr.mxu0 0.0
        %6548 = vmatpush1.msra.mxu0 0.0
        %6549 = vmatprep.subr.mxu0 0.0
        %6550 = vmatpush1.msra.mxu0 0.0
        %6551 = vmatprep.subr.mxu0 0.0
        %6552 = vmatpush1.msra.mxu0 0.0
        %6553 = vmatprep.mubr.f32.mxu0 0.0
        %6554 = vmatmul.mubr.f32.gmra.mrb[0].mxu0 %v6484
        %v6555 = vpop.f32.mrb[0].mxu0
        %v6556 = vadd.f32 0.0, %v6555
        %v6557 = vpop.f32.mrb[0].mxu0
        %6558 = vmatprep.mubr.f32.mxu0 0.0
        %6559 = vmatmul.mubr.f32.gmra.mrb[0].mxu0 %v6487
        %v6560 = vpop.f32.mrb[0].mxu0
        %v6561 = vadd.f32 0.0, %v6560
        %v6562 = vpop.f32.mrb[0].mxu0
        %6563 = vdwg.mxu0
        %v6564 = vadd.f32 %v6391, %v6556
        %v6565 = vadd.f32 %v6396, %v6561
        %s6566 = scalar_lea.vmem [#allocation11], 48
        %v6567 = vld [vmem:[%s6566] sm:$0xff]
        %v6568 = vld [vmem:[%s6566 + $0x8] sm:$0xff]
        %v6570 = vsel %vm837, %v6567, 0
        %v6573 = vsel %vm837, %v6568, 0
        %6575 = vmatprep.subr.mxu0 0.0
        %6576 = vmatpush1.msra.mxu0 %v6068
        %6577 = vmatprep.subr.mxu0 0.0
        %6578 = vmatpush1.msra.mxu0 %v6069
        %6579 = vmatprep.subr.mxu0 0.0
        %6580 = vmatpush1.msra.mxu0 0.0
        %6581 = vmatprep.subr.mxu0 0.0
        %6582 = vmatpush1.msra.mxu0 0.0
        %6583 = vmatprep.subr.mxu0 0.0
        %6584 = vmatpush1.msra.mxu0 0.0
        %6585 = vmatprep.subr.mxu0 0.0
        %6586 = vmatpush1.msra.mxu0 0.0
        %6587 = vmatprep.subr.mxu0 0.0
        %6588 = vmatpush1.msra.mxu0 0.0
        %6589 = vmatprep.subr.mxu0 0.0
        %6590 = vmatpush1.msra.mxu0 0.0
        %6591 = vmatprep.subr.mxu0 0.0
        %6592 = vmatpush1.msra.mxu0 0.0
        %6593 = vmatprep.subr.mxu0 0.0
        %6594 = vmatpush1.msra.mxu0 0.0
        %6595 = vmatprep.subr.mxu0 0.0
        %6596 = vmatpush1.msra.mxu0 0.0
        %6597 = vmatprep.subr.mxu0 0.0
        %6598 = vmatpush1.msra.mxu0 0.0
        %6599 = vmatprep.subr.mxu0 0.0
        %6600 = vmatpush1.msra.mxu0 0.0
        %6601 = vmatprep.subr.mxu0 0.0
        %6602 = vmatpush1.msra.mxu0 0.0
        %6603 = vmatprep.subr.mxu0 0.0
        %6604 = vmatpush1.msra.mxu0 0.0
        %6605 = vmatprep.subr.mxu0 0.0
        %6606 = vmatpush1.msra.mxu0 0.0
        %6607 = vmatprep.subr.mxu0 0.0
        %6608 = vmatpush1.msra.mxu0 0.0
        %6609 = vmatprep.subr.mxu0 0.0
        %6610 = vmatpush1.msra.mxu0 0.0
        %6611 = vmatprep.subr.mxu0 0.0
        %6612 = vmatpush1.msra.mxu0 0.0
        %6613 = vmatprep.subr.mxu0 0.0
        %6614 = vmatpush1.msra.mxu0 0.0
        %6615 = vmatprep.subr.mxu0 0.0
        %6616 = vmatpush1.msra.mxu0 0.0
        %6617 = vmatprep.subr.mxu0 0.0
        %6618 = vmatpush1.msra.mxu0 0.0
        %6619 = vmatprep.subr.mxu0 0.0
        %6620 = vmatpush1.msra.mxu0 0.0
        %6621 = vmatprep.subr.mxu0 0.0
        %6622 = vmatpush1.msra.mxu0 0.0
        %6623 = vmatprep.subr.mxu0 0.0
        %6624 = vmatpush1.msra.mxu0 0.0
        %6625 = vmatprep.subr.mxu0 0.0
        %6626 = vmatpush1.msra.mxu0 0.0
        %6627 = vmatprep.subr.mxu0 0.0
        %6628 = vmatpush1.msra.mxu0 0.0
        %6629 = vmatprep.subr.mxu0 0.0
        %6630 = vmatpush1.msra.mxu0 0.0
        %6631 = vmatprep.subr.mxu0 0.0
        %6632 = vmatpush1.msra.mxu0 0.0
        %6633 = vmatprep.subr.mxu0 0.0
        %6634 = vmatpush1.msra.mxu0 0.0
        %6635 = vmatprep.subr.mxu0 0.0
        %6636 = vmatpush1.msra.mxu0 0.0
        %6637 = vmatprep.subr.mxu0 0.0
        %6638 = vmatpush1.msra.mxu0 0.0
        %6639 = vmatprep.mubr.f32.mxu0 0.0
        %6640 = vmatmul.mubr.f32.gmra.mrb[0].mxu0 %v6570
        %v6641 = vpop.f32.mrb[0].mxu0
        %v6642 = vadd.f32 0.0, %v6641
        %v6643 = vpop.f32.mrb[0].mxu0
        %6644 = vmatprep.mubr.f32.mxu0 0.0
        %6645 = vmatmul.mubr.f32.gmra.mrb[0].mxu0 %v6573
        %v6646 = vpop.f32.mrb[0].mxu0
        %v6647 = vadd.f32 0.0, %v6646
        %v6648 = vpop.f32.mrb[0].mxu0
        %6649 = vdwg.mxu0
        %v6651 = vsel %vm4655, %v6642, 0
        %v6654 = vsel %vm4655, %v6647, 0
        %6656 = vmatprep.subr.mxu0 0.0
        %6657 = vmatpush1.msra.mxu0 %v5079
        %6658 = vmatprep.subr.mxu0 0.0
        %6659 = vmatpush1.msra.mxu0 %v5080
        %6660 = vmatprep.subr.mxu0 0.0
        %6661 = vmatpush1.msra.mxu0 %v5081
        %6662 = vmatprep.subr.mxu0 0.0
        %6663 = vmatpush1.msra.mxu0 %v5082
        %6664 = vmatprep.subr.mxu0 0.0
        %6665 = vmatpush1.msra.mxu0 %v5083
        %6666 = vmatprep.subr.mxu0 0.0
        %6667 = vmatpush1.msra.mxu0 %v5084
        %6668 = vmatprep.subr.mxu0 0.0
        %6669 = vmatpush1.msra.mxu0 %v5085
        %6670 = vmatprep.subr.mxu0 0.0
        %6671 = vmatpush1.msra.mxu0 %v5086
        %6672 = vmatprep.subr.mxu0 0.0
        %6673 = vmatpush1.msra.mxu0 0.0
        %6674 = vmatprep.subr.mxu0 0.0
        %6675 = vmatpush1.msra.mxu0 0.0
        %6676 = vmatprep.subr.mxu0 0.0
        %6677 = vmatpush1.msra.mxu0 0.0
        %6678 = vmatprep.subr.mxu0 0.0
        %6679 = vmatpush1.msra.mxu0 0.0
        %6680 = vmatprep.subr.mxu0 0.0
        %6681 = vmatpush1.msra.mxu0 0.0
        %6682 = vmatprep.subr.mxu0 0.0
        %6683 = vmatpush1.msra.mxu0 0.0
        %6684 = vmatprep.subr.mxu0 0.0
        %6685 = vmatpush1.msra.mxu0 0.0
        %6686 = vmatprep.subr.mxu0 0.0
        %6687 = vmatpush1.msra.mxu0 0.0
        %6688 = vmatprep.subr.mxu0 0.0
        %6689 = vmatpush1.msra.mxu0 0.0
        %6690 = vmatprep.subr.mxu0 0.0
        %6691 = vmatpush1.msra.mxu0 0.0
        %6692 = vmatprep.subr.mxu0 0.0
        %6693 = vmatpush1.msra.mxu0 0.0
        %6694 = vmatprep.subr.mxu0 0.0
        %6695 = vmatpush1.msra.mxu0 0.0
        %6696 = vmatprep.subr.mxu0 0.0
        %6697 = vmatpush1.msra.mxu0 0.0
        %6698 = vmatprep.subr.mxu0 0.0
        %6699 = vmatpush1.msra.mxu0 0.0
        %6700 = vmatprep.subr.mxu0 0.0
        %6701 = vmatpush1.msra.mxu0 0.0
        %6702 = vmatprep.subr.mxu0 0.0
        %6703 = vmatpush1.msra.mxu0 0.0
        %6704 = vmatprep.subr.mxu0 0.0
        %6705 = vmatpush1.msra.mxu0 0.0
        %6706 = vmatprep.subr.mxu0 0.0
        %6707 = vmatpush1.msra.mxu0 0.0
        %6708 = vmatprep.subr.mxu0 0.0
        %6709 = vmatpush1.msra.mxu0 0.0
        %6710 = vmatprep.subr.mxu0 0.0
        %6711 = vmatpush1.msra.mxu0 0.0
        %6712 = vmatprep.subr.mxu0 0.0
        %6713 = vmatpush1.msra.mxu0 0.0
        %6714 = vmatprep.subr.mxu0 0.0
        %6715 = vmatpush1.msra.mxu0 0.0
        %6716 = vmatprep.subr.mxu0 0.0
        %6717 = vmatpush1.msra.mxu0 0.0
        %6718 = vmatprep.subr.mxu0 0.0
        %6719 = vmatpush1.msra.mxu0 0.0
        %6720 = vmatprep.mubr.f32.mxu0 0.0
        %6721 = vmatmul.mubr.f32.gmra.mrb[0].mxu0 %v6651
        %v6722 = vpop.f32.mrb[0].mxu0
        %v6723 = vadd.f32 0.0, %v6722
        %v6724 = vpop.f32.mrb[0].mxu0
        %6725 = vmatprep.mubr.f32.mxu0 0.0
        %6726 = vmatmul.mubr.f32.gmra.mrb[0].mxu0 %v6654
        %v6727 = vpop.f32.mrb[0].mxu0
        %v6728 = vadd.f32 0.0, %v6727
        %v6729 = vpop.f32.mrb[0].mxu0
        %6730 = vdwg.mxu0
        %v6731 = vadd.f32 %v6564, %v6723
        %v6732 = vadd.f32 %v6565, %v6728
        %s6733 = scalar_lea.vmem [#allocation11], 64
        %v6734 = vld [vmem:[%s6733] sm:$0xff]
        %v6735 = vld [vmem:[%s6733 + $0x8] sm:$0xff]
        %v6737 = vsel %vm837, %v6734, 0
        %v6740 = vsel %vm837, %v6735, 0
        %6742 = vmatprep.subr.mxu0 0.0
        %6743 = vmatpush1.msra.mxu0 %v6068
        %6744 = vmatprep.subr.mxu0 0.0
        %6745 = vmatpush1.msra.mxu0 %v6069
        %6746 = vmatprep.subr.mxu0 0.0
        %6747 = vmatpush1.msra.mxu0 0.0
        %6748 = vmatprep.subr.mxu0 0.0
        %6749 = vmatpush1.msra.mxu0 0.0
        %6750 = vmatprep.subr.mxu0 0.0
        %6751 = vmatpush1.msra.mxu0 0.0
        %6752 = vmatprep.subr.mxu0 0.0
        %6753 = vmatpush1.msra.mxu0 0.0
        %6754 = vmatprep.subr.mxu0 0.0
        %6755 = vmatpush1.msra.mxu0 0.0
        %6756 = vmatprep.subr.mxu0 0.0
        %6757 = vmatpush1.msra.mxu0 0.0
        %6758 = vmatprep.subr.mxu0 0.0
        %6759 = vmatpush1.msra.mxu0 0.0
        %6760 = vmatprep.subr.mxu0 0.0
        %6761 = vmatpush1.msra.mxu0 0.0
        %6762 = vmatprep.subr.mxu0 0.0
        %6763 = vmatpush1.msra.mxu0 0.0
        %6764 = vmatprep.subr.mxu0 0.0
        %6765 = vmatpush1.msra.mxu0 0.0
        %6766 = vmatprep.subr.mxu0 0.0
        %6767 = vmatpush1.msra.mxu0 0.0
        %6768 = vmatprep.subr.mxu0 0.0
        %6769 = vmatpush1.msra.mxu0 0.0
        %6770 = vmatprep.subr.mxu0 0.0
        %6771 = vmatpush1.msra.mxu0 0.0
        %6772 = vmatprep.subr.mxu0 0.0
        %6773 = vmatpush1.msra.mxu0 0.0
        %6774 = vmatprep.subr.mxu0 0.0
        %6775 = vmatpush1.msra.mxu0 0.0
        %6776 = vmatprep.subr.mxu0 0.0
        %6777 = vmatpush1.msra.mxu0 0.0
        %6778 = vmatprep.subr.mxu0 0.0
        %6779 = vmatpush1.msra.mxu0 0.0
        %6780 = vmatprep.subr.mxu0 0.0
        %6781 = vmatpush1.msra.mxu0 0.0
        %6782 = vmatprep.subr.mxu0 0.0
        %6783 = vmatpush1.msra.mxu0 0.0
        %6784 = vmatprep.subr.mxu0 0.0
        %6785 = vmatpush1.msra.mxu0 0.0
        %6786 = vmatprep.subr.mxu0 0.0
        %6787 = vmatpush1.msra.mxu0 0.0
        %6788 = vmatprep.subr.mxu0 0.0
        %6789 = vmatpush1.msra.mxu0 0.0
        %6790 = vmatprep.subr.mxu0 0.0
        %6791 = vmatpush1.msra.mxu0 0.0
        %6792 = vmatprep.subr.mxu0 0.0
        %6793 = vmatpush1.msra.mxu0 0.0
        %6794 = vmatprep.subr.mxu0 0.0
        %6795 = vmatpush1.msra.mxu0 0.0
        %6796 = vmatprep.subr.mxu0 0.0
        %6797 = vmatpush1.msra.mxu0 0.0
        %6798 = vmatprep.subr.mxu0 0.0
        %6799 = vmatpush1.msra.mxu0 0.0
        %6800 = vmatprep.subr.mxu0 0.0
        %6801 = vmatpush1.msra.mxu0 0.0
        %6802 = vmatprep.subr.mxu0 0.0
        %6803 = vmatpush1.msra.mxu0 0.0
        %6804 = vmatprep.subr.mxu0 0.0
        %6805 = vmatpush1.msra.mxu0 0.0
        %6806 = vmatprep.mubr.f32.mxu0 0.0
        %6807 = vmatmul.mubr.f32.gmra.mrb[0].mxu0 %v6737
        %v6808 = vpop.f32.mrb[0].mxu0
        %v6809 = vadd.f32 0.0, %v6808
        %v6810 = vpop.f32.mrb[0].mxu0
        %6811 = vmatprep.mubr.f32.mxu0 0.0
        %6812 = vmatmul.mubr.f32.gmra.mrb[0].mxu0 %v6740
        %v6813 = vpop.f32.mrb[0].mxu0
        %v6814 = vadd.f32 0.0, %v6813
        %v6815 = vpop.f32.mrb[0].mxu0
        %6816 = vdwg.mxu0
        %v6818 = vsel %vm4655, %v6809, 0
        %v6821 = vsel %vm4655, %v6814, 0
        %6823 = vmatprep.subr.mxu0 0.0
        %6824 = vmatpush1.msra.mxu0 %v5255
        %6825 = vmatprep.subr.mxu0 0.0
        %6826 = vmatpush1.msra.mxu0 %v5256
        %6827 = vmatprep.subr.mxu0 0.0
        %6828 = vmatpush1.msra.mxu0 %v5257
        %6829 = vmatprep.subr.mxu0 0.0
        %6830 = vmatpush1.msra.mxu0 %v5258
        %6831 = vmatprep.subr.mxu0 0.0
        %6832 = vmatpush1.msra.mxu0 %v5259
        %6833 = vmatprep.subr.mxu0 0.0
        %6834 = vmatpush1.msra.mxu0 %v5260
        %6835 = vmatprep.subr.mxu0 0.0
        %6836 = vmatpush1.msra.mxu0 %v5261
        %6837 = vmatprep.subr.mxu0 0.0
        %6838 = vmatpush1.msra.mxu0 %v5262
        %6839 = vmatprep.subr.mxu0 0.0
        %6840 = vmatpush1.msra.mxu0 0.0
        %6841 = vmatprep.subr.mxu0 0.0
        %6842 = vmatpush1.msra.mxu0 0.0
        %6843 = vmatprep.subr.mxu0 0.0
        %6844 = vmatpush1.msra.mxu0 0.0
        %6845 = vmatprep.subr.mxu0 0.0
        %6846 = vmatpush1.msra.mxu0 0.0
        %6847 = vmatprep.subr.mxu0 0.0
        %6848 = vmatpush1.msra.mxu0 0.0
        %6849 = vmatprep.subr.mxu0 0.0
        %6850 = vmatpush1.msra.mxu0 0.0
        %6851 = vmatprep.subr.mxu0 0.0
        %6852 = vmatpush1.msra.mxu0 0.0
        %6853 = vmatprep.subr.mxu0 0.0
        %6854 = vmatpush1.msra.mxu0 0.0
        %6855 = vmatprep.subr.mxu0 0.0
        %6856 = vmatpush1.msra.mxu0 0.0
        %6857 = vmatprep.subr.mxu0 0.0
        %6858 = vmatpush1.msra.mxu0 0.0
        %6859 = vmatprep.subr.mxu0 0.0
        %6860 = vmatpush1.msra.mxu0 0.0
        %6861 = vmatprep.subr.mxu0 0.0
        %6862 = vmatpush1.msra.mxu0 0.0
        %6863 = vmatprep.subr.mxu0 0.0
        %6864 = vmatpush1.msra.mxu0 0.0
        %6865 = vmatprep.subr.mxu0 0.0
        %6866 = vmatpush1.msra.mxu0 0.0
        %6867 = vmatprep.subr.mxu0 0.0
        %6868 = vmatpush1.msra.mxu0 0.0
        %6869 = vmatprep.subr.mxu0 0.0
        %6870 = vmatpush1.msra.mxu0 0.0
        %6871 = vmatprep.subr.mxu0 0.0
        %6872 = vmatpush1.msra.mxu0 0.0
        %6873 = vmatprep.subr.mxu0 0.0
        %6874 = vmatpush1.msra.mxu0 0.0
        %6875 = vmatprep.subr.mxu0 0.0
        %6876 = vmatpush1.msra.mxu0 0.0
        %6877 = vmatprep.subr.mxu0 0.0
        %6878 = vmatpush1.msra.mxu0 0.0
        %6879 = vmatprep.subr.mxu0 0.0
        %6880 = vmatpush1.msra.mxu0 0.0
        %6881 = vmatprep.subr.mxu0 0.0
        %6882 = vmatpush1.msra.mxu0 0.0
        %6883 = vmatprep.subr.mxu0 0.0
        %6884 = vmatpush1.msra.mxu0 0.0
        %6885 = vmatprep.subr.mxu0 0.0
        %6886 = vmatpush1.msra.mxu0 0.0
        %6887 = vmatprep.mubr.f32.mxu0 0.0
        %6888 = vmatmul.mubr.f32.gmra.mrb[0].mxu0 %v6818
        %v6889 = vpop.f32.mrb[0].mxu0
        %v6890 = vadd.f32 0.0, %v6889
        %v6891 = vpop.f32.mrb[0].mxu0
        %6892 = vmatprep.mubr.f32.mxu0 0.0
        %6893 = vmatmul.mubr.f32.gmra.mrb[0].mxu0 %v6821
        %v6894 = vpop.f32.mrb[0].mxu0
        %v6895 = vadd.f32 0.0, %v6894
        %v6896 = vpop.f32.mrb[0].mxu0
        %6897 = vdwg.mxu0
        %v6898 = vadd.f32 %v6731, %v6890
        %v6899 = vadd.f32 %v6732, %v6895
        %s6900 = scalar_lea.vmem [#allocation11], 80
        %v6901 = vld [vmem:[%s6900] sm:$0xff]
        %v6902 = vld [vmem:[%s6900 + $0x8] sm:$0xff]
        %v6904 = vsel %vm837, %v6901, 0
        %v6907 = vsel %vm837, %v6902, 0
        %6909 = vmatprep.subr.mxu0 0.0
        %6910 = vmatpush1.msra.mxu0 %v6068
        %6911 = vmatprep.subr.mxu0 0.0
        %6912 = vmatpush1.msra.mxu0 %v6069
        %6913 = vmatprep.subr.mxu0 0.0
        %6914 = vmatpush1.msra.mxu0 0.0
        %6915 = vmatprep.subr.mxu0 0.0
        %6916 = vmatpush1.msra.mxu0 0.0
        %6917 = vmatprep.subr.mxu0 0.0
        %6918 = vmatpush1.msra.mxu0 0.0
        %6919 = vmatprep.subr.mxu0 0.0
        %6920 = vmatpush1.msra.mxu0 0.0
        %6921 = vmatprep.subr.mxu0 0.0
        %6922 = vmatpush1.msra.mxu0 0.0
        %6923 = vmatprep.subr.mxu0 0.0
        %6924 = vmatpush1.msra.mxu0 0.0
        %6925 = vmatprep.subr.mxu0 0.0
        %6926 = vmatpush1.msra.mxu0 0.0
        %6927 = vmatprep.subr.mxu0 0.0
        %6928 = vmatpush1.msra.mxu0 0.0
        %6929 = vmatprep.subr.mxu0 0.0
        %6930 = vmatpush1.msra.mxu0 0.0
        %6931 = vmatprep.subr.mxu0 0.0
        %6932 = vmatpush1.msra.mxu0 0.0
        %6933 = vmatprep.subr.mxu0 0.0
        %6934 = vmatpush1.msra.mxu0 0.0
        %6935 = vmatprep.subr.mxu0 0.0
        %6936 = vmatpush1.msra.mxu0 0.0
        %6937 = vmatprep.subr.mxu0 0.0
        %6938 = vmatpush1.msra.mxu0 0.0
        %6939 = vmatprep.subr.mxu0 0.0
        %6940 = vmatpush1.msra.mxu0 0.0
        %6941 = vmatprep.subr.mxu0 0.0
        %6942 = vmatpush1.msra.mxu0 0.0
        %6943 = vmatprep.subr.mxu0 0.0
        %6944 = vmatpush1.msra.mxu0 0.0
        %6945 = vmatprep.subr.mxu0 0.0
        %6946 = vmatpush1.msra.mxu0 0.0
        %6947 = vmatprep.subr.mxu0 0.0
        %6948 = vmatpush1.msra.mxu0 0.0
        %6949 = vmatprep.subr.mxu0 0.0
        %6950 = vmatpush1.msra.mxu0 0.0
        %6951 = vmatprep.subr.mxu0 0.0
        %6952 = vmatpush1.msra.mxu0 0.0
        %6953 = vmatprep.subr.mxu0 0.0
        %6954 = vmatpush1.msra.mxu0 0.0
        %6955 = vmatprep.subr.mxu0 0.0
        %6956 = vmatpush1.msra.mxu0 0.0
        %6957 = vmatprep.subr.mxu0 0.0
        %6958 = vmatpush1.msra.mxu0 0.0
        %6959 = vmatprep.subr.mxu0 0.0
        %6960 = vmatpush1.msra.mxu0 0.0
        %6961 = vmatprep.subr.mxu0 0.0
        %6962 = vmatpush1.msra.mxu0 0.0
        %6963 = vmatprep.subr.mxu0 0.0
        %6964 = vmatpush1.msra.mxu0 0.0
        %6965 = vmatprep.subr.mxu0 0.0
        %6966 = vmatpush1.msra.mxu0 0.0
        %6967 = vmatprep.subr.mxu0 0.0
        %6968 = vmatpush1.msra.mxu0 0.0
        %6969 = vmatprep.subr.mxu0 0.0
        %6970 = vmatpush1.msra.mxu0 0.0
        %6971 = vmatprep.subr.mxu0 0.0
        %6972 = vmatpush1.msra.mxu0 0.0
        %6973 = vmatprep.mubr.f32.mxu0 0.0
        %6974 = vmatmul.mubr.f32.gmra.mrb[0].mxu0 %v6904
        %v6975 = vpop.f32.mrb[0].mxu0
        %v6976 = vadd.f32 0.0, %v6975
        %v6977 = vpop.f32.mrb[0].mxu0
        %6978 = vmatprep.mubr.f32.mxu0 0.0
        %6979 = vmatmul.mubr.f32.gmra.mrb[0].mxu0 %v6907
        %v6980 = vpop.f32.mrb[0].mxu0
        %v6981 = vadd.f32 0.0, %v6980
        %v6982 = vpop.f32.mrb[0].mxu0
        %6983 = vdwg.mxu0
        %v6985 = vsel %vm4655, %v6976, 0
        %v6988 = vsel %vm4655, %v6981, 0
        %6990 = vmatprep.subr.mxu0 0.0
        %6991 = vmatpush1.msra.mxu0 %v5431
        %6992 = vmatprep.subr.mxu0 0.0
        %6993 = vmatpush1.msra.mxu0 %v5432
        %6994 = vmatprep.subr.mxu0 0.0
        %6995 = vmatpush1.msra.mxu0 %v5433
        %6996 = vmatprep.subr.mxu0 0.0
        %6997 = vmatpush1.msra.mxu0 %v5434
        %6998 = vmatprep.subr.mxu0 0.0
        %6999 = vmatpush1.msra.mxu0 %v5435
        %7000 = vmatprep.subr.mxu0 0.0
        %7001 = vmatpush1.msra.mxu0 %v5436
        %7002 = vmatprep.subr.mxu0 0.0
        %7003 = vmatpush1.msra.mxu0 %v5437
        %7004 = vmatprep.subr.mxu0 0.0
        %7005 = vmatpush1.msra.mxu0 %v5438
        %7006 = vmatprep.subr.mxu0 0.0
        %7007 = vmatpush1.msra.mxu0 0.0
        %7008 = vmatprep.subr.mxu0 0.0
        %7009 = vmatpush1.msra.mxu0 0.0
        %7010 = vmatprep.subr.mxu0 0.0
        %7011 = vmatpush1.msra.mxu0 0.0
        %7012 = vmatprep.subr.mxu0 0.0
        %7013 = vmatpush1.msra.mxu0 0.0
        %7014 = vmatprep.subr.mxu0 0.0
        %7015 = vmatpush1.msra.mxu0 0.0
        %7016 = vmatprep.subr.mxu0 0.0
        %7017 = vmatpush1.msra.mxu0 0.0
        %7018 = vmatprep.subr.mxu0 0.0
        %7019 = vmatpush1.msra.mxu0 0.0
        %7020 = vmatprep.subr.mxu0 0.0
        %7021 = vmatpush1.msra.mxu0 0.0
        %7022 = vmatprep.subr.mxu0 0.0
        %7023 = vmatpush1.msra.mxu0 0.0
        %7024 = vmatprep.subr.mxu0 0.0
        %7025 = vmatpush1.msra.mxu0 0.0
        %7026 = vmatprep.subr.mxu0 0.0
        %7027 = vmatpush1.msra.mxu0 0.0
        %7028 = vmatprep.subr.mxu0 0.0
        %7029 = vmatpush1.msra.mxu0 0.0
        %7030 = vmatprep.subr.mxu0 0.0
        %7031 = vmatpush1.msra.mxu0 0.0
        %7032 = vmatprep.subr.mxu0 0.0
        %7033 = vmatpush1.msra.mxu0 0.0
        %7034 = vmatprep.subr.mxu0 0.0
        %7035 = vmatpush1.msra.mxu0 0.0
        %7036 = vmatprep.subr.mxu0 0.0
        %7037 = vmatpush1.msra.mxu0 0.0
        %7038 = vmatprep.subr.mxu0 0.0
        %7039 = vmatpush1.msra.mxu0 0.0
        %7040 = vmatprep.subr.mxu0 0.0
        %7041 = vmatpush1.msra.mxu0 0.0
        %7042 = vmatprep.subr.mxu0 0.0
        %7043 = vmatpush1.msra.mxu0 0.0
        %7044 = vmatprep.subr.mxu0 0.0
        %7045 = vmatpush1.msra.mxu0 0.0
        %7046 = vmatprep.subr.mxu0 0.0
        %7047 = vmatpush1.msra.mxu0 0.0
        %7048 = vmatprep.subr.mxu0 0.0
        %7049 = vmatpush1.msra.mxu0 0.0
        %7050 = vmatprep.subr.mxu0 0.0
        %7051 = vmatpush1.msra.mxu0 0.0
        %7052 = vmatprep.subr.mxu0 0.0
        %7053 = vmatpush1.msra.mxu0 0.0
        %7054 = vmatprep.mubr.f32.mxu0 0.0
        %7055 = vmatmul.mubr.f32.gmra.mrb[0].mxu0 %v6985
        %v7056 = vpop.f32.mrb[0].mxu0
        %v7057 = vadd.f32 0.0, %v7056
        %v7058 = vpop.f32.mrb[0].mxu0
        %7059 = vmatprep.mubr.f32.mxu0 0.0
        %7060 = vmatmul.mubr.f32.gmra.mrb[0].mxu0 %v6988
        %v7061 = vpop.f32.mrb[0].mxu0
        %v7062 = vadd.f32 0.0, %v7061
        %v7063 = vpop.f32.mrb[0].mxu0
        %7064 = vdwg.mxu0
        %v7065 = vadd.f32 %v6898, %v7057
        %v7066 = vadd.f32 %v6899, %v7062
        %s7067 = scalar_lea.vmem [#allocation11], 96
        %v7068 = vld [vmem:[%s7067] sm:$0xff]
        %v7069 = vld [vmem:[%s7067 + $0x8] sm:$0xff]
        %v7071 = vsel %vm837, %v7068, 0
        %v7074 = vsel %vm837, %v7069, 0
        %7076 = vmatprep.subr.mxu0 0.0
        %7077 = vmatpush1.msra.mxu0 %v6068
        %7078 = vmatprep.subr.mxu0 0.0
        %7079 = vmatpush1.msra.mxu0 %v6069
        %7080 = vmatprep.subr.mxu0 0.0
        %7081 = vmatpush1.msra.mxu0 0.0
        %7082 = vmatprep.subr.mxu0 0.0
        %7083 = vmatpush1.msra.mxu0 0.0
        %7084 = vmatprep.subr.mxu0 0.0
        %7085 = vmatpush1.msra.mxu0 0.0
        %7086 = vmatprep.subr.mxu0 0.0
        %7087 = vmatpush1.msra.mxu0 0.0
        %7088 = vmatprep.subr.mxu0 0.0
        %7089 = vmatpush1.msra.mxu0 0.0
        %7090 = vmatprep.subr.mxu0 0.0
        %7091 = vmatpush1.msra.mxu0 0.0
        %7092 = vmatprep.subr.mxu0 0.0
        %7093 = vmatpush1.msra.mxu0 0.0
        %7094 = vmatprep.subr.mxu0 0.0
        %7095 = vmatpush1.msra.mxu0 0.0
        %7096 = vmatprep.subr.mxu0 0.0
        %7097 = vmatpush1.msra.mxu0 0.0
        %7098 = vmatprep.subr.mxu0 0.0
        %7099 = vmatpush1.msra.mxu0 0.0
        %7100 = vmatprep.subr.mxu0 0.0
        %7101 = vmatpush1.msra.mxu0 0.0
        %7102 = vmatprep.subr.mxu0 0.0
        %7103 = vmatpush1.msra.mxu0 0.0
        %7104 = vmatprep.subr.mxu0 0.0
        %7105 = vmatpush1.msra.mxu0 0.0
        %7106 = vmatprep.subr.mxu0 0.0
        %7107 = vmatpush1.msra.mxu0 0.0
        %7108 = vmatprep.subr.mxu0 0.0
        %7109 = vmatpush1.msra.mxu0 0.0
        %7110 = vmatprep.subr.mxu0 0.0
        %7111 = vmatpush1.msra.mxu0 0.0
        %7112 = vmatprep.subr.mxu0 0.0
        %7113 = vmatpush1.msra.mxu0 0.0
        %7114 = vmatprep.subr.mxu0 0.0
        %7115 = vmatpush1.msra.mxu0 0.0
        %7116 = vmatprep.subr.mxu0 0.0
        %7117 = vmatpush1.msra.mxu0 0.0
        %7118 = vmatprep.subr.mxu0 0.0
        %7119 = vmatpush1.msra.mxu0 0.0
        %7120 = vmatprep.subr.mxu0 0.0
        %7121 = vmatpush1.msra.mxu0 0.0
        %7122 = vmatprep.subr.mxu0 0.0
        %7123 = vmatpush1.msra.mxu0 0.0
        %7124 = vmatprep.subr.mxu0 0.0
        %7125 = vmatpush1.msra.mxu0 0.0
        %7126 = vmatprep.subr.mxu0 0.0
        %7127 = vmatpush1.msra.mxu0 0.0
        %7128 = vmatprep.subr.mxu0 0.0
        %7129 = vmatpush1.msra.mxu0 0.0
        %7130 = vmatprep.subr.mxu0 0.0
        %7131 = vmatpush1.msra.mxu0 0.0
        %7132 = vmatprep.subr.mxu0 0.0
        %7133 = vmatpush1.msra.mxu0 0.0
        %7134 = vmatprep.subr.mxu0 0.0
        %7135 = vmatpush1.msra.mxu0 0.0
        %7136 = vmatprep.subr.mxu0 0.0
        %7137 = vmatpush1.msra.mxu0 0.0
        %7138 = vmatprep.subr.mxu0 0.0
        %7139 = vmatpush1.msra.mxu0 0.0
        %7140 = vmatprep.mubr.f32.mxu0 0.0
        %7141 = vmatmul.mubr.f32.gmra.mrb[0].mxu0 %v7071
        %v7142 = vpop.f32.mrb[0].mxu0
        %v7143 = vadd.f32 0.0, %v7142
        %v7144 = vpop.f32.mrb[0].mxu0
        %7145 = vmatprep.mubr.f32.mxu0 0.0
        %7146 = vmatmul.mubr.f32.gmra.mrb[0].mxu0 %v7074
        %v7147 = vpop.f32.mrb[0].mxu0
        %v7148 = vadd.f32 0.0, %v7147
        %v7149 = vpop.f32.mrb[0].mxu0
        %7150 = vdwg.mxu0
        %v7152 = vsel %vm4655, %v7143, 0
        %v7155 = vsel %vm4655, %v7148, 0
        %7157 = vmatprep.subr.mxu0 0.0
        %7158 = vmatpush1.msra.mxu0 %v5607
        %7159 = vmatprep.subr.mxu0 0.0
        %7160 = vmatpush1.msra.mxu0 %v5608
        %7161 = vmatprep.subr.mxu0 0.0
        %7162 = vmatpush1.msra.mxu0 %v5609
        %7163 = vmatprep.subr.mxu0 0.0
        %7164 = vmatpush1.msra.mxu0 %v5610
        %7165 = vmatprep.subr.mxu0 0.0
        %7166 = vmatpush1.msra.mxu0 %v5611
        %7167 = vmatprep.subr.mxu0 0.0
        %7168 = vmatpush1.msra.mxu0 %v5612
        %7169 = vmatprep.subr.mxu0 0.0
        %7170 = vmatpush1.msra.mxu0 %v5613
        %7171 = vmatprep.subr.mxu0 0.0
        %7172 = vmatpush1.msra.mxu0 %v5614
        %7173 = vmatprep.subr.mxu0 0.0
        %7174 = vmatpush1.msra.mxu0 0.0
        %7175 = vmatprep.subr.mxu0 0.0
        %7176 = vmatpush1.msra.mxu0 0.0
        %7177 = vmatprep.subr.mxu0 0.0
        %7178 = vmatpush1.msra.mxu0 0.0
        %7179 = vmatprep.subr.mxu0 0.0
        %7180 = vmatpush1.msra.mxu0 0.0
        %7181 = vmatprep.subr.mxu0 0.0
        %7182 = vmatpush1.msra.mxu0 0.0
        %7183 = vmatprep.subr.mxu0 0.0
        %7184 = vmatpush1.msra.mxu0 0.0
        %7185 = vmatprep.subr.mxu0 0.0
        %7186 = vmatpush1.msra.mxu0 0.0
        %7187 = vmatprep.subr.mxu0 0.0
        %7188 = vmatpush1.msra.mxu0 0.0
        %7189 = vmatprep.subr.mxu0 0.0
        %7190 = vmatpush1.msra.mxu0 0.0
        %7191 = vmatprep.subr.mxu0 0.0
        %7192 = vmatpush1.msra.mxu0 0.0
        %7193 = vmatprep.subr.mxu0 0.0
        %7194 = vmatpush1.msra.mxu0 0.0
        %7195 = vmatprep.subr.mxu0 0.0
        %7196 = vmatpush1.msra.mxu0 0.0
        %7197 = vmatprep.subr.mxu0 0.0
        %7198 = vmatpush1.msra.mxu0 0.0
        %7199 = vmatprep.subr.mxu0 0.0
        %7200 = vmatpush1.msra.mxu0 0.0
        %7201 = vmatprep.subr.mxu0 0.0
        %7202 = vmatpush1.msra.mxu0 0.0
        %7203 = vmatprep.subr.mxu0 0.0
        %7204 = vmatpush1.msra.mxu0 0.0
        %7205 = vmatprep.subr.mxu0 0.0
        %7206 = vmatpush1.msra.mxu0 0.0
        %7207 = vmatprep.subr.mxu0 0.0
        %7208 = vmatpush1.msra.mxu0 0.0
        %7209 = vmatprep.subr.mxu0 0.0
        %7210 = vmatpush1.msra.mxu0 0.0
        %7211 = vmatprep.subr.mxu0 0.0
        %7212 = vmatpush1.msra.mxu0 0.0
        %7213 = vmatprep.subr.mxu0 0.0
        %7214 = vmatpush1.msra.mxu0 0.0
        %7215 = vmatprep.subr.mxu0 0.0
        %7216 = vmatpush1.msra.mxu0 0.0
        %7217 = vmatprep.subr.mxu0 0.0
        %7218 = vmatpush1.msra.mxu0 0.0
        %7219 = vmatprep.subr.mxu0 0.0
        %7220 = vmatpush1.msra.mxu0 0.0
        %7221 = vmatprep.mubr.f32.mxu0 0.0
        %7222 = vmatmul.mubr.f32.gmra.mrb[0].mxu0 %v7152
        %v7223 = vpop.f32.mrb[0].mxu0
        %v7224 = vadd.f32 0.0, %v7223
        %v7225 = vpop.f32.mrb[0].mxu0
        %7226 = vmatprep.mubr.f32.mxu0 0.0
        %7227 = vmatmul.mubr.f32.gmra.mrb[0].mxu0 %v7155
        %v7228 = vpop.f32.mrb[0].mxu0
        %v7229 = vadd.f32 0.0, %v7228
        %v7230 = vpop.f32.mrb[0].mxu0
        %7231 = vdwg.mxu0
        %v7232 = vadd.f32 %v7065, %v7224
        %v7233 = vadd.f32 %v7066, %v7229
        %s7234 = scalar_lea.vmem [#allocation11], 112
        %v7235 = vld [vmem:[%s7234] sm:$0xff]
        %v7236 = vld [vmem:[%s7234 + $0x8] sm:$0xff]
        %v7238 = vsel %vm837, %v7235, 0
        %v7241 = vsel %vm837, %v7236, 0
        %7243 = vmatprep.subr.mxu0 0.0
        %7244 = vmatpush1.msra.mxu0 %v6068
        %7245 = vmatprep.subr.mxu0 0.0
        %7246 = vmatpush1.msra.mxu0 %v6069
        %7247 = vmatprep.subr.mxu0 0.0
        %7248 = vmatpush1.msra.mxu0 0.0
        %7249 = vmatprep.subr.mxu0 0.0
        %7250 = vmatpush1.msra.mxu0 0.0
        %7251 = vmatprep.subr.mxu0 0.0
        %7252 = vmatpush1.msra.mxu0 0.0
        %7253 = vmatprep.subr.mxu0 0.0
        %7254 = vmatpush1.msra.mxu0 0.0
        %7255 = vmatprep.subr.mxu0 0.0
        %7256 = vmatpush1.msra.mxu0 0.0
        %7257 = vmatprep.subr.mxu0 0.0
        %7258 = vmatpush1.msra.mxu0 0.0
        %7259 = vmatprep.subr.mxu0 0.0
        %7260 = vmatpush1.msra.mxu0 0.0
        %7261 = vmatprep.subr.mxu0 0.0
        %7262 = vmatpush1.msra.mxu0 0.0
        %7263 = vmatprep.subr.mxu0 0.0
        %7264 = vmatpush1.msra.mxu0 0.0
        %7265 = vmatprep.subr.mxu0 0.0
        %7266 = vmatpush1.msra.mxu0 0.0
        %7267 = vmatprep.subr.mxu0 0.0
        %7268 = vmatpush1.msra.mxu0 0.0
        %7269 = vmatprep.subr.mxu0 0.0
        %7270 = vmatpush1.msra.mxu0 0.0
        %7271 = vmatprep.subr.mxu0 0.0
        %7272 = vmatpush1.msra.mxu0 0.0
        %7273 = vmatprep.subr.mxu0 0.0
        %7274 = vmatpush1.msra.mxu0 0.0
        %7275 = vmatprep.subr.mxu0 0.0
        %7276 = vmatpush1.msra.mxu0 0.0
        %7277 = vmatprep.subr.mxu0 0.0
        %7278 = vmatpush1.msra.mxu0 0.0
        %7279 = vmatprep.subr.mxu0 0.0
        %7280 = vmatpush1.msra.mxu0 0.0
        %7281 = vmatprep.subr.mxu0 0.0
        %7282 = vmatpush1.msra.mxu0 0.0
        %7283 = vmatprep.subr.mxu0 0.0
        %7284 = vmatpush1.msra.mxu0 0.0
        %7285 = vmatprep.subr.mxu0 0.0
        %7286 = vmatpush1.msra.mxu0 0.0
        %7287 = vmatprep.subr.mxu0 0.0
        %7288 = vmatpush1.msra.mxu0 0.0
        %7289 = vmatprep.subr.mxu0 0.0
        %7290 = vmatpush1.msra.mxu0 0.0
        %7291 = vmatprep.subr.mxu0 0.0
        %7292 = vmatpush1.msra.mxu0 0.0
        %7293 = vmatprep.subr.mxu0 0.0
        %7294 = vmatpush1.msra.mxu0 0.0
        %7295 = vmatprep.subr.mxu0 0.0
        %7296 = vmatpush1.msra.mxu0 0.0
        %7297 = vmatprep.subr.mxu0 0.0
        %7298 = vmatpush1.msra.mxu0 0.0
        %7299 = vmatprep.subr.mxu0 0.0
        %7300 = vmatpush1.msra.mxu0 0.0
        %7301 = vmatprep.subr.mxu0 0.0
        %7302 = vmatpush1.msra.mxu0 0.0
        %7303 = vmatprep.subr.mxu0 0.0
        %7304 = vmatpush1.msra.mxu0 0.0
        %7305 = vmatprep.subr.mxu0 0.0
        %7306 = vmatpush1.msra.mxu0 0.0
        %7307 = vmatprep.mubr.f32.mxu0 0.0
        %7308 = vmatmul.mubr.f32.gmra.mrb[0].mxu0 %v7238
        %v7309 = vpop.f32.mrb[0].mxu0
        %v7310 = vadd.f32 0.0, %v7309
        %v7311 = vpop.f32.mrb[0].mxu0
        %7312 = vmatprep.mubr.f32.mxu0 0.0
        %7313 = vmatmul.mubr.f32.gmra.mrb[0].mxu0 %v7241
        %v7314 = vpop.f32.mrb[0].mxu0
        %v7315 = vadd.f32 0.0, %v7314
        %v7316 = vpop.f32.mrb[0].mxu0
        %7317 = vdwg.mxu0
        %v7319 = vsel %vm4655, %v7310, 0
        %v7322 = vsel %vm4655, %v7315, 0
        %7324 = vmatprep.subr.mxu0 0.0
        %7325 = vmatpush1.msra.mxu0 %v5783
        %7326 = vmatprep.subr.mxu0 0.0
        %7327 = vmatpush1.msra.mxu0 %v5784
        %7328 = vmatprep.subr.mxu0 0.0
        %7329 = vmatpush1.msra.mxu0 %v5785
        %7330 = vmatprep.subr.mxu0 0.0
        %7331 = vmatpush1.msra.mxu0 %v5786
        %7332 = vmatprep.subr.mxu0 0.0
        %7333 = vmatpush1.msra.mxu0 %v5787
        %7334 = vmatprep.subr.mxu0 0.0
        %7335 = vmatpush1.msra.mxu0 %v5788
        %7336 = vmatprep.subr.mxu0 0.0
        %7337 = vmatpush1.msra.mxu0 %v5789
        %7338 = vmatprep.subr.mxu0 0.0
        %7339 = vmatpush1.msra.mxu0 %v5790
        %7340 = vmatprep.subr.mxu0 0.0
        %7341 = vmatpush1.msra.mxu0 0.0
        %7342 = vmatprep.subr.mxu0 0.0
        %7343 = vmatpush1.msra.mxu0 0.0
        %7344 = vmatprep.subr.mxu0 0.0
        %7345 = vmatpush1.msra.mxu0 0.0
        %7346 = vmatprep.subr.mxu0 0.0
        %7347 = vmatpush1.msra.mxu0 0.0
        %7348 = vmatprep.subr.mxu0 0.0
        %7349 = vmatpush1.msra.mxu0 0.0
        %7350 = vmatprep.subr.mxu0 0.0
        %7351 = vmatpush1.msra.mxu0 0.0
        %7352 = vmatprep.subr.mxu0 0.0
        %7353 = vmatpush1.msra.mxu0 0.0
        %7354 = vmatprep.subr.mxu0 0.0
        %7355 = vmatpush1.msra.mxu0 0.0
        %7356 = vmatprep.subr.mxu0 0.0
        %7357 = vmatpush1.msra.mxu0 0.0
        %7358 = vmatprep.subr.mxu0 0.0
        %7359 = vmatpush1.msra.mxu0 0.0
        %7360 = vmatprep.subr.mxu0 0.0
        %7361 = vmatpush1.msra.mxu0 0.0
        %7362 = vmatprep.subr.mxu0 0.0
        %7363 = vmatpush1.msra.mxu0 0.0
        %7364 = vmatprep.subr.mxu0 0.0
        %7365 = vmatpush1.msra.mxu0 0.0
        %7366 = vmatprep.subr.mxu0 0.0
        %7367 = vmatpush1.msra.mxu0 0.0
        %7368 = vmatprep.subr.mxu0 0.0
        %7369 = vmatpush1.msra.mxu0 0.0
        %7370 = vmatprep.subr.mxu0 0.0
        %7371 = vmatpush1.msra.mxu0 0.0
        %7372 = vmatprep.subr.mxu0 0.0
        %7373 = vmatpush1.msra.mxu0 0.0
        %7374 = vmatprep.subr.mxu0 0.0
        %7375 = vmatpush1.msra.mxu0 0.0
        %7376 = vmatprep.subr.mxu0 0.0
        %7377 = vmatpush1.msra.mxu0 0.0
        %7378 = vmatprep.subr.mxu0 0.0
        %7379 = vmatpush1.msra.mxu0 0.0
        %7380 = vmatprep.subr.mxu0 0.0
        %7381 = vmatpush1.msra.mxu0 0.0
        %7382 = vmatprep.subr.mxu0 0.0
        %7383 = vmatpush1.msra.mxu0 0.0
        %7384 = vmatprep.subr.mxu0 0.0
        %7385 = vmatpush1.msra.mxu0 0.0
        %7386 = vmatprep.subr.mxu0 0.0
        %7387 = vmatpush1.msra.mxu0 0.0
        %7388 = vmatprep.mubr.f32.mxu0 0.0
        %7389 = vmatmul.mubr.f32.gmra.mrb[0].mxu0 %v7319
        %v7390 = vpop.f32.mrb[0].mxu0
        %v7391 = vadd.f32 0.0, %v7390
        %v7392 = vpop.f32.mrb[0].mxu0
        %7393 = vmatprep.mubr.f32.mxu0 0.0
        %7394 = vmatmul.mubr.f32.gmra.mrb[0].mxu0 %v7322
        %v7395 = vpop.f32.mrb[0].mxu0
        %v7396 = vadd.f32 0.0, %v7395
        %v7397 = vpop.f32.mrb[0].mxu0
        %7398 = vdwg.mxu0
        %v7399 = vadd.f32 %v7232, %v7391
        %v7400 = vadd.f32 %v7233, %v7396
        %s7401 = scalar_lea.vmem [#allocation11], 128
        %v7402 = vld [vmem:[%s7401] sm:$0xff]
        %v7403 = vld [vmem:[%s7401 + $0x8] sm:$0xff]
        %v7405 = vsel %vm837, %v7402, 0
        %v7408 = vsel %vm837, %v7403, 0
        %7410 = vmatprep.subr.mxu0 0.0
        %7411 = vmatpush1.msra.mxu0 %v6068
        %7412 = vmatprep.subr.mxu0 0.0
        %7413 = vmatpush1.msra.mxu0 %v6069
        %7414 = vmatprep.subr.mxu0 0.0
        %7415 = vmatpush1.msra.mxu0 0.0
        %7416 = vmatprep.subr.mxu0 0.0
        %7417 = vmatpush1.msra.mxu0 0.0
        %7418 = vmatprep.subr.mxu0 0.0
        %7419 = vmatpush1.msra.mxu0 0.0
        %7420 = vmatprep.subr.mxu0 0.0
        %7421 = vmatpush1.msra.mxu0 0.0
        %7422 = vmatprep.subr.mxu0 0.0
        %7423 = vmatpush1.msra.mxu0 0.0
        %7424 = vmatprep.subr.mxu0 0.0
        %7425 = vmatpush1.msra.mxu0 0.0
        %7426 = vmatprep.subr.mxu0 0.0
        %7427 = vmatpush1.msra.mxu0 0.0
        %7428 = vmatprep.subr.mxu0 0.0
        %7429 = vmatpush1.msra.mxu0 0.0
        %7430 = vmatprep.subr.mxu0 0.0
        %7431 = vmatpush1.msra.mxu0 0.0
        %7432 = vmatprep.subr.mxu0 0.0
        %7433 = vmatpush1.msra.mxu0 0.0
        %7434 = vmatprep.subr.mxu0 0.0
        %7435 = vmatpush1.msra.mxu0 0.0
        %7436 = vmatprep.subr.mxu0 0.0
        %7437 = vmatpush1.msra.mxu0 0.0
        %7438 = vmatprep.subr.mxu0 0.0
        %7439 = vmatpush1.msra.mxu0 0.0
        %7440 = vmatprep.subr.mxu0 0.0
        %7441 = vmatpush1.msra.mxu0 0.0
        %7442 = vmatprep.subr.mxu0 0.0
        %7443 = vmatpush1.msra.mxu0 0.0
        %7444 = vmatprep.subr.mxu0 0.0
        %7445 = vmatpush1.msra.mxu0 0.0
        %7446 = vmatprep.subr.mxu0 0.0
        %7447 = vmatpush1.msra.mxu0 0.0
        %7448 = vmatprep.subr.mxu0 0.0
        %7449 = vmatpush1.msra.mxu0 0.0
        %7450 = vmatprep.subr.mxu0 0.0
        %7451 = vmatpush1.msra.mxu0 0.0
        %7452 = vmatprep.subr.mxu0 0.0
        %7453 = vmatpush1.msra.mxu0 0.0
        %7454 = vmatprep.subr.mxu0 0.0
        %7455 = vmatpush1.msra.mxu0 0.0
        %7456 = vmatprep.subr.mxu0 0.0
        %7457 = vmatpush1.msra.mxu0 0.0
        %7458 = vmatprep.subr.mxu0 0.0
        %7459 = vmatpush1.msra.mxu0 0.0
        %7460 = vmatprep.subr.mxu0 0.0
        %7461 = vmatpush1.msra.mxu0 0.0
        %7462 = vmatprep.subr.mxu0 0.0
        %7463 = vmatpush1.msra.mxu0 0.0
        %7464 = vmatprep.subr.mxu0 0.0
        %7465 = vmatpush1.msra.mxu0 0.0
        %7466 = vmatprep.subr.mxu0 0.0
        %7467 = vmatpush1.msra.mxu0 0.0
        %7468 = vmatprep.subr.mxu0 0.0
        %7469 = vmatpush1.msra.mxu0 0.0
        %7470 = vmatprep.subr.mxu0 0.0
        %7471 = vmatpush1.msra.mxu0 0.0
        %7472 = vmatprep.subr.mxu0 0.0
        %7473 = vmatpush1.msra.mxu0 0.0
        %7474 = vmatprep.mubr.f32.mxu0 0.0
        %7475 = vmatmul.mubr.f32.gmra.mrb[0].mxu0 %v7405
        %v7476 = vpop.f32.mrb[0].mxu0
        %v7477 = vadd.f32 0.0, %v7476
        %v7478 = vpop.f32.mrb[0].mxu0
        %7479 = vmatprep.mubr.f32.mxu0 0.0
        %7480 = vmatmul.mubr.f32.gmra.mrb[0].mxu0 %v7408
        %v7481 = vpop.f32.mrb[0].mxu0
        %v7482 = vadd.f32 0.0, %v7481
        %v7483 = vpop.f32.mrb[0].mxu0
        %7484 = vdwg.mxu0
        %v7486 = vsel %vm4655, %v7477, 0
        %v7489 = vsel %vm4655, %v7482, 0
        %7491 = vmatprep.subr.mxu0 0.0
        %7492 = vmatpush1.msra.mxu0 %v5959
        %7493 = vmatprep.subr.mxu0 0.0
        %7494 = vmatpush1.msra.mxu0 %v5960
        %7495 = vmatprep.subr.mxu0 0.0
        %7496 = vmatpush1.msra.mxu0 %v5961
        %7497 = vmatprep.subr.mxu0 0.0
        %7498 = vmatpush1.msra.mxu0 %v5962
        %7499 = vmatprep.subr.mxu0 0.0
        %7500 = vmatpush1.msra.mxu0 %v5963
        %7501 = vmatprep.subr.mxu0 0.0
        %7502 = vmatpush1.msra.mxu0 %v5964
        %7503 = vmatprep.subr.mxu0 0.0
        %7504 = vmatpush1.msra.mxu0 %v5965
        %7505 = vmatprep.subr.mxu0 0.0
        %7506 = vmatpush1.msra.mxu0 %v5966
        %7507 = vmatprep.subr.mxu0 0.0
        %7508 = vmatpush1.msra.mxu0 0.0
        %7509 = vmatprep.subr.mxu0 0.0
        %7510 = vmatpush1.msra.mxu0 0.0
        %7511 = vmatprep.subr.mxu0 0.0
        %7512 = vmatpush1.msra.mxu0 0.0
        %7513 = vmatprep.subr.mxu0 0.0
        %7514 = vmatpush1.msra.mxu0 0.0
        %7515 = vmatprep.subr.mxu0 0.0
        %7516 = vmatpush1.msra.mxu0 0.0
        %7517 = vmatprep.subr.mxu0 0.0
        %7518 = vmatpush1.msra.mxu0 0.0
        %7519 = vmatprep.subr.mxu0 0.0
        %7520 = vmatpush1.msra.mxu0 0.0
        %7521 = vmatprep.subr.mxu0 0.0
        %7522 = vmatpush1.msra.mxu0 0.0
        %7523 = vmatprep.subr.mxu0 0.0
        %7524 = vmatpush1.msra.mxu0 0.0
        %7525 = vmatprep.subr.mxu0 0.0
        %7526 = vmatpush1.msra.mxu0 0.0
        %7527 = vmatprep.subr.mxu0 0.0
        %7528 = vmatpush1.msra.mxu0 0.0
        %7529 = vmatprep.subr.mxu0 0.0
        %7530 = vmatpush1.msra.mxu0 0.0
        %7531 = vmatprep.subr.mxu0 0.0
        %7532 = vmatpush1.msra.mxu0 0.0
        %7533 = vmatprep.subr.mxu0 0.0
        %7534 = vmatpush1.msra.mxu0 0.0
        %7535 = vmatprep.subr.mxu0 0.0
        %7536 = vmatpush1.msra.mxu0 0.0
        %7537 = vmatprep.subr.mxu0 0.0
        %7538 = vmatpush1.msra.mxu0 0.0
        %7539 = vmatprep.subr.mxu0 0.0
        %7540 = vmatpush1.msra.mxu0 0.0
        %7541 = vmatprep.subr.mxu0 0.0
        %7542 = vmatpush1.msra.mxu0 0.0
        %7543 = vmatprep.subr.mxu0 0.0
        %7544 = vmatpush1.msra.mxu0 0.0
        %7545 = vmatprep.subr.mxu0 0.0
        %7546 = vmatpush1.msra.mxu0 0.0
        %7547 = vmatprep.subr.mxu0 0.0
        %7548 = vmatpush1.msra.mxu0 0.0
        %7549 = vmatprep.subr.mxu0 0.0
        %7550 = vmatpush1.msra.mxu0 0.0
        %7551 = vmatprep.subr.mxu0 0.0
        %7552 = vmatpush1.msra.mxu0 0.0
        %7553 = vmatprep.subr.mxu0 0.0
        %7554 = vmatpush1.msra.mxu0 0.0
        %7555 = vmatprep.mubr.f32.mxu0 0.0
        %7556 = vmatmul.mubr.f32.gmra.mrb[0].mxu0 %v7486
        %v7557 = vpop.f32.mrb[0].mxu0
        %v7558 = vadd.f32 0.0, %v7557
        %v7559 = vpop.f32.mrb[0].mxu0
        %7560 = vmatprep.mubr.f32.mxu0 0.0
        %7561 = vmatmul.mubr.f32.gmra.mrb[0].mxu0 %v7489
        %v7562 = vpop.f32.mrb[0].mxu0
        %v7563 = vadd.f32 0.0, %v7562
        %v7564 = vpop.f32.mrb[0].mxu0
        %7565 = vdwg.mxu0
        %v7566 = vadd.f32 %v7399, %v7558
        %v7567 = vadd.f32 %v7400, %v7563
        %v7568 = vld [vmem:[%s11] sm:$0xff]
        %v7569 = vld [vmem:[%s11 + $0x8] sm:$0xff]
        %7571 = vset.pattern.permute.xlu0 0
        %7572 = vperm.xlu0 %7571, %v7568
        %v7573 = vpop.permute.xlu0 %7572
        %7576 = vset.pattern.permute.xlu0 0
        %7577 = vperm.xlu0 %7576, %v7569
        %v7578 = vpop.permute.xlu0 %7577
        %v7580 = vadd.f32 %v7566, %v7573
        %v7581 = vadd.f32 %v7567, %v7578
        %vm7582 = vcmp.ge.f32.partialorder %v7580, 0.0
        %vm7583 = vcmp.ge.f32.partialorder %v7581, 0.0
        %v7584 = vmul.f32 %v7580, 0.2
        %v7585 = vmul.f32 %v7581, 0.2
        %v7586 = vsel %vm7582, %v7580, %v7584
        %v7587 = vsel %vm7583, %v7581, %v7585
        %v7588 = vld [vmem:[%s13] sm:$0x1]
        %v7589 = vld [vmem:[#allocation3] sm:$0x1]
        %7591 = vset.pattern.permute.xlu0 0
        %7592 = vperm.xlu0 %7591, %v7589
        %v7593 = vpop.permute.xlu0 %7592
        %v7595 = vlaneseq
        %v7596 = vshrl.u32 %v7595, 7
        %v7597 = vsub.s32 0, %v7596
        %v7598 = vrot.slane %v7593, %v7597
        %v7600 = vsel %vm837, %v7588, 0
        %7602 = vmatprep.subr.mxu0 0.0
        %7603 = vmatpush1.msra.mxu0 %v7586
        %7604 = vmatprep.subr.mxu0 0.0
        %7605 = vmatpush1.msra.mxu0 %v7587
        %7606 = vmatprep.subr.mxu0 0.0
        %7607 = vmatpush1.msra.mxu0 0.0
        %7608 = vmatprep.subr.mxu0 0.0
        %7609 = vmatpush1.msra.mxu0 0.0
        %7610 = vmatprep.subr.mxu0 0.0
        %7611 = vmatpush1.msra.mxu0 0.0
        %7612 = vmatprep.subr.mxu0 0.0
        %7613 = vmatpush1.msra.mxu0 0.0
        %7614 = vmatprep.subr.mxu0 0.0
        %7615 = vmatpush1.msra.mxu0 0.0
        %7616 = vmatprep.subr.mxu0 0.0
        %7617 = vmatpush1.msra.mxu0 0.0
        %7618 = vmatprep.subr.mxu0 0.0
        %7619 = vmatpush1.msra.mxu0 0.0
        %7620 = vmatprep.subr.mxu0 0.0
        %7621 = vmatpush1.msra.mxu0 0.0
        %7622 = vmatprep.subr.mxu0 0.0
        %7623 = vmatpush1.msra.mxu0 0.0
        %7624 = vmatprep.subr.mxu0 0.0
        %7625 = vmatpush1.msra.mxu0 0.0
        %7626 = vmatprep.subr.mxu0 0.0
        %7627 = vmatpush1.msra.mxu0 0.0
        %7628 = vmatprep.subr.mxu0 0.0
        %7629 = vmatpush1.msra.mxu0 0.0
        %7630 = vmatprep.subr.mxu0 0.0
        %7631 = vmatpush1.msra.mxu0 0.0
        %7632 = vmatprep.subr.mxu0 0.0
        %7633 = vmatpush1.msra.mxu0 0.0
        %7634 = vmatprep.subr.mxu0 0.0
        %7635 = vmatpush1.msra.mxu0 0.0
        %7636 = vmatprep.subr.mxu0 0.0
        %7637 = vmatpush1.msra.mxu0 0.0
        %7638 = vmatprep.subr.mxu0 0.0
        %7639 = vmatpush1.msra.mxu0 0.0
        %7640 = vmatprep.subr.mxu0 0.0
        %7641 = vmatpush1.msra.mxu0 0.0
        %7642 = vmatprep.subr.mxu0 0.0
        %7643 = vmatpush1.msra.mxu0 0.0
        %7644 = vmatprep.subr.mxu0 0.0
        %7645 = vmatpush1.msra.mxu0 0.0
        %7646 = vmatprep.subr.mxu0 0.0
        %7647 = vmatpush1.msra.mxu0 0.0
        %7648 = vmatprep.subr.mxu0 0.0
        %7649 = vmatpush1.msra.mxu0 0.0
        %7650 = vmatprep.subr.mxu0 0.0
        %7651 = vmatpush1.msra.mxu0 0.0
        %7652 = vmatprep.subr.mxu0 0.0
        %7653 = vmatpush1.msra.mxu0 0.0
        %7654 = vmatprep.subr.mxu0 0.0
        %7655 = vmatpush1.msra.mxu0 0.0
        %7656 = vmatprep.subr.mxu0 0.0
        %7657 = vmatpush1.msra.mxu0 0.0
        %7658 = vmatprep.subr.mxu0 0.0
        %7659 = vmatpush1.msra.mxu0 0.0
        %7660 = vmatprep.subr.mxu0 0.0
        %7661 = vmatpush1.msra.mxu0 0.0
        %7662 = vmatprep.subr.mxu0 0.0
        %7663 = vmatpush1.msra.mxu0 0.0
        %7664 = vmatprep.subr.mxu0 0.0
        %7665 = vmatpush1.msra.mxu0 0.0
        %7666 = vmatprep.mubr.f32.mxu0 0.0
        %7667 = vmatmul.mubr.f32.gmra.mrb[0].mxu0 %v7600
        %v7668 = vpop.f32.mrb[0].mxu0
        %v7669 = vadd.f32 %v7598, %v7668
        %v7670 = vpop.f32.mrb[0].mxu0
        %7671 = vdwg.mxu0
        %v7672 = vld [vmem:[%s15] sm:$0x1]
        %v7673 = vld [vmem:[#allocation4] sm:$0x1]
        %7675 = vset.pattern.permute.xlu0 0
        %7676 = vperm.xlu0 %7675, %v7673
        %v7677 = vpop.permute.xlu0 %7676
        %v7679 = vlaneseq
        %v7680 = vshrl.u32 %v7679, 7
        %v7681 = vsub.s32 0, %v7680
        %v7682 = vrot.slane %v7677, %v7681
        %v7684 = vsel %vm632, %v7672, 0
        %7686 = vmatprep.subr.mxu0 0.0
        %7687 = vmatpush1.msra.mxu0 %v4453
        %7688 = vmatprep.subr.mxu0 0.0
        %7689 = vmatpush1.msra.mxu0 %v4458
        %7690 = vmatprep.subr.mxu0 0.0
        %7691 = vmatpush1.msra.mxu0 %v4463
        %7692 = vmatprep.subr.mxu0 0.0
        %7693 = vmatpush1.msra.mxu0 %v4468
        %7694 = vmatprep.subr.mxu0 0.0
        %7695 = vmatpush1.msra.mxu0 0.0
        %7696 = vmatprep.subr.mxu0 0.0
        %7697 = vmatpush1.msra.mxu0 0.0
        %7698 = vmatprep.subr.mxu0 0.0
        %7699 = vmatpush1.msra.mxu0 0.0
        %7700 = vmatprep.subr.mxu0 0.0
        %7701 = vmatpush1.msra.mxu0 0.0
        %7702 = vmatprep.subr.mxu0 0.0
        %7703 = vmatpush1.msra.mxu0 0.0
        %7704 = vmatprep.subr.mxu0 0.0
        %7705 = vmatpush1.msra.mxu0 0.0
        %7706 = vmatprep.subr.mxu0 0.0
        %7707 = vmatpush1.msra.mxu0 0.0
        %7708 = vmatprep.subr.mxu0 0.0
        %7709 = vmatpush1.msra.mxu0 0.0
        %7710 = vmatprep.subr.mxu0 0.0
        %7711 = vmatpush1.msra.mxu0 0.0
        %7712 = vmatprep.subr.mxu0 0.0
        %7713 = vmatpush1.msra.mxu0 0.0
        %7714 = vmatprep.subr.mxu0 0.0
        %7715 = vmatpush1.msra.mxu0 0.0
        %7716 = vmatprep.subr.mxu0 0.0
        %7717 = vmatpush1.msra.mxu0 0.0
        %7718 = vmatprep.subr.mxu0 0.0
        %7719 = vmatpush1.msra.mxu0 0.0
        %7720 = vmatprep.subr.mxu0 0.0
        %7721 = vmatpush1.msra.mxu0 0.0
        %7722 = vmatprep.subr.mxu0 0.0
        %7723 = vmatpush1.msra.mxu0 0.0
        %7724 = vmatprep.subr.mxu0 0.0
        %7725 = vmatpush1.msra.mxu0 0.0
        %7726 = vmatprep.subr.mxu0 0.0
        %7727 = vmatpush1.msra.mxu0 0.0
        %7728 = vmatprep.subr.mxu0 0.0
        %7729 = vmatpush1.msra.mxu0 0.0
        %7730 = vmatprep.subr.mxu0 0.0
        %7731 = vmatpush1.msra.mxu0 0.0
        %7732 = vmatprep.subr.mxu0 0.0
        %7733 = vmatpush1.msra.mxu0 0.0
        %7734 = vmatprep.subr.mxu0 0.0
        %7735 = vmatpush1.msra.mxu0 0.0
        %7736 = vmatprep.subr.mxu0 0.0
        %7737 = vmatpush1.msra.mxu0 0.0
        %7738 = vmatprep.subr.mxu0 0.0
        %7739 = vmatpush1.msra.mxu0 0.0
        %7740 = vmatprep.subr.mxu0 0.0
        %7741 = vmatpush1.msra.mxu0 0.0
        %7742 = vmatprep.subr.mxu0 0.0
        %7743 = vmatpush1.msra.mxu0 0.0
        %7744 = vmatprep.subr.mxu0 0.0
        %7745 = vmatpush1.msra.mxu0 0.0
        %7746 = vmatprep.subr.mxu0 0.0
        %7747 = vmatpush1.msra.mxu0 0.0
        %7748 = vmatprep.subr.mxu0 0.0
        %7749 = vmatpush1.msra.mxu0 0.0
        %7750 = vmatprep.mubr.f32.mxu0 0.0
        %7751 = vmatmul.mubr.f32.gmra.mrb[0].mxu0 %v7684
        %v7752 = vpop.f32.mrb[0].mxu0
        %v7753 = vadd.f32 %v7682, %v7752
        %v7754 = vpop.f32.mrb[0].mxu0
        %7755 = vdwg.mxu0
        %s7756 = sld [smem:[#allocation2]]
        %s7757 = ssub.f32 1.0, %s7756
        %v7758 = vstv %s7757
        %v7759 = vmul.f32 %v7758, %v7753
        %v7760 = vstv %s7756
        %v7761 = vmul.f32 %v7760, %v7669
        %v7762 = vadd.f32 %v7759, %v7761
        %v7763 = vtanh.pop %v7762
        %vm7764 = vcmask 516096
        %7765 = vst.msk [vmem:[%s618] sm:$0x1] %vm7764, %v7763
        %s7766 = sand.u32 %s409, 1
        %s7767 = scalar_lea.sflag [#allocation7], %s7766
        %s7768 = sand.u32 %s409, 1
        %s7769 = scalar_lea.vmem [#allocation14], %s7768
        // Predicated region
        $region109: #{apply_fn.1} parent=87 // pred_check
          %p7770 = pneg %p419
        $region110: #{apply_fn.1} parent=87 // pred_check_branch
          %7772 = sbr.rel (%p7770) target = $region112
        $region111: #{apply_fn.1} parent=87 // pred_region
          %s7774 = ssub.s32 16, 16
          %7775 = vsyncadd %s7767, %s7774
          %s7776 = smul.addr %s39, 16
          %s7777 = scalar_lea.hbm %s17, %s7776
          %s7779 = sshll.u32 %s7769, 4
          %s7780 = int_to_ptr.vmem [resolvable:$true] %s7779
          %7782 = dma.vmem_to_hbm [thread:$0]  %s7780, 16, %s7777, %s7767
        $region112: #{apply_fn.1} parent=87 // pred_fallthru
          _
      $region88: #{apply_fn.1} parent=5 // pred_fallthru
        _
      %p7783 = scmp.le.s32.totalorder 2, %s34
      // Predicated region
      $region113: #{apply_fn.1} parent=5 // pred_check
        %p7784 = pneg %p7783
      $region114: #{apply_fn.1} parent=5 // pred_check_branch
        %7786 = sbr.rel (%p7784) target = $region116
      $region115: #{apply_fn.1} parent=5 // pred_region
        %s7787 = ssub.s32 %s34, 2
        // Predicated region
        $region117: #{apply_fn.1} parent=115 // pred_check
          %p7788 = pneg %p425
        $region118: #{apply_fn.1} parent=115 // pred_check_branch
          %7790 = sbr.rel (%p7788) target = $region120
        $region119: #{apply_fn.1} parent=115 // pred_region
          %s7791 = sand.u32 %s410, 1
          %s7792 = scalar_lea.sflag [#allocation7], %s7791
          %s7793 = sand.u32 %s410, 1
          %s7794 = scalar_lea.vmem [#allocation14], %s7793
          %7795 = dma.done %s7792, 16
        $region120: #{apply_fn.1} parent=115 // pred_fallthru
          _
      $region116: #{apply_fn.1} parent=5 // pred_fallthru
        _
    $region6: #{apply_fn.1} parent=1 // loop_footer
      %s38 = sadd.s32 1, %s34
    $region7: #{apply_fn.1} parent=1 // loop_footer_branch
      %33 = sbr.rel target = $region3
    $region8: #{apply_fn.1} parent=1 // loop_exit
      _
    %7796 = vsyncpa [#allocation6], 1
    %s7797 = scalar_lea.sflag [#allocation6], 1
    %7798 = vsyncpa %s7797, 1
    %7799 = vsyncpa [#allocation9], 1
    %7800 = vsyncpa [#allocation12], 1
    %7801 = vsyncpa [#allocation7], 1
    %s7802 = scalar_lea.sflag [#allocation7], 1
    %7803 = vsyncpa %s7802, 1

</llo_original>
